<compile_context>
chip_gen: v7x
topology: tpu7x:2x2x1
jax: 0.10.0
libtpu: 0.0.40
codegen_flags: <defaults>
</compile_context>

<pallas_src>
import jax
import jax.numpy as jnp
from jax import lax
from jax.experimental import pallas as pl
from jax.experimental.pallas import tpu as pltpu

# ---- model dimensions -------------------------------------------------------
B = 2                       # per-forward batch (the hash is computed over this dim)
C_IN = 1
SP = 8                      # input spatial size (D = H = W)
IN_FEAT = C_IN * SP ** 3    # 512
H1 = 64
LATENT = 32
MIN_DIM = 4
C_DEC = 8
VOX = MIN_DIM ** 3          # 64
DEC_FEAT = C_DEC * VOX      # 512
OUT_LANES = 128             # lane-dense output slab: [0:64] recon, [64:96] bits

# ---- packed-bias layout (lane-aligned 128-lane segments) --------------------
B1_OFF = 0                  # lanes [0, 64)     : encoder Linear-1 bias
B2_OFF = 128                # lanes [128, 160)  : encoder Linear-2 bias
BD_OFF = 256                # lanes [256, 768)  : decoder Linear bias
BC_OFF = 768                # lanes [768, 896)  : conv bias broadcast (64) + zero pad
BIAS_LANES = 896

# ---- tiling -----------------------------------------------------------------
TARGET_ROWS = 1024          # upper bound on rows/tile (x-tile = 1 MiB bf16)
ROW_ALIGN = 16              # bf16 sublane tile height


def _rows_per_tile(total_rows):
    """Pick rows-per-grid-step: large enough to fill the MXU / amortize per-step
    overhead, >=2 tiles when possible (v7x dual TensorCore), bf16 sublane aligned."""
    if total_rows <= ROW_ALIGN:
        return total_rows                       # single tiny tile == full dim
    rows = min(TARGET_ROWS, pl.cdiv(total_rows, 2))
    rows = max(ROW_ALIGN, rows - rows % ROW_ALIGN)
    return min(rows, total_rows)


def _hash_bits_pairs(z):
    """torch `hash.forward` applied independently to each B=2 group of rows.

    For N=2 the top int(N/2)=1 row of each latent column gets +1, the other -1,
    i.e. the larger of the two values wins.  Partner rows come from two XLU
    sublane rolls plus a parity select (rows 2k and 2k+1 form one group).
    Stays in f32 (hash is sign-sensitive).
    """
    rows = z.shape[0]
    up = pltpu.roll(z, rows - 1, axis=0)       # row i <- row (i+1) % rows
    down = pltpu.roll(z, 1, axis=0)            # row i <- row (i-1) % rows
    row = lax.broadcasted_iota(jnp.int32, z.shape, 0)
    is_first = (row % 2) == 0                  # first row of each B=2 pair
    other = jnp.where(is_first, up, down)      # partner row within the pair
    bits = jnp.where(z > other, 1.0, -1.0)
    # TODO(synk): torch's hash resolves exact ties via implementation-defined
    # sort order; here the first row of each pair deterministically wins ties.
    bits = jnp.where(z == other, jnp.where(is_first, 1.0, -1.0), bits)
    return bits.astype(z.dtype)


def hash_autoencoder_kernel(x_ref, w1_ref, w2_ref, wd_ref, wconv_ref, bias_ref,
                            out_ref):
    x = x_ref[...]                                                   # (ROWS, 512) bf16

    # ---------------- encoder: Linear -> ReLU -> Linear ----------------------
    h1 = jnp.dot(x, w1_ref[...], preferred_element_type=jnp.float32)        # bf16 MXU
    h1 = jnp.maximum(h1 + bias_ref[:, B1_OFF:B1_OFF + H1], 0.0)             # f32 ReLU
    z = jnp.dot(h1, w2_ref[...], preferred_element_type=jnp.float32)        # f32 (hash-sensitive)
    z = z + bias_ref[:, B2_OFF:B2_OFF + LATENT]
    # Tanh elided: strictly monotone, so hash(tanh(z)) == hash(z) exactly and
    # tanh(z) is not consumed anywhere else in the forward pass.

    # ---------------- hash layer (per B=2 group, f32 compare) ----------------
    bits = _hash_bits_pairs(z)                                       # (ROWS, 32) +-1

    # ---------------- decoder: Linear -> ReLU -> 1x1x1 Conv3d (as MXU matmul)
    hd = jnp.dot(bits.astype(jnp.bfloat16), wd_ref[...],
                 preferred_element_type=jnp.float32)
    hd = jnp.maximum(hd + bias_ref[:, BD_OFF:BD_OFF + DEC_FEAT], 0.0)        # (ROWS, 512)
    out = jnp.dot(hd.astype(jnp.bfloat16), wconv_ref[...],
                  preferred_element_type=jnp.float32)
    out = out + bias_ref[:, BC_OFF:BC_OFF + OUT_LANES]                       # (ROWS, 128)

    # Lane-dense bf16 store; hash code packed into otherwise-dead lanes 64:96.
    out_ref[...] = out.astype(out_ref.dtype)
    out_ref[:, VOX:VOX + LATENT] = bits.astype(out_ref.dtype)


def init_params(key):
    ks = jax.random.split(key, 8)
    s = 0.05
    # Linear weights stored pre-transposed as (in, out) so the kernel does x @ W.
    w1 = s * jax.random.normal(ks[0], (IN_FEAT, H1), jnp.float32)
    b1 = s * jax.random.normal(ks[1], (1, H1), jnp.float32)
    w2 = s * jax.random.normal(ks[2], (H1, LATENT), jnp.float32)
    b2 = s * jax.random.normal(ks[3], (1, LATENT), jnp.float32)
    wd = s * jax.random.normal(ks[4], (LATENT, DEC_FEAT), jnp.float32)
    bd = s * jax.random.normal(ks[5], (1, DEC_FEAT), jnp.float32)
    wc = s * jax.random.normal(ks[6], (1, C_DEC), jnp.float32)   # Conv3d(8,1,1) weight
    bc = s * jax.random.normal(ks[7], (1, 1), jnp.float32)       # Conv3d bias
    return (w1, b1, w2, b2, wd, bd, wc, bc)


def _prep_conv_weight(wc):
    """Fold pointwise Conv3d(8->1, k=1) into a (DEC_FEAT, OUT_LANES) matmul weight.

    W_conv[c*VOX + v, v] = wc[0, c]; columns VOX:OUT_LANES are zero so the kernel
    output is a lane-dense 128-wide slab (bits overwrite lanes 64:96 afterwards).
    """
    eye = jnp.eye(VOX, dtype=jnp.float32)                            # (64, 64)
    wconv = (wc.reshape(C_DEC, 1, 1) * eye[None, :, :]).reshape(DEC_FEAT, VOX)
    return jnp.pad(wconv, ((0, 0), (0, OUT_LANES - VOX)))            # (512, 128)


def _pack_biases(b1, b2, bd, bc):
    """All four bias vectors in one lane-aligned resident array (fewer DMA streams)."""
    bias = jnp.zeros((1, BIAS_LANES), jnp.float32)
    bias = bias.at[:, B1_OFF:B1_OFF + H1].set(b1)
    bias = bias.at[:, B2_OFF:B2_OFF + LATENT].set(b2)
    bias = bias.at[:, BD_OFF:BD_OFF + DEC_FEAT].set(bd)
    bias = bias.at[:, BC_OFF:BC_OFF + VOX].set(jnp.broadcast_to(bc, (1, VOX)))
    return bias


def hash_autoencoder_forward(x, params):
    """x: (G, B, C_IN, SP, SP, SP) -- G independent B=2 forward passes.

    Returns (x_hat, bits): x_hat is the Conv3d NCDHW reconstruction,
    bits is the +/-1 hash code (what `only_encode` mode would sign-return).
    """
    w1, b1, w2, b2, wd, bd, wc, bc = params
    G = x.shape[0]
    assert x.shape[1:] == (B, C_IN, SP, SP, SP), x.shape
    total_rows = G * B

    # Flatten (torch.flatten) and cast the dominant HBM stream to bf16.
    x_flat = x.reshape(total_rows, IN_FEAT).astype(jnp.bfloat16)
    w1b = w1.astype(jnp.bfloat16)
    wdb = wd.astype(jnp.bfloat16)
    wconvb = _prep_conv_weight(wc).astype(jnp.bfloat16)
    bias = _pack_biases(b1, b2, bd, bc)

    rows = _rows_per_tile(total_rows)
    num_tiles = pl.cdiv(total_rows, rows)   # ragged tail handled by Pallas masking

    def _resident(a):                       # whole array, VMEM-resident across grid
        return pl.BlockSpec(a.shape, lambda g: (0, 0))

    out = pl.pallas_call(
        hash_autoencoder_kernel,
        out_shape=jax.ShapeDtypeStruct((total_rows, OUT_LANES), jnp.bfloat16),
        grid=(num_tiles,),
        in_specs=[
            # x is the only per-step-varying stream (add pipeline_mode=
            # pl.Buffered(3) here if profiling shows its DMA still exposed).
            pl.BlockSpec((rows, IN_FEAT), lambda g: (g, 0)),
            _resident(w1b), _resident(w2), _resident(wdb),
            _resident(wconvb), _resident(bias),
        ],
        out_specs=pl.BlockSpec((rows, OUT_LANES), lambda g: (g, 0)),
        compiler_params=pltpu.CompilerParams(
            dimension_semantics=("parallel",)),   # v7x: shard tiles over 2 TCs
    )(x_flat, w1b, w2, wdb, wconvb, bias)

    recon = out[:, :VOX].astype(jnp.float32)
    recon = recon.reshape(G, B, 1, MIN_DIM, MIN_DIM, MIN_DIM)
    bits = out[:, VOX:VOX + LATENT].astype(jnp.float32).reshape(G, B, LATENT)
    return recon, bits


# ----------------------------- reference (pure JAX) --------------------------
def reference_latent(x, params):
    """Pre-tanh latent z, mirroring the kernel's bf16 cast on the first matmul.
    (tanh is monotone, so the hash decision depends only on z ordering.)"""
    w1, b1, w2, b2, *_ = params
    G = x.shape[0]
    xf = x.reshape(G * B, IN_FEAT).astype(jnp.bfloat16)
    h1 = jnp.dot(xf, w1.astype(jnp.bfloat16), preferred_element_type=jnp.float32) + b1
    h1 = jnp.maximum(h1, 0.0)
    z = jnp.dot(h1, w2, preferred_element_type=jnp.float32) + b2
    return z.reshape(G, B, LATENT)


def reference_decode(bits, params):
    """Decoder (Linear -> reshape -> ReLU -> 1x1x1 Conv3d) applied to given bits."""
    _, _, _, _, wd, bd, wc, bc = params
    r = bits.reshape(-1, LATENT)
    hd = jnp.dot(r.astype(jnp.bfloat16), wd.astype(jnp.bfloat16),
                 preferred_element_type=jnp.float32) + bd
    hd = jnp.maximum(hd, 0.0)
    hd_c = hd.reshape(-1, C_DEC, VOX)                 # channel-major, as Decoder.reshape
    out = jnp.einsum('rcv,c->rv', hd_c, wc[0]) + bc[0, 0]
    return out.reshape(bits.shape[0], B, 1, MIN_DIM, MIN_DIM, MIN_DIM)


if __name__ == "__main__":
    key = jax.random.PRNGKey(0)
    k_x, k_p = jax.random.split(key)

    G = 512                                           # 512 independent B=2 forwards
    x = jax.random.normal(k_x, (G, B, C_IN, SP, SP, SP), jnp.float32)
    params = init_params(k_p)

    fwd = jax.jit(hash_autoencoder_forward)
    x_hat, bits = fwd(x, params)
    jax.block_until_ready((x_hat, bits))

    assert x_hat.shape == (G, B, 1, MIN_DIM, MIN_DIM, MIN_DIM), x_hat.shape
    assert bits.shape == (G, B, LATENT), bits.shape
    assert bool(jnp.all(jnp.isfinite(x_hat)))

    # 1) Hash-layer structural invariants (N=2: exactly one +1 and one -1 per column).
    assert bool(jnp.all(jnp.abs(bits) == 1.0))
    assert bool(jnp.all(bits[:, 0] + bits[:, 1] == 0.0))

    # 2) The +1 goes to the row with the larger latent (checked where the
    #    reference margin is comfortably above any f32/bf16 rounding skew).
    z_ref = reference_latent(x, params)
    d = z_ref[:, 0] - z_ref[:, 1]
    clear = jnp.abs(d) > 2e-2
    ok = jnp.where(clear, bits[:, 0] == jnp.where(d > 0, 1.0, -1.0), True)
    assert bool(jnp.all(ok))

    # 3) Decoder path: kernel reconstruction vs reference decoder on the kernel's bits.
    ref = reference_decode(bits, params)
    assert bool(jnp.allclose(x_hat, ref, atol=5e-3, rtol=5e-3)), \
        float(jnp.max(jnp.abs(x_hat - ref)))

    print("KERNEL_OK")
</pallas_src>

<mosaic_0001>
module attributes {stable_mosaic.version = 11 : i64} {
  func.func @hash_autoencoder_kernel(%arg0: i32, %arg1: memref<512x512xbf16, #tpu.memory_space<vmem>>, %arg2: memref<512x64xbf16, #tpu.memory_space<vmem>>, %arg3: memref<64x32xf32, #tpu.memory_space<vmem>>, %arg4: memref<32x512xbf16, #tpu.memory_space<vmem>>, %arg5: memref<512x128xbf16, #tpu.memory_space<vmem>>, %arg6: memref<1x896xf32, #tpu.memory_space<vmem>>, %arg7: memref<512x128xbf16, #tpu.memory_space<vmem>>) attributes {dimension_semantics = [#tpu.dimension_semantics<parallel>], iteration_bounds = array<i64: 2>, scalar_prefetch = 0 : i64, scratch_operands = 0 : i64, tpu.core_type = #tpu.core_type<tc>, window_params = [{transform_indices = @transform_0, window_bounds = array<i64: 512, 512>}, {pipeline_mode = #tpu.pipeline_mode<synchronous>, transform_indices = @transform_1, window_bounds = array<i64: 512, 64>}, {pipeline_mode = #tpu.pipeline_mode<synchronous>, transform_indices = @transform_2, window_bounds = array<i64: 64, 32>}, {pipeline_mode = #tpu.pipeline_mode<synchronous>, transform_indices = @transform_3, window_bounds = array<i64: 32, 512>}, {pipeline_mode = #tpu.pipeline_mode<synchronous>, transform_indices = @transform_4, window_bounds = array<i64: 512, 128>}, {pipeline_mode = #tpu.pipeline_mode<synchronous>, transform_indices = @transform_5, window_bounds = array<i64: 1, 896>}, {transform_indices = @transform_6, window_bounds = array<i64: 512, 128>}]} {
    %c0 = arith.constant 0 : index
    %c0_0 = arith.constant 0 : index
    %0 = vector.load %arg1[%c0, %c0_0] : memref<512x512xbf16, #tpu.memory_space<vmem>>, vector<512x512xbf16>
    %c0_1 = arith.constant 0 : index
    %c0_2 = arith.constant 0 : index
    %1 = vector.load %arg2[%c0_1, %c0_2] : memref<512x64xbf16, #tpu.memory_space<vmem>>, vector<512x64xbf16>
    %cst = arith.constant dense<0.000000e+00> : vector<512x64xf32>
    %2 = tpu.matmul %0, %1, %cst {dimension_numbers = #tpu.dot_dimension_numbers<[1], [0], [0], [1], [0, 0, 1, 1], [], []>} : vector<512x512xbf16>, vector<512x64xbf16>, vector<512x64xf32> -> vector<512x64xf32>
    %c0_3 = arith.constant 0 : index
    %c0_4 = arith.constant 0 : index
    %3 = vector.load %arg6[%c0_3, %c0_4] : memref<1x896xf32, #tpu.memory_space<vmem>>, vector<1x64xf32>
    %4 = vector.broadcast %3 : vector<1x64xf32> to vector<512x64xf32>
    %5 = arith.addf %2, %4 : vector<512x64xf32>
    %cst_5 = arith.constant 0.000000e+00 : f32
    %6 = vector.broadcast %cst_5 : f32 to vector<512x64xf32>
    %7 = arith.maximumf %5, %6 : vector<512x64xf32>
    %c0_6 = arith.constant 0 : index
    %c0_7 = arith.constant 0 : index
    %8 = vector.load %arg3[%c0_6, %c0_7] : memref<64x32xf32, #tpu.memory_space<vmem>>, vector<64x32xf32>
    %cst_8 = arith.constant dense<0.000000e+00> : vector<512x32xf32>
    %9 = tpu.matmul %7, %8, %cst_8 {dimension_numbers = #tpu.dot_dimension_numbers<[1], [0], [0], [1], [0, 0, 1, 1], [], []>} : vector<512x64xf32>, vector<64x32xf32>, vector<512x32xf32> -> vector<512x32xf32>
    %c0_9 = arith.constant 0 : index
    %c128 = arith.constant 128 : index
    %10 = vector.load %arg6[%c0_9, %c128] : memref<1x896xf32, #tpu.memory_space<vmem>>, vector<1x32xf32>
    %11 = vector.broadcast %10 : vector<1x32xf32> to vector<512x32xf32>
    %12 = arith.addf %9, %11 : vector<512x32xf32>
    %c511_i32 = arith.constant 511 : i32
    %13 = tpu.dynamic_rotate %12 by %c511_i32 dim 0 : vector<512x32xf32>, i32 -> vector<512x32xf32>
    %c1_i32 = arith.constant 1 : i32
    %14 = tpu.dynamic_rotate %12 by %c1_i32 dim 0 : vector<512x32xf32>, i32 -> vector<512x32xf32>
    %15 = tpu.iota {dimensions = array<i32: 0>} : vector<512x32xi32>
    %c2_i32 = arith.constant 2 : i32
    %c0_i32 = arith.constant 0 : i32
    %16 = arith.cmpi eq, %c2_i32, %c0_i32 : i32
    %c1_i32_10 = arith.constant 1 : i32
    %17 = arith.select %16, %c1_i32_10, %c2_i32 : i32
    %18 = vector.broadcast %17 : i32 to vector<512x32xi32>
    %19 = arith.remsi %15, %18 : vector<512x32xi32>
    %c0_i32_11 = arith.constant 0 : i32
    %20 = vector.broadcast %c0_i32_11 : i32 to vector<512x32xi32>
    %21 = arith.cmpi ne, %19, %20 : vector<512x32xi32>
    %c0_i32_12 = arith.constant 0 : i32
    %22 = vector.broadcast %c0_i32_12 : i32 to vector<512x32xi32>
    %23 = arith.cmpi slt, %19, %22 : vector<512x32xi32>
    %c0_i32_13 = arith.constant 0 : i32
    %24 = arith.cmpi slt, %17, %c0_i32_13 : i32
    %25 = vector.broadcast %24 : i1 to vector<512x32xi1>
    %26 = vector.broadcast %25 : vector<512x32xi1> to vector<512x32xi1>
    %27 = arith.xori %23, %26 : vector<512x32xi1>
    %28 = arith.andi %27, %21 : vector<512x32xi1>
    %29 = vector.broadcast %17 : i32 to vector<512x32xi32>
    %30 = arith.addi %19, %29 : vector<512x32xi32>
    %31 = arith.select %28, %30, %19 : vector<512x32xi1>, vector<512x32xi32>
    %c0_i32_14 = arith.constant 0 : i32
    %32 = vector.broadcast %c0_i32_14 : i32 to vector<512x32xi32>
    %33 = arith.cmpi eq, %31, %32 : vector<512x32xi32>
    %34 = arith.select %33, %13, %14 : vector<512x32xi1>, vector<512x32xf32>
    %35 = arith.cmpf ogt, %12, %34 : vector<512x32xf32>
    %cst_15 = arith.constant 1.000000e+00 : f32
    %cst_16 = arith.constant -1.000000e+00 : f32
    %36 = vector.broadcast %cst_15 : f32 to vector<512x32xf32>
    %37 = vector.broadcast %cst_16 : f32 to vector<512x32xf32>
    %38 = arith.select %35, %36, %37 : vector<512x32xi1>, vector<512x32xf32>
    %39 = arith.cmpf oeq, %12, %34 : vector<512x32xf32>
    %cst_17 = arith.constant 1.000000e+00 : f32
    %cst_18 = arith.constant -1.000000e+00 : f32
    %40 = vector.broadcast %cst_17 : f32 to vector<512x32xf32>
    %41 = vector.broadcast %cst_18 : f32 to vector<512x32xf32>
    %42 = arith.select %33, %40, %41 : vector<512x32xi1>, vector<512x32xf32>
    %43 = arith.select %39, %42, %38 : vector<512x32xi1>, vector<512x32xf32>
    %44 = arith.truncf %43 : vector<512x32xf32> to vector<512x32xbf16>
    %c0_19 = arith.constant 0 : index
    %c0_20 = arith.constant 0 : index
    %45 = vector.load %arg4[%c0_19, %c0_20] : memref<32x512xbf16, #tpu.memory_space<vmem>>, vector<32x512xbf16>
    %cst_21 = arith.constant dense<0.000000e+00> : vector<512x512xf32>
    %46 = tpu.matmul %44, %45, %cst_21 {dimension_numbers = #tpu.dot_dimension_numbers<[1], [0], [0], [1], [0, 0, 1, 1], [], []>} : vector<512x32xbf16>, vector<32x512xbf16>, vector<512x512xf32> -> vector<512x512xf32>
    %c0_22 = arith.constant 0 : index
    %c256 = arith.constant 256 : index
    %47 = vector.load %arg6[%c0_22, %c256] : memref<1x896xf32, #tpu.memory_space<vmem>>, vector<1x512xf32>
    %48 = vector.broadcast %47 : vector<1x512xf32> to vector<512x512xf32>
    %49 = arith.addf %46, %48 : vector<512x512xf32>
    %cst_23 = arith.constant 0.000000e+00 : f32
    %50 = vector.broadcast %cst_23 : f32 to vector<512x512xf32>
    %51 = arith.maximumf %49, %50 : vector<512x512xf32>
    %52 = arith.truncf %51 : vector<512x512xf32> to vector<512x512xbf16>
    %c0_24 = arith.constant 0 : index
    %c0_25 = arith.constant 0 : index
    %53 = vector.load %arg5[%c0_24, %c0_25] : memref<512x128xbf16, #tpu.memory_space<vmem>>, vector<512x128xbf16>
    %cst_26 = arith.constant dense<0.000000e+00> : vector<512x128xf32>
    %54 = tpu.matmul %52, %53, %cst_26 {dimension_numbers = #tpu.dot_dimension_numbers<[1], [0], [0], [1], [0, 0, 1, 1], [], []>} : vector<512x512xbf16>, vector<512x128xbf16>, vector<512x128xf32> -> vector<512x128xf32>
    %c0_27 = arith.constant 0 : index
    %c768 = arith.constant 768 : index
    %55 = vector.load %arg6[%c0_27, %c768] : memref<1x896xf32, #tpu.memory_space<vmem>>, vector<1x128xf32>
    %56 = vector.broadcast %55 : vector<1x128xf32> to vector<512x128xf32>
    %57 = arith.addf %54, %56 : vector<512x128xf32>
    %58 = arith.truncf %57 : vector<512x128xf32> to vector<512x128xbf16>
    %c0_28 = arith.constant 0 : index
    %c0_29 = arith.constant 0 : index
    %59 = vector.load %arg7[%c0_28, %c0_29] : memref<512x128xbf16, #tpu.memory_space<vmem>>, vector<512x128xbf16>
    tpu.vector_store %arg7[%c0_28, %c0_29], %58 {strides = array<i32>} : memref<512x128xbf16, #tpu.memory_space<vmem>>, vector<512x128xbf16>,
    %60 = arith.truncf %43 : vector<512x32xf32> to vector<512x32xbf16>
    %c0_30 = arith.constant 0 : index
    %c64 = arith.constant 64 : index
    %61 = vector.load %arg7[%c0_30, %c64] : memref<512x128xbf16, #tpu.memory_space<vmem>>, vector<512x32xbf16>
    tpu.vector_store %arg7[%c0_30, %c64], %60 {strides = array<i32>} : memref<512x128xbf16, #tpu.memory_space<vmem>>, vector<512x32xbf16>,
    return
  }
  func.func @transform_0(%arg0: i32) -> (i32, i32) {
    %c0_i32 = arith.constant 0 : i32
    %c0_i32_0 = arith.constant 0 : i32
    return %arg0, %c0_i32 : i32, i32
  }
  func.func @transform_1(%arg0: i32) -> (i32, i32) {
    %c0_i32 = arith.constant 0 : i32
    %c0_i32_0 = arith.constant 0 : i32
    %c0_i32_1 = arith.constant 0 : i32
    return %c0_i32, %c0_i32_0 : i32, i32
  }
  func.func @transform_2(%arg0: i32) -> (i32, i32) {
    %c0_i32 = arith.constant 0 : i32
    %c0_i32_0 = arith.constant 0 : i32
    %c0_i32_1 = arith.constant 0 : i32
    return %c0_i32, %c0_i32_0 : i32, i32
  }
  func.func @transform_3(%arg0: i32) -> (i32, i32) {
    %c0_i32 = arith.constant 0 : i32
    %c0_i32_0 = arith.constant 0 : i32
    %c0_i32_1 = arith.constant 0 : i32
    return %c0_i32, %c0_i32_0 : i32, i32
  }
  func.func @transform_4(%arg0: i32) -> (i32, i32) {
    %c0_i32 = arith.constant 0 : i32
    %c0_i32_0 = arith.constant 0 : i32
    %c0_i32_1 = arith.constant 0 : i32
    return %c0_i32, %c0_i32_0 : i32, i32
  }
  func.func @transform_5(%arg0: i32) -> (i32, i32) {
    %c0_i32 = arith.constant 0 : i32
    %c0_i32_0 = arith.constant 0 : i32
    %c0_i32_1 = arith.constant 0 : i32
    return %c0_i32, %c0_i32_0 : i32, i32
  }
  func.func @transform_6(%arg0: i32) -> (i32, i32) {
    %c0_i32 = arith.constant 0 : i32
    %c0_i32_0 = arith.constant 0 : i32
    return %arg0, %c0_i32 : i32, i32
  }
}

</mosaic_0001>

<llo_original>
// kernel: hash_autoencoder_forward.1
$region0: #{hash_autoencoder_forward.1}
  #allocation0 [shape = 'u32[]', space=smem, size = 0x4, offset = 0x4, fixed_abs, tag = 'smem constant byte address 0x4 - core index']
  #allocation1 [shape = 'u32[144,128]{1,0:T(1,128)}', space=vmem, size = 0x12000, scoped, tag = 'internal scratch']
  %s0 = inlined_call_operand.vmem [shape: bf16[1024,512], index: 0, kind: input, shape index: {}]
  %s1 = inlined_call_operand.vmem [shape: bf16[512,64], index: 1, kind: input, shape index: {}]
  %s2 = inlined_call_operand.vmem [shape: f32[64,32], index: 2, kind: input, shape index: {}]
  %s3 = inlined_call_operand.vmem [shape: bf16[32,512], index: 3, kind: input, shape index: {}]
  %s4 = inlined_call_operand.vmem [shape: bf16[512,128], index: 4, kind: input, shape index: {}]
  %s5 = inlined_call_operand.vmem [shape: f32[1,896], index: 5, kind: input, shape index: {}]
  %s6 = inlined_call_operand.vmem [shape: bf16[1024,128], index: 6, kind: output, shape index: {}]
  %s7 = sld [smem:[#allocation0]]
  $region57: #{hash_autoencoder_forward.1} parent=0
    _
  %s9 = ssub.s32 1, %s7
  %s10 = scalar_select 0, %s9, %s7
  loop: start=0, step=1, limit=4
  $region2: #{hash_autoencoder_forward.1} parent=0 // loop_pre_header
    _
  $region3: #{hash_autoencoder_forward.1} parent=0 // loop_header
    %s12 = sphi 0, %s16
    %p13 = scmp.ge.s32.totalorder %s12, 4
    %s22 = sphi 0, %s24
    %s25 = sphi 0, %s22
    %s26 = sphi 0, %s25
    %s42 = sphi 0, %s26
    %s46 = sphi 0, %s46
    %s48 = sphi 0, %s46
    %s49 = sphi 0, %s48
    %s63 = sphi 0, %s49
    %s67 = sphi 0, %s67
    %s69 = sphi 0, %s67
    %s70 = sphi 0, %s69
    %s84 = sphi 0, %s70
    %s88 = sphi 0, %s88
    %s90 = sphi 0, %s88
    %s91 = sphi 0, %s90
    %s105 = sphi 0, %s91
    %s109 = sphi 0, %s109
    %s111 = sphi 0, %s109
    %s112 = sphi 0, %s111
    %s126 = sphi 0, %s112
    %s130 = sphi 0, %s130
    %s132 = sphi 0, %s130
    %s133 = sphi 0, %s132
    %s147 = sphi 0, %s133
    %s153 = sphi 0, %s155
    %s156 = sphi 0, %s153
    %s157 = sphi 0, %s156
    %s173 = sphi 0, %s157
  $region4: #{hash_autoencoder_forward.1} parent=0 // loop_header_branch
    %15 = sbr.rel (%p13) target = $region8
  $region5: #{hash_autoencoder_forward.1} parent=0 // loop_body
    %s17 = ssub.s32 %s12, 1
    %s18 = ssub.s32 %s12, 2
    %s19 = sadd.s32 %s12, 1
    %s20 = ssub.s32 %s12, %s19
    %p21 = scmp.eq.s32.totalorder %s20, 0
    %s23 = sadd.s32 %s22, 1
    %s24 = scalar_select %p21, %s22, %s23
    %p27 = pneg %p21
    %p28 = scmp.eq.s32.totalorder %s12, 1
    %p29 = por %p27, %p28
    %p30 = scmp.ne.s32.totalorder %s22, %s25
    %p31 = scmp.eq.s32.totalorder %s12, 0
    %p32 = por %p30, %p31
    %p33 = scmp.ne.s32.totalorder %s22, %s25
    %p34 = scmp.eq.s32.totalorder %s17, 1
    %p35 = por %p33, %p34
    %p36 = scmp.ne.s32.totalorder %s25, %s26
    %p37 = scmp.eq.s32.totalorder %s17, 0
    %p38 = por %p36, %p37
    %p39 = scmp.ne.s32.totalorder %s25, %s26
    %p40 = scmp.eq.s32.totalorder %s18, 1
    %p41 = por %p39, %p40
    %p43 = scmp.ne.s32.totalorder %s26, %s42
    %p44 = scmp.eq.s32.totalorder %s18, 0
    %p45 = por %p43, %p44
    %s47 = sadd.s32 %s46, 1
    %p50 = scmp.eq.s32.totalorder %s12, 1
    %p51 = scmp.ne.s32.totalorder %s46, %s48
    %p52 = scmp.eq.s32.totalorder %s12, 0
    %p53 = por %p51, %p52
    %p54 = scmp.ne.s32.totalorder %s46, %s48
    %p55 = scmp.eq.s32.totalorder %s17, 1
    %p56 = por %p54, %p55
    %p57 = scmp.ne.s32.totalorder %s48, %s49
    %p58 = scmp.eq.s32.totalorder %s17, 0
    %p59 = por %p57, %p58
    %p60 = scmp.ne.s32.totalorder %s48, %s49
    %p61 = scmp.eq.s32.totalorder %s18, 1
    %p62 = por %p60, %p61
    %p64 = scmp.ne.s32.totalorder %s49, %s63
    %p65 = scmp.eq.s32.totalorder %s18, 0
    %p66 = por %p64, %p65
    %s68 = sadd.s32 %s67, 1
    %p71 = scmp.eq.s32.totalorder %s12, 1
    %p72 = scmp.ne.s32.totalorder %s67, %s69
    %p73 = scmp.eq.s32.totalorder %s12, 0
    %p74 = por %p72, %p73
    %p75 = scmp.ne.s32.totalorder %s67, %s69
    %p76 = scmp.eq.s32.totalorder %s17, 1
    %p77 = por %p75, %p76
    %p78 = scmp.ne.s32.totalorder %s69, %s70
    %p79 = scmp.eq.s32.totalorder %s17, 0
    %p80 = por %p78, %p79
    %p81 = scmp.ne.s32.totalorder %s69, %s70
    %p82 = scmp.eq.s32.totalorder %s18, 1
    %p83 = por %p81, %p82
    %p85 = scmp.ne.s32.totalorder %s70, %s84
    %p86 = scmp.eq.s32.totalorder %s18, 0
    %p87 = por %p85, %p86
    %s89 = sadd.s32 %s88, 1
    %p92 = scmp.eq.s32.totalorder %s12, 1
    %p93 = scmp.ne.s32.totalorder %s88, %s90
    %p94 = scmp.eq.s32.totalorder %s12, 0
    %p95 = por %p93, %p94
    %p96 = scmp.ne.s32.totalorder %s88, %s90
    %p97 = scmp.eq.s32.totalorder %s17, 1
    %p98 = por %p96, %p97
    %p99 = scmp.ne.s32.totalorder %s90, %s91
    %p100 = scmp.eq.s32.totalorder %s17, 0
    %p101 = por %p99, %p100
    %p102 = scmp.ne.s32.totalorder %s90, %s91
    %p103 = scmp.eq.s32.totalorder %s18, 1
    %p104 = por %p102, %p103
    %p106 = scmp.ne.s32.totalorder %s91, %s105
    %p107 = scmp.eq.s32.totalorder %s18, 0
    %p108 = por %p106, %p107
    %s110 = sadd.s32 %s109, 1
    %p113 = scmp.eq.s32.totalorder %s12, 1
    %p114 = scmp.ne.s32.totalorder %s109, %s111
    %p115 = scmp.eq.s32.totalorder %s12, 0
    %p116 = por %p114, %p115
    %p117 = scmp.ne.s32.totalorder %s109, %s111
    %p118 = scmp.eq.s32.totalorder %s17, 1
    %p119 = por %p117, %p118
    %p120 = scmp.ne.s32.totalorder %s111, %s112
    %p121 = scmp.eq.s32.totalorder %s17, 0
    %p122 = por %p120, %p121
    %p123 = scmp.ne.s32.totalorder %s111, %s112
    %p124 = scmp.eq.s32.totalorder %s18, 1
    %p125 = por %p123, %p124
    %p127 = scmp.ne.s32.totalorder %s112, %s126
    %p128 = scmp.eq.s32.totalorder %s18, 0
    %p129 = por %p127, %p128
    %s131 = sadd.s32 %s130, 1
    %p134 = scmp.eq.s32.totalorder %s12, 1
    %p135 = scmp.ne.s32.totalorder %s130, %s132
    %p136 = scmp.eq.s32.totalorder %s12, 0
    %p137 = por %p135, %p136
    %p138 = scmp.ne.s32.totalorder %s130, %s132
    %p139 = scmp.eq.s32.totalorder %s17, 1
    %p140 = por %p138, %p139
    %p141 = scmp.ne.s32.totalorder %s132, %s133
    %p142 = scmp.eq.s32.totalorder %s17, 0
    %p143 = por %p141, %p142
    %p144 = scmp.ne.s32.totalorder %s132, %s133
    %p145 = scmp.eq.s32.totalorder %s18, 1
    %p146 = por %p144, %p145
    %p148 = scmp.ne.s32.totalorder %s133, %s147
    %p149 = scmp.eq.s32.totalorder %s18, 0
    %p150 = por %p148, %p149
    %s151 = ssub.s32 %s12, %s19
    %p152 = scmp.eq.s32.totalorder %s151, 0
    %s154 = sadd.s32 %s153, 1
    %s155 = scalar_select %p152, %s153, %s154
    %p158 = pneg %p152
    %p159 = scmp.eq.s32.totalorder %s12, 1
    %p160 = por %p158, %p159
    %p161 = scmp.ne.s32.totalorder %s153, %s156
    %p162 = scmp.eq.s32.totalorder %s12, 0
    %p163 = por %p161, %p162
    %p164 = scmp.ne.s32.totalorder %s153, %s156
    %p165 = scmp.eq.s32.totalorder %s17, 1
    %p166 = por %p164, %p165
    %p167 = scmp.ne.s32.totalorder %s156, %s157
    %p168 = scmp.eq.s32.totalorder %s17, 0
    %p169 = por %p167, %p168
    %p170 = scmp.ne.s32.totalorder %s156, %s157
    %p171 = scmp.eq.s32.totalorder %s18, 1
    %p172 = por %p170, %p171
    %p174 = scmp.ne.s32.totalorder %s157, %s173
    %p175 = scmp.eq.s32.totalorder %s18, 0
    %p176 = por %p174, %p175
    %p177 = scmp.le.s32.totalorder 1, %s12
    %p178 = scmp.lt.s32.totalorder %s12, 3
    %p179 = pnand %p177, %p178
    %p180 = pneg %p179
    // Predicated region
    $region9: #{hash_autoencoder_forward.1} parent=5 // pred_check
      _
    $region10: #{hash_autoencoder_forward.1} parent=5 // pred_check_branch
      %182 = sbr.rel (%p179) target = $region12
    $region11: #{hash_autoencoder_forward.1} parent=5 // pred_region
      %s183 = ssub.s32 %s12, 1
      // Predicated region
      $region13: #{hash_autoencoder_forward.1} parent=11 // pred_check
        %p184 = pneg %p59
      $region14: #{hash_autoencoder_forward.1} parent=11 // pred_check_branch
        %186 = sbr.rel (%p184) target = $region16
      $region15: #{hash_autoencoder_forward.1} parent=11 // pred_region
        _
      $region16: #{hash_autoencoder_forward.1} parent=11 // pred_fallthru
        _
      // Predicated region
      $region17: #{hash_autoencoder_forward.1} parent=11 // pred_check
        %p187 = pneg %p80
      $region18: #{hash_autoencoder_forward.1} parent=11 // pred_check_branch
        %189 = sbr.rel (%p187) target = $region20
      $region19: #{hash_autoencoder_forward.1} parent=11 // pred_region
        _
      $region20: #{hash_autoencoder_forward.1} parent=11 // pred_fallthru
        _
      // Predicated region
      $region21: #{hash_autoencoder_forward.1} parent=11 // pred_check
        %p190 = pneg %p101
      $region22: #{hash_autoencoder_forward.1} parent=11 // pred_check_branch
        %192 = sbr.rel (%p190) target = $region24
      $region23: #{hash_autoencoder_forward.1} parent=11 // pred_region
        _
      $region24: #{hash_autoencoder_forward.1} parent=11 // pred_fallthru
        _
      // Predicated region
      $region25: #{hash_autoencoder_forward.1} parent=11 // pred_check
        %p193 = pneg %p122
      $region26: #{hash_autoencoder_forward.1} parent=11 // pred_check_branch
        %195 = sbr.rel (%p193) target = $region28
      $region27: #{hash_autoencoder_forward.1} parent=11 // pred_region
        _
      $region28: #{hash_autoencoder_forward.1} parent=11 // pred_fallthru
        _
      // Predicated region
      $region29: #{hash_autoencoder_forward.1} parent=11 // pred_check
        %p196 = pneg %p143
      $region30: #{hash_autoencoder_forward.1} parent=11 // pred_check_branch
        %198 = sbr.rel (%p196) target = $region32
      $region31: #{hash_autoencoder_forward.1} parent=11 // pred_region
        _
      $region32: #{hash_autoencoder_forward.1} parent=11 // pred_fallthru
        _
    $region12: #{hash_autoencoder_forward.1} parent=5 // pred_fallthru
      _
    %p199 = scmp.lt.s32.totalorder %s12, 2
    // Predicated region
    $region33: #{hash_autoencoder_forward.1} parent=5 // pred_check
      %p200 = pneg %p199
    $region34: #{hash_autoencoder_forward.1} parent=5 // pred_check_branch
      %202 = sbr.rel (%p200) target = $region36
    $region35: #{hash_autoencoder_forward.1} parent=5 // pred_region
      // Predicated region
      $region37: #{hash_autoencoder_forward.1} parent=35 // pred_check
        %p203 = pneg %p32
      $region38: #{hash_autoencoder_forward.1} parent=35 // pred_check_branch
        %205 = sbr.rel (%p203) target = $region40
      $region39: #{hash_autoencoder_forward.1} parent=35 // pred_region
        %s206 = smul.u32 64, %s12
        %p207 = scmp.lt.s32.totalorder %s206, 127
        %s208 = scalar_select %p207, %s206, 127
        %s209 = smul.addr %s208, 4
        %s210 = smul.addr %s209, 4
        %s211 = scalar_lea.vmem %s0, %s210
        %s212 = smul.u32 64, %s12
      $region40: #{hash_autoencoder_forward.1} parent=35 // pred_fallthru
        _
    $region36: #{hash_autoencoder_forward.1} parent=5 // pred_fallthru
      _
    %p213 = scmp.le.s32.totalorder 1, %s12
    %p214 = scmp.lt.s32.totalorder %s12, 3
    %p215 = pnand %p213, %p214
    %p216 = pneg %p215
    // Predicated region
    $region41: #{hash_autoencoder_forward.1} parent=5 // pred_check
      _
    $region42: #{hash_autoencoder_forward.1} parent=5 // pred_check_branch
      %218 = sbr.rel (%p215) target = $region44
    $region43: #{hash_autoencoder_forward.1} parent=5 // pred_region
      %s219 = ssub.s32 %s12, 1
      %s220 = smul.u32 64, %s17
      %p221 = scmp.lt.s32.totalorder %s220, 127
      %s222 = scalar_select %p221, %s220, 127
      %s223 = smul.addr %s222, 4
      %s224 = smul.addr %s223, 4
      %s225 = scalar_lea.vmem %s0, %s224
      %p226 = pneg %p38
      %p227 = pneg %p35
      %p228 = pneg %p59
      %p229 = pneg %p56
      %p230 = pneg %p80
      %p231 = pneg %p77
      %p232 = pneg %p101
      %p233 = pneg %p98
      %p234 = pneg %p122
      %p235 = pneg %p119
      %p236 = pneg %p143
      %p237 = pneg %p140
      %p238 = pneg %p169
      %p239 = pneg %p166
      %s240 = smul.u32 64, %s17
      %p241 = scmp.lt.s32.totalorder %s240, 127
      %s242 = scalar_select %p241, %s240, 127
      %s243 = smul.addr %s242, 4
      %s244 = scalar_lea.vmem %s6, %s243
      %s245 = smul.u32 64, %s17
      %p246 = scmp.lt.s32.totalorder %s245, 127
      %s247 = scalar_select %p246, %s245, 127
      %s248 = smul.addr %s247, 4
      %s249 = smul.addr %s248, 4
      %s250 = scalar_lea.vmem %s0, %s249
      %s251 = smul.u32 64, %s17
      %s252 = smul.u32 64, %s17
      %p253 = scmp.lt.s32.totalorder %s252, 127
      %s254 = scalar_select %p253, %s252, 127
      %s255 = smul.addr %s254, 4
      %s256 = scalar_lea.vmem %s6, %s255
      %s257 = smul.u32 64, %s17
      %v259 = vld [vmem:[%s250] sm:$0xff]
      %v260 = vld [vmem:[%s250 + $0x8] sm:$0xff]
      %v261 = vld [vmem:[%s250 + $0x10] sm:$0xff]
      %v262 = vld [vmem:[%s250 + $0x18] sm:$0xff]
      %v263 = vld [vmem:[%s250 + $0x20] sm:$0xff]
      %v264 = vld [vmem:[%s250 + $0x28] sm:$0xff]
      %v265 = vld [vmem:[%s250 + $0x30] sm:$0xff]
      %v266 = vld [vmem:[%s250 + $0x38] sm:$0xff]
      %v267 = vld [vmem:[%s250 + $0x40] sm:$0xff]
      %v268 = vld [vmem:[%s250 + $0x48] sm:$0xff]
      %v269 = vld [vmem:[%s250 + $0x50] sm:$0xff]
      %v270 = vld [vmem:[%s250 + $0x58] sm:$0xff]
      %v271 = vld [vmem:[%s250 + $0x60] sm:$0xff]
      %v272 = vld [vmem:[%s250 + $0x68] sm:$0xff]
      %v273 = vld [vmem:[%s250 + $0x70] sm:$0xff]
      %v274 = vld [vmem:[%s250 + $0x78] sm:$0xff]
      %v275 = vld [vmem:[%s250 + $0x80] sm:$0xff]
      %v276 = vld [vmem:[%s250 + $0x88] sm:$0xff]
      %v277 = vld [vmem:[%s250 + $0x90] sm:$0xff]
      %v278 = vld [vmem:[%s250 + $0x98] sm:$0xff]
      %v279 = vld [vmem:[%s250 + $0xa0] sm:$0xff]
      %v280 = vld [vmem:[%s250 + $0xa8] sm:$0xff]
      %v281 = vld [vmem:[%s250 + $0xb0] sm:$0xff]
      %v282 = vld [vmem:[%s250 + $0xb8] sm:$0xff]
      %v283 = vld [vmem:[%s250 + $0xc0] sm:$0xff]
      %v284 = vld [vmem:[%s250 + $0xc8] sm:$0xff]
      %v285 = vld [vmem:[%s250 + $0xd0] sm:$0xff]
      %v286 = vld [vmem:[%s250 + $0xd8] sm:$0xff]
      %v287 = vld [vmem:[%s250 + $0xe0] sm:$0xff]
      %v288 = vld [vmem:[%s250 + $0xe8] sm:$0xff]
      %v289 = vld [vmem:[%s250 + $0xf0] sm:$0xff]
      %v290 = vld [vmem:[%s250 + $0xf8] sm:$0xff]
      %v291 = vld [vmem:[%s250 + $0x100] sm:$0xff]
      %v292 = vld [vmem:[%s250 + $0x108] sm:$0xff]
      %v293 = vld [vmem:[%s250 + $0x110] sm:$0xff]
      %v294 = vld [vmem:[%s250 + $0x118] sm:$0xff]
      %v295 = vld [vmem:[%s250 + $0x120] sm:$0xff]
      %v296 = vld [vmem:[%s250 + $0x128] sm:$0xff]
      %v297 = vld [vmem:[%s250 + $0x130] sm:$0xff]
      %v298 = vld [vmem:[%s250 + $0x138] sm:$0xff]
      %v299 = vld [vmem:[%s250 + $0x140] sm:$0xff]
      %v300 = vld [vmem:[%s250 + $0x148] sm:$0xff]
      %v301 = vld [vmem:[%s250 + $0x150] sm:$0xff]
      %v302 = vld [vmem:[%s250 + $0x158] sm:$0xff]
      %v303 = vld [vmem:[%s250 + $0x160] sm:$0xff]
      %v304 = vld [vmem:[%s250 + $0x168] sm:$0xff]
      %v305 = vld [vmem:[%s250 + $0x170] sm:$0xff]
      %v306 = vld [vmem:[%s250 + $0x178] sm:$0xff]
      %v307 = vld [vmem:[%s250 + $0x180] sm:$0xff]
      %v308 = vld [vmem:[%s250 + $0x188] sm:$0xff]
      %v309 = vld [vmem:[%s250 + $0x190] sm:$0xff]
      %v310 = vld [vmem:[%s250 + $0x198] sm:$0xff]
      %v311 = vld [vmem:[%s250 + $0x1a0] sm:$0xff]
      %v312 = vld [vmem:[%s250 + $0x1a8] sm:$0xff]
      %v313 = vld [vmem:[%s250 + $0x1b0] sm:$0xff]
      %v314 = vld [vmem:[%s250 + $0x1b8] sm:$0xff]
      %v315 = vld [vmem:[%s250 + $0x1c0] sm:$0xff]
      %v316 = vld [vmem:[%s250 + $0x1c8] sm:$0xff]
      %v317 = vld [vmem:[%s250 + $0x1d0] sm:$0xff]
      %v318 = vld [vmem:[%s250 + $0x1d8] sm:$0xff]
      %v319 = vld [vmem:[%s250 + $0x1e0] sm:$0xff]
      %v320 = vld [vmem:[%s250 + $0x1e8] sm:$0xff]
      %v321 = vld [vmem:[%s250 + $0x1f0] sm:$0xff]
      %v322 = vld [vmem:[%s250 + $0x1f8] sm:$0xff]
      %v323 = vld [vmem:[%s250 + $0x200] sm:$0xff]
      %v324 = vld [vmem:[%s250 + $0x208] sm:$0xff]
      %v325 = vld [vmem:[%s250 + $0x210] sm:$0xff]
      %v326 = vld [vmem:[%s250 + $0x218] sm:$0xff]
      %v327 = vld [vmem:[%s250 + $0x220] sm:$0xff]
      %v328 = vld [vmem:[%s250 + $0x228] sm:$0xff]
      %v329 = vld [vmem:[%s250 + $0x230] sm:$0xff]
      %v330 = vld [vmem:[%s250 + $0x238] sm:$0xff]
      %v331 = vld [vmem:[%s250 + $0x240] sm:$0xff]
      %v332 = vld [vmem:[%s250 + $0x248] sm:$0xff]
      %v333 = vld [vmem:[%s250 + $0x250] sm:$0xff]
      %v334 = vld [vmem:[%s250 + $0x258] sm:$0xff]
      %v335 = vld [vmem:[%s250 + $0x260] sm:$0xff]
      %v336 = vld [vmem:[%s250 + $0x268] sm:$0xff]
      %v337 = vld [vmem:[%s250 + $0x270] sm:$0xff]
      %v338 = vld [vmem:[%s250 + $0x278] sm:$0xff]
      %v339 = vld [vmem:[%s250 + $0x280] sm:$0xff]
      %v340 = vld [vmem:[%s250 + $0x288] sm:$0xff]
      %v341 = vld [vmem:[%s250 + $0x290] sm:$0xff]
      %v342 = vld [vmem:[%s250 + $0x298] sm:$0xff]
      %v343 = vld [vmem:[%s250 + $0x2a0] sm:$0xff]
      %v344 = vld [vmem:[%s250 + $0x2a8] sm:$0xff]
      %v345 = vld [vmem:[%s250 + $0x2b0] sm:$0xff]
      %v346 = vld [vmem:[%s250 + $0x2b8] sm:$0xff]
      %v347 = vld [vmem:[%s250 + $0x2c0] sm:$0xff]
      %v348 = vld [vmem:[%s250 + $0x2c8] sm:$0xff]
      %v349 = vld [vmem:[%s250 + $0x2d0] sm:$0xff]
      %v350 = vld [vmem:[%s250 + $0x2d8] sm:$0xff]
      %v351 = vld [vmem:[%s250 + $0x2e0] sm:$0xff]
      %v352 = vld [vmem:[%s250 + $0x2e8] sm:$0xff]
      %v353 = vld [vmem:[%s250 + $0x2f0] sm:$0xff]
      %v354 = vld [vmem:[%s250 + $0x2f8] sm:$0xff]
      %v355 = vld [vmem:[%s250 + $0x300] sm:$0xff]
      %v356 = vld [vmem:[%s250 + $0x308] sm:$0xff]
      %v357 = vld [vmem:[%s250 + $0x310] sm:$0xff]
      %v358 = vld [vmem:[%s250 + $0x318] sm:$0xff]
      %v359 = vld [vmem:[%s250 + $0x320] sm:$0xff]
      %v360 = vld [vmem:[%s250 + $0x328] sm:$0xff]
      %v361 = vld [vmem:[%s250 + $0x330] sm:$0xff]
      %v362 = vld [vmem:[%s250 + $0x338] sm:$0xff]
      %v363 = vld [vmem:[%s250 + $0x340] sm:$0xff]
      %v364 = vld [vmem:[%s250 + $0x348] sm:$0xff]
      %v365 = vld [vmem:[%s250 + $0x350] sm:$0xff]
      %v366 = vld [vmem:[%s250 + $0x358] sm:$0xff]
      %v367 = vld [vmem:[%s250 + $0x360] sm:$0xff]
      %v368 = vld [vmem:[%s250 + $0x368] sm:$0xff]
      %v369 = vld [vmem:[%s250 + $0x370] sm:$0xff]
      %v370 = vld [vmem:[%s250 + $0x378] sm:$0xff]
      %v371 = vld [vmem:[%s250 + $0x380] sm:$0xff]
      %v372 = vld [vmem:[%s250 + $0x388] sm:$0xff]
      %v373 = vld [vmem:[%s250 + $0x390] sm:$0xff]
      %v374 = vld [vmem:[%s250 + $0x398] sm:$0xff]
      %v375 = vld [vmem:[%s250 + $0x3a0] sm:$0xff]
      %v376 = vld [vmem:[%s250 + $0x3a8] sm:$0xff]
      %v377 = vld [vmem:[%s250 + $0x3b0] sm:$0xff]
      %v378 = vld [vmem:[%s250 + $0x3b8] sm:$0xff]
      %v379 = vld [vmem:[%s250 + $0x3c0] sm:$0xff]
      %v380 = vld [vmem:[%s250 + $0x3c8] sm:$0xff]
      %v381 = vld [vmem:[%s250 + $0x3d0] sm:$0xff]
      %v382 = vld [vmem:[%s250 + $0x3d8] sm:$0xff]
      %v383 = vld [vmem:[%s250 + $0x3e0] sm:$0xff]
      %v384 = vld [vmem:[%s250 + $0x3e8] sm:$0xff]
      %v385 = vld [vmem:[%s250 + $0x3f0] sm:$0xff]
      %v386 = vld [vmem:[%s250 + $0x3f8] sm:$0xff]
      %v387 = vld [vmem:[%s1] sm:$0xf]
      %v388 = vld [vmem:[%s1 + $0x4] sm:$0xf]
      %v389 = vld [vmem:[%s1 + $0x8] sm:$0xf]
      %v390 = vld [vmem:[%s1 + $0xc] sm:$0xf]
      %v391 = vld [vmem:[%s1 + $0x10] sm:$0xf]
      %v392 = vld [vmem:[%s1 + $0x14] sm:$0xf]
      %v393 = vld [vmem:[%s1 + $0x18] sm:$0xf]
      %v394 = vld [vmem:[%s1 + $0x1c] sm:$0xf]
      %v395 = vld [vmem:[%s1 + $0x20] sm:$0xf]
      %v396 = vld [vmem:[%s1 + $0x24] sm:$0xf]
      %v397 = vld [vmem:[%s1 + $0x28] sm:$0xf]
      %v398 = vld [vmem:[%s1 + $0x2c] sm:$0xf]
      %v399 = vld [vmem:[%s1 + $0x30] sm:$0xf]
      %v400 = vld [vmem:[%s1 + $0x34] sm:$0xf]
      %v401 = vld [vmem:[%s1 + $0x38] sm:$0xf]
      %v402 = vld [vmem:[%s1 + $0x3c] sm:$0xf]
      %v403 = vld [vmem:[%s1 + $0x40] sm:$0xf]
      %v404 = vld [vmem:[%s1 + $0x44] sm:$0xf]
      %v405 = vld [vmem:[%s1 + $0x48] sm:$0xf]
      %v406 = vld [vmem:[%s1 + $0x4c] sm:$0xf]
      %v407 = vld [vmem:[%s1 + $0x50] sm:$0xf]
      %v408 = vld [vmem:[%s1 + $0x54] sm:$0xf]
      %v409 = vld [vmem:[%s1 + $0x58] sm:$0xf]
      %v410 = vld [vmem:[%s1 + $0x5c] sm:$0xf]
      %v411 = vld [vmem:[%s1 + $0x60] sm:$0xf]
      %v412 = vld [vmem:[%s1 + $0x64] sm:$0xf]
      %v413 = vld [vmem:[%s1 + $0x68] sm:$0xf]
      %v414 = vld [vmem:[%s1 + $0x6c] sm:$0xf]
      %v415 = vld [vmem:[%s1 + $0x70] sm:$0xf]
      %v416 = vld [vmem:[%s1 + $0x74] sm:$0xf]
      %v417 = vld [vmem:[%s1 + $0x78] sm:$0xf]
      %v418 = vld [vmem:[%s1 + $0x7c] sm:$0xf]
      %v419 = vld [vmem:[%s1 + $0x80] sm:$0xf]
      %v420 = vld [vmem:[%s1 + $0x84] sm:$0xf]
      %v421 = vld [vmem:[%s1 + $0x88] sm:$0xf]
      %v422 = vld [vmem:[%s1 + $0x8c] sm:$0xf]
      %v423 = vld [vmem:[%s1 + $0x90] sm:$0xf]
      %v424 = vld [vmem:[%s1 + $0x94] sm:$0xf]
      %v425 = vld [vmem:[%s1 + $0x98] sm:$0xf]
      %v426 = vld [vmem:[%s1 + $0x9c] sm:$0xf]
      %v427 = vld [vmem:[%s1 + $0xa0] sm:$0xf]
      %v428 = vld [vmem:[%s1 + $0xa4] sm:$0xf]
      %v429 = vld [vmem:[%s1 + $0xa8] sm:$0xf]
      %v430 = vld [vmem:[%s1 + $0xac] sm:$0xf]
      %v431 = vld [vmem:[%s1 + $0xb0] sm:$0xf]
      %v432 = vld [vmem:[%s1 + $0xb4] sm:$0xf]
      %v433 = vld [vmem:[%s1 + $0xb8] sm:$0xf]
      %v434 = vld [vmem:[%s1 + $0xbc] sm:$0xf]
      %v435 = vld [vmem:[%s1 + $0xc0] sm:$0xf]
      %v436 = vld [vmem:[%s1 + $0xc4] sm:$0xf]
      %v437 = vld [vmem:[%s1 + $0xc8] sm:$0xf]
      %v438 = vld [vmem:[%s1 + $0xcc] sm:$0xf]
      %v439 = vld [vmem:[%s1 + $0xd0] sm:$0xf]
      %v440 = vld [vmem:[%s1 + $0xd4] sm:$0xf]
      %v441 = vld [vmem:[%s1 + $0xd8] sm:$0xf]
      %v442 = vld [vmem:[%s1 + $0xdc] sm:$0xf]
      %v443 = vld [vmem:[%s1 + $0xe0] sm:$0xf]
      %v444 = vld [vmem:[%s1 + $0xe4] sm:$0xf]
      %v445 = vld [vmem:[%s1 + $0xe8] sm:$0xf]
      %v446 = vld [vmem:[%s1 + $0xec] sm:$0xf]
      %v447 = vld [vmem:[%s1 + $0xf0] sm:$0xf]
      %v448 = vld [vmem:[%s1 + $0xf4] sm:$0xf]
      %v449 = vld [vmem:[%s1 + $0xf8] sm:$0xf]
      %v450 = vld [vmem:[%s1 + $0xfc] sm:$0xf]
      %v451 = vld [vmem:[%s5] sm:$0x1]
      %v453 = vlaneseq
      %v454 = vshrl.u32 %v453, 7
      %v455 = vsub.s32 0, %v454
      %v456 = vrot.slane %v451, %v455
      %v586 = vunpack.c.l.b16 %v259
      %v587 = vunpack.c.h.b16 %v259
      %v588 = vunpack.c.l.b16 %v260
      %v589 = vunpack.c.h.b16 %v260
      %v590 = vunpack.c.l.b16 %v261
      %v591 = vunpack.c.h.b16 %v261
      %v592 = vunpack.c.l.b16 %v262
      %v593 = vunpack.c.h.b16 %v262
      %v594 = vunpack.c.l.b16 %v263
      %v595 = vunpack.c.h.b16 %v263
      %v596 = vunpack.c.l.b16 %v264
      %v597 = vunpack.c.h.b16 %v264
      %v598 = vunpack.c.l.b16 %v265
      %v599 = vunpack.c.h.b16 %v265
      %v600 = vunpack.c.l.b16 %v266
      %v601 = vunpack.c.h.b16 %v266
      %v602 = vunpack.c.l.b16 %v267
      %v603 = vunpack.c.h.b16 %v267
      %v604 = vunpack.c.l.b16 %v268
      %v605 = vunpack.c.h.b16 %v268
      %v606 = vunpack.c.l.b16 %v269
      %v607 = vunpack.c.h.b16 %v269
      %v608 = vunpack.c.l.b16 %v270
      %v609 = vunpack.c.h.b16 %v270
      %v610 = vunpack.c.l.b16 %v271
      %v611 = vunpack.c.h.b16 %v271
      %v612 = vunpack.c.l.b16 %v272
      %v613 = vunpack.c.h.b16 %v272
      %v614 = vunpack.c.l.b16 %v273
      %v615 = vunpack.c.h.b16 %v273
      %v616 = vunpack.c.l.b16 %v274
      %v617 = vunpack.c.h.b16 %v274
      %v618 = vunpack.c.l.b16 %v275
      %v619 = vunpack.c.h.b16 %v275
      %v620 = vunpack.c.l.b16 %v276
      %v621 = vunpack.c.h.b16 %v276
      %v622 = vunpack.c.l.b16 %v277
      %v623 = vunpack.c.h.b16 %v277
      %v624 = vunpack.c.l.b16 %v278
      %v625 = vunpack.c.h.b16 %v278
      %v626 = vunpack.c.l.b16 %v279
      %v627 = vunpack.c.h.b16 %v279
      %v628 = vunpack.c.l.b16 %v280
      %v629 = vunpack.c.h.b16 %v280
      %v630 = vunpack.c.l.b16 %v281
      %v631 = vunpack.c.h.b16 %v281
      %v632 = vunpack.c.l.b16 %v282
      %v633 = vunpack.c.h.b16 %v282
      %v634 = vunpack.c.l.b16 %v283
      %v635 = vunpack.c.h.b16 %v283
      %v636 = vunpack.c.l.b16 %v284
      %v637 = vunpack.c.h.b16 %v284
      %v638 = vunpack.c.l.b16 %v285
      %v639 = vunpack.c.h.b16 %v285
      %v640 = vunpack.c.l.b16 %v286
      %v641 = vunpack.c.h.b16 %v286
      %v642 = vunpack.c.l.b16 %v287
      %v643 = vunpack.c.h.b16 %v287
      %v644 = vunpack.c.l.b16 %v288
      %v645 = vunpack.c.h.b16 %v288
      %v646 = vunpack.c.l.b16 %v289
      %v647 = vunpack.c.h.b16 %v289
      %v648 = vunpack.c.l.b16 %v290
      %v649 = vunpack.c.h.b16 %v290
      %v650 = vunpack.c.l.b16 %v291
      %v651 = vunpack.c.h.b16 %v291
      %v652 = vunpack.c.l.b16 %v292
      %v653 = vunpack.c.h.b16 %v292
      %v654 = vunpack.c.l.b16 %v293
      %v655 = vunpack.c.h.b16 %v293
      %v656 = vunpack.c.l.b16 %v294
      %v657 = vunpack.c.h.b16 %v294
      %v658 = vunpack.c.l.b16 %v295
      %v659 = vunpack.c.h.b16 %v295
      %v660 = vunpack.c.l.b16 %v296
      %v661 = vunpack.c.h.b16 %v296
      %v662 = vunpack.c.l.b16 %v297
      %v663 = vunpack.c.h.b16 %v297
      %v664 = vunpack.c.l.b16 %v298
      %v665 = vunpack.c.h.b16 %v298
      %v666 = vunpack.c.l.b16 %v299
      %v667 = vunpack.c.h.b16 %v299
      %v668 = vunpack.c.l.b16 %v300
      %v669 = vunpack.c.h.b16 %v300
      %v670 = vunpack.c.l.b16 %v301
      %v671 = vunpack.c.h.b16 %v301
      %v672 = vunpack.c.l.b16 %v302
      %v673 = vunpack.c.h.b16 %v302
      %v674 = vunpack.c.l.b16 %v303
      %v675 = vunpack.c.h.b16 %v303
      %v676 = vunpack.c.l.b16 %v304
      %v677 = vunpack.c.h.b16 %v304
      %v678 = vunpack.c.l.b16 %v305
      %v679 = vunpack.c.h.b16 %v305
      %v680 = vunpack.c.l.b16 %v306
      %v681 = vunpack.c.h.b16 %v306
      %v682 = vunpack.c.l.b16 %v307
      %v683 = vunpack.c.h.b16 %v307
      %v684 = vunpack.c.l.b16 %v308
      %v685 = vunpack.c.h.b16 %v308
      %v686 = vunpack.c.l.b16 %v309
      %v687 = vunpack.c.h.b16 %v309
      %v688 = vunpack.c.l.b16 %v310
      %v689 = vunpack.c.h.b16 %v310
      %v690 = vunpack.c.l.b16 %v311
      %v691 = vunpack.c.h.b16 %v311
      %v692 = vunpack.c.l.b16 %v312
      %v693 = vunpack.c.h.b16 %v312
      %v694 = vunpack.c.l.b16 %v313
      %v695 = vunpack.c.h.b16 %v313
      %v696 = vunpack.c.l.b16 %v314
      %v697 = vunpack.c.h.b16 %v314
      %v698 = vunpack.c.l.b16 %v315
      %v699 = vunpack.c.h.b16 %v315
      %v700 = vunpack.c.l.b16 %v316
      %v701 = vunpack.c.h.b16 %v316
      %v702 = vunpack.c.l.b16 %v317
      %v703 = vunpack.c.h.b16 %v317
      %v704 = vunpack.c.l.b16 %v318
      %v705 = vunpack.c.h.b16 %v318
      %v706 = vunpack.c.l.b16 %v319
      %v707 = vunpack.c.h.b16 %v319
      %v708 = vunpack.c.l.b16 %v320
      %v709 = vunpack.c.h.b16 %v320
      %v710 = vunpack.c.l.b16 %v321
      %v711 = vunpack.c.h.b16 %v321
      %v712 = vunpack.c.l.b16 %v322
      %v713 = vunpack.c.h.b16 %v322
      %v714 = vunpack.c.l.b16 %v323
      %v715 = vunpack.c.h.b16 %v323
      %v716 = vunpack.c.l.b16 %v324
      %v717 = vunpack.c.h.b16 %v324
      %v718 = vunpack.c.l.b16 %v325
      %v719 = vunpack.c.h.b16 %v325
      %v720 = vunpack.c.l.b16 %v326
      %v721 = vunpack.c.h.b16 %v326
      %v722 = vunpack.c.l.b16 %v327
      %v723 = vunpack.c.h.b16 %v327
      %v724 = vunpack.c.l.b16 %v328
      %v725 = vunpack.c.h.b16 %v328
      %v726 = vunpack.c.l.b16 %v329
      %v727 = vunpack.c.h.b16 %v329
      %v728 = vunpack.c.l.b16 %v330
      %v729 = vunpack.c.h.b16 %v330
      %v730 = vunpack.c.l.b16 %v331
      %v731 = vunpack.c.h.b16 %v331
      %v732 = vunpack.c.l.b16 %v332
      %v733 = vunpack.c.h.b16 %v332
      %v734 = vunpack.c.l.b16 %v333
      %v735 = vunpack.c.h.b16 %v333
      %v736 = vunpack.c.l.b16 %v334
      %v737 = vunpack.c.h.b16 %v334
      %v738 = vunpack.c.l.b16 %v335
      %v739 = vunpack.c.h.b16 %v335
      %v740 = vunpack.c.l.b16 %v336
      %v741 = vunpack.c.h.b16 %v336
      %v742 = vunpack.c.l.b16 %v337
      %v743 = vunpack.c.h.b16 %v337
      %v744 = vunpack.c.l.b16 %v338
      %v745 = vunpack.c.h.b16 %v338
      %v746 = vunpack.c.l.b16 %v339
      %v747 = vunpack.c.h.b16 %v339
      %v748 = vunpack.c.l.b16 %v340
      %v749 = vunpack.c.h.b16 %v340
      %v750 = vunpack.c.l.b16 %v341
      %v751 = vunpack.c.h.b16 %v341
      %v752 = vunpack.c.l.b16 %v342
      %v753 = vunpack.c.h.b16 %v342
      %v754 = vunpack.c.l.b16 %v343
      %v755 = vunpack.c.h.b16 %v343
      %v756 = vunpack.c.l.b16 %v344
      %v757 = vunpack.c.h.b16 %v344
      %v758 = vunpack.c.l.b16 %v345
      %v759 = vunpack.c.h.b16 %v345
      %v760 = vunpack.c.l.b16 %v346
      %v761 = vunpack.c.h.b16 %v346
      %v762 = vunpack.c.l.b16 %v347
      %v763 = vunpack.c.h.b16 %v347
      %v764 = vunpack.c.l.b16 %v348
      %v765 = vunpack.c.h.b16 %v348
      %v766 = vunpack.c.l.b16 %v349
      %v767 = vunpack.c.h.b16 %v349
      %v768 = vunpack.c.l.b16 %v350
      %v769 = vunpack.c.h.b16 %v350
      %v770 = vunpack.c.l.b16 %v351
      %v771 = vunpack.c.h.b16 %v351
      %v772 = vunpack.c.l.b16 %v352
      %v773 = vunpack.c.h.b16 %v352
      %v774 = vunpack.c.l.b16 %v353
      %v775 = vunpack.c.h.b16 %v353
      %v776 = vunpack.c.l.b16 %v354
      %v777 = vunpack.c.h.b16 %v354
      %v778 = vunpack.c.l.b16 %v355
      %v779 = vunpack.c.h.b16 %v355
      %v780 = vunpack.c.l.b16 %v356
      %v781 = vunpack.c.h.b16 %v356
      %v782 = vunpack.c.l.b16 %v357
      %v783 = vunpack.c.h.b16 %v357
      %v784 = vunpack.c.l.b16 %v358
      %v785 = vunpack.c.h.b16 %v358
      %v786 = vunpack.c.l.b16 %v359
      %v787 = vunpack.c.h.b16 %v359
      %v788 = vunpack.c.l.b16 %v360
      %v789 = vunpack.c.h.b16 %v360
      %v790 = vunpack.c.l.b16 %v361
      %v791 = vunpack.c.h.b16 %v361
      %v792 = vunpack.c.l.b16 %v362
      %v793 = vunpack.c.h.b16 %v362
      %v794 = vunpack.c.l.b16 %v363
      %v795 = vunpack.c.h.b16 %v363
      %v796 = vunpack.c.l.b16 %v364
      %v797 = vunpack.c.h.b16 %v364
      %v798 = vunpack.c.l.b16 %v365
      %v799 = vunpack.c.h.b16 %v365
      %v800 = vunpack.c.l.b16 %v366
      %v801 = vunpack.c.h.b16 %v366
      %v802 = vunpack.c.l.b16 %v367
      %v803 = vunpack.c.h.b16 %v367
      %v804 = vunpack.c.l.b16 %v368
      %v805 = vunpack.c.h.b16 %v368
      %v806 = vunpack.c.l.b16 %v369
      %v807 = vunpack.c.h.b16 %v369
      %v808 = vunpack.c.l.b16 %v370
      %v809 = vunpack.c.h.b16 %v370
      %v810 = vunpack.c.l.b16 %v371
      %v811 = vunpack.c.h.b16 %v371
      %v812 = vunpack.c.l.b16 %v372
      %v813 = vunpack.c.h.b16 %v372
      %v814 = vunpack.c.l.b16 %v373
      %v815 = vunpack.c.h.b16 %v373
      %v816 = vunpack.c.l.b16 %v374
      %v817 = vunpack.c.h.b16 %v374
      %v818 = vunpack.c.l.b16 %v375
      %v819 = vunpack.c.h.b16 %v375
      %v820 = vunpack.c.l.b16 %v376
      %v821 = vunpack.c.h.b16 %v376
      %v822 = vunpack.c.l.b16 %v377
      %v823 = vunpack.c.h.b16 %v377
      %v824 = vunpack.c.l.b16 %v378
      %v825 = vunpack.c.h.b16 %v378
      %v826 = vunpack.c.l.b16 %v379
      %v827 = vunpack.c.h.b16 %v379
      %v828 = vunpack.c.l.b16 %v380
      %v829 = vunpack.c.h.b16 %v380
      %v830 = vunpack.c.l.b16 %v381
      %v831 = vunpack.c.h.b16 %v381
      %v832 = vunpack.c.l.b16 %v382
      %v833 = vunpack.c.h.b16 %v382
      %v834 = vunpack.c.l.b16 %v383
      %v835 = vunpack.c.h.b16 %v383
      %v836 = vunpack.c.l.b16 %v384
      %v837 = vunpack.c.h.b16 %v384
      %v838 = vunpack.c.l.b16 %v385
      %v839 = vunpack.c.h.b16 %v385
      %v840 = vunpack.c.l.b16 %v386
      %v841 = vunpack.c.h.b16 %v386
      %v842 = vpack.c.b16 %v590, %v586
      %v843 = vpack.c.b16 %v591, %v587
      %v844 = vpack.c.b16 %v592, %v588
      %v845 = vpack.c.b16 %v593, %v589
      %v846 = vpack.c.b16 %v598, %v594
      %v847 = vpack.c.b16 %v599, %v595
      %v848 = vpack.c.b16 %v600, %v596
      %v849 = vpack.c.b16 %v601, %v597
      %v850 = vpack.c.b16 %v606, %v602
      %v851 = vpack.c.b16 %v607, %v603
      %v852 = vpack.c.b16 %v608, %v604
      %v853 = vpack.c.b16 %v609, %v605
      %v854 = vpack.c.b16 %v614, %v610
      %v855 = vpack.c.b16 %v615, %v611
      %v856 = vpack.c.b16 %v616, %v612
      %v857 = vpack.c.b16 %v617, %v613
      %v858 = vpack.c.b16 %v622, %v618
      %v859 = vpack.c.b16 %v623, %v619
      %v860 = vpack.c.b16 %v624, %v620
      %v861 = vpack.c.b16 %v625, %v621
      %v862 = vpack.c.b16 %v630, %v626
      %v863 = vpack.c.b16 %v631, %v627
      %v864 = vpack.c.b16 %v632, %v628
      %v865 = vpack.c.b16 %v633, %v629
      %v866 = vpack.c.b16 %v638, %v634
      %v867 = vpack.c.b16 %v639, %v635
      %v868 = vpack.c.b16 %v640, %v636
      %v869 = vpack.c.b16 %v641, %v637
      %v870 = vpack.c.b16 %v646, %v642
      %v871 = vpack.c.b16 %v647, %v643
      %v872 = vpack.c.b16 %v648, %v644
      %v873 = vpack.c.b16 %v649, %v645
      %v874 = vpack.c.b16 %v654, %v650
      %v875 = vpack.c.b16 %v655, %v651
      %v876 = vpack.c.b16 %v656, %v652
      %v877 = vpack.c.b16 %v657, %v653
      %v878 = vpack.c.b16 %v662, %v658
      %v879 = vpack.c.b16 %v663, %v659
      %v880 = vpack.c.b16 %v664, %v660
      %v881 = vpack.c.b16 %v665, %v661
      %v882 = vpack.c.b16 %v670, %v666
      %v883 = vpack.c.b16 %v671, %v667
      %v884 = vpack.c.b16 %v672, %v668
      %v885 = vpack.c.b16 %v673, %v669
      %v886 = vpack.c.b16 %v678, %v674
      %v887 = vpack.c.b16 %v679, %v675
      %v888 = vpack.c.b16 %v680, %v676
      %v889 = vpack.c.b16 %v681, %v677
      %v890 = vpack.c.b16 %v686, %v682
      %v891 = vpack.c.b16 %v687, %v683
      %v892 = vpack.c.b16 %v688, %v684
      %v893 = vpack.c.b16 %v689, %v685
      %v894 = vpack.c.b16 %v694, %v690
      %v895 = vpack.c.b16 %v695, %v691
      %v896 = vpack.c.b16 %v696, %v692
      %v897 = vpack.c.b16 %v697, %v693
      %v898 = vpack.c.b16 %v702, %v698
      %v899 = vpack.c.b16 %v703, %v699
      %v900 = vpack.c.b16 %v704, %v700
      %v901 = vpack.c.b16 %v705, %v701
      %v902 = vpack.c.b16 %v710, %v706
      %v903 = vpack.c.b16 %v711, %v707
      %v904 = vpack.c.b16 %v712, %v708
      %v905 = vpack.c.b16 %v713, %v709
      %v906 = vpack.c.b16 %v718, %v714
      %v907 = vpack.c.b16 %v719, %v715
      %v908 = vpack.c.b16 %v720, %v716
      %v909 = vpack.c.b16 %v721, %v717
      %v910 = vpack.c.b16 %v726, %v722
      %v911 = vpack.c.b16 %v727, %v723
      %v912 = vpack.c.b16 %v728, %v724
      %v913 = vpack.c.b16 %v729, %v725
      %v914 = vpack.c.b16 %v734, %v730
      %v915 = vpack.c.b16 %v735, %v731
      %v916 = vpack.c.b16 %v736, %v732
      %v917 = vpack.c.b16 %v737, %v733
      %v918 = vpack.c.b16 %v742, %v738
      %v919 = vpack.c.b16 %v743, %v739
      %v920 = vpack.c.b16 %v744, %v740
      %v921 = vpack.c.b16 %v745, %v741
      %v922 = vpack.c.b16 %v750, %v746
      %v923 = vpack.c.b16 %v751, %v747
      %v924 = vpack.c.b16 %v752, %v748
      %v925 = vpack.c.b16 %v753, %v749
      %v926 = vpack.c.b16 %v758, %v754
      %v927 = vpack.c.b16 %v759, %v755
      %v928 = vpack.c.b16 %v760, %v756
      %v929 = vpack.c.b16 %v761, %v757
      %v930 = vpack.c.b16 %v766, %v762
      %v931 = vpack.c.b16 %v767, %v763
      %v932 = vpack.c.b16 %v768, %v764
      %v933 = vpack.c.b16 %v769, %v765
      %v934 = vpack.c.b16 %v774, %v770
      %v935 = vpack.c.b16 %v775, %v771
      %v936 = vpack.c.b16 %v776, %v772
      %v937 = vpack.c.b16 %v777, %v773
      %v938 = vpack.c.b16 %v782, %v778
      %v939 = vpack.c.b16 %v783, %v779
      %v940 = vpack.c.b16 %v784, %v780
      %v941 = vpack.c.b16 %v785, %v781
      %v942 = vpack.c.b16 %v790, %v786
      %v943 = vpack.c.b16 %v791, %v787
      %v944 = vpack.c.b16 %v792, %v788
      %v945 = vpack.c.b16 %v793, %v789
      %v946 = vpack.c.b16 %v798, %v794
      %v947 = vpack.c.b16 %v799, %v795
      %v948 = vpack.c.b16 %v800, %v796
      %v949 = vpack.c.b16 %v801, %v797
      %v950 = vpack.c.b16 %v806, %v802
      %v951 = vpack.c.b16 %v807, %v803
      %v952 = vpack.c.b16 %v808, %v804
      %v953 = vpack.c.b16 %v809, %v805
      %v954 = vpack.c.b16 %v814, %v810
      %v955 = vpack.c.b16 %v815, %v811
      %v956 = vpack.c.b16 %v816, %v812
      %v957 = vpack.c.b16 %v817, %v813
      %v958 = vpack.c.b16 %v822, %v818
      %v959 = vpack.c.b16 %v823, %v819
      %v960 = vpack.c.b16 %v824, %v820
      %v961 = vpack.c.b16 %v825, %v821
      %v962 = vpack.c.b16 %v830, %v826
      %v963 = vpack.c.b16 %v831, %v827
      %v964 = vpack.c.b16 %v832, %v828
      %v965 = vpack.c.b16 %v833, %v829
      %v966 = vpack.c.b16 %v838, %v834
      %v967 = vpack.c.b16 %v839, %v835
      %v968 = vpack.c.b16 %v840, %v836
      %v969 = vpack.c.b16 %v841, %v837
      %v1162 = vunpack.c.l.b16 %v387
      %v1163 = vunpack.c.l.b16 %v388
      %v1164 = vunpack.c.l.b16 %v389
      %v1165 = vunpack.c.l.b16 %v390
      %v1166 = vunpack.c.l.b16 %v391
      %v1167 = vunpack.c.l.b16 %v392
      %v1168 = vunpack.c.l.b16 %v393
      %v1169 = vunpack.c.l.b16 %v394
      %v1170 = vunpack.c.l.b16 %v395
      %v1171 = vunpack.c.l.b16 %v396
      %v1172 = vunpack.c.l.b16 %v397
      %v1173 = vunpack.c.l.b16 %v398
      %v1174 = vunpack.c.l.b16 %v399
      %v1175 = vunpack.c.l.b16 %v400
      %v1176 = vunpack.c.l.b16 %v401
      %v1177 = vunpack.c.l.b16 %v402
      %v1178 = vunpack.c.l.b16 %v403
      %v1179 = vunpack.c.l.b16 %v404
      %v1180 = vunpack.c.l.b16 %v405
      %v1181 = vunpack.c.l.b16 %v406
      %v1182 = vunpack.c.l.b16 %v407
      %v1183 = vunpack.c.l.b16 %v408
      %v1184 = vunpack.c.l.b16 %v409
      %v1185 = vunpack.c.l.b16 %v410
      %v1186 = vunpack.c.l.b16 %v411
      %v1187 = vunpack.c.l.b16 %v412
      %v1188 = vunpack.c.l.b16 %v413
      %v1189 = vunpack.c.l.b16 %v414
      %v1190 = vunpack.c.l.b16 %v415
      %v1191 = vunpack.c.l.b16 %v416
      %v1192 = vunpack.c.l.b16 %v417
      %v1193 = vunpack.c.l.b16 %v418
      %v1194 = vunpack.c.l.b16 %v419
      %v1195 = vunpack.c.l.b16 %v420
      %v1196 = vunpack.c.l.b16 %v421
      %v1197 = vunpack.c.l.b16 %v422
      %v1198 = vunpack.c.l.b16 %v423
      %v1199 = vunpack.c.l.b16 %v424
      %v1200 = vunpack.c.l.b16 %v425
      %v1201 = vunpack.c.l.b16 %v426
      %v1202 = vunpack.c.l.b16 %v427
      %v1203 = vunpack.c.l.b16 %v428
      %v1204 = vunpack.c.l.b16 %v429
      %v1205 = vunpack.c.l.b16 %v430
      %v1206 = vunpack.c.l.b16 %v431
      %v1207 = vunpack.c.l.b16 %v432
      %v1208 = vunpack.c.l.b16 %v433
      %v1209 = vunpack.c.l.b16 %v434
      %v1210 = vunpack.c.l.b16 %v435
      %v1211 = vunpack.c.l.b16 %v436
      %v1212 = vunpack.c.l.b16 %v437
      %v1213 = vunpack.c.l.b16 %v438
      %v1214 = vunpack.c.l.b16 %v439
      %v1215 = vunpack.c.l.b16 %v440
      %v1216 = vunpack.c.l.b16 %v441
      %v1217 = vunpack.c.l.b16 %v442
      %v1218 = vunpack.c.l.b16 %v443
      %v1219 = vunpack.c.l.b16 %v444
      %v1220 = vunpack.c.l.b16 %v445
      %v1221 = vunpack.c.l.b16 %v446
      %v1222 = vunpack.c.l.b16 %v447
      %v1223 = vunpack.c.l.b16 %v448
      %v1224 = vunpack.c.l.b16 %v449
      %v1225 = vunpack.c.l.b16 %v450
      %v1226 = vpack.c.b16 %v1163, %v1162
      %v1227 = vpack.c.b16 %v1165, %v1164
      %v1228 = vpack.c.b16 %v1167, %v1166
      %v1229 = vpack.c.b16 %v1169, %v1168
      %v1230 = vpack.c.b16 %v1171, %v1170
      %v1231 = vpack.c.b16 %v1173, %v1172
      %v1232 = vpack.c.b16 %v1175, %v1174
      %v1233 = vpack.c.b16 %v1177, %v1176
      %v1234 = vpack.c.b16 %v1179, %v1178
      %v1235 = vpack.c.b16 %v1181, %v1180
      %v1236 = vpack.c.b16 %v1183, %v1182
      %v1237 = vpack.c.b16 %v1185, %v1184
      %v1238 = vpack.c.b16 %v1187, %v1186
      %v1239 = vpack.c.b16 %v1189, %v1188
      %v1240 = vpack.c.b16 %v1191, %v1190
      %v1241 = vpack.c.b16 %v1193, %v1192
      %v1242 = vpack.c.b16 %v1195, %v1194
      %v1243 = vpack.c.b16 %v1197, %v1196
      %v1244 = vpack.c.b16 %v1199, %v1198
      %v1245 = vpack.c.b16 %v1201, %v1200
      %v1246 = vpack.c.b16 %v1203, %v1202
      %v1247 = vpack.c.b16 %v1205, %v1204
      %v1248 = vpack.c.b16 %v1207, %v1206
      %v1249 = vpack.c.b16 %v1209, %v1208
      %v1250 = vpack.c.b16 %v1211, %v1210
      %v1251 = vpack.c.b16 %v1213, %v1212
      %v1252 = vpack.c.b16 %v1215, %v1214
      %v1253 = vpack.c.b16 %v1217, %v1216
      %v1254 = vpack.c.b16 %v1219, %v1218
      %v1255 = vpack.c.b16 %v1221, %v1220
      %v1256 = vpack.c.b16 %v1223, %v1222
      %v1257 = vpack.c.b16 %v1225, %v1224
      %1290 = vmatprep.subr.bf16.mxu0 0
      %1291 = vmatpush1.bf16.msra.mxu0 %v1226
      %1292 = vmatprep.subr.bf16.mxu0 0
      %1293 = vmatpush1.bf16.msra.mxu0 %v1227
      %1294 = vmatprep.subr.bf16.mxu0 0
      %1295 = vmatpush1.bf16.msra.mxu0 %v1228
      %1296 = vmatprep.subr.bf16.mxu0 0
      %1297 = vmatpush1.bf16.msra.mxu0 %v1229
      %1298 = vmatprep.subr.bf16.mxu0 0
      %1299 = vmatpush1.bf16.msra.mxu0 %v1230
      %1300 = vmatprep.subr.bf16.mxu0 0
      %1301 = vmatpush1.bf16.msra.mxu0 %v1231
      %1302 = vmatprep.subr.bf16.mxu0 0
      %1303 = vmatpush1.bf16.msra.mxu0 %v1232
      %1304 = vmatprep.subr.bf16.mxu0 0
      %1305 = vmatpush1.bf16.msra.mxu0 %v1233
      %1306 = vmatprep.subr.bf16.mxu0 0
      %1307 = vmatpush1.bf16.msra.mxu0 %v1234
      %1308 = vmatprep.subr.bf16.mxu0 0
      %1309 = vmatpush1.bf16.msra.mxu0 %v1235
      %1310 = vmatprep.subr.bf16.mxu0 0
      %1311 = vmatpush1.bf16.msra.mxu0 %v1236
      %1312 = vmatprep.subr.bf16.mxu0 0
      %1313 = vmatpush1.bf16.msra.mxu0 %v1237
      %1314 = vmatprep.subr.bf16.mxu0 0
      %1315 = vmatpush1.bf16.msra.mxu0 %v1238
      %1316 = vmatprep.subr.bf16.mxu0 0
      %1317 = vmatpush1.bf16.msra.mxu0 %v1239
      %1318 = vmatprep.subr.bf16.mxu0 0
      %1319 = vmatpush1.bf16.msra.mxu0 %v1240
      %1320 = vmatprep.subr.bf16.mxu0 0
      %1321 = vmatpush1.bf16.msra.mxu0 %v1241
      %1322 = vmatprep.mubr.bf16.mxu0 %v843
      %1323 = vmatmul.mubr.bf16.gmra.mrb[0].mxu0 %v842
      %v1324 = vpop.f32.mrb[0].mxu0
      %v1325 = vadd.f32 %v456, %v1324
      %v1326 = vpop.f32.mrb[0].mxu0
      %v1327 = vpop.f32.mrb[0].mxu0
      %v1328 = vadd.f32 %v456, %v1327
      %v1329 = vpop.f32.mrb[0].mxu0
      %1330 = vmatprep.mubr.bf16.mxu0 %v847
      %1331 = vmatmul.mubr.bf16.gmra.mrb[0].mxu0 %v846
      %v1332 = vpop.f32.mrb[0].mxu0
      %v1333 = vadd.f32 %v456, %v1332
      %v1334 = vpop.f32.mrb[0].mxu0
      %v1335 = vpop.f32.mrb[0].mxu0
      %v1336 = vadd.f32 %v456, %v1335
      %v1337 = vpop.f32.mrb[0].mxu0
      %1338 = vmatprep.mubr.bf16.mxu0 %v851
      %1339 = vmatmul.mubr.bf16.gmra.mrb[0].mxu0 %v850
      %v1340 = vpop.f32.mrb[0].mxu0
      %v1341 = vadd.f32 %v456, %v1340
      %v1342 = vpop.f32.mrb[0].mxu0
      %v1343 = vpop.f32.mrb[0].mxu0
      %v1344 = vadd.f32 %v456, %v1343
      %v1345 = vpop.f32.mrb[0].mxu0
      %1346 = vmatprep.mubr.bf16.mxu0 %v855
      %1347 = vmatmul.mubr.bf16.gmra.mrb[0].mxu0 %v854
      %v1348 = vpop.f32.mrb[0].mxu0
      %v1349 = vadd.f32 %v456, %v1348
      %v1350 = vpop.f32.mrb[0].mxu0
      %v1351 = vpop.f32.mrb[0].mxu0
      %v1352 = vadd.f32 %v456, %v1351
      %v1353 = vpop.f32.mrb[0].mxu0
      %1354 = vmatprep.mubr.bf16.mxu0 %v859
      %1355 = vmatmul.mubr.bf16.gmra.mrb[0].mxu0 %v858
      %v1356 = vpop.f32.mrb[0].mxu0
      %v1357 = vadd.f32 %v456, %v1356
      %v1358 = vpop.f32.mrb[0].mxu0
      %v1359 = vpop.f32.mrb[0].mxu0
      %v1360 = vadd.f32 %v456, %v1359
      %v1361 = vpop.f32.mrb[0].mxu0
      %1362 = vmatprep.mubr.bf16.mxu0 %v863
      %1363 = vmatmul.mubr.bf16.gmra.mrb[0].mxu0 %v862
      %v1364 = vpop.f32.mrb[0].mxu0
      %v1365 = vadd.f32 %v456, %v1364
      %v1366 = vpop.f32.mrb[0].mxu0
      %v1367 = vpop.f32.mrb[0].mxu0
      %v1368 = vadd.f32 %v456, %v1367
      %v1369 = vpop.f32.mrb[0].mxu0
      %1370 = vmatprep.mubr.bf16.mxu0 %v867
      %1371 = vmatmul.mubr.bf16.gmra.mrb[0].mxu0 %v866
      %v1372 = vpop.f32.mrb[0].mxu0
      %v1373 = vadd.f32 %v456, %v1372
      %v1374 = vpop.f32.mrb[0].mxu0
      %v1375 = vpop.f32.mrb[0].mxu0
      %v1376 = vadd.f32 %v456, %v1375
      %v1377 = vpop.f32.mrb[0].mxu0
      %1378 = vmatprep.mubr.bf16.mxu0 %v871
      %1379 = vmatmul.mubr.bf16.gmra.mrb[0].mxu0 %v870
      %v1380 = vpop.f32.mrb[0].mxu0
      %v1381 = vadd.f32 %v456, %v1380
      %v1382 = vpop.f32.mrb[0].mxu0
      %v1383 = vpop.f32.mrb[0].mxu0
      %v1384 = vadd.f32 %v456, %v1383
      %v1385 = vpop.f32.mrb[0].mxu0
      %1386 = vmatprep.mubr.bf16.mxu0 %v875
      %1387 = vmatmul.mubr.bf16.gmra.mrb[0].mxu0 %v874
      %v1388 = vpop.f32.mrb[0].mxu0
      %v1389 = vadd.f32 %v456, %v1388
      %v1390 = vpop.f32.mrb[0].mxu0
      %v1391 = vpop.f32.mrb[0].mxu0
      %v1392 = vadd.f32 %v456, %v1391
      %v1393 = vpop.f32.mrb[0].mxu0
      %1394 = vmatprep.mubr.bf16.mxu0 %v879
      %1395 = vmatmul.mubr.bf16.gmra.mrb[0].mxu0 %v878
      %v1396 = vpop.f32.mrb[0].mxu0
      %v1397 = vadd.f32 %v456, %v1396
      %v1398 = vpop.f32.mrb[0].mxu0
      %v1399 = vpop.f32.mrb[0].mxu0
      %v1400 = vadd.f32 %v456, %v1399
      %v1401 = vpop.f32.mrb[0].mxu0
      %1402 = vmatprep.mubr.bf16.mxu0 %v883
      %1403 = vmatmul.mubr.bf16.gmra.mrb[0].mxu0 %v882
      %v1404 = vpop.f32.mrb[0].mxu0
      %v1405 = vadd.f32 %v456, %v1404
      %v1406 = vpop.f32.mrb[0].mxu0
      %v1407 = vpop.f32.mrb[0].mxu0
      %v1408 = vadd.f32 %v456, %v1407
      %v1409 = vpop.f32.mrb[0].mxu0
      %1410 = vmatprep.mubr.bf16.mxu0 %v887
      %1411 = vmatmul.mubr.bf16.gmra.mrb[0].mxu0 %v886
      %v1412 = vpop.f32.mrb[0].mxu0
      %v1413 = vadd.f32 %v456, %v1412
      %v1414 = vpop.f32.mrb[0].mxu0
      %v1415 = vpop.f32.mrb[0].mxu0
      %v1416 = vadd.f32 %v456, %v1415
      %v1417 = vpop.f32.mrb[0].mxu0
      %1418 = vmatprep.mubr.bf16.mxu0 %v891
      %1419 = vmatmul.mubr.bf16.gmra.mrb[0].mxu0 %v890
      %v1420 = vpop.f32.mrb[0].mxu0
      %v1421 = vadd.f32 %v456, %v1420
      %v1422 = vpop.f32.mrb[0].mxu0
      %v1423 = vpop.f32.mrb[0].mxu0
      %v1424 = vadd.f32 %v456, %v1423
      %v1425 = vpop.f32.mrb[0].mxu0
      %1426 = vmatprep.mubr.bf16.mxu0 %v895
      %1427 = vmatmul.mubr.bf16.gmra.mrb[0].mxu0 %v894
      %v1428 = vpop.f32.mrb[0].mxu0
      %v1429 = vadd.f32 %v456, %v1428
      %v1430 = vpop.f32.mrb[0].mxu0
      %v1431 = vpop.f32.mrb[0].mxu0
      %v1432 = vadd.f32 %v456, %v1431
      %v1433 = vpop.f32.mrb[0].mxu0
      %1434 = vmatprep.mubr.bf16.mxu0 %v899
      %1435 = vmatmul.mubr.bf16.gmra.mrb[0].mxu0 %v898
      %v1436 = vpop.f32.mrb[0].mxu0
      %v1437 = vadd.f32 %v456, %v1436
      %v1438 = vpop.f32.mrb[0].mxu0
      %v1439 = vpop.f32.mrb[0].mxu0
      %v1440 = vadd.f32 %v456, %v1439
      %v1441 = vpop.f32.mrb[0].mxu0
      %1442 = vmatprep.mubr.bf16.mxu0 %v903
      %1443 = vmatmul.mubr.bf16.gmra.mrb[0].mxu0 %v902
      %v1444 = vpop.f32.mrb[0].mxu0
      %v1445 = vadd.f32 %v456, %v1444
      %v1446 = vpop.f32.mrb[0].mxu0
      %v1447 = vpop.f32.mrb[0].mxu0
      %v1448 = vadd.f32 %v456, %v1447
      %v1449 = vpop.f32.mrb[0].mxu0
      %1450 = vmatprep.mubr.bf16.mxu0 %v907
      %1451 = vmatmul.mubr.bf16.gmra.mrb[0].mxu0 %v906
      %v1452 = vpop.f32.mrb[0].mxu0
      %v1453 = vadd.f32 %v456, %v1452
      %v1454 = vpop.f32.mrb[0].mxu0
      %v1455 = vpop.f32.mrb[0].mxu0
      %v1456 = vadd.f32 %v456, %v1455
      %v1457 = vpop.f32.mrb[0].mxu0
      %1458 = vmatprep.mubr.bf16.mxu0 %v911
      %1459 = vmatmul.mubr.bf16.gmra.mrb[0].mxu0 %v910
      %v1460 = vpop.f32.mrb[0].mxu0
      %v1461 = vadd.f32 %v456, %v1460
      %v1462 = vpop.f32.mrb[0].mxu0
      %v1463 = vpop.f32.mrb[0].mxu0
      %v1464 = vadd.f32 %v456, %v1463
      %v1465 = vpop.f32.mrb[0].mxu0
      %1466 = vmatprep.mubr.bf16.mxu0 %v915
      %1467 = vmatmul.mubr.bf16.gmra.mrb[0].mxu0 %v914
      %v1468 = vpop.f32.mrb[0].mxu0
      %v1469 = vadd.f32 %v456, %v1468
      %v1470 = vpop.f32.mrb[0].mxu0
      %v1471 = vpop.f32.mrb[0].mxu0
      %v1472 = vadd.f32 %v456, %v1471
      %v1473 = vpop.f32.mrb[0].mxu0
      %1474 = vmatprep.mubr.bf16.mxu0 %v919
      %1475 = vmatmul.mubr.bf16.gmra.mrb[0].mxu0 %v918
      %v1476 = vpop.f32.mrb[0].mxu0
      %v1477 = vadd.f32 %v456, %v1476
      %v1478 = vpop.f32.mrb[0].mxu0
      %v1479 = vpop.f32.mrb[0].mxu0
      %v1480 = vadd.f32 %v456, %v1479
      %v1481 = vpop.f32.mrb[0].mxu0
      %1482 = vmatprep.mubr.bf16.mxu0 %v923
      %1483 = vmatmul.mubr.bf16.gmra.mrb[0].mxu0 %v922
      %v1484 = vpop.f32.mrb[0].mxu0
      %v1485 = vadd.f32 %v456, %v1484
      %v1486 = vpop.f32.mrb[0].mxu0
      %v1487 = vpop.f32.mrb[0].mxu0
      %v1488 = vadd.f32 %v456, %v1487
      %v1489 = vpop.f32.mrb[0].mxu0
      %1490 = vmatprep.mubr.bf16.mxu0 %v927
      %1491 = vmatmul.mubr.bf16.gmra.mrb[0].mxu0 %v926
      %v1492 = vpop.f32.mrb[0].mxu0
      %v1493 = vadd.f32 %v456, %v1492
      %v1494 = vpop.f32.mrb[0].mxu0
      %v1495 = vpop.f32.mrb[0].mxu0
      %v1496 = vadd.f32 %v456, %v1495
      %v1497 = vpop.f32.mrb[0].mxu0
      %1498 = vmatprep.mubr.bf16.mxu0 %v931
      %1499 = vmatmul.mubr.bf16.gmra.mrb[0].mxu0 %v930
      %v1500 = vpop.f32.mrb[0].mxu0
      %v1501 = vadd.f32 %v456, %v1500
      %v1502 = vpop.f32.mrb[0].mxu0
      %v1503 = vpop.f32.mrb[0].mxu0
      %v1504 = vadd.f32 %v456, %v1503
      %v1505 = vpop.f32.mrb[0].mxu0
      %1506 = vmatprep.mubr.bf16.mxu0 %v935
      %1507 = vmatmul.mubr.bf16.gmra.mrb[0].mxu0 %v934
      %v1508 = vpop.f32.mrb[0].mxu0
      %v1509 = vadd.f32 %v456, %v1508
      %v1510 = vpop.f32.mrb[0].mxu0
      %v1511 = vpop.f32.mrb[0].mxu0
      %v1512 = vadd.f32 %v456, %v1511
      %v1513 = vpop.f32.mrb[0].mxu0
      %1514 = vmatprep.mubr.bf16.mxu0 %v939
      %1515 = vmatmul.mubr.bf16.gmra.mrb[0].mxu0 %v938
      %v1516 = vpop.f32.mrb[0].mxu0
      %v1517 = vadd.f32 %v456, %v1516
      %v1518 = vpop.f32.mrb[0].mxu0
      %v1519 = vpop.f32.mrb[0].mxu0
      %v1520 = vadd.f32 %v456, %v1519
      %v1521 = vpop.f32.mrb[0].mxu0
      %1522 = vmatprep.mubr.bf16.mxu0 %v943
      %1523 = vmatmul.mubr.bf16.gmra.mrb[0].mxu0 %v942
      %v1524 = vpop.f32.mrb[0].mxu0
      %v1525 = vadd.f32 %v456, %v1524
      %v1526 = vpop.f32.mrb[0].mxu0
      %v1527 = vpop.f32.mrb[0].mxu0
      %v1528 = vadd.f32 %v456, %v1527
      %v1529 = vpop.f32.mrb[0].mxu0
      %1530 = vmatprep.mubr.bf16.mxu0 %v947
      %1531 = vmatmul.mubr.bf16.gmra.mrb[0].mxu0 %v946
      %v1532 = vpop.f32.mrb[0].mxu0
      %v1533 = vadd.f32 %v456, %v1532
      %v1534 = vpop.f32.mrb[0].mxu0
      %v1535 = vpop.f32.mrb[0].mxu0
      %v1536 = vadd.f32 %v456, %v1535
      %v1537 = vpop.f32.mrb[0].mxu0
      %1538 = vmatprep.mubr.bf16.mxu0 %v951
      %1539 = vmatmul.mubr.bf16.gmra.mrb[0].mxu0 %v950
      %v1540 = vpop.f32.mrb[0].mxu0
      %v1541 = vadd.f32 %v456, %v1540
      %v1542 = vpop.f32.mrb[0].mxu0
      %v1543 = vpop.f32.mrb[0].mxu0
      %v1544 = vadd.f32 %v456, %v1543
      %v1545 = vpop.f32.mrb[0].mxu0
      %1546 = vmatprep.mubr.bf16.mxu0 %v955
      %1547 = vmatmul.mubr.bf16.gmra.mrb[0].mxu0 %v954
      %v1548 = vpop.f32.mrb[0].mxu0
      %v1549 = vadd.f32 %v456, %v1548
      %v1550 = vpop.f32.mrb[0].mxu0
      %v1551 = vpop.f32.mrb[0].mxu0
      %v1552 = vadd.f32 %v456, %v1551
      %v1553 = vpop.f32.mrb[0].mxu0
      %1554 = vmatprep.mubr.bf16.mxu0 %v959
      %1555 = vmatmul.mubr.bf16.gmra.mrb[0].mxu0 %v958
      %v1556 = vpop.f32.mrb[0].mxu0
      %v1557 = vadd.f32 %v456, %v1556
      %v1558 = vpop.f32.mrb[0].mxu0
      %v1559 = vpop.f32.mrb[0].mxu0
      %v1560 = vadd.f32 %v456, %v1559
      %v1561 = vpop.f32.mrb[0].mxu0
      %1562 = vmatprep.mubr.bf16.mxu0 %v963
      %1563 = vmatmul.mubr.bf16.gmra.mrb[0].mxu0 %v962
      %v1564 = vpop.f32.mrb[0].mxu0
      %v1565 = vadd.f32 %v456, %v1564
      %v1566 = vpop.f32.mrb[0].mxu0
      %v1567 = vpop.f32.mrb[0].mxu0
      %v1568 = vadd.f32 %v456, %v1567
      %v1569 = vpop.f32.mrb[0].mxu0
      %1570 = vmatprep.mubr.bf16.mxu0 %v967
      %1571 = vmatmul.mubr.bf16.gmra.mrb[0].mxu0 %v966
      %v1572 = vpop.f32.mrb[0].mxu0
      %v1573 = vadd.f32 %v456, %v1572
      %v1574 = vpop.f32.mrb[0].mxu0
      %v1575 = vpop.f32.mrb[0].mxu0
      %v1576 = vadd.f32 %v456, %v1575
      %v1577 = vpop.f32.mrb[0].mxu0
      %1578 = vdwg.mxu0
      %1579 = vmatprep.subr.bf16.mxu0 0
      %1580 = vmatpush1.bf16.msra.mxu0 %v1242
      %1581 = vmatprep.subr.bf16.mxu0 0
      %1582 = vmatpush1.bf16.msra.mxu0 %v1243
      %1583 = vmatprep.subr.bf16.mxu0 0
      %1584 = vmatpush1.bf16.msra.mxu0 %v1244
      %1585 = vmatprep.subr.bf16.mxu0 0
      %1586 = vmatpush1.bf16.msra.mxu0 %v1245
      %1587 = vmatprep.subr.bf16.mxu0 0
      %1588 = vmatpush1.bf16.msra.mxu0 %v1246
      %1589 = vmatprep.subr.bf16.mxu0 0
      %1590 = vmatpush1.bf16.msra.mxu0 %v1247
      %1591 = vmatprep.subr.bf16.mxu0 0
      %1592 = vmatpush1.bf16.msra.mxu0 %v1248
      %1593 = vmatprep.subr.bf16.mxu0 0
      %1594 = vmatpush1.bf16.msra.mxu0 %v1249
      %1595 = vmatprep.subr.bf16.mxu0 0
      %1596 = vmatpush1.bf16.msra.mxu0 %v1250
      %1597 = vmatprep.subr.bf16.mxu0 0
      %1598 = vmatpush1.bf16.msra.mxu0 %v1251
      %1599 = vmatprep.subr.bf16.mxu0 0
      %1600 = vmatpush1.bf16.msra.mxu0 %v1252
      %1601 = vmatprep.subr.bf16.mxu0 0
      %1602 = vmatpush1.bf16.msra.mxu0 %v1253
      %1603 = vmatprep.subr.bf16.mxu0 0
      %1604 = vmatpush1.bf16.msra.mxu0 %v1254
      %1605 = vmatprep.subr.bf16.mxu0 0
      %1606 = vmatpush1.bf16.msra.mxu0 %v1255
      %1607 = vmatprep.subr.bf16.mxu0 0
      %1608 = vmatpush1.bf16.msra.mxu0 %v1256
      %1609 = vmatprep.subr.bf16.mxu0 0
      %1610 = vmatpush1.bf16.msra.mxu0 %v1257
      %1611 = vmatprep.mubr.bf16.mxu0 %v845
      %1612 = vmatmul.mubr.bf16.gmra.mrb[0].mxu0 %v844
      %v1613 = vpop.f32.mrb[0].mxu0
      %v1614 = vadd.f32 %v1325, %v1613
      %v1615 = vpop.f32.mrb[0].mxu0
      %v1616 = vpop.f32.mrb[0].mxu0
      %v1617 = vadd.f32 %v1328, %v1616
      %v1618 = vpop.f32.mrb[0].mxu0
      %1619 = vmatprep.mubr.bf16.mxu0 %v849
      %1620 = vmatmul.mubr.bf16.gmra.mrb[0].mxu0 %v848
      %v1621 = vpop.f32.mrb[0].mxu0
      %v1622 = vadd.f32 %v1333, %v1621
      %v1623 = vpop.f32.mrb[0].mxu0
      %v1624 = vpop.f32.mrb[0].mxu0
      %v1625 = vadd.f32 %v1336, %v1624
      %v1626 = vpop.f32.mrb[0].mxu0
      %1627 = vmatprep.mubr.bf16.mxu0 %v853
      %1628 = vmatmul.mubr.bf16.gmra.mrb[0].mxu0 %v852
      %v1629 = vpop.f32.mrb[0].mxu0
      %v1630 = vadd.f32 %v1341, %v1629
      %v1631 = vpop.f32.mrb[0].mxu0
      %v1632 = vpop.f32.mrb[0].mxu0
      %v1633 = vadd.f32 %v1344, %v1632
      %v1634 = vpop.f32.mrb[0].mxu0
      %1635 = vmatprep.mubr.bf16.mxu0 %v857
      %1636 = vmatmul.mubr.bf16.gmra.mrb[0].mxu0 %v856
      %v1637 = vpop.f32.mrb[0].mxu0
      %v1638 = vadd.f32 %v1349, %v1637
      %v1639 = vpop.f32.mrb[0].mxu0
      %v1640 = vpop.f32.mrb[0].mxu0
      %v1641 = vadd.f32 %v1352, %v1640
      %v1642 = vpop.f32.mrb[0].mxu0
      %1643 = vmatprep.mubr.bf16.mxu0 %v861
      %1644 = vmatmul.mubr.bf16.gmra.mrb[0].mxu0 %v860
      %v1645 = vpop.f32.mrb[0].mxu0
      %v1646 = vadd.f32 %v1357, %v1645
      %v1647 = vpop.f32.mrb[0].mxu0
      %v1648 = vpop.f32.mrb[0].mxu0
      %v1649 = vadd.f32 %v1360, %v1648
      %v1650 = vpop.f32.mrb[0].mxu0
      %1651 = vmatprep.mubr.bf16.mxu0 %v865
      %1652 = vmatmul.mubr.bf16.gmra.mrb[0].mxu0 %v864
      %v1653 = vpop.f32.mrb[0].mxu0
      %v1654 = vadd.f32 %v1365, %v1653
      %v1655 = vpop.f32.mrb[0].mxu0
      %v1656 = vpop.f32.mrb[0].mxu0
      %v1657 = vadd.f32 %v1368, %v1656
      %v1658 = vpop.f32.mrb[0].mxu0
      %1659 = vmatprep.mubr.bf16.mxu0 %v869
      %1660 = vmatmul.mubr.bf16.gmra.mrb[0].mxu0 %v868
      %v1661 = vpop.f32.mrb[0].mxu0
      %v1662 = vadd.f32 %v1373, %v1661
      %v1663 = vpop.f32.mrb[0].mxu0
      %v1664 = vpop.f32.mrb[0].mxu0
      %v1665 = vadd.f32 %v1376, %v1664
      %v1666 = vpop.f32.mrb[0].mxu0
      %1667 = vmatprep.mubr.bf16.mxu0 %v873
      %1668 = vmatmul.mubr.bf16.gmra.mrb[0].mxu0 %v872
      %v1669 = vpop.f32.mrb[0].mxu0
      %v1670 = vadd.f32 %v1381, %v1669
      %v1671 = vpop.f32.mrb[0].mxu0
      %v1672 = vpop.f32.mrb[0].mxu0
      %v1673 = vadd.f32 %v1384, %v1672
      %v1674 = vpop.f32.mrb[0].mxu0
      %1675 = vmatprep.mubr.bf16.mxu0 %v877
      %1676 = vmatmul.mubr.bf16.gmra.mrb[0].mxu0 %v876
      %v1677 = vpop.f32.mrb[0].mxu0
      %v1678 = vadd.f32 %v1389, %v1677
      %v1679 = vpop.f32.mrb[0].mxu0
      %v1680 = vpop.f32.mrb[0].mxu0
      %v1681 = vadd.f32 %v1392, %v1680
      %v1682 = vpop.f32.mrb[0].mxu0
      %1683 = vmatprep.mubr.bf16.mxu0 %v881
      %1684 = vmatmul.mubr.bf16.gmra.mrb[0].mxu0 %v880
      %v1685 = vpop.f32.mrb[0].mxu0
      %v1686 = vadd.f32 %v1397, %v1685
      %v1687 = vpop.f32.mrb[0].mxu0
      %v1688 = vpop.f32.mrb[0].mxu0
      %v1689 = vadd.f32 %v1400, %v1688
      %v1690 = vpop.f32.mrb[0].mxu0
      %1691 = vmatprep.mubr.bf16.mxu0 %v885
      %1692 = vmatmul.mubr.bf16.gmra.mrb[0].mxu0 %v884
      %v1693 = vpop.f32.mrb[0].mxu0
      %v1694 = vadd.f32 %v1405, %v1693
      %v1695 = vpop.f32.mrb[0].mxu0
      %v1696 = vpop.f32.mrb[0].mxu0
      %v1697 = vadd.f32 %v1408, %v1696
      %v1698 = vpop.f32.mrb[0].mxu0
      %1699 = vmatprep.mubr.bf16.mxu0 %v889
      %1700 = vmatmul.mubr.bf16.gmra.mrb[0].mxu0 %v888
      %v1701 = vpop.f32.mrb[0].mxu0
      %v1702 = vadd.f32 %v1413, %v1701
      %v1703 = vpop.f32.mrb[0].mxu0
      %v1704 = vpop.f32.mrb[0].mxu0
      %v1705 = vadd.f32 %v1416, %v1704
      %v1706 = vpop.f32.mrb[0].mxu0
      %1707 = vmatprep.mubr.bf16.mxu0 %v893
      %1708 = vmatmul.mubr.bf16.gmra.mrb[0].mxu0 %v892
      %v1709 = vpop.f32.mrb[0].mxu0
      %v1710 = vadd.f32 %v1421, %v1709
      %v1711 = vpop.f32.mrb[0].mxu0
      %v1712 = vpop.f32.mrb[0].mxu0
      %v1713 = vadd.f32 %v1424, %v1712
      %v1714 = vpop.f32.mrb[0].mxu0
      %1715 = vmatprep.mubr.bf16.mxu0 %v897
      %1716 = vmatmul.mubr.bf16.gmra.mrb[0].mxu0 %v896
      %v1717 = vpop.f32.mrb[0].mxu0
      %v1718 = vadd.f32 %v1429, %v1717
      %v1719 = vpop.f32.mrb[0].mxu0
      %v1720 = vpop.f32.mrb[0].mxu0
      %v1721 = vadd.f32 %v1432, %v1720
      %v1722 = vpop.f32.mrb[0].mxu0
      %1723 = vmatprep.mubr.bf16.mxu0 %v901
      %1724 = vmatmul.mubr.bf16.gmra.mrb[0].mxu0 %v900
      %v1725 = vpop.f32.mrb[0].mxu0
      %v1726 = vadd.f32 %v1437, %v1725
      %v1727 = vpop.f32.mrb[0].mxu0
      %v1728 = vpop.f32.mrb[0].mxu0
      %v1729 = vadd.f32 %v1440, %v1728
      %v1730 = vpop.f32.mrb[0].mxu0
      %1731 = vmatprep.mubr.bf16.mxu0 %v905
      %1732 = vmatmul.mubr.bf16.gmra.mrb[0].mxu0 %v904
      %v1733 = vpop.f32.mrb[0].mxu0
      %v1734 = vadd.f32 %v1445, %v1733
      %v1735 = vpop.f32.mrb[0].mxu0
      %v1736 = vpop.f32.mrb[0].mxu0
      %v1737 = vadd.f32 %v1448, %v1736
      %v1738 = vpop.f32.mrb[0].mxu0
      %1739 = vmatprep.mubr.bf16.mxu0 %v909
      %1740 = vmatmul.mubr.bf16.gmra.mrb[0].mxu0 %v908
      %v1741 = vpop.f32.mrb[0].mxu0
      %v1742 = vadd.f32 %v1453, %v1741
      %v1743 = vpop.f32.mrb[0].mxu0
      %v1744 = vpop.f32.mrb[0].mxu0
      %v1745 = vadd.f32 %v1456, %v1744
      %v1746 = vpop.f32.mrb[0].mxu0
      %1747 = vmatprep.mubr.bf16.mxu0 %v913
      %1748 = vmatmul.mubr.bf16.gmra.mrb[0].mxu0 %v912
      %v1749 = vpop.f32.mrb[0].mxu0
      %v1750 = vadd.f32 %v1461, %v1749
      %v1751 = vpop.f32.mrb[0].mxu0
      %v1752 = vpop.f32.mrb[0].mxu0
      %v1753 = vadd.f32 %v1464, %v1752
      %v1754 = vpop.f32.mrb[0].mxu0
      %1755 = vmatprep.mubr.bf16.mxu0 %v917
      %1756 = vmatmul.mubr.bf16.gmra.mrb[0].mxu0 %v916
      %v1757 = vpop.f32.mrb[0].mxu0
      %v1758 = vadd.f32 %v1469, %v1757
      %v1759 = vpop.f32.mrb[0].mxu0
      %v1760 = vpop.f32.mrb[0].mxu0
      %v1761 = vadd.f32 %v1472, %v1760
      %v1762 = vpop.f32.mrb[0].mxu0
      %1763 = vmatprep.mubr.bf16.mxu0 %v921
      %1764 = vmatmul.mubr.bf16.gmra.mrb[0].mxu0 %v920
      %v1765 = vpop.f32.mrb[0].mxu0
      %v1766 = vadd.f32 %v1477, %v1765
      %v1767 = vpop.f32.mrb[0].mxu0
      %v1768 = vpop.f32.mrb[0].mxu0
      %v1769 = vadd.f32 %v1480, %v1768
      %v1770 = vpop.f32.mrb[0].mxu0
      %1771 = vmatprep.mubr.bf16.mxu0 %v925
      %1772 = vmatmul.mubr.bf16.gmra.mrb[0].mxu0 %v924
      %v1773 = vpop.f32.mrb[0].mxu0
      %v1774 = vadd.f32 %v1485, %v1773
      %v1775 = vpop.f32.mrb[0].mxu0
      %v1776 = vpop.f32.mrb[0].mxu0
      %v1777 = vadd.f32 %v1488, %v1776
      %v1778 = vpop.f32.mrb[0].mxu0
      %1779 = vmatprep.mubr.bf16.mxu0 %v929
      %1780 = vmatmul.mubr.bf16.gmra.mrb[0].mxu0 %v928
      %v1781 = vpop.f32.mrb[0].mxu0
      %v1782 = vadd.f32 %v1493, %v1781
      %v1783 = vpop.f32.mrb[0].mxu0
      %v1784 = vpop.f32.mrb[0].mxu0
      %v1785 = vadd.f32 %v1496, %v1784
      %v1786 = vpop.f32.mrb[0].mxu0
      %1787 = vmatprep.mubr.bf16.mxu0 %v933
      %1788 = vmatmul.mubr.bf16.gmra.mrb[0].mxu0 %v932
      %v1789 = vpop.f32.mrb[0].mxu0
      %v1790 = vadd.f32 %v1501, %v1789
      %v1791 = vpop.f32.mrb[0].mxu0
      %v1792 = vpop.f32.mrb[0].mxu0
      %v1793 = vadd.f32 %v1504, %v1792
      %v1794 = vpop.f32.mrb[0].mxu0
      %1795 = vmatprep.mubr.bf16.mxu0 %v937
      %1796 = vmatmul.mubr.bf16.gmra.mrb[0].mxu0 %v936
      %v1797 = vpop.f32.mrb[0].mxu0
      %v1798 = vadd.f32 %v1509, %v1797
      %v1799 = vpop.f32.mrb[0].mxu0
      %v1800 = vpop.f32.mrb[0].mxu0
      %v1801 = vadd.f32 %v1512, %v1800
      %v1802 = vpop.f32.mrb[0].mxu0
      %1803 = vmatprep.mubr.bf16.mxu0 %v941
      %1804 = vmatmul.mubr.bf16.gmra.mrb[0].mxu0 %v940
      %v1805 = vpop.f32.mrb[0].mxu0
      %v1806 = vadd.f32 %v1517, %v1805
      %v1807 = vpop.f32.mrb[0].mxu0
      %v1808 = vpop.f32.mrb[0].mxu0
      %v1809 = vadd.f32 %v1520, %v1808
      %v1810 = vpop.f32.mrb[0].mxu0
      %1811 = vmatprep.mubr.bf16.mxu0 %v945
      %1812 = vmatmul.mubr.bf16.gmra.mrb[0].mxu0 %v944
      %v1813 = vpop.f32.mrb[0].mxu0
      %v1814 = vadd.f32 %v1525, %v1813
      %v1815 = vpop.f32.mrb[0].mxu0
      %v1816 = vpop.f32.mrb[0].mxu0
      %v1817 = vadd.f32 %v1528, %v1816
      %v1818 = vpop.f32.mrb[0].mxu0
      %1819 = vmatprep.mubr.bf16.mxu0 %v949
      %1820 = vmatmul.mubr.bf16.gmra.mrb[0].mxu0 %v948
      %v1821 = vpop.f32.mrb[0].mxu0
      %v1822 = vadd.f32 %v1533, %v1821
      %v1823 = vpop.f32.mrb[0].mxu0
      %v1824 = vpop.f32.mrb[0].mxu0
      %v1825 = vadd.f32 %v1536, %v1824
      %v1826 = vpop.f32.mrb[0].mxu0
      %1827 = vmatprep.mubr.bf16.mxu0 %v953
      %1828 = vmatmul.mubr.bf16.gmra.mrb[0].mxu0 %v952
      %v1829 = vpop.f32.mrb[0].mxu0
      %v1830 = vadd.f32 %v1541, %v1829
      %v1831 = vpop.f32.mrb[0].mxu0
      %v1832 = vpop.f32.mrb[0].mxu0
      %v1833 = vadd.f32 %v1544, %v1832
      %v1834 = vpop.f32.mrb[0].mxu0
      %1835 = vmatprep.mubr.bf16.mxu0 %v957
      %1836 = vmatmul.mubr.bf16.gmra.mrb[0].mxu0 %v956
      %v1837 = vpop.f32.mrb[0].mxu0
      %v1838 = vadd.f32 %v1549, %v1837
      %v1839 = vpop.f32.mrb[0].mxu0
      %v1840 = vpop.f32.mrb[0].mxu0
      %v1841 = vadd.f32 %v1552, %v1840
      %v1842 = vpop.f32.mrb[0].mxu0
      %1843 = vmatprep.mubr.bf16.mxu0 %v961
      %1844 = vmatmul.mubr.bf16.gmra.mrb[0].mxu0 %v960
      %v1845 = vpop.f32.mrb[0].mxu0
      %v1846 = vadd.f32 %v1557, %v1845
      %v1847 = vpop.f32.mrb[0].mxu0
      %v1848 = vpop.f32.mrb[0].mxu0
      %v1849 = vadd.f32 %v1560, %v1848
      %v1850 = vpop.f32.mrb[0].mxu0
      %1851 = vmatprep.mubr.bf16.mxu0 %v965
      %1852 = vmatmul.mubr.bf16.gmra.mrb[0].mxu0 %v964
      %v1853 = vpop.f32.mrb[0].mxu0
      %v1854 = vadd.f32 %v1565, %v1853
      %v1855 = vpop.f32.mrb[0].mxu0
      %v1856 = vpop.f32.mrb[0].mxu0
      %v1857 = vadd.f32 %v1568, %v1856
      %v1858 = vpop.f32.mrb[0].mxu0
      %1859 = vmatprep.mubr.bf16.mxu0 %v969
      %1860 = vmatmul.mubr.bf16.gmra.mrb[0].mxu0 %v968
      %v1861 = vpop.f32.mrb[0].mxu0
      %v1862 = vadd.f32 %v1573, %v1861
      %v1863 = vpop.f32.mrb[0].mxu0
      %v1864 = vpop.f32.mrb[0].mxu0
      %v1865 = vadd.f32 %v1576, %v1864
      %v1866 = vpop.f32.mrb[0].mxu0
      %1867 = vdwg.mxu0
      %v1868 = vmax.f32 %v1614, 0.0
      %v1869 = vmax.f32 %v1617, 0.0
      %v1870 = vmax.f32 %v1622, 0.0
      %v1871 = vmax.f32 %v1625, 0.0
      %v1872 = vmax.f32 %v1630, 0.0
      %v1873 = vmax.f32 %v1633, 0.0
      %v1874 = vmax.f32 %v1638, 0.0
      %v1875 = vmax.f32 %v1641, 0.0
      %v1876 = vmax.f32 %v1646, 0.0
      %v1877 = vmax.f32 %v1649, 0.0
      %v1878 = vmax.f32 %v1654, 0.0
      %v1879 = vmax.f32 %v1657, 0.0
      %v1880 = vmax.f32 %v1662, 0.0
      %v1881 = vmax.f32 %v1665, 0.0
      %v1882 = vmax.f32 %v1670, 0.0
      %v1883 = vmax.f32 %v1673, 0.0
      %v1884 = vmax.f32 %v1678, 0.0
      %v1885 = vmax.f32 %v1681, 0.0
      %v1886 = vmax.f32 %v1686, 0.0
      %v1887 = vmax.f32 %v1689, 0.0
      %v1888 = vmax.f32 %v1694, 0.0
      %v1889 = vmax.f32 %v1697, 0.0
      %v1890 = vmax.f32 %v1702, 0.0
      %v1891 = vmax.f32 %v1705, 0.0
      %v1892 = vmax.f32 %v1710, 0.0
      %v1893 = vmax.f32 %v1713, 0.0
      %v1894 = vmax.f32 %v1718, 0.0
      %v1895 = vmax.f32 %v1721, 0.0
      %v1896 = vmax.f32 %v1726, 0.0
      %v1897 = vmax.f32 %v1729, 0.0
      %v1898 = vmax.f32 %v1734, 0.0
      %v1899 = vmax.f32 %v1737, 0.0
      %v1900 = vmax.f32 %v1742, 0.0
      %v1901 = vmax.f32 %v1745, 0.0
      %v1902 = vmax.f32 %v1750, 0.0
      %v1903 = vmax.f32 %v1753, 0.0
      %v1904 = vmax.f32 %v1758, 0.0
      %v1905 = vmax.f32 %v1761, 0.0
      %v1906 = vmax.f32 %v1766, 0.0
      %v1907 = vmax.f32 %v1769, 0.0
      %v1908 = vmax.f32 %v1774, 0.0
      %v1909 = vmax.f32 %v1777, 0.0
      %v1910 = vmax.f32 %v1782, 0.0
      %v1911 = vmax.f32 %v1785, 0.0
      %v1912 = vmax.f32 %v1790, 0.0
      %v1913 = vmax.f32 %v1793, 0.0
      %v1914 = vmax.f32 %v1798, 0.0
      %v1915 = vmax.f32 %v1801, 0.0
      %v1916 = vmax.f32 %v1806, 0.0
      %v1917 = vmax.f32 %v1809, 0.0
      %v1918 = vmax.f32 %v1814, 0.0
      %v1919 = vmax.f32 %v1817, 0.0
      %v1920 = vmax.f32 %v1822, 0.0
      %v1921 = vmax.f32 %v1825, 0.0
      %v1922 = vmax.f32 %v1830, 0.0
      %v1923 = vmax.f32 %v1833, 0.0
      %v1924 = vmax.f32 %v1838, 0.0
      %v1925 = vmax.f32 %v1841, 0.0
      %v1926 = vmax.f32 %v1846, 0.0
      %v1927 = vmax.f32 %v1849, 0.0
      %v1928 = vmax.f32 %v1854, 0.0
      %v1929 = vmax.f32 %v1857, 0.0
      %v1930 = vmax.f32 %v1862, 0.0
      %v1931 = vmax.f32 %v1865, 0.0
      %v1932 = vld [vmem:[%s2] sm:$0xff]
      %v1933 = vld [vmem:[%s2 + $0x8] sm:$0xff]
      %v1934 = vld [vmem:[%s2 + $0x10] sm:$0xff]
      %v1935 = vld [vmem:[%s2 + $0x18] sm:$0xff]
      %v1936 = vld [vmem:[%s2 + $0x20] sm:$0xff]
      %v1937 = vld [vmem:[%s2 + $0x28] sm:$0xff]
      %v1938 = vld [vmem:[%s2 + $0x30] sm:$0xff]
      %v1939 = vld [vmem:[%s2 + $0x38] sm:$0xff]
      %v1940 = vld [vmem:[%s5 + $0x1] sm:$0x1]
      %v1942 = vlaneseq
      %v1943 = vshrl.u32 %v1942, 7
      %v1944 = vsub.s32 0, %v1943
      %v1945 = vrot.slane %v1940, %v1944
      %vm1947 = vcmask 523264
      %v1949 = vsel %vm1947, %v1868, 0
      %v1952 = vsel %vm1947, %v1869, 0
      %v1955 = vsel %vm1947, %v1870, 0
      %v1958 = vsel %vm1947, %v1871, 0
      %v1961 = vsel %vm1947, %v1872, 0
      %v1964 = vsel %vm1947, %v1873, 0
      %v1967 = vsel %vm1947, %v1874, 0
      %v1970 = vsel %vm1947, %v1875, 0
      %v1973 = vsel %vm1947, %v1876, 0
      %v1976 = vsel %vm1947, %v1877, 0
      %v1979 = vsel %vm1947, %v1878, 0
      %v1982 = vsel %vm1947, %v1879, 0
      %v1985 = vsel %vm1947, %v1880, 0
      %v1988 = vsel %vm1947, %v1881, 0
      %v1991 = vsel %vm1947, %v1882, 0
      %v1994 = vsel %vm1947, %v1883, 0
      %v1997 = vsel %vm1947, %v1884, 0
      %v2000 = vsel %vm1947, %v1885, 0
      %v2003 = vsel %vm1947, %v1886, 0
      %v2006 = vsel %vm1947, %v1887, 0
      %v2009 = vsel %vm1947, %v1888, 0
      %v2012 = vsel %vm1947, %v1889, 0
      %v2015 = vsel %vm1947, %v1890, 0
      %v2018 = vsel %vm1947, %v1891, 0
      %v2021 = vsel %vm1947, %v1892, 0
      %v2024 = vsel %vm1947, %v1893, 0
      %v2027 = vsel %vm1947, %v1894, 0
      %v2030 = vsel %vm1947, %v1895, 0
      %v2033 = vsel %vm1947, %v1896, 0
      %v2036 = vsel %vm1947, %v1897, 0
      %v2039 = vsel %vm1947, %v1898, 0
      %v2042 = vsel %vm1947, %v1899, 0
      %v2045 = vsel %vm1947, %v1900, 0
      %v2048 = vsel %vm1947, %v1901, 0
      %v2051 = vsel %vm1947, %v1902, 0
      %v2054 = vsel %vm1947, %v1903, 0
      %v2057 = vsel %vm1947, %v1904, 0
      %v2060 = vsel %vm1947, %v1905, 0
      %v2063 = vsel %vm1947, %v1906, 0
      %v2066 = vsel %vm1947, %v1907, 0
      %v2069 = vsel %vm1947, %v1908, 0
      %v2072 = vsel %vm1947, %v1909, 0
      %v2075 = vsel %vm1947, %v1910, 0
      %v2078 = vsel %vm1947, %v1911, 0
      %v2081 = vsel %vm1947, %v1912, 0
      %v2084 = vsel %vm1947, %v1913, 0
      %v2087 = vsel %vm1947, %v1914, 0
      %v2090 = vsel %vm1947, %v1915, 0
      %v2093 = vsel %vm1947, %v1916, 0
      %v2096 = vsel %vm1947, %v1917, 0
      %v2099 = vsel %vm1947, %v1918, 0
      %v2102 = vsel %vm1947, %v1919, 0
      %v2105 = vsel %vm1947, %v1920, 0
      %v2108 = vsel %vm1947, %v1921, 0
      %v2111 = vsel %vm1947, %v1922, 0
      %v2114 = vsel %vm1947, %v1923, 0
      %v2117 = vsel %vm1947, %v1924, 0
      %v2120 = vsel %vm1947, %v1925, 0
      %v2123 = vsel %vm1947, %v1926, 0
      %v2126 = vsel %vm1947, %v1927, 0
      %v2129 = vsel %vm1947, %v1928, 0
      %v2132 = vsel %vm1947, %v1929, 0
      %v2135 = vsel %vm1947, %v1930, 0
      %v2138 = vsel %vm1947, %v1931, 0
      %2140 = vmatprep.subr.mxu0 0.0
      %2141 = vmatpush1.msra.mxu0 %v1932
      %2142 = vmatprep.subr.mxu0 0.0
      %2143 = vmatpush1.msra.mxu0 %v1933
      %2144 = vmatprep.subr.mxu0 0.0
      %2145 = vmatpush1.msra.mxu0 %v1934
      %2146 = vmatprep.subr.mxu0 0.0
      %2147 = vmatpush1.msra.mxu0 %v1935
      %2148 = vmatprep.subr.mxu0 0.0
      %2149 = vmatpush1.msra.mxu0 %v1936
      %2150 = vmatprep.subr.mxu0 0.0
      %2151 = vmatpush1.msra.mxu0 %v1937
      %2152 = vmatprep.subr.mxu0 0.0
      %2153 = vmatpush1.msra.mxu0 %v1938
      %2154 = vmatprep.subr.mxu0 0.0
      %2155 = vmatpush1.msra.mxu0 %v1939
      %2156 = vmatprep.subr.mxu0 0.0
      %2157 = vmatpush1.msra.mxu0 0.0
      %2158 = vmatprep.subr.mxu0 0.0
      %2159 = vmatpush1.msra.mxu0 0.0
      %2160 = vmatprep.subr.mxu0 0.0
      %2161 = vmatpush1.msra.mxu0 0.0
      %2162 = vmatprep.subr.mxu0 0.0
      %2163 = vmatpush1.msra.mxu0 0.0
      %2164 = vmatprep.subr.mxu0 0.0
      %2165 = vmatpush1.msra.mxu0 0.0
      %2166 = vmatprep.subr.mxu0 0.0
      %2167 = vmatpush1.msra.mxu0 0.0
      %2168 = vmatprep.subr.mxu0 0.0
      %2169 = vmatpush1.msra.mxu0 0.0
      %2170 = vmatprep.subr.mxu0 0.0
      %2171 = vmatpush1.msra.mxu0 0.0
      %2172 = vmatprep.subr.mxu0 0.0
      %2173 = vmatpush1.msra.mxu0 0.0
      %2174 = vmatprep.subr.mxu0 0.0
      %2175 = vmatpush1.msra.mxu0 0.0
      %2176 = vmatprep.subr.mxu0 0.0
      %2177 = vmatpush1.msra.mxu0 0.0
      %2178 = vmatprep.subr.mxu0 0.0
      %2179 = vmatpush1.msra.mxu0 0.0
      %2180 = vmatprep.subr.mxu0 0.0
      %2181 = vmatpush1.msra.mxu0 0.0
      %2182 = vmatprep.subr.mxu0 0.0
      %2183 = vmatpush1.msra.mxu0 0.0
      %2184 = vmatprep.subr.mxu0 0.0
      %2185 = vmatpush1.msra.mxu0 0.0
      %2186 = vmatprep.subr.mxu0 0.0
      %2187 = vmatpush1.msra.mxu0 0.0
      %2188 = vmatprep.subr.mxu0 0.0
      %2189 = vmatpush1.msra.mxu0 0.0
      %2190 = vmatprep.subr.mxu0 0.0
      %2191 = vmatpush1.msra.mxu0 0.0
      %2192 = vmatprep.subr.mxu0 0.0
      %2193 = vmatpush1.msra.mxu0 0.0
      %2194 = vmatprep.subr.mxu0 0.0
      %2195 = vmatpush1.msra.mxu0 0.0
      %2196 = vmatprep.subr.mxu0 0.0
      %2197 = vmatpush1.msra.mxu0 0.0
      %2198 = vmatprep.subr.mxu0 0.0
      %2199 = vmatpush1.msra.mxu0 0.0
      %2200 = vmatprep.subr.mxu0 0.0
      %2201 = vmatpush1.msra.mxu0 0.0
      %2202 = vmatprep.subr.mxu0 0.0
      %2203 = vmatpush1.msra.mxu0 0.0
      %2204 = vmatprep.mubr.f32.mxu0 0.0
      %2205 = vmatmul.mubr.f32.gmra.mrb[0].mxu0 %v1949
      %v2206 = vpop.f32.mrb[0].mxu0
      %v2207 = vadd.f32 %v1945, %v2206
      %v2208 = vpop.f32.mrb[0].mxu0
      %2209 = vmatprep.mubr.f32.mxu0 0.0
      %2210 = vmatmul.mubr.f32.gmra.mrb[0].mxu0 %v1952
      %v2211 = vpop.f32.mrb[0].mxu0
      %v2212 = vadd.f32 %v1945, %v2211
      %v2213 = vpop.f32.mrb[0].mxu0
      %2214 = vmatprep.mubr.f32.mxu0 0.0
      %2215 = vmatmul.mubr.f32.gmra.mrb[0].mxu0 %v1955
      %v2216 = vpop.f32.mrb[0].mxu0
      %v2217 = vadd.f32 %v1945, %v2216
      %v2218 = vpop.f32.mrb[0].mxu0
      %2219 = vmatprep.mubr.f32.mxu0 0.0
      %2220 = vmatmul.mubr.f32.gmra.mrb[0].mxu0 %v1958
      %v2221 = vpop.f32.mrb[0].mxu0
      %v2222 = vadd.f32 %v1945, %v2221
      %v2223 = vpop.f32.mrb[0].mxu0
      %2224 = vmatprep.mubr.f32.mxu0 0.0
      %2225 = vmatmul.mubr.f32.gmra.mrb[0].mxu0 %v1961
      %v2226 = vpop.f32.mrb[0].mxu0
      %v2227 = vadd.f32 %v1945, %v2226
      %v2228 = vpop.f32.mrb[0].mxu0
      %2229 = vmatprep.mubr.f32.mxu0 0.0
      %2230 = vmatmul.mubr.f32.gmra.mrb[0].mxu0 %v1964
      %v2231 = vpop.f32.mrb[0].mxu0
      %v2232 = vadd.f32 %v1945, %v2231
      %v2233 = vpop.f32.mrb[0].mxu0
      %2234 = vmatprep.mubr.f32.mxu0 0.0
      %2235 = vmatmul.mubr.f32.gmra.mrb[0].mxu0 %v1967
      %v2236 = vpop.f32.mrb[0].mxu0
      %v2237 = vadd.f32 %v1945, %v2236
      %v2238 = vpop.f32.mrb[0].mxu0
      %2239 = vmatprep.mubr.f32.mxu0 0.0
      %2240 = vmatmul.mubr.f32.gmra.mrb[0].mxu0 %v1970
      %v2241 = vpop.f32.mrb[0].mxu0
      %v2242 = vadd.f32 %v1945, %v2241
      %v2243 = vpop.f32.mrb[0].mxu0
      %2244 = vmatprep.mubr.f32.mxu0 0.0
      %2245 = vmatmul.mubr.f32.gmra.mrb[0].mxu0 %v1973
      %v2246 = vpop.f32.mrb[0].mxu0
      %v2247 = vadd.f32 %v1945, %v2246
      %v2248 = vpop.f32.mrb[0].mxu0
      %2249 = vmatprep.mubr.f32.mxu0 0.0
      %2250 = vmatmul.mubr.f32.gmra.mrb[0].mxu0 %v1976
      %v2251 = vpop.f32.mrb[0].mxu0
      %v2252 = vadd.f32 %v1945, %v2251
      %v2253 = vpop.f32.mrb[0].mxu0
      %2254 = vmatprep.mubr.f32.mxu0 0.0
      %2255 = vmatmul.mubr.f32.gmra.mrb[0].mxu0 %v1979
      %v2256 = vpop.f32.mrb[0].mxu0
      %v2257 = vadd.f32 %v1945, %v2256
      %v2258 = vpop.f32.mrb[0].mxu0
      %2259 = vmatprep.mubr.f32.mxu0 0.0
      %2260 = vmatmul.mubr.f32.gmra.mrb[0].mxu0 %v1982
      %v2261 = vpop.f32.mrb[0].mxu0
      %v2262 = vadd.f32 %v1945, %v2261
      %v2263 = vpop.f32.mrb[0].mxu0
      %2264 = vmatprep.mubr.f32.mxu0 0.0
      %2265 = vmatmul.mubr.f32.gmra.mrb[0].mxu0 %v1985
      %v2266 = vpop.f32.mrb[0].mxu0
      %v2267 = vadd.f32 %v1945, %v2266
      %v2268 = vpop.f32.mrb[0].mxu0
      %2269 = vmatprep.mubr.f32.mxu0 0.0
      %2270 = vmatmul.mubr.f32.gmra.mrb[0].mxu0 %v1988
      %v2271 = vpop.f32.mrb[0].mxu0
      %v2272 = vadd.f32 %v1945, %v2271
      %v2273 = vpop.f32.mrb[0].mxu0
      %2274 = vmatprep.mubr.f32.mxu0 0.0
      %2275 = vmatmul.mubr.f32.gmra.mrb[0].mxu0 %v1991
      %v2276 = vpop.f32.mrb[0].mxu0
      %v2277 = vadd.f32 %v1945, %v2276
      %v2278 = vpop.f32.mrb[0].mxu0
      %2279 = vmatprep.mubr.f32.mxu0 0.0
      %2280 = vmatmul.mubr.f32.gmra.mrb[0].mxu0 %v1994
      %v2281 = vpop.f32.mrb[0].mxu0
      %v2282 = vadd.f32 %v1945, %v2281
      %v2283 = vpop.f32.mrb[0].mxu0
      %2284 = vmatprep.mubr.f32.mxu0 0.0
      %2285 = vmatmul.mubr.f32.gmra.mrb[0].mxu0 %v1997
      %v2286 = vpop.f32.mrb[0].mxu0
      %v2287 = vadd.f32 %v1945, %v2286
      %v2288 = vpop.f32.mrb[0].mxu0
      %2289 = vmatprep.mubr.f32.mxu0 0.0
      %2290 = vmatmul.mubr.f32.gmra.mrb[0].mxu0 %v2000
      %v2291 = vpop.f32.mrb[0].mxu0
      %v2292 = vadd.f32 %v1945, %v2291
      %v2293 = vpop.f32.mrb[0].mxu0
      %2294 = vmatprep.mubr.f32.mxu0 0.0
      %2295 = vmatmul.mubr.f32.gmra.mrb[0].mxu0 %v2003
      %v2296 = vpop.f32.mrb[0].mxu0
      %v2297 = vadd.f32 %v1945, %v2296
      %v2298 = vpop.f32.mrb[0].mxu0
      %2299 = vmatprep.mubr.f32.mxu0 0.0
      %2300 = vmatmul.mubr.f32.gmra.mrb[0].mxu0 %v2006
      %v2301 = vpop.f32.mrb[0].mxu0
      %v2302 = vadd.f32 %v1945, %v2301
      %v2303 = vpop.f32.mrb[0].mxu0
      %2304 = vmatprep.mubr.f32.mxu0 0.0
      %2305 = vmatmul.mubr.f32.gmra.mrb[0].mxu0 %v2009
      %v2306 = vpop.f32.mrb[0].mxu0
      %v2307 = vadd.f32 %v1945, %v2306
      %v2308 = vpop.f32.mrb[0].mxu0
      %2309 = vmatprep.mubr.f32.mxu0 0.0
      %2310 = vmatmul.mubr.f32.gmra.mrb[0].mxu0 %v2012
      %v2311 = vpop.f32.mrb[0].mxu0
      %v2312 = vadd.f32 %v1945, %v2311
      %v2313 = vpop.f32.mrb[0].mxu0
      %2314 = vmatprep.mubr.f32.mxu0 0.0
      %2315 = vmatmul.mubr.f32.gmra.mrb[0].mxu0 %v2015
      %v2316 = vpop.f32.mrb[0].mxu0
      %v2317 = vadd.f32 %v1945, %v2316
      %v2318 = vpop.f32.mrb[0].mxu0
      %2319 = vmatprep.mubr.f32.mxu0 0.0
      %2320 = vmatmul.mubr.f32.gmra.mrb[0].mxu0 %v2018
      %v2321 = vpop.f32.mrb[0].mxu0
      %v2322 = vadd.f32 %v1945, %v2321
      %v2323 = vpop.f32.mrb[0].mxu0
      %2324 = vmatprep.mubr.f32.mxu0 0.0
      %2325 = vmatmul.mubr.f32.gmra.mrb[0].mxu0 %v2021
      %v2326 = vpop.f32.mrb[0].mxu0
      %v2327 = vadd.f32 %v1945, %v2326
      %v2328 = vpop.f32.mrb[0].mxu0
      %2329 = vmatprep.mubr.f32.mxu0 0.0
      %2330 = vmatmul.mubr.f32.gmra.mrb[0].mxu0 %v2024
      %v2331 = vpop.f32.mrb[0].mxu0
      %v2332 = vadd.f32 %v1945, %v2331
      %v2333 = vpop.f32.mrb[0].mxu0
      %2334 = vmatprep.mubr.f32.mxu0 0.0
      %2335 = vmatmul.mubr.f32.gmra.mrb[0].mxu0 %v2027
      %v2336 = vpop.f32.mrb[0].mxu0
      %v2337 = vadd.f32 %v1945, %v2336
      %v2338 = vpop.f32.mrb[0].mxu0
      %2339 = vmatprep.mubr.f32.mxu0 0.0
      %2340 = vmatmul.mubr.f32.gmra.mrb[0].mxu0 %v2030
      %v2341 = vpop.f32.mrb[0].mxu0
      %v2342 = vadd.f32 %v1945, %v2341
      %v2343 = vpop.f32.mrb[0].mxu0
      %2344 = vmatprep.mubr.f32.mxu0 0.0
      %2345 = vmatmul.mubr.f32.gmra.mrb[0].mxu0 %v2033
      %v2346 = vpop.f32.mrb[0].mxu0
      %v2347 = vadd.f32 %v1945, %v2346
      %v2348 = vpop.f32.mrb[0].mxu0
      %2349 = vmatprep.mubr.f32.mxu0 0.0
      %2350 = vmatmul.mubr.f32.gmra.mrb[0].mxu0 %v2036
      %v2351 = vpop.f32.mrb[0].mxu0
      %v2352 = vadd.f32 %v1945, %v2351
      %v2353 = vpop.f32.mrb[0].mxu0
      %2354 = vmatprep.mubr.f32.mxu0 0.0
      %2355 = vmatmul.mubr.f32.gmra.mrb[0].mxu0 %v2039
      %v2356 = vpop.f32.mrb[0].mxu0
      %v2357 = vadd.f32 %v1945, %v2356
      %v2358 = vpop.f32.mrb[0].mxu0
      %2359 = vmatprep.mubr.f32.mxu0 0.0
      %2360 = vmatmul.mubr.f32.gmra.mrb[0].mxu0 %v2042
      %v2361 = vpop.f32.mrb[0].mxu0
      %v2362 = vadd.f32 %v1945, %v2361
      %v2363 = vpop.f32.mrb[0].mxu0
      %2364 = vmatprep.mubr.f32.mxu0 0.0
      %2365 = vmatmul.mubr.f32.gmra.mrb[0].mxu0 %v2045
      %v2366 = vpop.f32.mrb[0].mxu0
      %v2367 = vadd.f32 %v1945, %v2366
      %v2368 = vpop.f32.mrb[0].mxu0
      %2369 = vmatprep.mubr.f32.mxu0 0.0
      %2370 = vmatmul.mubr.f32.gmra.mrb[0].mxu0 %v2048
      %v2371 = vpop.f32.mrb[0].mxu0
      %v2372 = vadd.f32 %v1945, %v2371
      %v2373 = vpop.f32.mrb[0].mxu0
      %2374 = vmatprep.mubr.f32.mxu0 0.0
      %2375 = vmatmul.mubr.f32.gmra.mrb[0].mxu0 %v2051
      %v2376 = vpop.f32.mrb[0].mxu0
      %v2377 = vadd.f32 %v1945, %v2376
      %v2378 = vpop.f32.mrb[0].mxu0
      %2379 = vmatprep.mubr.f32.mxu0 0.0
      %2380 = vmatmul.mubr.f32.gmra.mrb[0].mxu0 %v2054
      %v2381 = vpop.f32.mrb[0].mxu0
      %v2382 = vadd.f32 %v1945, %v2381
      %v2383 = vpop.f32.mrb[0].mxu0
      %2384 = vmatprep.mubr.f32.mxu0 0.0
      %2385 = vmatmul.mubr.f32.gmra.mrb[0].mxu0 %v2057
      %v2386 = vpop.f32.mrb[0].mxu0
      %v2387 = vadd.f32 %v1945, %v2386
      %v2388 = vpop.f32.mrb[0].mxu0
      %2389 = vmatprep.mubr.f32.mxu0 0.0
      %2390 = vmatmul.mubr.f32.gmra.mrb[0].mxu0 %v2060
      %v2391 = vpop.f32.mrb[0].mxu0
      %v2392 = vadd.f32 %v1945, %v2391
      %v2393 = vpop.f32.mrb[0].mxu0
      %2394 = vmatprep.mubr.f32.mxu0 0.0
      %2395 = vmatmul.mubr.f32.gmra.mrb[0].mxu0 %v2063
      %v2396 = vpop.f32.mrb[0].mxu0
      %v2397 = vadd.f32 %v1945, %v2396
      %v2398 = vpop.f32.mrb[0].mxu0
      %2399 = vmatprep.mubr.f32.mxu0 0.0
      %2400 = vmatmul.mubr.f32.gmra.mrb[0].mxu0 %v2066
      %v2401 = vpop.f32.mrb[0].mxu0
      %v2402 = vadd.f32 %v1945, %v2401
      %v2403 = vpop.f32.mrb[0].mxu0
      %2404 = vmatprep.mubr.f32.mxu0 0.0
      %2405 = vmatmul.mubr.f32.gmra.mrb[0].mxu0 %v2069
      %v2406 = vpop.f32.mrb[0].mxu0
      %v2407 = vadd.f32 %v1945, %v2406
      %v2408 = vpop.f32.mrb[0].mxu0
      %2409 = vmatprep.mubr.f32.mxu0 0.0
      %2410 = vmatmul.mubr.f32.gmra.mrb[0].mxu0 %v2072
      %v2411 = vpop.f32.mrb[0].mxu0
      %v2412 = vadd.f32 %v1945, %v2411
      %v2413 = vpop.f32.mrb[0].mxu0
      %2414 = vmatprep.mubr.f32.mxu0 0.0
      %2415 = vmatmul.mubr.f32.gmra.mrb[0].mxu0 %v2075
      %v2416 = vpop.f32.mrb[0].mxu0
      %v2417 = vadd.f32 %v1945, %v2416
      %v2418 = vpop.f32.mrb[0].mxu0
      %2419 = vmatprep.mubr.f32.mxu0 0.0
      %2420 = vmatmul.mubr.f32.gmra.mrb[0].mxu0 %v2078
      %v2421 = vpop.f32.mrb[0].mxu0
      %v2422 = vadd.f32 %v1945, %v2421
      %v2423 = vpop.f32.mrb[0].mxu0
      %2424 = vmatprep.mubr.f32.mxu0 0.0
      %2425 = vmatmul.mubr.f32.gmra.mrb[0].mxu0 %v2081
      %v2426 = vpop.f32.mrb[0].mxu0
      %v2427 = vadd.f32 %v1945, %v2426
      %v2428 = vpop.f32.mrb[0].mxu0
      %2429 = vmatprep.mubr.f32.mxu0 0.0
      %2430 = vmatmul.mubr.f32.gmra.mrb[0].mxu0 %v2084
      %v2431 = vpop.f32.mrb[0].mxu0
      %v2432 = vadd.f32 %v1945, %v2431
      %v2433 = vpop.f32.mrb[0].mxu0
      %2434 = vmatprep.mubr.f32.mxu0 0.0
      %2435 = vmatmul.mubr.f32.gmra.mrb[0].mxu0 %v2087
      %v2436 = vpop.f32.mrb[0].mxu0
      %v2437 = vadd.f32 %v1945, %v2436
      %v2438 = vpop.f32.mrb[0].mxu0
      %2439 = vmatprep.mubr.f32.mxu0 0.0
      %2440 = vmatmul.mubr.f32.gmra.mrb[0].mxu0 %v2090
      %v2441 = vpop.f32.mrb[0].mxu0
      %v2442 = vadd.f32 %v1945, %v2441
      %v2443 = vpop.f32.mrb[0].mxu0
      %2444 = vmatprep.mubr.f32.mxu0 0.0
      %2445 = vmatmul.mubr.f32.gmra.mrb[0].mxu0 %v2093
      %v2446 = vpop.f32.mrb[0].mxu0
      %v2447 = vadd.f32 %v1945, %v2446
      %v2448 = vpop.f32.mrb[0].mxu0
      %2449 = vmatprep.mubr.f32.mxu0 0.0
      %2450 = vmatmul.mubr.f32.gmra.mrb[0].mxu0 %v2096
      %v2451 = vpop.f32.mrb[0].mxu0
      %v2452 = vadd.f32 %v1945, %v2451
      %v2453 = vpop.f32.mrb[0].mxu0
      %2454 = vmatprep.mubr.f32.mxu0 0.0
      %2455 = vmatmul.mubr.f32.gmra.mrb[0].mxu0 %v2099
      %v2456 = vpop.f32.mrb[0].mxu0
      %v2457 = vadd.f32 %v1945, %v2456
      %v2458 = vpop.f32.mrb[0].mxu0
      %2459 = vmatprep.mubr.f32.mxu0 0.0
      %2460 = vmatmul.mubr.f32.gmra.mrb[0].mxu0 %v2102
      %v2461 = vpop.f32.mrb[0].mxu0
      %v2462 = vadd.f32 %v1945, %v2461
      %v2463 = vpop.f32.mrb[0].mxu0
      %2464 = vmatprep.mubr.f32.mxu0 0.0
      %2465 = vmatmul.mubr.f32.gmra.mrb[0].mxu0 %v2105
      %v2466 = vpop.f32.mrb[0].mxu0
      %v2467 = vadd.f32 %v1945, %v2466
      %v2468 = vpop.f32.mrb[0].mxu0
      %2469 = vmatprep.mubr.f32.mxu0 0.0
      %2470 = vmatmul.mubr.f32.gmra.mrb[0].mxu0 %v2108
      %v2471 = vpop.f32.mrb[0].mxu0
      %v2472 = vadd.f32 %v1945, %v2471
      %v2473 = vpop.f32.mrb[0].mxu0
      %2474 = vmatprep.mubr.f32.mxu0 0.0
      %2475 = vmatmul.mubr.f32.gmra.mrb[0].mxu0 %v2111
      %v2476 = vpop.f32.mrb[0].mxu0
      %v2477 = vadd.f32 %v1945, %v2476
      %v2478 = vpop.f32.mrb[0].mxu0
      %2479 = vmatprep.mubr.f32.mxu0 0.0
      %2480 = vmatmul.mubr.f32.gmra.mrb[0].mxu0 %v2114
      %v2481 = vpop.f32.mrb[0].mxu0
      %v2482 = vadd.f32 %v1945, %v2481
      %v2483 = vpop.f32.mrb[0].mxu0
      %2484 = vmatprep.mubr.f32.mxu0 0.0
      %2485 = vmatmul.mubr.f32.gmra.mrb[0].mxu0 %v2117
      %v2486 = vpop.f32.mrb[0].mxu0
      %v2487 = vadd.f32 %v1945, %v2486
      %v2488 = vpop.f32.mrb[0].mxu0
      %2489 = vmatprep.mubr.f32.mxu0 0.0
      %2490 = vmatmul.mubr.f32.gmra.mrb[0].mxu0 %v2120
      %v2491 = vpop.f32.mrb[0].mxu0
      %v2492 = vadd.f32 %v1945, %v2491
      %v2493 = vpop.f32.mrb[0].mxu0
      %2494 = vmatprep.mubr.f32.mxu0 0.0
      %2495 = vmatmul.mubr.f32.gmra.mrb[0].mxu0 %v2123
      %v2496 = vpop.f32.mrb[0].mxu0
      %v2497 = vadd.f32 %v1945, %v2496
      %v2498 = vpop.f32.mrb[0].mxu0
      %2499 = vmatprep.mubr.f32.mxu0 0.0
      %2500 = vmatmul.mubr.f32.gmra.mrb[0].mxu0 %v2126
      %v2501 = vpop.f32.mrb[0].mxu0
      %v2502 = vadd.f32 %v1945, %v2501
      %v2503 = vpop.f32.mrb[0].mxu0
      %2504 = vmatprep.mubr.f32.mxu0 0.0
      %2505 = vmatmul.mubr.f32.gmra.mrb[0].mxu0 %v2129
      %v2506 = vpop.f32.mrb[0].mxu0
      %v2507 = vadd.f32 %v1945, %v2506
      %v2508 = vpop.f32.mrb[0].mxu0
      %2509 = vmatprep.mubr.f32.mxu0 0.0
      %2510 = vmatmul.mubr.f32.gmra.mrb[0].mxu0 %v2132
      %v2511 = vpop.f32.mrb[0].mxu0
      %v2512 = vadd.f32 %v1945, %v2511
      %v2513 = vpop.f32.mrb[0].mxu0
      %2514 = vmatprep.mubr.f32.mxu0 0.0
      %2515 = vmatmul.mubr.f32.gmra.mrb[0].mxu0 %v2135
      %v2516 = vpop.f32.mrb[0].mxu0
      %v2517 = vadd.f32 %v1945, %v2516
      %v2518 = vpop.f32.mrb[0].mxu0
      %2519 = vmatprep.mubr.f32.mxu0 0.0
      %2520 = vmatmul.mubr.f32.gmra.mrb[0].mxu0 %v2138
      %v2521 = vpop.f32.mrb[0].mxu0
      %v2522 = vadd.f32 %v1945, %v2521
      %v2523 = vpop.f32.mrb[0].mxu0
      %2524 = vdwg.mxu0
      %v2525 = vrot.slane %v2207, 1
      %v2526 = vrot.slane %v2212, 1
      %v2527 = vrot.slane %v2217, 1
      %v2528 = vrot.slane %v2222, 1
      %v2529 = vrot.slane %v2227, 1
      %v2530 = vrot.slane %v2232, 1
      %v2531 = vrot.slane %v2237, 1
      %v2532 = vrot.slane %v2242, 1
      %v2533 = vrot.slane %v2247, 1
      %v2534 = vrot.slane %v2252, 1
      %v2535 = vrot.slane %v2257, 1
      %v2536 = vrot.slane %v2262, 1
      %v2537 = vrot.slane %v2267, 1
      %v2538 = vrot.slane %v2272, 1
      %v2539 = vrot.slane %v2277, 1
      %v2540 = vrot.slane %v2282, 1
      %v2541 = vrot.slane %v2287, 1
      %v2542 = vrot.slane %v2292, 1
      %v2543 = vrot.slane %v2297, 1
      %v2544 = vrot.slane %v2302, 1
      %v2545 = vrot.slane %v2307, 1
      %v2546 = vrot.slane %v2312, 1
      %v2547 = vrot.slane %v2317, 1
      %v2548 = vrot.slane %v2322, 1
      %v2549 = vrot.slane %v2327, 1
      %v2550 = vrot.slane %v2332, 1
      %v2551 = vrot.slane %v2337, 1
      %v2552 = vrot.slane %v2342, 1
      %v2553 = vrot.slane %v2347, 1
      %v2554 = vrot.slane %v2352, 1
      %v2555 = vrot.slane %v2357, 1
      %v2556 = vrot.slane %v2362, 1
      %v2557 = vrot.slane %v2367, 1
      %v2558 = vrot.slane %v2372, 1
      %v2559 = vrot.slane %v2377, 1
      %v2560 = vrot.slane %v2382, 1
      %v2561 = vrot.slane %v2387, 1
      %v2562 = vrot.slane %v2392, 1
      %v2563 = vrot.slane %v2397, 1
      %v2564 = vrot.slane %v2402, 1
      %v2565 = vrot.slane %v2407, 1
      %v2566 = vrot.slane %v2412, 1
      %v2567 = vrot.slane %v2417, 1
      %v2568 = vrot.slane %v2422, 1
      %v2569 = vrot.slane %v2427, 1
      %v2570 = vrot.slane %v2432, 1
      %v2571 = vrot.slane %v2437, 1
      %v2572 = vrot.slane %v2442, 1
      %v2573 = vrot.slane %v2447, 1
      %v2574 = vrot.slane %v2452, 1
      %v2575 = vrot.slane %v2457, 1
      %v2576 = vrot.slane %v2462, 1
      %v2577 = vrot.slane %v2467, 1
      %v2578 = vrot.slane %v2472, 1
      %v2579 = vrot.slane %v2477, 1
      %v2580 = vrot.slane %v2482, 1
      %v2581 = vrot.slane %v2487, 1
      %v2582 = vrot.slane %v2492, 1
      %v2583 = vrot.slane %v2497, 1
      %v2584 = vrot.slane %v2502, 1
      %v2585 = vrot.slane %v2507, 1
      %v2586 = vrot.slane %v2512, 1
      %v2587 = vrot.slane %v2517, 1
      %v2588 = vrot.slane %v2522, 1
      %v2589 = vlaneseq
      %v2590 = vshrl.u32 %v2589, 7
      %vm2591 = vcmp.lt.s32.totalorder %v2590, 7
      %v2592 = vsel %vm2591, %v2587, %v2588
      %v2593 = vsel %vm2591, %v2586, %v2587
      %v2594 = vsel %vm2591, %v2585, %v2586
      %v2595 = vsel %vm2591, %v2584, %v2585
      %v2596 = vsel %vm2591, %v2583, %v2584
      %v2597 = vsel %vm2591, %v2582, %v2583
      %v2598 = vsel %vm2591, %v2581, %v2582
      %v2599 = vsel %vm2591, %v2580, %v2581
      %v2600 = vsel %vm2591, %v2579, %v2580
      %v2601 = vsel %vm2591, %v2578, %v2579
      %v2602 = vsel %vm2591, %v2577, %v2578
      %v2603 = vsel %vm2591, %v2576, %v2577
      %v2604 = vsel %vm2591, %v2575, %v2576
      %v2605 = vsel %vm2591, %v2574, %v2575
      %v2606 = vsel %vm2591, %v2573, %v2574
      %v2607 = vsel %vm2591, %v2572, %v2573
      %v2608 = vsel %vm2591, %v2571, %v2572
      %v2609 = vsel %vm2591, %v2570, %v2571
      %v2610 = vsel %vm2591, %v2569, %v2570
      %v2611 = vsel %vm2591, %v2568, %v2569
      %v2612 = vsel %vm2591, %v2567, %v2568
      %v2613 = vsel %vm2591, %v2566, %v2567
      %v2614 = vsel %vm2591, %v2565, %v2566
      %v2615 = vsel %vm2591, %v2564, %v2565
      %v2616 = vsel %vm2591, %v2563, %v2564
      %v2617 = vsel %vm2591, %v2562, %v2563
      %v2618 = vsel %vm2591, %v2561, %v2562
      %v2619 = vsel %vm2591, %v2560, %v2561
      %v2620 = vsel %vm2591, %v2559, %v2560
      %v2621 = vsel %vm2591, %v2558, %v2559
      %v2622 = vsel %vm2591, %v2557, %v2558
      %v2623 = vsel %vm2591, %v2556, %v2557
      %v2624 = vsel %vm2591, %v2555, %v2556
      %v2625 = vsel %vm2591, %v2554, %v2555
      %v2626 = vsel %vm2591, %v2553, %v2554
      %v2627 = vsel %vm2591, %v2552, %v2553
      %v2628 = vsel %vm2591, %v2551, %v2552
      %v2629 = vsel %vm2591, %v2550, %v2551
      %v2630 = vsel %vm2591, %v2549, %v2550
      %v2631 = vsel %vm2591, %v2548, %v2549
      %v2632 = vsel %vm2591, %v2547, %v2548
      %v2633 = vsel %vm2591, %v2546, %v2547
      %v2634 = vsel %vm2591, %v2545, %v2546
      %v2635 = vsel %vm2591, %v2544, %v2545
      %v2636 = vsel %vm2591, %v2543, %v2544
      %v2637 = vsel %vm2591, %v2542, %v2543
      %v2638 = vsel %vm2591, %v2541, %v2542
      %v2639 = vsel %vm2591, %v2540, %v2541
      %v2640 = vsel %vm2591, %v2539, %v2540
      %v2641 = vsel %vm2591, %v2538, %v2539
      %v2642 = vsel %vm2591, %v2537, %v2538
      %v2643 = vsel %vm2591, %v2536, %v2537
      %v2644 = vsel %vm2591, %v2535, %v2536
      %v2645 = vsel %vm2591, %v2534, %v2535
      %v2646 = vsel %vm2591, %v2533, %v2534
      %v2647 = vsel %vm2591, %v2532, %v2533
      %v2648 = vsel %vm2591, %v2531, %v2532
      %v2649 = vsel %vm2591, %v2530, %v2531
      %v2650 = vsel %vm2591, %v2529, %v2530
      %v2651 = vsel %vm2591, %v2528, %v2529
      %v2652 = vsel %vm2591, %v2527, %v2528
      %v2653 = vsel %vm2591, %v2526, %v2527
      %v2654 = vsel %vm2591, %v2525, %v2526
      %v2655 = vsel %vm2591, %v2588, %v2525
      %v2656 = vrot.slane %v2207, 7
      %v2657 = vrot.slane %v2212, 7
      %v2658 = vrot.slane %v2217, 7
      %v2659 = vrot.slane %v2222, 7
      %v2660 = vrot.slane %v2227, 7
      %v2661 = vrot.slane %v2232, 7
      %v2662 = vrot.slane %v2237, 7
      %v2663 = vrot.slane %v2242, 7
      %v2664 = vrot.slane %v2247, 7
      %v2665 = vrot.slane %v2252, 7
      %v2666 = vrot.slane %v2257, 7
      %v2667 = vrot.slane %v2262, 7
      %v2668 = vrot.slane %v2267, 7
      %v2669 = vrot.slane %v2272, 7
      %v2670 = vrot.slane %v2277, 7
      %v2671 = vrot.slane %v2282, 7
      %v2672 = vrot.slane %v2287, 7
      %v2673 = vrot.slane %v2292, 7
      %v2674 = vrot.slane %v2297, 7
      %v2675 = vrot.slane %v2302, 7
      %v2676 = vrot.slane %v2307, 7
      %v2677 = vrot.slane %v2312, 7
      %v2678 = vrot.slane %v2317, 7
      %v2679 = vrot.slane %v2322, 7
      %v2680 = vrot.slane %v2327, 7
      %v2681 = vrot.slane %v2332, 7
      %v2682 = vrot.slane %v2337, 7
      %v2683 = vrot.slane %v2342, 7
      %v2684 = vrot.slane %v2347, 7
      %v2685 = vrot.slane %v2352, 7
      %v2686 = vrot.slane %v2357, 7
      %v2687 = vrot.slane %v2362, 7
      %v2688 = vrot.slane %v2367, 7
      %v2689 = vrot.slane %v2372, 7
      %v2690 = vrot.slane %v2377, 7
      %v2691 = vrot.slane %v2382, 7
      %v2692 = vrot.slane %v2387, 7
      %v2693 = vrot.slane %v2392, 7
      %v2694 = vrot.slane %v2397, 7
      %v2695 = vrot.slane %v2402, 7
      %v2696 = vrot.slane %v2407, 7
      %v2697 = vrot.slane %v2412, 7
      %v2698 = vrot.slane %v2417, 7
      %v2699 = vrot.slane %v2422, 7
      %v2700 = vrot.slane %v2427, 7
      %v2701 = vrot.slane %v2432, 7
      %v2702 = vrot.slane %v2437, 7
      %v2703 = vrot.slane %v2442, 7
      %v2704 = vrot.slane %v2447, 7
      %v2705 = vrot.slane %v2452, 7
      %v2706 = vrot.slane %v2457, 7
      %v2707 = vrot.slane %v2462, 7
      %v2708 = vrot.slane %v2467, 7
      %v2709 = vrot.slane %v2472, 7
      %v2710 = vrot.slane %v2477, 7
      %v2711 = vrot.slane %v2482, 7
      %v2712 = vrot.slane %v2487, 7
      %v2713 = vrot.slane %v2492, 7
      %v2714 = vrot.slane %v2497, 7
      %v2715 = vrot.slane %v2502, 7
      %v2716 = vrot.slane %v2507, 7
      %v2717 = vrot.slane %v2512, 7
      %v2718 = vrot.slane %v2517, 7
      %v2719 = vrot.slane %v2522, 7
      %vm2720 = vcmp.lt.s32.totalorder %v2590, 1
      %v2721 = vsel %vm2720, %v2718, %v2719
      %v2722 = vsel %vm2720, %v2717, %v2718
      %v2723 = vsel %vm2720, %v2716, %v2717
      %v2724 = vsel %vm2720, %v2715, %v2716
      %v2725 = vsel %vm2720, %v2714, %v2715
      %v2726 = vsel %vm2720, %v2713, %v2714
      %v2727 = vsel %vm2720, %v2712, %v2713
      %v2728 = vsel %vm2720, %v2711, %v2712
      %v2729 = vsel %vm2720, %v2710, %v2711
      %v2730 = vsel %vm2720, %v2709, %v2710
      %v2731 = vsel %vm2720, %v2708, %v2709
      %v2732 = vsel %vm2720, %v2707, %v2708
      %v2733 = vsel %vm2720, %v2706, %v2707
      %v2734 = vsel %vm2720, %v2705, %v2706
      %v2735 = vsel %vm2720, %v2704, %v2705
      %v2736 = vsel %vm2720, %v2703, %v2704
      %v2737 = vsel %vm2720, %v2702, %v2703
      %v2738 = vsel %vm2720, %v2701, %v2702
      %v2739 = vsel %vm2720, %v2700, %v2701
      %v2740 = vsel %vm2720, %v2699, %v2700
      %v2741 = vsel %vm2720, %v2698, %v2699
      %v2742 = vsel %vm2720, %v2697, %v2698
      %v2743 = vsel %vm2720, %v2696, %v2697
      %v2744 = vsel %vm2720, %v2695, %v2696
      %v2745 = vsel %vm2720, %v2694, %v2695
      %v2746 = vsel %vm2720, %v2693, %v2694
      %v2747 = vsel %vm2720, %v2692, %v2693
      %v2748 = vsel %vm2720, %v2691, %v2692
      %v2749 = vsel %vm2720, %v2690, %v2691
      %v2750 = vsel %vm2720, %v2689, %v2690
      %v2751 = vsel %vm2720, %v2688, %v2689
      %v2752 = vsel %vm2720, %v2687, %v2688
      %v2753 = vsel %vm2720, %v2686, %v2687
      %v2754 = vsel %vm2720, %v2685, %v2686
      %v2755 = vsel %vm2720, %v2684, %v2685
      %v2756 = vsel %vm2720, %v2683, %v2684
      %v2757 = vsel %vm2720, %v2682, %v2683
      %v2758 = vsel %vm2720, %v2681, %v2682
      %v2759 = vsel %vm2720, %v2680, %v2681
      %v2760 = vsel %vm2720, %v2679, %v2680
      %v2761 = vsel %vm2720, %v2678, %v2679
      %v2762 = vsel %vm2720, %v2677, %v2678
      %v2763 = vsel %vm2720, %v2676, %v2677
      %v2764 = vsel %vm2720, %v2675, %v2676
      %v2765 = vsel %vm2720, %v2674, %v2675
      %v2766 = vsel %vm2720, %v2673, %v2674
      %v2767 = vsel %vm2720, %v2672, %v2673
      %v2768 = vsel %vm2720, %v2671, %v2672
      %v2769 = vsel %vm2720, %v2670, %v2671
      %v2770 = vsel %vm2720, %v2669, %v2670
      %v2771 = vsel %vm2720, %v2668, %v2669
      %v2772 = vsel %vm2720, %v2667, %v2668
      %v2773 = vsel %vm2720, %v2666, %v2667
      %v2774 = vsel %vm2720, %v2665, %v2666
      %v2775 = vsel %vm2720, %v2664, %v2665
      %v2776 = vsel %vm2720, %v2663, %v2664
      %v2777 = vsel %vm2720, %v2662, %v2663
      %v2778 = vsel %vm2720, %v2661, %v2662
      %v2779 = vsel %vm2720, %v2660, %v2661
      %v2780 = vsel %vm2720, %v2659, %v2660
      %v2781 = vsel %vm2720, %v2658, %v2659
      %v2782 = vsel %vm2720, %v2657, %v2658
      %v2783 = vsel %vm2720, %v2656, %v2657
      %v2784 = vsel %vm2720, %v2719, %v2656
      %v2785 = vadd.s32 %v2590, 8
      %v2786 = vadd.s32 %v2590, 16
      %v2787 = vadd.s32 %v2590, 24
      %v2788 = vadd.s32 %v2590, 32
      %v2789 = vadd.s32 %v2590, 40
      %v2790 = vadd.s32 %v2590, 48
      %v2791 = vadd.s32 %v2590, 56
      %v2792 = vadd.s32 %v2590, 64
      %v2793 = vadd.s32 %v2590, 72
      %v2794 = vadd.s32 %v2590, 80
      %v2795 = vadd.s32 %v2590, 88
      %v2796 = vadd.s32 %v2590, 96
      %v2797 = vadd.s32 %v2590, 104
      %v2798 = vadd.s32 %v2590, 112
      %v2799 = vadd.s32 %v2590, 120
      %v2800 = vadd.s32 %v2590, 128
      %v2801 = vadd.s32 %v2590, 136
      %v2802 = vadd.s32 %v2590, 144
      %v2803 = vadd.s32 %v2590, 152
      %v2804 = vadd.s32 %v2590, 160
      %v2805 = vadd.s32 %v2590, 168
      %v2806 = vadd.s32 %v2590, 176
      %v2807 = vadd.s32 %v2590, 184
      %v2808 = vadd.s32 %v2590, 192
      %v2809 = vadd.s32 %v2590, 200
      %v2810 = vadd.s32 %v2590, 208
      %v2811 = vadd.s32 %v2590, 216
      %v2812 = vadd.s32 %v2590, 224
      %v2813 = vadd.s32 %v2590, 232
      %v2814 = vadd.s32 %v2590, 240
      %v2815 = vadd.s32 %v2590, 248
      %v2816 = vadd.s32 %v2590, 256
      %v2817 = vadd.s32 %v2590, 264
      %v2818 = vadd.s32 %v2590, 272
      %v2819 = vadd.s32 %v2590, 280
      %v2820 = vadd.s32 %v2590, 288
      %v2821 = vadd.s32 %v2590, 296
      %v2822 = vadd.s32 %v2590, 304
      %v2823 = vadd.s32 %v2590, 312
      %v2824 = vadd.s32 %v2590, 320
      %v2825 = vadd.s32 %v2590, 328
      %v2826 = vadd.s32 %v2590, 336
      %v2827 = vadd.s32 %v2590, 344
      %v2828 = vadd.s32 %v2590, 352
      %v2829 = vadd.s32 %v2590, 360
      %v2830 = vadd.s32 %v2590, 368
      %v2831 = vadd.s32 %v2590, 376
      %v2832 = vadd.s32 %v2590, 384
      %v2833 = vadd.s32 %v2590, 392
      %v2834 = vadd.s32 %v2590, 400
      %v2835 = vadd.s32 %v2590, 408
      %v2836 = vadd.s32 %v2590, 416
      %v2837 = vadd.s32 %v2590, 424
      %v2838 = vadd.s32 %v2590, 432
      %v2839 = vadd.s32 %v2590, 440
      %v2840 = vadd.s32 %v2590, 448
      %v2841 = vadd.s32 %v2590, 456
      %v2842 = vadd.s32 %v2590, 464
      %v2843 = vadd.s32 %v2590, 472
      %v2844 = vadd.s32 %v2590, 480
      %v2845 = vadd.s32 %v2590, 488
      %v2846 = vadd.s32 %v2590, 496
      %v2847 = vadd.s32 %v2590, 504
      %vm2848 = vcmp.lt.s32.totalorder %v2590, 0
      %v2849 = vsub.s32 0, %v2590
      %v2850 = vsel %vm2848, %v2849, %v2590
      %v2851 = vshrl.u32 %v2850, 1
      %v2852 = vand.u32 %v2850, 1
      %v2853 = vsub.s32 0, %v2852
      %v2854 = vsel %vm2848, %v2853, %v2852
      %vm2855 = vcmp.lt.s32.totalorder %v2785, 0
      %v2856 = vsub.s32 0, %v2785
      %v2857 = vsel %vm2855, %v2856, %v2785
      %v2858 = vshrl.u32 %v2857, 1
      %v2859 = vand.u32 %v2857, 1
      %v2860 = vsub.s32 0, %v2859
      %v2861 = vsel %vm2855, %v2860, %v2859
      %vm2862 = vcmp.lt.s32.totalorder %v2786, 0
      %v2863 = vsub.s32 0, %v2786
      %v2864 = vsel %vm2862, %v2863, %v2786
      %v2865 = vshrl.u32 %v2864, 1
      %v2866 = vand.u32 %v2864, 1
      %v2867 = vsub.s32 0, %v2866
      %v2868 = vsel %vm2862, %v2867, %v2866
      %vm2869 = vcmp.lt.s32.totalorder %v2787, 0
      %v2870 = vsub.s32 0, %v2787
      %v2871 = vsel %vm2869, %v2870, %v2787
      %v2872 = vshrl.u32 %v2871, 1
      %v2873 = vand.u32 %v2871, 1
      %v2874 = vsub.s32 0, %v2873
      %v2875 = vsel %vm2869, %v2874, %v2873
      %vm2876 = vcmp.lt.s32.totalorder %v2788, 0
      %v2877 = vsub.s32 0, %v2788
      %v2878 = vsel %vm2876, %v2877, %v2788
      %v2879 = vshrl.u32 %v2878, 1
      %v2880 = vand.u32 %v2878, 1
      %v2881 = vsub.s32 0, %v2880
      %v2882 = vsel %vm2876, %v2881, %v2880
      %vm2883 = vcmp.lt.s32.totalorder %v2789, 0
      %v2884 = vsub.s32 0, %v2789
      %v2885 = vsel %vm2883, %v2884, %v2789
      %v2886 = vshrl.u32 %v2885, 1
      %v2887 = vand.u32 %v2885, 1
      %v2888 = vsub.s32 0, %v2887
      %v2889 = vsel %vm2883, %v2888, %v2887
      %vm2890 = vcmp.lt.s32.totalorder %v2790, 0
      %v2891 = vsub.s32 0, %v2790
      %v2892 = vsel %vm2890, %v2891, %v2790
      %v2893 = vshrl.u32 %v2892, 1
      %v2894 = vand.u32 %v2892, 1
      %v2895 = vsub.s32 0, %v2894
      %v2896 = vsel %vm2890, %v2895, %v2894
      %vm2897 = vcmp.lt.s32.totalorder %v2791, 0
      %v2898 = vsub.s32 0, %v2791
      %v2899 = vsel %vm2897, %v2898, %v2791
      %v2900 = vshrl.u32 %v2899, 1
      %v2901 = vand.u32 %v2899, 1
      %v2902 = vsub.s32 0, %v2901
      %v2903 = vsel %vm2897, %v2902, %v2901
      %vm2904 = vcmp.lt.s32.totalorder %v2792, 0
      %v2905 = vsub.s32 0, %v2792
      %v2906 = vsel %vm2904, %v2905, %v2792
      %v2907 = vshrl.u32 %v2906, 1
      %v2908 = vand.u32 %v2906, 1
      %v2909 = vsub.s32 0, %v2908
      %v2910 = vsel %vm2904, %v2909, %v2908
      %vm2911 = vcmp.lt.s32.totalorder %v2793, 0
      %v2912 = vsub.s32 0, %v2793
      %v2913 = vsel %vm2911, %v2912, %v2793
      %v2914 = vshrl.u32 %v2913, 1
      %v2915 = vand.u32 %v2913, 1
      %v2916 = vsub.s32 0, %v2915
      %v2917 = vsel %vm2911, %v2916, %v2915
      %vm2918 = vcmp.lt.s32.totalorder %v2794, 0
      %v2919 = vsub.s32 0, %v2794
      %v2920 = vsel %vm2918, %v2919, %v2794
      %v2921 = vshrl.u32 %v2920, 1
      %v2922 = vand.u32 %v2920, 1
      %v2923 = vsub.s32 0, %v2922
      %v2924 = vsel %vm2918, %v2923, %v2922
      %vm2925 = vcmp.lt.s32.totalorder %v2795, 0
      %v2926 = vsub.s32 0, %v2795
      %v2927 = vsel %vm2925, %v2926, %v2795
      %v2928 = vshrl.u32 %v2927, 1
      %v2929 = vand.u32 %v2927, 1
      %v2930 = vsub.s32 0, %v2929
      %v2931 = vsel %vm2925, %v2930, %v2929
      %vm2932 = vcmp.lt.s32.totalorder %v2796, 0
      %v2933 = vsub.s32 0, %v2796
      %v2934 = vsel %vm2932, %v2933, %v2796
      %v2935 = vshrl.u32 %v2934, 1
      %v2936 = vand.u32 %v2934, 1
      %v2937 = vsub.s32 0, %v2936
      %v2938 = vsel %vm2932, %v2937, %v2936
      %vm2939 = vcmp.lt.s32.totalorder %v2797, 0
      %v2940 = vsub.s32 0, %v2797
      %v2941 = vsel %vm2939, %v2940, %v2797
      %v2942 = vshrl.u32 %v2941, 1
      %v2943 = vand.u32 %v2941, 1
      %v2944 = vsub.s32 0, %v2943
      %v2945 = vsel %vm2939, %v2944, %v2943
      %vm2946 = vcmp.lt.s32.totalorder %v2798, 0
      %v2947 = vsub.s32 0, %v2798
      %v2948 = vsel %vm2946, %v2947, %v2798
      %v2949 = vshrl.u32 %v2948, 1
      %v2950 = vand.u32 %v2948, 1
      %v2951 = vsub.s32 0, %v2950
      %v2952 = vsel %vm2946, %v2951, %v2950
      %vm2953 = vcmp.lt.s32.totalorder %v2799, 0
      %v2954 = vsub.s32 0, %v2799
      %v2955 = vsel %vm2953, %v2954, %v2799
      %v2956 = vshrl.u32 %v2955, 1
      %v2957 = vand.u32 %v2955, 1
      %v2958 = vsub.s32 0, %v2957
      %v2959 = vsel %vm2953, %v2958, %v2957
      %vm2960 = vcmp.lt.s32.totalorder %v2800, 0
      %v2961 = vsub.s32 0, %v2800
      %v2962 = vsel %vm2960, %v2961, %v2800
      %v2963 = vshrl.u32 %v2962, 1
      %v2964 = vand.u32 %v2962, 1
      %v2965 = vsub.s32 0, %v2964
      %v2966 = vsel %vm2960, %v2965, %v2964
      %vm2967 = vcmp.lt.s32.totalorder %v2801, 0
      %v2968 = vsub.s32 0, %v2801
      %v2969 = vsel %vm2967, %v2968, %v2801
      %v2970 = vshrl.u32 %v2969, 1
      %v2971 = vand.u32 %v2969, 1
      %v2972 = vsub.s32 0, %v2971
      %v2973 = vsel %vm2967, %v2972, %v2971
      %vm2974 = vcmp.lt.s32.totalorder %v2802, 0
      %v2975 = vsub.s32 0, %v2802
      %v2976 = vsel %vm2974, %v2975, %v2802
      %v2977 = vshrl.u32 %v2976, 1
      %v2978 = vand.u32 %v2976, 1
      %v2979 = vsub.s32 0, %v2978
      %v2980 = vsel %vm2974, %v2979, %v2978
      %vm2981 = vcmp.lt.s32.totalorder %v2803, 0
      %v2982 = vsub.s32 0, %v2803
      %v2983 = vsel %vm2981, %v2982, %v2803
      %v2984 = vshrl.u32 %v2983, 1
      %v2985 = vand.u32 %v2983, 1
      %v2986 = vsub.s32 0, %v2985
      %v2987 = vsel %vm2981, %v2986, %v2985
      %vm2988 = vcmp.lt.s32.totalorder %v2804, 0
      %v2989 = vsub.s32 0, %v2804
      %v2990 = vsel %vm2988, %v2989, %v2804
      %v2991 = vshrl.u32 %v2990, 1
      %v2992 = vand.u32 %v2990, 1
      %v2993 = vsub.s32 0, %v2992
      %v2994 = vsel %vm2988, %v2993, %v2992
      %vm2995 = vcmp.lt.s32.totalorder %v2805, 0
      %v2996 = vsub.s32 0, %v2805
      %v2997 = vsel %vm2995, %v2996, %v2805
      %v2998 = vshrl.u32 %v2997, 1
      %v2999 = vand.u32 %v2997, 1
      %v3000 = vsub.s32 0, %v2999
      %v3001 = vsel %vm2995, %v3000, %v2999
      %vm3002 = vcmp.lt.s32.totalorder %v2806, 0
      %v3003 = vsub.s32 0, %v2806
      %v3004 = vsel %vm3002, %v3003, %v2806
      %v3005 = vshrl.u32 %v3004, 1
      %v3006 = vand.u32 %v3004, 1
      %v3007 = vsub.s32 0, %v3006
      %v3008 = vsel %vm3002, %v3007, %v3006
      %vm3009 = vcmp.lt.s32.totalorder %v2807, 0
      %v3010 = vsub.s32 0, %v2807
      %v3011 = vsel %vm3009, %v3010, %v2807
      %v3012 = vshrl.u32 %v3011, 1
      %v3013 = vand.u32 %v3011, 1
      %v3014 = vsub.s32 0, %v3013
      %v3015 = vsel %vm3009, %v3014, %v3013
      %vm3016 = vcmp.lt.s32.totalorder %v2808, 0
      %v3017 = vsub.s32 0, %v2808
      %v3018 = vsel %vm3016, %v3017, %v2808
      %v3019 = vshrl.u32 %v3018, 1
      %v3020 = vand.u32 %v3018, 1
      %v3021 = vsub.s32 0, %v3020
      %v3022 = vsel %vm3016, %v3021, %v3020
      %vm3023 = vcmp.lt.s32.totalorder %v2809, 0
      %v3024 = vsub.s32 0, %v2809
      %v3025 = vsel %vm3023, %v3024, %v2809
      %v3026 = vshrl.u32 %v3025, 1
      %v3027 = vand.u32 %v3025, 1
      %v3028 = vsub.s32 0, %v3027
      %v3029 = vsel %vm3023, %v3028, %v3027
      %vm3030 = vcmp.lt.s32.totalorder %v2810, 0
      %v3031 = vsub.s32 0, %v2810
      %v3032 = vsel %vm3030, %v3031, %v2810
      %v3033 = vshrl.u32 %v3032, 1
      %v3034 = vand.u32 %v3032, 1
      %v3035 = vsub.s32 0, %v3034
      %v3036 = vsel %vm3030, %v3035, %v3034
      %vm3037 = vcmp.lt.s32.totalorder %v2811, 0
      %v3038 = vsub.s32 0, %v2811
      %v3039 = vsel %vm3037, %v3038, %v2811
      %v3040 = vshrl.u32 %v3039, 1
      %v3041 = vand.u32 %v3039, 1
      %v3042 = vsub.s32 0, %v3041
      %v3043 = vsel %vm3037, %v3042, %v3041
      %vm3044 = vcmp.lt.s32.totalorder %v2812, 0
      %v3045 = vsub.s32 0, %v2812
      %v3046 = vsel %vm3044, %v3045, %v2812
      %v3047 = vshrl.u32 %v3046, 1
      %v3048 = vand.u32 %v3046, 1
      %v3049 = vsub.s32 0, %v3048
      %v3050 = vsel %vm3044, %v3049, %v3048
      %vm3051 = vcmp.lt.s32.totalorder %v2813, 0
      %v3052 = vsub.s32 0, %v2813
      %v3053 = vsel %vm3051, %v3052, %v2813
      %v3054 = vshrl.u32 %v3053, 1
      %v3055 = vand.u32 %v3053, 1
      %v3056 = vsub.s32 0, %v3055
      %v3057 = vsel %vm3051, %v3056, %v3055
      %vm3058 = vcmp.lt.s32.totalorder %v2814, 0
      %v3059 = vsub.s32 0, %v2814
      %v3060 = vsel %vm3058, %v3059, %v2814
      %v3061 = vshrl.u32 %v3060, 1
      %v3062 = vand.u32 %v3060, 1
      %v3063 = vsub.s32 0, %v3062
      %v3064 = vsel %vm3058, %v3063, %v3062
      %vm3065 = vcmp.lt.s32.totalorder %v2815, 0
      %v3066 = vsub.s32 0, %v2815
      %v3067 = vsel %vm3065, %v3066, %v2815
      %v3068 = vshrl.u32 %v3067, 1
      %v3069 = vand.u32 %v3067, 1
      %v3070 = vsub.s32 0, %v3069
      %v3071 = vsel %vm3065, %v3070, %v3069
      %vm3072 = vcmp.lt.s32.totalorder %v2816, 0
      %v3073 = vsub.s32 0, %v2816
      %v3074 = vsel %vm3072, %v3073, %v2816
      %v3075 = vshrl.u32 %v3074, 1
      %v3076 = vand.u32 %v3074, 1
      %v3077 = vsub.s32 0, %v3076
      %v3078 = vsel %vm3072, %v3077, %v3076
      %vm3079 = vcmp.lt.s32.totalorder %v2817, 0
      %v3080 = vsub.s32 0, %v2817
      %v3081 = vsel %vm3079, %v3080, %v2817
      %v3082 = vshrl.u32 %v3081, 1
      %v3083 = vand.u32 %v3081, 1
      %v3084 = vsub.s32 0, %v3083
      %v3085 = vsel %vm3079, %v3084, %v3083
      %vm3086 = vcmp.lt.s32.totalorder %v2818, 0
      %v3087 = vsub.s32 0, %v2818
      %v3088 = vsel %vm3086, %v3087, %v2818
      %v3089 = vshrl.u32 %v3088, 1
      %v3090 = vand.u32 %v3088, 1
      %v3091 = vsub.s32 0, %v3090
      %v3092 = vsel %vm3086, %v3091, %v3090
      %vm3093 = vcmp.lt.s32.totalorder %v2819, 0
      %v3094 = vsub.s32 0, %v2819
      %v3095 = vsel %vm3093, %v3094, %v2819
      %v3096 = vshrl.u32 %v3095, 1
      %v3097 = vand.u32 %v3095, 1
      %v3098 = vsub.s32 0, %v3097
      %v3099 = vsel %vm3093, %v3098, %v3097
      %vm3100 = vcmp.lt.s32.totalorder %v2820, 0
      %v3101 = vsub.s32 0, %v2820
      %v3102 = vsel %vm3100, %v3101, %v2820
      %v3103 = vshrl.u32 %v3102, 1
      %v3104 = vand.u32 %v3102, 1
      %v3105 = vsub.s32 0, %v3104
      %v3106 = vsel %vm3100, %v3105, %v3104
      %vm3107 = vcmp.lt.s32.totalorder %v2821, 0
      %v3108 = vsub.s32 0, %v2821
      %v3109 = vsel %vm3107, %v3108, %v2821
      %v3110 = vshrl.u32 %v3109, 1
      %v3111 = vand.u32 %v3109, 1
      %v3112 = vsub.s32 0, %v3111
      %v3113 = vsel %vm3107, %v3112, %v3111
      %vm3114 = vcmp.lt.s32.totalorder %v2822, 0
      %v3115 = vsub.s32 0, %v2822
      %v3116 = vsel %vm3114, %v3115, %v2822
      %v3117 = vshrl.u32 %v3116, 1
      %v3118 = vand.u32 %v3116, 1
      %v3119 = vsub.s32 0, %v3118
      %v3120 = vsel %vm3114, %v3119, %v3118
      %vm3121 = vcmp.lt.s32.totalorder %v2823, 0
      %v3122 = vsub.s32 0, %v2823
      %v3123 = vsel %vm3121, %v3122, %v2823
      %v3124 = vshrl.u32 %v3123, 1
      %v3125 = vand.u32 %v3123, 1
      %v3126 = vsub.s32 0, %v3125
      %v3127 = vsel %vm3121, %v3126, %v3125
      %vm3128 = vcmp.lt.s32.totalorder %v2824, 0
      %v3129 = vsub.s32 0, %v2824
      %v3130 = vsel %vm3128, %v3129, %v2824
      %v3131 = vshrl.u32 %v3130, 1
      %v3132 = vand.u32 %v3130, 1
      %v3133 = vsub.s32 0, %v3132
      %v3134 = vsel %vm3128, %v3133, %v3132
      %vm3135 = vcmp.lt.s32.totalorder %v2825, 0
      %v3136 = vsub.s32 0, %v2825
      %v3137 = vsel %vm3135, %v3136, %v2825
      %v3138 = vshrl.u32 %v3137, 1
      %v3139 = vand.u32 %v3137, 1
      %v3140 = vsub.s32 0, %v3139
      %v3141 = vsel %vm3135, %v3140, %v3139
      %vm3142 = vcmp.lt.s32.totalorder %v2826, 0
      %v3143 = vsub.s32 0, %v2826
      %v3144 = vsel %vm3142, %v3143, %v2826
      %v3145 = vshrl.u32 %v3144, 1
      %v3146 = vand.u32 %v3144, 1
      %v3147 = vsub.s32 0, %v3146
      %v3148 = vsel %vm3142, %v3147, %v3146
      %vm3149 = vcmp.lt.s32.totalorder %v2827, 0
      %v3150 = vsub.s32 0, %v2827
      %v3151 = vsel %vm3149, %v3150, %v2827
      %v3152 = vshrl.u32 %v3151, 1
      %v3153 = vand.u32 %v3151, 1
      %v3154 = vsub.s32 0, %v3153
      %v3155 = vsel %vm3149, %v3154, %v3153
      %vm3156 = vcmp.lt.s32.totalorder %v2828, 0
      %v3157 = vsub.s32 0, %v2828
      %v3158 = vsel %vm3156, %v3157, %v2828
      %v3159 = vshrl.u32 %v3158, 1
      %v3160 = vand.u32 %v3158, 1
      %v3161 = vsub.s32 0, %v3160
      %v3162 = vsel %vm3156, %v3161, %v3160
      %vm3163 = vcmp.lt.s32.totalorder %v2829, 0
      %v3164 = vsub.s32 0, %v2829
      %v3165 = vsel %vm3163, %v3164, %v2829
      %v3166 = vshrl.u32 %v3165, 1
      %v3167 = vand.u32 %v3165, 1
      %v3168 = vsub.s32 0, %v3167
      %v3169 = vsel %vm3163, %v3168, %v3167
      %vm3170 = vcmp.lt.s32.totalorder %v2830, 0
      %v3171 = vsub.s32 0, %v2830
      %v3172 = vsel %vm3170, %v3171, %v2830
      %v3173 = vshrl.u32 %v3172, 1
      %v3174 = vand.u32 %v3172, 1
      %v3175 = vsub.s32 0, %v3174
      %v3176 = vsel %vm3170, %v3175, %v3174
      %vm3177 = vcmp.lt.s32.totalorder %v2831, 0
      %v3178 = vsub.s32 0, %v2831
      %v3179 = vsel %vm3177, %v3178, %v2831
      %v3180 = vshrl.u32 %v3179, 1
      %v3181 = vand.u32 %v3179, 1
      %v3182 = vsub.s32 0, %v3181
      %v3183 = vsel %vm3177, %v3182, %v3181
      %vm3184 = vcmp.lt.s32.totalorder %v2832, 0
      %v3185 = vsub.s32 0, %v2832
      %v3186 = vsel %vm3184, %v3185, %v2832
      %v3187 = vshrl.u32 %v3186, 1
      %v3188 = vand.u32 %v3186, 1
      %v3189 = vsub.s32 0, %v3188
      %v3190 = vsel %vm3184, %v3189, %v3188
      %vm3191 = vcmp.lt.s32.totalorder %v2833, 0
      %v3192 = vsub.s32 0, %v2833
      %v3193 = vsel %vm3191, %v3192, %v2833
      %v3194 = vshrl.u32 %v3193, 1
      %v3195 = vand.u32 %v3193, 1
      %v3196 = vsub.s32 0, %v3195
      %v3197 = vsel %vm3191, %v3196, %v3195
      %vm3198 = vcmp.lt.s32.totalorder %v2834, 0
      %v3199 = vsub.s32 0, %v2834
      %v3200 = vsel %vm3198, %v3199, %v2834
      %v3201 = vshrl.u32 %v3200, 1
      %v3202 = vand.u32 %v3200, 1
      %v3203 = vsub.s32 0, %v3202
      %v3204 = vsel %vm3198, %v3203, %v3202
      %vm3205 = vcmp.lt.s32.totalorder %v2835, 0
      %v3206 = vsub.s32 0, %v2835
      %v3207 = vsel %vm3205, %v3206, %v2835
      %v3208 = vshrl.u32 %v3207, 1
      %v3209 = vand.u32 %v3207, 1
      %v3210 = vsub.s32 0, %v3209
      %v3211 = vsel %vm3205, %v3210, %v3209
      %vm3212 = vcmp.lt.s32.totalorder %v2836, 0
      %v3213 = vsub.s32 0, %v2836
      %v3214 = vsel %vm3212, %v3213, %v2836
      %v3215 = vshrl.u32 %v3214, 1
      %v3216 = vand.u32 %v3214, 1
      %v3217 = vsub.s32 0, %v3216
      %v3218 = vsel %vm3212, %v3217, %v3216
      %vm3219 = vcmp.lt.s32.totalorder %v2837, 0
      %v3220 = vsub.s32 0, %v2837
      %v3221 = vsel %vm3219, %v3220, %v2837
      %v3222 = vshrl.u32 %v3221, 1
      %v3223 = vand.u32 %v3221, 1
      %v3224 = vsub.s32 0, %v3223
      %v3225 = vsel %vm3219, %v3224, %v3223
      %vm3226 = vcmp.lt.s32.totalorder %v2838, 0
      %v3227 = vsub.s32 0, %v2838
      %v3228 = vsel %vm3226, %v3227, %v2838
      %v3229 = vshrl.u32 %v3228, 1
      %v3230 = vand.u32 %v3228, 1
      %v3231 = vsub.s32 0, %v3230
      %v3232 = vsel %vm3226, %v3231, %v3230
      %vm3233 = vcmp.lt.s32.totalorder %v2839, 0
      %v3234 = vsub.s32 0, %v2839
      %v3235 = vsel %vm3233, %v3234, %v2839
      %v3236 = vshrl.u32 %v3235, 1
      %v3237 = vand.u32 %v3235, 1
      %v3238 = vsub.s32 0, %v3237
      %v3239 = vsel %vm3233, %v3238, %v3237
      %vm3240 = vcmp.lt.s32.totalorder %v2840, 0
      %v3241 = vsub.s32 0, %v2840
      %v3242 = vsel %vm3240, %v3241, %v2840
      %v3243 = vshrl.u32 %v3242, 1
      %v3244 = vand.u32 %v3242, 1
      %v3245 = vsub.s32 0, %v3244
      %v3246 = vsel %vm3240, %v3245, %v3244
      %vm3247 = vcmp.lt.s32.totalorder %v2841, 0
      %v3248 = vsub.s32 0, %v2841
      %v3249 = vsel %vm3247, %v3248, %v2841
      %v3250 = vshrl.u32 %v3249, 1
      %v3251 = vand.u32 %v3249, 1
      %v3252 = vsub.s32 0, %v3251
      %v3253 = vsel %vm3247, %v3252, %v3251
      %vm3254 = vcmp.lt.s32.totalorder %v2842, 0
      %v3255 = vsub.s32 0, %v2842
      %v3256 = vsel %vm3254, %v3255, %v2842
      %v3257 = vshrl.u32 %v3256, 1
      %v3258 = vand.u32 %v3256, 1
      %v3259 = vsub.s32 0, %v3258
      %v3260 = vsel %vm3254, %v3259, %v3258
      %vm3261 = vcmp.lt.s32.totalorder %v2843, 0
      %v3262 = vsub.s32 0, %v2843
      %v3263 = vsel %vm3261, %v3262, %v2843
      %v3264 = vshrl.u32 %v3263, 1
      %v3265 = vand.u32 %v3263, 1
      %v3266 = vsub.s32 0, %v3265
      %v3267 = vsel %vm3261, %v3266, %v3265
      %vm3268 = vcmp.lt.s32.totalorder %v2844, 0
      %v3269 = vsub.s32 0, %v2844
      %v3270 = vsel %vm3268, %v3269, %v2844
      %v3271 = vshrl.u32 %v3270, 1
      %v3272 = vand.u32 %v3270, 1
      %v3273 = vsub.s32 0, %v3272
      %v3274 = vsel %vm3268, %v3273, %v3272
      %vm3275 = vcmp.lt.s32.totalorder %v2845, 0
      %v3276 = vsub.s32 0, %v2845
      %v3277 = vsel %vm3275, %v3276, %v2845
      %v3278 = vshrl.u32 %v3277, 1
      %v3279 = vand.u32 %v3277, 1
      %v3280 = vsub.s32 0, %v3279
      %v3281 = vsel %vm3275, %v3280, %v3279
      %vm3282 = vcmp.lt.s32.totalorder %v2846, 0
      %v3283 = vsub.s32 0, %v2846
      %v3284 = vsel %vm3282, %v3283, %v2846
      %v3285 = vshrl.u32 %v3284, 1
      %v3286 = vand.u32 %v3284, 1
      %v3287 = vsub.s32 0, %v3286
      %v3288 = vsel %vm3282, %v3287, %v3286
      %vm3289 = vcmp.lt.s32.totalorder %v2847, 0
      %v3290 = vsub.s32 0, %v2847
      %v3291 = vsel %vm3289, %v3290, %v2847
      %v3292 = vshrl.u32 %v3291, 1
      %v3293 = vand.u32 %v3291, 1
      %v3294 = vsub.s32 0, %v3293
      %v3295 = vsel %vm3289, %v3294, %v3293
      %vm3296 = vcmp.ne.s32.totalorder %v2854, 0
      %vm3297 = vcmp.ne.s32.totalorder %v2861, 0
      %vm3298 = vcmp.ne.s32.totalorder %v2868, 0
      %vm3299 = vcmp.ne.s32.totalorder %v2875, 0
      %vm3300 = vcmp.ne.s32.totalorder %v2882, 0
      %vm3301 = vcmp.ne.s32.totalorder %v2889, 0
      %vm3302 = vcmp.ne.s32.totalorder %v2896, 0
      %vm3303 = vcmp.ne.s32.totalorder %v2903, 0
      %vm3304 = vcmp.ne.s32.totalorder %v2910, 0
      %vm3305 = vcmp.ne.s32.totalorder %v2917, 0
      %vm3306 = vcmp.ne.s32.totalorder %v2924, 0
      %vm3307 = vcmp.ne.s32.totalorder %v2931, 0
      %vm3308 = vcmp.ne.s32.totalorder %v2938, 0
      %vm3309 = vcmp.ne.s32.totalorder %v2945, 0
      %vm3310 = vcmp.ne.s32.totalorder %v2952, 0
      %vm3311 = vcmp.ne.s32.totalorder %v2959, 0
      %vm3312 = vcmp.ne.s32.totalorder %v2966, 0
      %vm3313 = vcmp.ne.s32.totalorder %v2973, 0
      %vm3314 = vcmp.ne.s32.totalorder %v2980, 0
      %vm3315 = vcmp.ne.s32.totalorder %v2987, 0
      %vm3316 = vcmp.ne.s32.totalorder %v2994, 0
      %vm3317 = vcmp.ne.s32.totalorder %v3001, 0
      %vm3318 = vcmp.ne.s32.totalorder %v3008, 0
      %vm3319 = vcmp.ne.s32.totalorder %v3015, 0
      %vm3320 = vcmp.ne.s32.totalorder %v3022, 0
      %vm3321 = vcmp.ne.s32.totalorder %v3029, 0
      %vm3322 = vcmp.ne.s32.totalorder %v3036, 0
      %vm3323 = vcmp.ne.s32.totalorder %v3043, 0
      %vm3324 = vcmp.ne.s32.totalorder %v3050, 0
      %vm3325 = vcmp.ne.s32.totalorder %v3057, 0
      %vm3326 = vcmp.ne.s32.totalorder %v3064, 0
      %vm3327 = vcmp.ne.s32.totalorder %v3071, 0
      %vm3328 = vcmp.ne.s32.totalorder %v3078, 0
      %vm3329 = vcmp.ne.s32.totalorder %v3085, 0
      %vm3330 = vcmp.ne.s32.totalorder %v3092, 0
      %vm3331 = vcmp.ne.s32.totalorder %v3099, 0
      %vm3332 = vcmp.ne.s32.totalorder %v3106, 0
      %vm3333 = vcmp.ne.s32.totalorder %v3113, 0
      %vm3334 = vcmp.ne.s32.totalorder %v3120, 0
      %vm3335 = vcmp.ne.s32.totalorder %v3127, 0
      %vm3336 = vcmp.ne.s32.totalorder %v3134, 0
      %vm3337 = vcmp.ne.s32.totalorder %v3141, 0
      %vm3338 = vcmp.ne.s32.totalorder %v3148, 0
      %vm3339 = vcmp.ne.s32.totalorder %v3155, 0
      %vm3340 = vcmp.ne.s32.totalorder %v3162, 0
      %vm3341 = vcmp.ne.s32.totalorder %v3169, 0
      %vm3342 = vcmp.ne.s32.totalorder %v3176, 0
      %vm3343 = vcmp.ne.s32.totalorder %v3183, 0
      %vm3344 = vcmp.ne.s32.totalorder %v3190, 0
      %vm3345 = vcmp.ne.s32.totalorder %v3197, 0
      %vm3346 = vcmp.ne.s32.totalorder %v3204, 0
      %vm3347 = vcmp.ne.s32.totalorder %v3211, 0
      %vm3348 = vcmp.ne.s32.totalorder %v3218, 0
      %vm3349 = vcmp.ne.s32.totalorder %v3225, 0
      %vm3350 = vcmp.ne.s32.totalorder %v3232, 0
      %vm3351 = vcmp.ne.s32.totalorder %v3239, 0
      %vm3352 = vcmp.ne.s32.totalorder %v3246, 0
      %vm3353 = vcmp.ne.s32.totalorder %v3253, 0
      %vm3354 = vcmp.ne.s32.totalorder %v3260, 0
      %vm3355 = vcmp.ne.s32.totalorder %v3267, 0
      %vm3356 = vcmp.ne.s32.totalorder %v3274, 0
      %vm3357 = vcmp.ne.s32.totalorder %v3281, 0
      %vm3358 = vcmp.ne.s32.totalorder %v3288, 0
      %vm3359 = vcmp.ne.s32.totalorder %v3295, 0
      %vm3360 = vcmp.lt.s32.totalorder %v2854, 0
      %vm3361 = vcmp.lt.s32.totalorder %v2861, 0
      %vm3362 = vcmp.lt.s32.totalorder %v2868, 0
      %vm3363 = vcmp.lt.s32.totalorder %v2875, 0
      %vm3364 = vcmp.lt.s32.totalorder %v2882, 0
      %vm3365 = vcmp.lt.s32.totalorder %v2889, 0
      %vm3366 = vcmp.lt.s32.totalorder %v2896, 0
      %vm3367 = vcmp.lt.s32.totalorder %v2903, 0
      %vm3368 = vcmp.lt.s32.totalorder %v2910, 0
      %vm3369 = vcmp.lt.s32.totalorder %v2917, 0
      %vm3370 = vcmp.lt.s32.totalorder %v2924, 0
      %vm3371 = vcmp.lt.s32.totalorder %v2931, 0
      %vm3372 = vcmp.lt.s32.totalorder %v2938, 0
      %vm3373 = vcmp.lt.s32.totalorder %v2945, 0
      %vm3374 = vcmp.lt.s32.totalorder %v2952, 0
      %vm3375 = vcmp.lt.s32.totalorder %v2959, 0
      %vm3376 = vcmp.lt.s32.totalorder %v2966, 0
      %vm3377 = vcmp.lt.s32.totalorder %v2973, 0
      %vm3378 = vcmp.lt.s32.totalorder %v2980, 0
      %vm3379 = vcmp.lt.s32.totalorder %v2987, 0
      %vm3380 = vcmp.lt.s32.totalorder %v2994, 0
      %vm3381 = vcmp.lt.s32.totalorder %v3001, 0
      %vm3382 = vcmp.lt.s32.totalorder %v3008, 0
      %vm3383 = vcmp.lt.s32.totalorder %v3015, 0
      %vm3384 = vcmp.lt.s32.totalorder %v3022, 0
      %vm3385 = vcmp.lt.s32.totalorder %v3029, 0
      %vm3386 = vcmp.lt.s32.totalorder %v3036, 0
      %vm3387 = vcmp.lt.s32.totalorder %v3043, 0
      %vm3388 = vcmp.lt.s32.totalorder %v3050, 0
      %vm3389 = vcmp.lt.s32.totalorder %v3057, 0
      %vm3390 = vcmp.lt.s32.totalorder %v3064, 0
      %vm3391 = vcmp.lt.s32.totalorder %v3071, 0
      %vm3392 = vcmp.lt.s32.totalorder %v3078, 0
      %vm3393 = vcmp.lt.s32.totalorder %v3085, 0
      %vm3394 = vcmp.lt.s32.totalorder %v3092, 0
      %vm3395 = vcmp.lt.s32.totalorder %v3099, 0
      %vm3396 = vcmp.lt.s32.totalorder %v3106, 0
      %vm3397 = vcmp.lt.s32.totalorder %v3113, 0
      %vm3398 = vcmp.lt.s32.totalorder %v3120, 0
      %vm3399 = vcmp.lt.s32.totalorder %v3127, 0
      %vm3400 = vcmp.lt.s32.totalorder %v3134, 0
      %vm3401 = vcmp.lt.s32.totalorder %v3141, 0
      %vm3402 = vcmp.lt.s32.totalorder %v3148, 0
      %vm3403 = vcmp.lt.s32.totalorder %v3155, 0
      %vm3404 = vcmp.lt.s32.totalorder %v3162, 0
      %vm3405 = vcmp.lt.s32.totalorder %v3169, 0
      %vm3406 = vcmp.lt.s32.totalorder %v3176, 0
      %vm3407 = vcmp.lt.s32.totalorder %v3183, 0
      %vm3408 = vcmp.lt.s32.totalorder %v3190, 0
      %vm3409 = vcmp.lt.s32.totalorder %v3197, 0
      %vm3410 = vcmp.lt.s32.totalorder %v3204, 0
      %vm3411 = vcmp.lt.s32.totalorder %v3211, 0
      %vm3412 = vcmp.lt.s32.totalorder %v3218, 0
      %vm3413 = vcmp.lt.s32.totalorder %v3225, 0
      %vm3414 = vcmp.lt.s32.totalorder %v3232, 0
      %vm3415 = vcmp.lt.s32.totalorder %v3239, 0
      %vm3416 = vcmp.lt.s32.totalorder %v3246, 0
      %vm3417 = vcmp.lt.s32.totalorder %v3253, 0
      %vm3418 = vcmp.lt.s32.totalorder %v3260, 0
      %vm3419 = vcmp.lt.s32.totalorder %v3267, 0
      %vm3420 = vcmp.lt.s32.totalorder %v3274, 0
      %vm3421 = vcmp.lt.s32.totalorder %v3281, 0
      %vm3422 = vcmp.lt.s32.totalorder %v3288, 0
      %vm3423 = vcmp.lt.s32.totalorder %v3295, 0
      %vm3424 = vmand %vm3360, %vm3296
      %vm3425 = vmand %vm3361, %vm3297
      %vm3426 = vmand %vm3362, %vm3298
      %vm3427 = vmand %vm3363, %vm3299
      %vm3428 = vmand %vm3364, %vm3300
      %vm3429 = vmand %vm3365, %vm3301
      %vm3430 = vmand %vm3366, %vm3302
      %vm3431 = vmand %vm3367, %vm3303
      %vm3432 = vmand %vm3368, %vm3304
      %vm3433 = vmand %vm3369, %vm3305
      %vm3434 = vmand %vm3370, %vm3306
      %vm3435 = vmand %vm3371, %vm3307
      %vm3436 = vmand %vm3372, %vm3308
      %vm3437 = vmand %vm3373, %vm3309
      %vm3438 = vmand %vm3374, %vm3310
      %vm3439 = vmand %vm3375, %vm3311
      %vm3440 = vmand %vm3376, %vm3312
      %vm3441 = vmand %vm3377, %vm3313
      %vm3442 = vmand %vm3378, %vm3314
      %vm3443 = vmand %vm3379, %vm3315
      %vm3444 = vmand %vm3380, %vm3316
      %vm3445 = vmand %vm3381, %vm3317
      %vm3446 = vmand %vm3382, %vm3318
      %vm3447 = vmand %vm3383, %vm3319
      %vm3448 = vmand %vm3384, %vm3320
      %vm3449 = vmand %vm3385, %vm3321
      %vm3450 = vmand %vm3386, %vm3322
      %vm3451 = vmand %vm3387, %vm3323
      %vm3452 = vmand %vm3388, %vm3324
      %vm3453 = vmand %vm3389, %vm3325
      %vm3454 = vmand %vm3390, %vm3326
      %vm3455 = vmand %vm3391, %vm3327
      %vm3456 = vmand %vm3392, %vm3328
      %vm3457 = vmand %vm3393, %vm3329
      %vm3458 = vmand %vm3394, %vm3330
      %vm3459 = vmand %vm3395, %vm3331
      %vm3460 = vmand %vm3396, %vm3332
      %vm3461 = vmand %vm3397, %vm3333
      %vm3462 = vmand %vm3398, %vm3334
      %vm3463 = vmand %vm3399, %vm3335
      %vm3464 = vmand %vm3400, %vm3336
      %vm3465 = vmand %vm3401, %vm3337
      %vm3466 = vmand %vm3402, %vm3338
      %vm3467 = vmand %vm3403, %vm3339
      %vm3468 = vmand %vm3404, %vm3340
      %vm3469 = vmand %vm3405, %vm3341
      %vm3470 = vmand %vm3406, %vm3342
      %vm3471 = vmand %vm3407, %vm3343
      %vm3472 = vmand %vm3408, %vm3344
      %vm3473 = vmand %vm3409, %vm3345
      %vm3474 = vmand %vm3410, %vm3346
      %vm3475 = vmand %vm3411, %vm3347
      %vm3476 = vmand %vm3412, %vm3348
      %vm3477 = vmand %vm3413, %vm3349
      %vm3478 = vmand %vm3414, %vm3350
      %vm3479 = vmand %vm3415, %vm3351
      %vm3480 = vmand %vm3416, %vm3352
      %vm3481 = vmand %vm3417, %vm3353
      %vm3482 = vmand %vm3418, %vm3354
      %vm3483 = vmand %vm3419, %vm3355
      %vm3484 = vmand %vm3420, %vm3356
      %vm3485 = vmand %vm3421, %vm3357
      %vm3486 = vmand %vm3422, %vm3358
      %vm3487 = vmand %vm3423, %vm3359
      %v3488 = vadd.s32 %v2854, 2
      %v3489 = vadd.s32 %v2861, 2
      %v3490 = vadd.s32 %v2868, 2
      %v3491 = vadd.s32 %v2875, 2
      %v3492 = vadd.s32 %v2882, 2
      %v3493 = vadd.s32 %v2889, 2
      %v3494 = vadd.s32 %v2896, 2
      %v3495 = vadd.s32 %v2903, 2
      %v3496 = vadd.s32 %v2910, 2
      %v3497 = vadd.s32 %v2917, 2
      %v3498 = vadd.s32 %v2924, 2
      %v3499 = vadd.s32 %v2931, 2
      %v3500 = vadd.s32 %v2938, 2
      %v3501 = vadd.s32 %v2945, 2
      %v3502 = vadd.s32 %v2952, 2
      %v3503 = vadd.s32 %v2959, 2
      %v3504 = vadd.s32 %v2966, 2
      %v3505 = vadd.s32 %v2973, 2
      %v3506 = vadd.s32 %v2980, 2
      %v3507 = vadd.s32 %v2987, 2
      %v3508 = vadd.s32 %v2994, 2
      %v3509 = vadd.s32 %v3001, 2
      %v3510 = vadd.s32 %v3008, 2
      %v3511 = vadd.s32 %v3015, 2
      %v3512 = vadd.s32 %v3022, 2
      %v3513 = vadd.s32 %v3029, 2
      %v3514 = vadd.s32 %v3036, 2
      %v3515 = vadd.s32 %v3043, 2
      %v3516 = vadd.s32 %v3050, 2
      %v3517 = vadd.s32 %v3057, 2
      %v3518 = vadd.s32 %v3064, 2
      %v3519 = vadd.s32 %v3071, 2
      %v3520 = vadd.s32 %v3078, 2
      %v3521 = vadd.s32 %v3085, 2
      %v3522 = vadd.s32 %v3092, 2
      %v3523 = vadd.s32 %v3099, 2
      %v3524 = vadd.s32 %v3106, 2
      %v3525 = vadd.s32 %v3113, 2
      %v3526 = vadd.s32 %v3120, 2
      %v3527 = vadd.s32 %v3127, 2
      %v3528 = vadd.s32 %v3134, 2
      %v3529 = vadd.s32 %v3141, 2
      %v3530 = vadd.s32 %v3148, 2
      %v3531 = vadd.s32 %v3155, 2
      %v3532 = vadd.s32 %v3162, 2
      %v3533 = vadd.s32 %v3169, 2
      %v3534 = vadd.s32 %v3176, 2
      %v3535 = vadd.s32 %v3183, 2
      %v3536 = vadd.s32 %v3190, 2
      %v3537 = vadd.s32 %v3197, 2
      %v3538 = vadd.s32 %v3204, 2
      %v3539 = vadd.s32 %v3211, 2
      %v3540 = vadd.s32 %v3218, 2
      %v3541 = vadd.s32 %v3225, 2
      %v3542 = vadd.s32 %v3232, 2
      %v3543 = vadd.s32 %v3239, 2
      %v3544 = vadd.s32 %v3246, 2
      %v3545 = vadd.s32 %v3253, 2
      %v3546 = vadd.s32 %v3260, 2
      %v3547 = vadd.s32 %v3267, 2
      %v3548 = vadd.s32 %v3274, 2
      %v3549 = vadd.s32 %v3281, 2
      %v3550 = vadd.s32 %v3288, 2
      %v3551 = vadd.s32 %v3295, 2
      %v3552 = vsel %vm3424, %v3488, %v2854
      %v3553 = vsel %vm3425, %v3489, %v2861
      %v3554 = vsel %vm3426, %v3490, %v2868
      %v3555 = vsel %vm3427, %v3491, %v2875
      %v3556 = vsel %vm3428, %v3492, %v2882
      %v3557 = vsel %vm3429, %v3493, %v2889
      %v3558 = vsel %vm3430, %v3494, %v2896
      %v3559 = vsel %vm3431, %v3495, %v2903
      %v3560 = vsel %vm3432, %v3496, %v2910
      %v3561 = vsel %vm3433, %v3497, %v2917
      %v3562 = vsel %vm3434, %v3498, %v2924
      %v3563 = vsel %vm3435, %v3499, %v2931
      %v3564 = vsel %vm3436, %v3500, %v2938
      %v3565 = vsel %vm3437, %v3501, %v2945
      %v3566 = vsel %vm3438, %v3502, %v2952
      %v3567 = vsel %vm3439, %v3503, %v2959
      %v3568 = vsel %vm3440, %v3504, %v2966
      %v3569 = vsel %vm3441, %v3505, %v2973
      %v3570 = vsel %vm3442, %v3506, %v2980
      %v3571 = vsel %vm3443, %v3507, %v2987
      %v3572 = vsel %vm3444, %v3508, %v2994
      %v3573 = vsel %vm3445, %v3509, %v3001
      %v3574 = vsel %vm3446, %v3510, %v3008
      %v3575 = vsel %vm3447, %v3511, %v3015
      %v3576 = vsel %vm3448, %v3512, %v3022
      %v3577 = vsel %vm3449, %v3513, %v3029
      %v3578 = vsel %vm3450, %v3514, %v3036
      %v3579 = vsel %vm3451, %v3515, %v3043
      %v3580 = vsel %vm3452, %v3516, %v3050
      %v3581 = vsel %vm3453, %v3517, %v3057
      %v3582 = vsel %vm3454, %v3518, %v3064
      %v3583 = vsel %vm3455, %v3519, %v3071
      %v3584 = vsel %vm3456, %v3520, %v3078
      %v3585 = vsel %vm3457, %v3521, %v3085
      %v3586 = vsel %vm3458, %v3522, %v3092
      %v3587 = vsel %vm3459, %v3523, %v3099
      %v3588 = vsel %vm3460, %v3524, %v3106
      %v3589 = vsel %vm3461, %v3525, %v3113
      %v3590 = vsel %vm3462, %v3526, %v3120
      %v3591 = vsel %vm3463, %v3527, %v3127
      %v3592 = vsel %vm3464, %v3528, %v3134
      %v3593 = vsel %vm3465, %v3529, %v3141
      %v3594 = vsel %vm3466, %v3530, %v3148
      %v3595 = vsel %vm3467, %v3531, %v3155
      %v3596 = vsel %vm3468, %v3532, %v3162
      %v3597 = vsel %vm3469, %v3533, %v3169
      %v3598 = vsel %vm3470, %v3534, %v3176
      %v3599 = vsel %vm3471, %v3535, %v3183
      %v3600 = vsel %vm3472, %v3536, %v3190
      %v3601 = vsel %vm3473, %v3537, %v3197
      %v3602 = vsel %vm3474, %v3538, %v3204
      %v3603 = vsel %vm3475, %v3539, %v3211
      %v3604 = vsel %vm3476, %v3540, %v3218
      %v3605 = vsel %vm3477, %v3541, %v3225
      %v3606 = vsel %vm3478, %v3542, %v3232
      %v3607 = vsel %vm3479, %v3543, %v3239
      %v3608 = vsel %vm3480, %v3544, %v3246
      %v3609 = vsel %vm3481, %v3545, %v3253
      %v3610 = vsel %vm3482, %v3546, %v3260
      %v3611 = vsel %vm3483, %v3547, %v3267
      %v3612 = vsel %vm3484, %v3548, %v3274
      %v3613 = vsel %vm3485, %v3549, %v3281
      %v3614 = vsel %vm3486, %v3550, %v3288
      %v3615 = vsel %vm3487, %v3551, %v3295
      %vm3616 = vcmp.eq.s32.totalorder %v3552, 0
      %vm3617 = vcmp.eq.s32.totalorder %v3553, 0
      %vm3618 = vcmp.eq.s32.totalorder %v3554, 0
      %vm3619 = vcmp.eq.s32.totalorder %v3555, 0
      %vm3620 = vcmp.eq.s32.totalorder %v3556, 0
      %vm3621 = vcmp.eq.s32.totalorder %v3557, 0
      %vm3622 = vcmp.eq.s32.totalorder %v3558, 0
      %vm3623 = vcmp.eq.s32.totalorder %v3559, 0
      %vm3624 = vcmp.eq.s32.totalorder %v3560, 0
      %vm3625 = vcmp.eq.s32.totalorder %v3561, 0
      %vm3626 = vcmp.eq.s32.totalorder %v3562, 0
      %vm3627 = vcmp.eq.s32.totalorder %v3563, 0
      %vm3628 = vcmp.eq.s32.totalorder %v3564, 0
      %vm3629 = vcmp.eq.s32.totalorder %v3565, 0
      %vm3630 = vcmp.eq.s32.totalorder %v3566, 0
      %vm3631 = vcmp.eq.s32.totalorder %v3567, 0
      %vm3632 = vcmp.eq.s32.totalorder %v3568, 0
      %vm3633 = vcmp.eq.s32.totalorder %v3569, 0
      %vm3634 = vcmp.eq.s32.totalorder %v3570, 0
      %vm3635 = vcmp.eq.s32.totalorder %v3571, 0
      %vm3636 = vcmp.eq.s32.totalorder %v3572, 0
      %vm3637 = vcmp.eq.s32.totalorder %v3573, 0
      %vm3638 = vcmp.eq.s32.totalorder %v3574, 0
      %vm3639 = vcmp.eq.s32.totalorder %v3575, 0
      %vm3640 = vcmp.eq.s32.totalorder %v3576, 0
      %vm3641 = vcmp.eq.s32.totalorder %v3577, 0
      %vm3642 = vcmp.eq.s32.totalorder %v3578, 0
      %vm3643 = vcmp.eq.s32.totalorder %v3579, 0
      %vm3644 = vcmp.eq.s32.totalorder %v3580, 0
      %vm3645 = vcmp.eq.s32.totalorder %v3581, 0
      %vm3646 = vcmp.eq.s32.totalorder %v3582, 0
      %vm3647 = vcmp.eq.s32.totalorder %v3583, 0
      %vm3648 = vcmp.eq.s32.totalorder %v3584, 0
      %vm3649 = vcmp.eq.s32.totalorder %v3585, 0
      %vm3650 = vcmp.eq.s32.totalorder %v3586, 0
      %vm3651 = vcmp.eq.s32.totalorder %v3587, 0
      %vm3652 = vcmp.eq.s32.totalorder %v3588, 0
      %vm3653 = vcmp.eq.s32.totalorder %v3589, 0
      %vm3654 = vcmp.eq.s32.totalorder %v3590, 0
      %vm3655 = vcmp.eq.s32.totalorder %v3591, 0
      %vm3656 = vcmp.eq.s32.totalorder %v3592, 0
      %vm3657 = vcmp.eq.s32.totalorder %v3593, 0
      %vm3658 = vcmp.eq.s32.totalorder %v3594, 0
      %vm3659 = vcmp.eq.s32.totalorder %v3595, 0
      %vm3660 = vcmp.eq.s32.totalorder %v3596, 0
      %vm3661 = vcmp.eq.s32.totalorder %v3597, 0
      %vm3662 = vcmp.eq.s32.totalorder %v3598, 0
      %vm3663 = vcmp.eq.s32.totalorder %v3599, 0
      %vm3664 = vcmp.eq.s32.totalorder %v3600, 0
      %vm3665 = vcmp.eq.s32.totalorder %v3601, 0
      %vm3666 = vcmp.eq.s32.totalorder %v3602, 0
      %vm3667 = vcmp.eq.s32.totalorder %v3603, 0
      %vm3668 = vcmp.eq.s32.totalorder %v3604, 0
      %vm3669 = vcmp.eq.s32.totalorder %v3605, 0
      %vm3670 = vcmp.eq.s32.totalorder %v3606, 0
      %vm3671 = vcmp.eq.s32.totalorder %v3607, 0
      %vm3672 = vcmp.eq.s32.totalorder %v3608, 0
      %vm3673 = vcmp.eq.s32.totalorder %v3609, 0
      %vm3674 = vcmp.eq.s32.totalorder %v3610, 0
      %vm3675 = vcmp.eq.s32.totalorder %v3611, 0
      %vm3676 = vcmp.eq.s32.totalorder %v3612, 0
      %vm3677 = vcmp.eq.s32.totalorder %v3613, 0
      %vm3678 = vcmp.eq.s32.totalorder %v3614, 0
      %vm3679 = vcmp.eq.s32.totalorder %v3615, 0
      %v3680 = vsel %vm3616, %v2654, %v2784
      %v3681 = vsel %vm3617, %v2653, %v2783
      %v3682 = vsel %vm3618, %v2652, %v2782
      %v3683 = vsel %vm3619, %v2651, %v2781
      %v3684 = vsel %vm3620, %v2650, %v2780
      %v3685 = vsel %vm3621, %v2649, %v2779
      %v3686 = vsel %vm3622, %v2648, %v2778
      %v3687 = vsel %vm3623, %v2647, %v2777
      %v3688 = vsel %vm3624, %v2646, %v2776
      %v3689 = vsel %vm3625, %v2645, %v2775
      %v3690 = vsel %vm3626, %v2644, %v2774
      %v3691 = vsel %vm3627, %v2643, %v2773
      %v3692 = vsel %vm3628, %v2642, %v2772
      %v3693 = vsel %vm3629, %v2641, %v2771
      %v3694 = vsel %vm3630, %v2640, %v2770
      %v3695 = vsel %vm3631, %v2639, %v2769
      %v3696 = vsel %vm3632, %v2638, %v2768
      %v3697 = vsel %vm3633, %v2637, %v2767
      %v3698 = vsel %vm3634, %v2636, %v2766
      %v3699 = vsel %vm3635, %v2635, %v2765
      %v3700 = vsel %vm3636, %v2634, %v2764
      %v3701 = vsel %vm3637, %v2633, %v2763
      %v3702 = vsel %vm3638, %v2632, %v2762
      %v3703 = vsel %vm3639, %v2631, %v2761
      %v3704 = vsel %vm3640, %v2630, %v2760
      %v3705 = vsel %vm3641, %v2629, %v2759
      %v3706 = vsel %vm3642, %v2628, %v2758
      %v3707 = vsel %vm3643, %v2627, %v2757
      %v3708 = vsel %vm3644, %v2626, %v2756
      %v3709 = vsel %vm3645, %v2625, %v2755
      %v3710 = vsel %vm3646, %v2624, %v2754
      %v3711 = vsel %vm3647, %v2623, %v2753
      %v3712 = vsel %vm3648, %v2622, %v2752
      %v3713 = vsel %vm3649, %v2621, %v2751
      %v3714 = vsel %vm3650, %v2620, %v2750
      %v3715 = vsel %vm3651, %v2619, %v2749
      %v3716 = vsel %vm3652, %v2618, %v2748
      %v3717 = vsel %vm3653, %v2617, %v2747
      %v3718 = vsel %vm3654, %v2616, %v2746
      %v3719 = vsel %vm3655, %v2615, %v2745
      %v3720 = vsel %vm3656, %v2614, %v2744
      %v3721 = vsel %vm3657, %v2613, %v2743
      %v3722 = vsel %vm3658, %v2612, %v2742
      %v3723 = vsel %vm3659, %v2611, %v2741
      %v3724 = vsel %vm3660, %v2610, %v2740
      %v3725 = vsel %vm3661, %v2609, %v2739
      %v3726 = vsel %vm3662, %v2608, %v2738
      %v3727 = vsel %vm3663, %v2607, %v2737
      %v3728 = vsel %vm3664, %v2606, %v2736
      %v3729 = vsel %vm3665, %v2605, %v2735
      %v3730 = vsel %vm3666, %v2604, %v2734
      %v3731 = vsel %vm3667, %v2603, %v2733
      %v3732 = vsel %vm3668, %v2602, %v2732
      %v3733 = vsel %vm3669, %v2601, %v2731
      %v3734 = vsel %vm3670, %v2600, %v2730
      %v3735 = vsel %vm3671, %v2599, %v2729
      %v3736 = vsel %vm3672, %v2598, %v2728
      %v3737 = vsel %vm3673, %v2597, %v2727
      %v3738 = vsel %vm3674, %v2596, %v2726
      %v3739 = vsel %vm3675, %v2595, %v2725
      %v3740 = vsel %vm3676, %v2594, %v2724
      %v3741 = vsel %vm3677, %v2593, %v2723
      %v3742 = vsel %vm3678, %v2592, %v2722
      %v3743 = vsel %vm3679, %v2655, %v2721
      %vm3744 = vcmp.gt.f32.partialorder %v2207, %v3680
      %vm3745 = vcmp.gt.f32.partialorder %v2212, %v3681
      %vm3746 = vcmp.gt.f32.partialorder %v2217, %v3682
      %vm3747 = vcmp.gt.f32.partialorder %v2222, %v3683
      %vm3748 = vcmp.gt.f32.partialorder %v2227, %v3684
      %vm3749 = vcmp.gt.f32.partialorder %v2232, %v3685
      %vm3750 = vcmp.gt.f32.partialorder %v2237, %v3686
      %vm3751 = vcmp.gt.f32.partialorder %v2242, %v3687
      %vm3752 = vcmp.gt.f32.partialorder %v2247, %v3688
      %vm3753 = vcmp.gt.f32.partialorder %v2252, %v3689
      %vm3754 = vcmp.gt.f32.partialorder %v2257, %v3690
      %vm3755 = vcmp.gt.f32.partialorder %v2262, %v3691
      %vm3756 = vcmp.gt.f32.partialorder %v2267, %v3692
      %vm3757 = vcmp.gt.f32.partialorder %v2272, %v3693
      %vm3758 = vcmp.gt.f32.partialorder %v2277, %v3694
      %vm3759 = vcmp.gt.f32.partialorder %v2282, %v3695
      %vm3760 = vcmp.gt.f32.partialorder %v2287, %v3696
      %vm3761 = vcmp.gt.f32.partialorder %v2292, %v3697
      %vm3762 = vcmp.gt.f32.partialorder %v2297, %v3698
      %vm3763 = vcmp.gt.f32.partialorder %v2302, %v3699
      %vm3764 = vcmp.gt.f32.partialorder %v2307, %v3700
      %vm3765 = vcmp.gt.f32.partialorder %v2312, %v3701
      %vm3766 = vcmp.gt.f32.partialorder %v2317, %v3702
      %vm3767 = vcmp.gt.f32.partialorder %v2322, %v3703
      %vm3768 = vcmp.gt.f32.partialorder %v2327, %v3704
      %vm3769 = vcmp.gt.f32.partialorder %v2332, %v3705
      %vm3770 = vcmp.gt.f32.partialorder %v2337, %v3706
      %vm3771 = vcmp.gt.f32.partialorder %v2342, %v3707
      %vm3772 = vcmp.gt.f32.partialorder %v2347, %v3708
      %vm3773 = vcmp.gt.f32.partialorder %v2352, %v3709
      %vm3774 = vcmp.gt.f32.partialorder %v2357, %v3710
      %vm3775 = vcmp.gt.f32.partialorder %v2362, %v3711
      %vm3776 = vcmp.gt.f32.partialorder %v2367, %v3712
      %vm3777 = vcmp.gt.f32.partialorder %v2372, %v3713
      %vm3778 = vcmp.gt.f32.partialorder %v2377, %v3714
      %vm3779 = vcmp.gt.f32.partialorder %v2382, %v3715
      %vm3780 = vcmp.gt.f32.partialorder %v2387, %v3716
      %vm3781 = vcmp.gt.f32.partialorder %v2392, %v3717
      %vm3782 = vcmp.gt.f32.partialorder %v2397, %v3718
      %vm3783 = vcmp.gt.f32.partialorder %v2402, %v3719
      %vm3784 = vcmp.gt.f32.partialorder %v2407, %v3720
      %vm3785 = vcmp.gt.f32.partialorder %v2412, %v3721
      %vm3786 = vcmp.gt.f32.partialorder %v2417, %v3722
      %vm3787 = vcmp.gt.f32.partialorder %v2422, %v3723
      %vm3788 = vcmp.gt.f32.partialorder %v2427, %v3724
      %vm3789 = vcmp.gt.f32.partialorder %v2432, %v3725
      %vm3790 = vcmp.gt.f32.partialorder %v2437, %v3726
      %vm3791 = vcmp.gt.f32.partialorder %v2442, %v3727
      %vm3792 = vcmp.gt.f32.partialorder %v2447, %v3728
      %vm3793 = vcmp.gt.f32.partialorder %v2452, %v3729
      %vm3794 = vcmp.gt.f32.partialorder %v2457, %v3730
      %vm3795 = vcmp.gt.f32.partialorder %v2462, %v3731
      %vm3796 = vcmp.gt.f32.partialorder %v2467, %v3732
      %vm3797 = vcmp.gt.f32.partialorder %v2472, %v3733
      %vm3798 = vcmp.gt.f32.partialorder %v2477, %v3734
      %vm3799 = vcmp.gt.f32.partialorder %v2482, %v3735
      %vm3800 = vcmp.gt.f32.partialorder %v2487, %v3736
      %vm3801 = vcmp.gt.f32.partialorder %v2492, %v3737
      %vm3802 = vcmp.gt.f32.partialorder %v2497, %v3738
      %vm3803 = vcmp.gt.f32.partialorder %v2502, %v3739
      %vm3804 = vcmp.gt.f32.partialorder %v2507, %v3740
      %vm3805 = vcmp.gt.f32.partialorder %v2512, %v3741
      %vm3806 = vcmp.gt.f32.partialorder %v2517, %v3742
      %vm3807 = vcmp.gt.f32.partialorder %v2522, %v3743
      %v3808 = vsel %vm3744, 1.0, -1.0
      %v3809 = vsel %vm3745, 1.0, -1.0
      %v3810 = vsel %vm3746, 1.0, -1.0
      %v3811 = vsel %vm3747, 1.0, -1.0
      %v3812 = vsel %vm3748, 1.0, -1.0
      %v3813 = vsel %vm3749, 1.0, -1.0
      %v3814 = vsel %vm3750, 1.0, -1.0
      %v3815 = vsel %vm3751, 1.0, -1.0
      %v3816 = vsel %vm3752, 1.0, -1.0
      %v3817 = vsel %vm3753, 1.0, -1.0
      %v3818 = vsel %vm3754, 1.0, -1.0
      %v3819 = vsel %vm3755, 1.0, -1.0
      %v3820 = vsel %vm3756, 1.0, -1.0
      %v3821 = vsel %vm3757, 1.0, -1.0
      %v3822 = vsel %vm3758, 1.0, -1.0
      %v3823 = vsel %vm3759, 1.0, -1.0
      %v3824 = vsel %vm3760, 1.0, -1.0
      %v3825 = vsel %vm3761, 1.0, -1.0
      %v3826 = vsel %vm3762, 1.0, -1.0
      %v3827 = vsel %vm3763, 1.0, -1.0
      %v3828 = vsel %vm3764, 1.0, -1.0
      %v3829 = vsel %vm3765, 1.0, -1.0
      %v3830 = vsel %vm3766, 1.0, -1.0
      %v3831 = vsel %vm3767, 1.0, -1.0
      %v3832 = vsel %vm3768, 1.0, -1.0
      %v3833 = vsel %vm3769, 1.0, -1.0
      %v3834 = vsel %vm3770, 1.0, -1.0
      %v3835 = vsel %vm3771, 1.0, -1.0
      %v3836 = vsel %vm3772, 1.0, -1.0
      %v3837 = vsel %vm3773, 1.0, -1.0
      %v3838 = vsel %vm3774, 1.0, -1.0
      %v3839 = vsel %vm3775, 1.0, -1.0
      %v3840 = vsel %vm3776, 1.0, -1.0
      %v3841 = vsel %vm3777, 1.0, -1.0
      %v3842 = vsel %vm3778, 1.0, -1.0
      %v3843 = vsel %vm3779, 1.0, -1.0
      %v3844 = vsel %vm3780, 1.0, -1.0
      %v3845 = vsel %vm3781, 1.0, -1.0
      %v3846 = vsel %vm3782, 1.0, -1.0
      %v3847 = vsel %vm3783, 1.0, -1.0
      %v3848 = vsel %vm3784, 1.0, -1.0
      %v3849 = vsel %vm3785, 1.0, -1.0
      %v3850 = vsel %vm3786, 1.0, -1.0
      %v3851 = vsel %vm3787, 1.0, -1.0
      %v3852 = vsel %vm3788, 1.0, -1.0
      %v3853 = vsel %vm3789, 1.0, -1.0
      %v3854 = vsel %vm3790, 1.0, -1.0
      %v3855 = vsel %vm3791, 1.0, -1.0
      %v3856 = vsel %vm3792, 1.0, -1.0
      %v3857 = vsel %vm3793, 1.0, -1.0
      %v3858 = vsel %vm3794, 1.0, -1.0
      %v3859 = vsel %vm3795, 1.0, -1.0
      %v3860 = vsel %vm3796, 1.0, -1.0
      %v3861 = vsel %vm3797, 1.0, -1.0
      %v3862 = vsel %vm3798, 1.0, -1.0
      %v3863 = vsel %vm3799, 1.0, -1.0
      %v3864 = vsel %vm3800, 1.0, -1.0
      %v3865 = vsel %vm3801, 1.0, -1.0
      %v3866 = vsel %vm3802, 1.0, -1.0
      %v3867 = vsel %vm3803, 1.0, -1.0
      %v3868 = vsel %vm3804, 1.0, -1.0
      %v3869 = vsel %vm3805, 1.0, -1.0
      %v3870 = vsel %vm3806, 1.0, -1.0
      %v3871 = vsel %vm3807, 1.0, -1.0
      %vm3872 = vcmp.eq.f32.partialorder %v2207, %v3680
      %vm3873 = vcmp.eq.f32.partialorder %v2212, %v3681
      %vm3874 = vcmp.eq.f32.partialorder %v2217, %v3682
      %vm3875 = vcmp.eq.f32.partialorder %v2222, %v3683
      %vm3876 = vcmp.eq.f32.partialorder %v2227, %v3684
      %vm3877 = vcmp.eq.f32.partialorder %v2232, %v3685
      %vm3878 = vcmp.eq.f32.partialorder %v2237, %v3686
      %vm3879 = vcmp.eq.f32.partialorder %v2242, %v3687
      %vm3880 = vcmp.eq.f32.partialorder %v2247, %v3688
      %vm3881 = vcmp.eq.f32.partialorder %v2252, %v3689
      %vm3882 = vcmp.eq.f32.partialorder %v2257, %v3690
      %vm3883 = vcmp.eq.f32.partialorder %v2262, %v3691
      %vm3884 = vcmp.eq.f32.partialorder %v2267, %v3692
      %vm3885 = vcmp.eq.f32.partialorder %v2272, %v3693
      %vm3886 = vcmp.eq.f32.partialorder %v2277, %v3694
      %vm3887 = vcmp.eq.f32.partialorder %v2282, %v3695
      %vm3888 = vcmp.eq.f32.partialorder %v2287, %v3696
      %vm3889 = vcmp.eq.f32.partialorder %v2292, %v3697
      %vm3890 = vcmp.eq.f32.partialorder %v2297, %v3698
      %vm3891 = vcmp.eq.f32.partialorder %v2302, %v3699
      %vm3892 = vcmp.eq.f32.partialorder %v2307, %v3700
      %vm3893 = vcmp.eq.f32.partialorder %v2312, %v3701
      %vm3894 = vcmp.eq.f32.partialorder %v2317, %v3702
      %vm3895 = vcmp.eq.f32.partialorder %v2322, %v3703
      %vm3896 = vcmp.eq.f32.partialorder %v2327, %v3704
      %vm3897 = vcmp.eq.f32.partialorder %v2332, %v3705
      %vm3898 = vcmp.eq.f32.partialorder %v2337, %v3706
      %vm3899 = vcmp.eq.f32.partialorder %v2342, %v3707
      %vm3900 = vcmp.eq.f32.partialorder %v2347, %v3708
      %vm3901 = vcmp.eq.f32.partialorder %v2352, %v3709
      %vm3902 = vcmp.eq.f32.partialorder %v2357, %v3710
      %vm3903 = vcmp.eq.f32.partialorder %v2362, %v3711
      %vm3904 = vcmp.eq.f32.partialorder %v2367, %v3712
      %vm3905 = vcmp.eq.f32.partialorder %v2372, %v3713
      %vm3906 = vcmp.eq.f32.partialorder %v2377, %v3714
      %vm3907 = vcmp.eq.f32.partialorder %v2382, %v3715
      %vm3908 = vcmp.eq.f32.partialorder %v2387, %v3716
      %vm3909 = vcmp.eq.f32.partialorder %v2392, %v3717
      %vm3910 = vcmp.eq.f32.partialorder %v2397, %v3718
      %vm3911 = vcmp.eq.f32.partialorder %v2402, %v3719
      %vm3912 = vcmp.eq.f32.partialorder %v2407, %v3720
      %vm3913 = vcmp.eq.f32.partialorder %v2412, %v3721
      %vm3914 = vcmp.eq.f32.partialorder %v2417, %v3722
      %vm3915 = vcmp.eq.f32.partialorder %v2422, %v3723
      %vm3916 = vcmp.eq.f32.partialorder %v2427, %v3724
      %vm3917 = vcmp.eq.f32.partialorder %v2432, %v3725
      %vm3918 = vcmp.eq.f32.partialorder %v2437, %v3726
      %vm3919 = vcmp.eq.f32.partialorder %v2442, %v3727
      %vm3920 = vcmp.eq.f32.partialorder %v2447, %v3728
      %vm3921 = vcmp.eq.f32.partialorder %v2452, %v3729
      %vm3922 = vcmp.eq.f32.partialorder %v2457, %v3730
      %vm3923 = vcmp.eq.f32.partialorder %v2462, %v3731
      %vm3924 = vcmp.eq.f32.partialorder %v2467, %v3732
      %vm3925 = vcmp.eq.f32.partialorder %v2472, %v3733
      %vm3926 = vcmp.eq.f32.partialorder %v2477, %v3734
      %vm3927 = vcmp.eq.f32.partialorder %v2482, %v3735
      %vm3928 = vcmp.eq.f32.partialorder %v2487, %v3736
      %vm3929 = vcmp.eq.f32.partialorder %v2492, %v3737
      %vm3930 = vcmp.eq.f32.partialorder %v2497, %v3738
      %vm3931 = vcmp.eq.f32.partialorder %v2502, %v3739
      %vm3932 = vcmp.eq.f32.partialorder %v2507, %v3740
      %vm3933 = vcmp.eq.f32.partialorder %v2512, %v3741
      %vm3934 = vcmp.eq.f32.partialorder %v2517, %v3742
      %vm3935 = vcmp.eq.f32.partialorder %v2522, %v3743
      %v3936 = vsel %vm3616, 1.0, -1.0
      %v3937 = vsel %vm3617, 1.0, -1.0
      %v3938 = vsel %vm3618, 1.0, -1.0
      %v3939 = vsel %vm3619, 1.0, -1.0
      %v3940 = vsel %vm3620, 1.0, -1.0
      %v3941 = vsel %vm3621, 1.0, -1.0
      %v3942 = vsel %vm3622, 1.0, -1.0
      %v3943 = vsel %vm3623, 1.0, -1.0
      %v3944 = vsel %vm3624, 1.0, -1.0
      %v3945 = vsel %vm3625, 1.0, -1.0
      %v3946 = vsel %vm3626, 1.0, -1.0
      %v3947 = vsel %vm3627, 1.0, -1.0
      %v3948 = vsel %vm3628, 1.0, -1.0
      %v3949 = vsel %vm3629, 1.0, -1.0
      %v3950 = vsel %vm3630, 1.0, -1.0
      %v3951 = vsel %vm3631, 1.0, -1.0
      %v3952 = vsel %vm3632, 1.0, -1.0
      %v3953 = vsel %vm3633, 1.0, -1.0
      %v3954 = vsel %vm3634, 1.0, -1.0
      %v3955 = vsel %vm3635, 1.0, -1.0
      %v3956 = vsel %vm3636, 1.0, -1.0
      %v3957 = vsel %vm3637, 1.0, -1.0
      %v3958 = vsel %vm3638, 1.0, -1.0
      %v3959 = vsel %vm3639, 1.0, -1.0
      %v3960 = vsel %vm3640, 1.0, -1.0
      %v3961 = vsel %vm3641, 1.0, -1.0
      %v3962 = vsel %vm3642, 1.0, -1.0
      %v3963 = vsel %vm3643, 1.0, -1.0
      %v3964 = vsel %vm3644, 1.0, -1.0
      %v3965 = vsel %vm3645, 1.0, -1.0
      %v3966 = vsel %vm3646, 1.0, -1.0
      %v3967 = vsel %vm3647, 1.0, -1.0
      %v3968 = vsel %vm3648, 1.0, -1.0
      %v3969 = vsel %vm3649, 1.0, -1.0
      %v3970 = vsel %vm3650, 1.0, -1.0
      %v3971 = vsel %vm3651, 1.0, -1.0
      %v3972 = vsel %vm3652, 1.0, -1.0
      %v3973 = vsel %vm3653, 1.0, -1.0
      %v3974 = vsel %vm3654, 1.0, -1.0
      %v3975 = vsel %vm3655, 1.0, -1.0
      %v3976 = vsel %vm3656, 1.0, -1.0
      %v3977 = vsel %vm3657, 1.0, -1.0
      %v3978 = vsel %vm3658, 1.0, -1.0
      %v3979 = vsel %vm3659, 1.0, -1.0
      %v3980 = vsel %vm3660, 1.0, -1.0
      %v3981 = vsel %vm3661, 1.0, -1.0
      %v3982 = vsel %vm3662, 1.0, -1.0
      %v3983 = vsel %vm3663, 1.0, -1.0
      %v3984 = vsel %vm3664, 1.0, -1.0
      %v3985 = vsel %vm3665, 1.0, -1.0
      %v3986 = vsel %vm3666, 1.0, -1.0
      %v3987 = vsel %vm3667, 1.0, -1.0
      %v3988 = vsel %vm3668, 1.0, -1.0
      %v3989 = vsel %vm3669, 1.0, -1.0
      %v3990 = vsel %vm3670, 1.0, -1.0
      %v3991 = vsel %vm3671, 1.0, -1.0
      %v3992 = vsel %vm3672, 1.0, -1.0
      %v3993 = vsel %vm3673, 1.0, -1.0
      %v3994 = vsel %vm3674, 1.0, -1.0
      %v3995 = vsel %vm3675, 1.0, -1.0
      %v3996 = vsel %vm3676, 1.0, -1.0
      %v3997 = vsel %vm3677, 1.0, -1.0
      %v3998 = vsel %vm3678, 1.0, -1.0
      %v3999 = vsel %vm3679, 1.0, -1.0
      %v4000 = vsel %vm3872, %v3936, %v3808
      %v4001 = vsel %vm3873, %v3937, %v3809
      %v4002 = vsel %vm3874, %v3938, %v3810
      %v4003 = vsel %vm3875, %v3939, %v3811
      %v4004 = vsel %vm3876, %v3940, %v3812
      %v4005 = vsel %vm3877, %v3941, %v3813
      %v4006 = vsel %vm3878, %v3942, %v3814
      %v4007 = vsel %vm3879, %v3943, %v3815
      %v4008 = vsel %vm3880, %v3944, %v3816
      %v4009 = vsel %vm3881, %v3945, %v3817
      %v4010 = vsel %vm3882, %v3946, %v3818
      %v4011 = vsel %vm3883, %v3947, %v3819
      %v4012 = vsel %vm3884, %v3948, %v3820
      %v4013 = vsel %vm3885, %v3949, %v3821
      %v4014 = vsel %vm3886, %v3950, %v3822
      %v4015 = vsel %vm3887, %v3951, %v3823
      %v4016 = vsel %vm3888, %v3952, %v3824
      %v4017 = vsel %vm3889, %v3953, %v3825
      %v4018 = vsel %vm3890, %v3954, %v3826
      %v4019 = vsel %vm3891, %v3955, %v3827
      %v4020 = vsel %vm3892, %v3956, %v3828
      %v4021 = vsel %vm3893, %v3957, %v3829
      %v4022 = vsel %vm3894, %v3958, %v3830
      %v4023 = vsel %vm3895, %v3959, %v3831
      %v4024 = vsel %vm3896, %v3960, %v3832
      %v4025 = vsel %vm3897, %v3961, %v3833
      %v4026 = vsel %vm3898, %v3962, %v3834
      %v4027 = vsel %vm3899, %v3963, %v3835
      %v4028 = vsel %vm3900, %v3964, %v3836
      %v4029 = vsel %vm3901, %v3965, %v3837
      %v4030 = vsel %vm3902, %v3966, %v3838
      %v4031 = vsel %vm3903, %v3967, %v3839
      %v4032 = vsel %vm3904, %v3968, %v3840
      %v4033 = vsel %vm3905, %v3969, %v3841
      %v4034 = vsel %vm3906, %v3970, %v3842
      %v4035 = vsel %vm3907, %v3971, %v3843
      %v4036 = vsel %vm3908, %v3972, %v3844
      %v4037 = vsel %vm3909, %v3973, %v3845
      %v4038 = vsel %vm3910, %v3974, %v3846
      %v4039 = vsel %vm3911, %v3975, %v3847
      %v4040 = vsel %vm3912, %v3976, %v3848
      %v4041 = vsel %vm3913, %v3977, %v3849
      %v4042 = vsel %vm3914, %v3978, %v3850
      %v4043 = vsel %vm3915, %v3979, %v3851
      %v4044 = vsel %vm3916, %v3980, %v3852
      %v4045 = vsel %vm3917, %v3981, %v3853
      %v4046 = vsel %vm3918, %v3982, %v3854
      %v4047 = vsel %vm3919, %v3983, %v3855
      %v4048 = vsel %vm3920, %v3984, %v3856
      %v4049 = vsel %vm3921, %v3985, %v3857
      %v4050 = vsel %vm3922, %v3986, %v3858
      %v4051 = vsel %vm3923, %v3987, %v3859
      %v4052 = vsel %vm3924, %v3988, %v3860
      %v4053 = vsel %vm3925, %v3989, %v3861
      %v4054 = vsel %vm3926, %v3990, %v3862
      %v4055 = vsel %vm3927, %v3991, %v3863
      %v4056 = vsel %vm3928, %v3992, %v3864
      %v4057 = vsel %vm3929, %v3993, %v3865
      %v4058 = vsel %vm3930, %v3994, %v3866
      %v4059 = vsel %vm3931, %v3995, %v3867
      %v4060 = vsel %vm3932, %v3996, %v3868
      %v4061 = vsel %vm3933, %v3997, %v3869
      %v4062 = vsel %vm3934, %v3998, %v3870
      %v4063 = vsel %vm3935, %v3999, %v3871
      %v4064 = vpack.c.bf16 %v4001, %v4000
      %v4065 = vpack.c.bf16 %v4003, %v4002
      %v4066 = vpack.c.bf16 %v4005, %v4004
      %v4067 = vpack.c.bf16 %v4007, %v4006
      %v4068 = vpack.c.bf16 %v4009, %v4008
      %v4069 = vpack.c.bf16 %v4011, %v4010
      %v4070 = vpack.c.bf16 %v4013, %v4012
      %v4071 = vpack.c.bf16 %v4015, %v4014
      %v4072 = vpack.c.bf16 %v4017, %v4016
      %v4073 = vpack.c.bf16 %v4019, %v4018
      %v4074 = vpack.c.bf16 %v4021, %v4020
      %v4075 = vpack.c.bf16 %v4023, %v4022
      %v4076 = vpack.c.bf16 %v4025, %v4024
      %v4077 = vpack.c.bf16 %v4027, %v4026
      %v4078 = vpack.c.bf16 %v4029, %v4028
      %v4079 = vpack.c.bf16 %v4031, %v4030
      %v4080 = vpack.c.bf16 %v4033, %v4032
      %v4081 = vpack.c.bf16 %v4035, %v4034
      %v4082 = vpack.c.bf16 %v4037, %v4036
      %v4083 = vpack.c.bf16 %v4039, %v4038
      %v4084 = vpack.c.bf16 %v4041, %v4040
      %v4085 = vpack.c.bf16 %v4043, %v4042
      %v4086 = vpack.c.bf16 %v4045, %v4044
      %v4087 = vpack.c.bf16 %v4047, %v4046
      %v4088 = vpack.c.bf16 %v4049, %v4048
      %v4089 = vpack.c.bf16 %v4051, %v4050
      %v4090 = vpack.c.bf16 %v4053, %v4052
      %v4091 = vpack.c.bf16 %v4055, %v4054
      %v4092 = vpack.c.bf16 %v4057, %v4056
      %v4093 = vpack.c.bf16 %v4059, %v4058
      %v4094 = vpack.c.bf16 %v4061, %v4060
      %v4095 = vpack.c.bf16 %v4063, %v4062
      %v4096 = vld [vmem:[%s3] sm:$0xff]
      %v4097 = vld [vmem:[%s3 + $0x8] sm:$0xff]
      %v4098 = vld [vmem:[%s3 + $0x10] sm:$0xff]
      %v4099 = vld [vmem:[%s3 + $0x18] sm:$0xff]
      %v4100 = vld [vmem:[%s3 + $0x20] sm:$0xff]
      %v4101 = vld [vmem:[%s3 + $0x28] sm:$0xff]
      %v4102 = vld [vmem:[%s3 + $0x30] sm:$0xff]
      %v4103 = vld [vmem:[%s3 + $0x38] sm:$0xff]
      %v4104 = vld [vmem:[%s5 + $0x2] sm:$0xf]
      %v4106 = vlaneseq
      %v4107 = vshrl.u32 %v4106, 7
      %v4108 = vsub.s32 0, %v4107
      %v4109 = vrot.slane %v4104, %v4108
      %v4110 = vlaneseq
      %v4111 = vshrl.u32 %v4110, 7
      %v4112 = vsub.s32 1, %v4111
      %v4113 = vrot.slane %v4104, %v4112
      %v4114 = vlaneseq
      %v4115 = vshrl.u32 %v4114, 7
      %v4116 = vsub.s32 2, %v4115
      %v4117 = vrot.slane %v4104, %v4116
      %v4118 = vlaneseq
      %v4119 = vshrl.u32 %v4118, 7
      %v4120 = vsub.s32 3, %v4119
      %v4121 = vrot.slane %v4104, %v4120
      %v4134 = vunpack.c.l.b16 %v4096
      %v4135 = vunpack.c.h.b16 %v4096
      %v4136 = vunpack.c.l.b16 %v4097
      %v4137 = vunpack.c.h.b16 %v4097
      %v4138 = vunpack.c.l.b16 %v4098
      %v4139 = vunpack.c.h.b16 %v4098
      %v4140 = vunpack.c.l.b16 %v4099
      %v4141 = vunpack.c.h.b16 %v4099
      %v4142 = vunpack.c.l.b16 %v4100
      %v4143 = vunpack.c.h.b16 %v4100
      %v4144 = vunpack.c.l.b16 %v4101
      %v4145 = vunpack.c.h.b16 %v4101
      %v4146 = vunpack.c.l.b16 %v4102
      %v4147 = vunpack.c.h.b16 %v4102
      %v4148 = vunpack.c.l.b16 %v4103
      %v4149 = vunpack.c.h.b16 %v4103
      %v4150 = vpack.c.b16 %v4138, %v4134
      %v4151 = vpack.c.b16 %v4139, %v4135
      %v4152 = vpack.c.b16 %v4140, %v4136
      %v4153 = vpack.c.b16 %v4141, %v4137
      %v4154 = vpack.c.b16 %v4146, %v4142
      %v4155 = vpack.c.b16 %v4147, %v4143
      %v4156 = vpack.c.b16 %v4148, %v4144
      %v4157 = vpack.c.b16 %v4149, %v4145
      %vm4166 = vcmask 261120
      %v4168 = vsel %vm4166, %v4064, 0
      %v4171 = vsel %vm4166, %v4065, 0
      %v4174 = vsel %vm4166, %v4066, 0
      %v4177 = vsel %vm4166, %v4067, 0
      %v4180 = vsel %vm4166, %v4068, 0
      %v4183 = vsel %vm4166, %v4069, 0
      %v4186 = vsel %vm4166, %v4070, 0
      %v4189 = vsel %vm4166, %v4071, 0
      %v4192 = vsel %vm4166, %v4072, 0
      %v4195 = vsel %vm4166, %v4073, 0
      %v4198 = vsel %vm4166, %v4074, 0
      %v4201 = vsel %vm4166, %v4075, 0
      %v4204 = vsel %vm4166, %v4076, 0
      %v4207 = vsel %vm4166, %v4077, 0
      %v4210 = vsel %vm4166, %v4078, 0
      %v4213 = vsel %vm4166, %v4079, 0
      %v4216 = vsel %vm4166, %v4080, 0
      %v4219 = vsel %vm4166, %v4081, 0
      %v4222 = vsel %vm4166, %v4082, 0
      %v4225 = vsel %vm4166, %v4083, 0
      %v4228 = vsel %vm4166, %v4084, 0
      %v4231 = vsel %vm4166, %v4085, 0
      %v4234 = vsel %vm4166, %v4086, 0
      %v4237 = vsel %vm4166, %v4087, 0
      %v4240 = vsel %vm4166, %v4088, 0
      %v4243 = vsel %vm4166, %v4089, 0
      %v4246 = vsel %vm4166, %v4090, 0
      %v4249 = vsel %vm4166, %v4091, 0
      %v4252 = vsel %vm4166, %v4092, 0
      %v4255 = vsel %vm4166, %v4093, 0
      %v4258 = vsel %vm4166, %v4094, 0
      %v4261 = vsel %vm4166, %v4095, 0
      %4263 = vmatprep.subr.bf16.mxu0 %v4151
      %4264 = vmatpush1.bf16.msra.mxu0 %v4150
      %4265 = vmatprep.subr.bf16.mxu0 %v4155
      %4266 = vmatpush1.bf16.msra.mxu0 %v4154
      %4267 = vmatprep.subr.bf16.mxu0 0
      %4268 = vmatpush1.bf16.msra.mxu0 0
      %4269 = vmatprep.subr.bf16.mxu0 0
      %4270 = vmatpush1.bf16.msra.mxu0 0
      %4271 = vmatprep.subr.bf16.mxu0 0
      %4272 = vmatpush1.bf16.msra.mxu0 0
      %4273 = vmatprep.subr.bf16.mxu0 0
      %4274 = vmatpush1.bf16.msra.mxu0 0
      %4275 = vmatprep.subr.bf16.mxu0 0
      %4276 = vmatpush1.bf16.msra.mxu0 0
      %4277 = vmatprep.subr.bf16.mxu0 0
      %4278 = vmatpush1.bf16.msra.mxu0 0
      %4279 = vmatprep.subr.bf16.mxu0 0
      %4280 = vmatpush1.bf16.msra.mxu0 0
      %4281 = vmatprep.subr.bf16.mxu0 0
      %4282 = vmatpush1.bf16.msra.mxu0 0
      %4283 = vmatprep.subr.bf16.mxu0 0
      %4284 = vmatpush1.bf16.msra.mxu0 0
      %4285 = vmatprep.subr.bf16.mxu0 0
      %4286 = vmatpush1.bf16.msra.mxu0 0
      %4287 = vmatprep.subr.bf16.mxu0 0
      %4288 = vmatpush1.bf16.msra.mxu0 0
      %4289 = vmatprep.subr.bf16.mxu0 0
      %4290 = vmatpush1.bf16.msra.mxu0 0
      %4291 = vmatprep.subr.bf16.mxu0 0
      %4292 = vmatpush1.bf16.msra.mxu0 0
      %4293 = vmatprep.subr.bf16.mxu0 0
      %4294 = vmatpush1.bf16.msra.mxu0 0
      %4295 = vmatprep.mubr.bf16.mxu0 0
      %4296 = vmatmul.mubr.bf16.gmra.mrb[0].mxu0 %v4168
      %v4297 = vpop.f32.mrb[0].mxu0
      %v4298 = vadd.f32 %v4109, %v4297
      %v4299 = vpop.f32.mrb[0].mxu0
      %v4300 = vadd.f32 %v4113, %v4299
      %v4301 = vpop.f32.mrb[0].mxu0
      %v4302 = vadd.f32 %v4109, %v4301
      %v4303 = vpop.f32.mrb[0].mxu0
      %v4304 = vadd.f32 %v4113, %v4303
      %4305 = vmatprep.mubr.bf16.mxu0 0
      %4306 = vmatmul.mubr.bf16.gmra.mrb[0].mxu0 %v4171
      %v4307 = vpop.f32.mrb[0].mxu0
      %v4308 = vadd.f32 %v4109, %v4307
      %v4309 = vpop.f32.mrb[0].mxu0
      %v4310 = vadd.f32 %v4113, %v4309
      %v4311 = vpop.f32.mrb[0].mxu0
      %v4312 = vadd.f32 %v4109, %v4311
      %v4313 = vpop.f32.mrb[0].mxu0
      %v4314 = vadd.f32 %v4113, %v4313
      %4315 = vmatprep.mubr.bf16.mxu0 0
      %4316 = vmatmul.mubr.bf16.gmra.mrb[0].mxu0 %v4174
      %v4317 = vpop.f32.mrb[0].mxu0
      %v4318 = vadd.f32 %v4109, %v4317
      %v4319 = vpop.f32.mrb[0].mxu0
      %v4320 = vadd.f32 %v4113, %v4319
      %v4321 = vpop.f32.mrb[0].mxu0
      %v4322 = vadd.f32 %v4109, %v4321
      %v4323 = vpop.f32.mrb[0].mxu0
      %v4324 = vadd.f32 %v4113, %v4323
      %4325 = vmatprep.mubr.bf16.mxu0 0
      %4326 = vmatmul.mubr.bf16.gmra.mrb[0].mxu0 %v4177
      %v4327 = vpop.f32.mrb[0].mxu0
      %v4328 = vadd.f32 %v4109, %v4327
      %v4329 = vpop.f32.mrb[0].mxu0
      %v4330 = vadd.f32 %v4113, %v4329
      %v4331 = vpop.f32.mrb[0].mxu0
      %v4332 = vadd.f32 %v4109, %v4331
      %v4333 = vpop.f32.mrb[0].mxu0
      %v4334 = vadd.f32 %v4113, %v4333
      %4335 = vmatprep.mubr.bf16.mxu0 0
      %4336 = vmatmul.mubr.bf16.gmra.mrb[0].mxu0 %v4180
      %v4337 = vpop.f32.mrb[0].mxu0
      %v4338 = vadd.f32 %v4109, %v4337
      %v4339 = vpop.f32.mrb[0].mxu0
      %v4340 = vadd.f32 %v4113, %v4339
      %v4341 = vpop.f32.mrb[0].mxu0
      %v4342 = vadd.f32 %v4109, %v4341
      %v4343 = vpop.f32.mrb[0].mxu0
      %v4344 = vadd.f32 %v4113, %v4343
      %4345 = vmatprep.mubr.bf16.mxu0 0
      %4346 = vmatmul.mubr.bf16.gmra.mrb[0].mxu0 %v4183
      %v4347 = vpop.f32.mrb[0].mxu0
      %v4348 = vadd.f32 %v4109, %v4347
      %v4349 = vpop.f32.mrb[0].mxu0
      %v4350 = vadd.f32 %v4113, %v4349
      %v4351 = vpop.f32.mrb[0].mxu0
      %v4352 = vadd.f32 %v4109, %v4351
      %v4353 = vpop.f32.mrb[0].mxu0
      %v4354 = vadd.f32 %v4113, %v4353
      %4355 = vmatprep.mubr.bf16.mxu0 0
      %4356 = vmatmul.mubr.bf16.gmra.mrb[0].mxu0 %v4186
      %v4357 = vpop.f32.mrb[0].mxu0
      %v4358 = vadd.f32 %v4109, %v4357
      %v4359 = vpop.f32.mrb[0].mxu0
      %v4360 = vadd.f32 %v4113, %v4359
      %v4361 = vpop.f32.mrb[0].mxu0
      %v4362 = vadd.f32 %v4109, %v4361
      %v4363 = vpop.f32.mrb[0].mxu0
      %v4364 = vadd.f32 %v4113, %v4363
      %4365 = vmatprep.mubr.bf16.mxu0 0
      %4366 = vmatmul.mubr.bf16.gmra.mrb[0].mxu0 %v4189
      %v4367 = vpop.f32.mrb[0].mxu0
      %v4368 = vadd.f32 %v4109, %v4367
      %v4369 = vpop.f32.mrb[0].mxu0
      %v4370 = vadd.f32 %v4113, %v4369
      %v4371 = vpop.f32.mrb[0].mxu0
      %v4372 = vadd.f32 %v4109, %v4371
      %v4373 = vpop.f32.mrb[0].mxu0
      %v4374 = vadd.f32 %v4113, %v4373
      %4375 = vmatprep.mubr.bf16.mxu0 0
      %4376 = vmatmul.mubr.bf16.gmra.mrb[0].mxu0 %v4192
      %v4377 = vpop.f32.mrb[0].mxu0
      %v4378 = vadd.f32 %v4109, %v4377
      %v4379 = vpop.f32.mrb[0].mxu0
      %v4380 = vadd.f32 %v4113, %v4379
      %v4381 = vpop.f32.mrb[0].mxu0
      %v4382 = vadd.f32 %v4109, %v4381
      %v4383 = vpop.f32.mrb[0].mxu0
      %v4384 = vadd.f32 %v4113, %v4383
      %4385 = vmatprep.mubr.bf16.mxu0 0
      %4386 = vmatmul.mubr.bf16.gmra.mrb[0].mxu0 %v4195
      %v4387 = vpop.f32.mrb[0].mxu0
      %v4388 = vadd.f32 %v4109, %v4387
      %v4389 = vpop.f32.mrb[0].mxu0
      %v4390 = vadd.f32 %v4113, %v4389
      %v4391 = vpop.f32.mrb[0].mxu0
      %v4392 = vadd.f32 %v4109, %v4391
      %v4393 = vpop.f32.mrb[0].mxu0
      %v4394 = vadd.f32 %v4113, %v4393
      %4395 = vmatprep.mubr.bf16.mxu0 0
      %4396 = vmatmul.mubr.bf16.gmra.mrb[0].mxu0 %v4198
      %v4397 = vpop.f32.mrb[0].mxu0
      %v4398 = vadd.f32 %v4109, %v4397
      %v4399 = vpop.f32.mrb[0].mxu0
      %v4400 = vadd.f32 %v4113, %v4399
      %v4401 = vpop.f32.mrb[0].mxu0
      %v4402 = vadd.f32 %v4109, %v4401
      %v4403 = vpop.f32.mrb[0].mxu0
      %v4404 = vadd.f32 %v4113, %v4403
      %4405 = vmatprep.mubr.bf16.mxu0 0
      %4406 = vmatmul.mubr.bf16.gmra.mrb[0].mxu0 %v4201
      %v4407 = vpop.f32.mrb[0].mxu0
      %v4408 = vadd.f32 %v4109, %v4407
      %v4409 = vpop.f32.mrb[0].mxu0
      %v4410 = vadd.f32 %v4113, %v4409
      %v4411 = vpop.f32.mrb[0].mxu0
      %v4412 = vadd.f32 %v4109, %v4411
      %v4413 = vpop.f32.mrb[0].mxu0
      %v4414 = vadd.f32 %v4113, %v4413
      %4415 = vmatprep.mubr.bf16.mxu0 0
      %4416 = vmatmul.mubr.bf16.gmra.mrb[0].mxu0 %v4204
      %v4417 = vpop.f32.mrb[0].mxu0
      %v4418 = vadd.f32 %v4109, %v4417
      %v4419 = vpop.f32.mrb[0].mxu0
      %v4420 = vadd.f32 %v4113, %v4419
      %v4421 = vpop.f32.mrb[0].mxu0
      %v4422 = vadd.f32 %v4109, %v4421
      %v4423 = vpop.f32.mrb[0].mxu0
      %v4424 = vadd.f32 %v4113, %v4423
      %4425 = vmatprep.mubr.bf16.mxu0 0
      %4426 = vmatmul.mubr.bf16.gmra.mrb[0].mxu0 %v4207
      %v4427 = vpop.f32.mrb[0].mxu0
      %v4428 = vadd.f32 %v4109, %v4427
      %v4429 = vpop.f32.mrb[0].mxu0
      %v4430 = vadd.f32 %v4113, %v4429
      %v4431 = vpop.f32.mrb[0].mxu0
      %v4432 = vadd.f32 %v4109, %v4431
      %v4433 = vpop.f32.mrb[0].mxu0
      %v4434 = vadd.f32 %v4113, %v4433
      %4435 = vmatprep.mubr.bf16.mxu0 0
      %4436 = vmatmul.mubr.bf16.gmra.mrb[0].mxu0 %v4210
      %v4437 = vpop.f32.mrb[0].mxu0
      %v4438 = vadd.f32 %v4109, %v4437
      %v4439 = vpop.f32.mrb[0].mxu0
      %v4440 = vadd.f32 %v4113, %v4439
      %v4441 = vpop.f32.mrb[0].mxu0
      %v4442 = vadd.f32 %v4109, %v4441
      %v4443 = vpop.f32.mrb[0].mxu0
      %v4444 = vadd.f32 %v4113, %v4443
      %4445 = vmatprep.mubr.bf16.mxu0 0
      %4446 = vmatmul.mubr.bf16.gmra.mrb[0].mxu0 %v4213
      %v4447 = vpop.f32.mrb[0].mxu0
      %v4448 = vadd.f32 %v4109, %v4447
      %v4449 = vpop.f32.mrb[0].mxu0
      %v4450 = vadd.f32 %v4113, %v4449
      %v4451 = vpop.f32.mrb[0].mxu0
      %v4452 = vadd.f32 %v4109, %v4451
      %v4453 = vpop.f32.mrb[0].mxu0
      %v4454 = vadd.f32 %v4113, %v4453
      %4455 = vmatprep.mubr.bf16.mxu0 0
      %4456 = vmatmul.mubr.bf16.gmra.mrb[0].mxu0 %v4216
      %v4457 = vpop.f32.mrb[0].mxu0
      %v4458 = vadd.f32 %v4109, %v4457
      %v4459 = vpop.f32.mrb[0].mxu0
      %v4460 = vadd.f32 %v4113, %v4459
      %v4461 = vpop.f32.mrb[0].mxu0
      %v4462 = vadd.f32 %v4109, %v4461
      %v4463 = vpop.f32.mrb[0].mxu0
      %v4464 = vadd.f32 %v4113, %v4463
      %4465 = vmatprep.mubr.bf16.mxu0 0
      %4466 = vmatmul.mubr.bf16.gmra.mrb[0].mxu0 %v4219
      %v4467 = vpop.f32.mrb[0].mxu0
      %v4468 = vadd.f32 %v4109, %v4467
      %v4469 = vpop.f32.mrb[0].mxu0
      %v4470 = vadd.f32 %v4113, %v4469
      %v4471 = vpop.f32.mrb[0].mxu0
      %v4472 = vadd.f32 %v4109, %v4471
      %v4473 = vpop.f32.mrb[0].mxu0
      %v4474 = vadd.f32 %v4113, %v4473
      %4475 = vmatprep.mubr.bf16.mxu0 0
      %4476 = vmatmul.mubr.bf16.gmra.mrb[0].mxu0 %v4222
      %v4477 = vpop.f32.mrb[0].mxu0
      %v4478 = vadd.f32 %v4109, %v4477
      %v4479 = vpop.f32.mrb[0].mxu0
      %v4480 = vadd.f32 %v4113, %v4479
      %v4481 = vpop.f32.mrb[0].mxu0
      %v4482 = vadd.f32 %v4109, %v4481
      %v4483 = vpop.f32.mrb[0].mxu0
      %v4484 = vadd.f32 %v4113, %v4483
      %4485 = vmatprep.mubr.bf16.mxu0 0
      %4486 = vmatmul.mubr.bf16.gmra.mrb[0].mxu0 %v4225
      %v4487 = vpop.f32.mrb[0].mxu0
      %v4488 = vadd.f32 %v4109, %v4487
      %v4489 = vpop.f32.mrb[0].mxu0
      %v4490 = vadd.f32 %v4113, %v4489
      %v4491 = vpop.f32.mrb[0].mxu0
      %v4492 = vadd.f32 %v4109, %v4491
      %v4493 = vpop.f32.mrb[0].mxu0
      %v4494 = vadd.f32 %v4113, %v4493
      %4495 = vmatprep.mubr.bf16.mxu0 0
      %4496 = vmatmul.mubr.bf16.gmra.mrb[0].mxu0 %v4228
      %v4497 = vpop.f32.mrb[0].mxu0
      %v4498 = vadd.f32 %v4109, %v4497
      %v4499 = vpop.f32.mrb[0].mxu0
      %v4500 = vadd.f32 %v4113, %v4499
      %v4501 = vpop.f32.mrb[0].mxu0
      %v4502 = vadd.f32 %v4109, %v4501
      %v4503 = vpop.f32.mrb[0].mxu0
      %v4504 = vadd.f32 %v4113, %v4503
      %4505 = vmatprep.mubr.bf16.mxu0 0
      %4506 = vmatmul.mubr.bf16.gmra.mrb[0].mxu0 %v4231
      %v4507 = vpop.f32.mrb[0].mxu0
      %v4508 = vadd.f32 %v4109, %v4507
      %v4509 = vpop.f32.mrb[0].mxu0
      %v4510 = vadd.f32 %v4113, %v4509
      %v4511 = vpop.f32.mrb[0].mxu0
      %v4512 = vadd.f32 %v4109, %v4511
      %v4513 = vpop.f32.mrb[0].mxu0
      %v4514 = vadd.f32 %v4113, %v4513
      %4515 = vmatprep.mubr.bf16.mxu0 0
      %4516 = vmatmul.mubr.bf16.gmra.mrb[0].mxu0 %v4234
      %v4517 = vpop.f32.mrb[0].mxu0
      %v4518 = vadd.f32 %v4109, %v4517
      %v4519 = vpop.f32.mrb[0].mxu0
      %v4520 = vadd.f32 %v4113, %v4519
      %v4521 = vpop.f32.mrb[0].mxu0
      %v4522 = vadd.f32 %v4109, %v4521
      %v4523 = vpop.f32.mrb[0].mxu0
      %v4524 = vadd.f32 %v4113, %v4523
      %4525 = vmatprep.mubr.bf16.mxu0 0
      %4526 = vmatmul.mubr.bf16.gmra.mrb[0].mxu0 %v4237
      %v4527 = vpop.f32.mrb[0].mxu0
      %v4528 = vadd.f32 %v4109, %v4527
      %v4529 = vpop.f32.mrb[0].mxu0
      %v4530 = vadd.f32 %v4113, %v4529
      %v4531 = vpop.f32.mrb[0].mxu0
      %v4532 = vadd.f32 %v4109, %v4531
      %v4533 = vpop.f32.mrb[0].mxu0
      %v4534 = vadd.f32 %v4113, %v4533
      %4535 = vmatprep.mubr.bf16.mxu0 0
      %4536 = vmatmul.mubr.bf16.gmra.mrb[0].mxu0 %v4240
      %v4537 = vpop.f32.mrb[0].mxu0
      %v4538 = vadd.f32 %v4109, %v4537
      %v4539 = vpop.f32.mrb[0].mxu0
      %v4540 = vadd.f32 %v4113, %v4539
      %v4541 = vpop.f32.mrb[0].mxu0
      %v4542 = vadd.f32 %v4109, %v4541
      %v4543 = vpop.f32.mrb[0].mxu0
      %v4544 = vadd.f32 %v4113, %v4543
      %4545 = vmatprep.mubr.bf16.mxu0 0
      %4546 = vmatmul.mubr.bf16.gmra.mrb[0].mxu0 %v4243
      %v4547 = vpop.f32.mrb[0].mxu0
      %v4548 = vadd.f32 %v4109, %v4547
      %v4549 = vpop.f32.mrb[0].mxu0
      %v4550 = vadd.f32 %v4113, %v4549
      %v4551 = vpop.f32.mrb[0].mxu0
      %v4552 = vadd.f32 %v4109, %v4551
      %v4553 = vpop.f32.mrb[0].mxu0
      %v4554 = vadd.f32 %v4113, %v4553
      %4555 = vmatprep.mubr.bf16.mxu0 0
      %4556 = vmatmul.mubr.bf16.gmra.mrb[0].mxu0 %v4246
      %v4557 = vpop.f32.mrb[0].mxu0
      %v4558 = vadd.f32 %v4109, %v4557
      %v4559 = vpop.f32.mrb[0].mxu0
      %v4560 = vadd.f32 %v4113, %v4559
      %v4561 = vpop.f32.mrb[0].mxu0
      %v4562 = vadd.f32 %v4109, %v4561
      %v4563 = vpop.f32.mrb[0].mxu0
      %v4564 = vadd.f32 %v4113, %v4563
      %4565 = vmatprep.mubr.bf16.mxu0 0
      %4566 = vmatmul.mubr.bf16.gmra.mrb[0].mxu0 %v4249
      %v4567 = vpop.f32.mrb[0].mxu0
      %v4568 = vadd.f32 %v4109, %v4567
      %v4569 = vpop.f32.mrb[0].mxu0
      %v4570 = vadd.f32 %v4113, %v4569
      %v4571 = vpop.f32.mrb[0].mxu0
      %v4572 = vadd.f32 %v4109, %v4571
      %v4573 = vpop.f32.mrb[0].mxu0
      %v4574 = vadd.f32 %v4113, %v4573
      %4575 = vmatprep.mubr.bf16.mxu0 0
      %4576 = vmatmul.mubr.bf16.gmra.mrb[0].mxu0 %v4252
      %v4577 = vpop.f32.mrb[0].mxu0
      %v4578 = vadd.f32 %v4109, %v4577
      %v4579 = vpop.f32.mrb[0].mxu0
      %v4580 = vadd.f32 %v4113, %v4579
      %v4581 = vpop.f32.mrb[0].mxu0
      %v4582 = vadd.f32 %v4109, %v4581
      %v4583 = vpop.f32.mrb[0].mxu0
      %v4584 = vadd.f32 %v4113, %v4583
      %4585 = vmatprep.mubr.bf16.mxu0 0
      %4586 = vmatmul.mubr.bf16.gmra.mrb[0].mxu0 %v4255
      %v4587 = vpop.f32.mrb[0].mxu0
      %v4588 = vadd.f32 %v4109, %v4587
      %v4589 = vpop.f32.mrb[0].mxu0
      %v4590 = vadd.f32 %v4113, %v4589
      %v4591 = vpop.f32.mrb[0].mxu0
      %v4592 = vadd.f32 %v4109, %v4591
      %v4593 = vpop.f32.mrb[0].mxu0
      %v4594 = vadd.f32 %v4113, %v4593
      %4595 = vmatprep.mubr.bf16.mxu0 0
      %4596 = vmatmul.mubr.bf16.gmra.mrb[0].mxu0 %v4258
      %v4597 = vpop.f32.mrb[0].mxu0
      %v4598 = vadd.f32 %v4109, %v4597
      %v4599 = vpop.f32.mrb[0].mxu0
      %v4600 = vadd.f32 %v4113, %v4599
      %v4601 = vpop.f32.mrb[0].mxu0
      %v4602 = vadd.f32 %v4109, %v4601
      %v4603 = vpop.f32.mrb[0].mxu0
      %v4604 = vadd.f32 %v4113, %v4603
      %4605 = vmatprep.mubr.bf16.mxu0 0
      %4606 = vmatmul.mubr.bf16.gmra.mrb[0].mxu0 %v4261
      %v4607 = vpop.f32.mrb[0].mxu0
      %v4608 = vadd.f32 %v4109, %v4607
      %v4609 = vpop.f32.mrb[0].mxu0
      %v4610 = vadd.f32 %v4113, %v4609
      %v4611 = vpop.f32.mrb[0].mxu0
      %v4612 = vadd.f32 %v4109, %v4611
      %v4613 = vpop.f32.mrb[0].mxu0
      %v4614 = vadd.f32 %v4113, %v4613
      %4615 = vdwg.mxu0
      %4616 = vmatprep.subr.bf16.mxu0 %v4153
      %4617 = vmatpush1.bf16.msra.mxu0 %v4152
      %4618 = vmatprep.subr.bf16.mxu0 %v4157
      %4619 = vmatpush1.bf16.msra.mxu0 %v4156
      %4620 = vmatprep.subr.bf16.mxu0 0
      %4621 = vmatpush1.bf16.msra.mxu0 0
      %4622 = vmatprep.subr.bf16.mxu0 0
      %4623 = vmatpush1.bf16.msra.mxu0 0
      %4624 = vmatprep.subr.bf16.mxu0 0
      %4625 = vmatpush1.bf16.msra.mxu0 0
      %4626 = vmatprep.subr.bf16.mxu0 0
      %4627 = vmatpush1.bf16.msra.mxu0 0
      %4628 = vmatprep.subr.bf16.mxu0 0
      %4629 = vmatpush1.bf16.msra.mxu0 0
      %4630 = vmatprep.subr.bf16.mxu0 0
      %4631 = vmatpush1.bf16.msra.mxu0 0
      %4632 = vmatprep.subr.bf16.mxu0 0
      %4633 = vmatpush1.bf16.msra.mxu0 0
      %4634 = vmatprep.subr.bf16.mxu0 0
      %4635 = vmatpush1.bf16.msra.mxu0 0
      %4636 = vmatprep.subr.bf16.mxu0 0
      %4637 = vmatpush1.bf16.msra.mxu0 0
      %4638 = vmatprep.subr.bf16.mxu0 0
      %4639 = vmatpush1.bf16.msra.mxu0 0
      %4640 = vmatprep.subr.bf16.mxu0 0
      %4641 = vmatpush1.bf16.msra.mxu0 0
      %4642 = vmatprep.subr.bf16.mxu0 0
      %4643 = vmatpush1.bf16.msra.mxu0 0
      %4644 = vmatprep.subr.bf16.mxu0 0
      %4645 = vmatpush1.bf16.msra.mxu0 0
      %4646 = vmatprep.subr.bf16.mxu0 0
      %4647 = vmatpush1.bf16.msra.mxu0 0
      %4648 = vmatprep.mubr.bf16.mxu0 0
      %4649 = vmatmul.mubr.bf16.gmra.mrb[0].mxu0 %v4168
      %v4650 = vpop.f32.mrb[0].mxu0
      %v4651 = vadd.f32 %v4117, %v4650
      %v4652 = vpop.f32.mrb[0].mxu0
      %v4653 = vadd.f32 %v4121, %v4652
      %v4654 = vpop.f32.mrb[0].mxu0
      %v4655 = vadd.f32 %v4117, %v4654
      %v4656 = vpop.f32.mrb[0].mxu0
      %v4657 = vadd.f32 %v4121, %v4656
      %4658 = vmatprep.mubr.bf16.mxu0 0
      %4659 = vmatmul.mubr.bf16.gmra.mrb[0].mxu0 %v4171
      %v4660 = vpop.f32.mrb[0].mxu0
      %v4661 = vadd.f32 %v4117, %v4660
      %v4662 = vpop.f32.mrb[0].mxu0
      %v4663 = vadd.f32 %v4121, %v4662
      %v4664 = vpop.f32.mrb[0].mxu0
      %v4665 = vadd.f32 %v4117, %v4664
      %v4666 = vpop.f32.mrb[0].mxu0
      %v4667 = vadd.f32 %v4121, %v4666
      %4668 = vmatprep.mubr.bf16.mxu0 0
      %4669 = vmatmul.mubr.bf16.gmra.mrb[0].mxu0 %v4174
      %v4670 = vpop.f32.mrb[0].mxu0
      %v4671 = vadd.f32 %v4117, %v4670
      %v4672 = vpop.f32.mrb[0].mxu0
      %v4673 = vadd.f32 %v4121, %v4672
      %v4674 = vpop.f32.mrb[0].mxu0
      %v4675 = vadd.f32 %v4117, %v4674
      %v4676 = vpop.f32.mrb[0].mxu0
      %v4677 = vadd.f32 %v4121, %v4676
      %4678 = vmatprep.mubr.bf16.mxu0 0
      %4679 = vmatmul.mubr.bf16.gmra.mrb[0].mxu0 %v4177
      %v4680 = vpop.f32.mrb[0].mxu0
      %v4681 = vadd.f32 %v4117, %v4680
      %v4682 = vpop.f32.mrb[0].mxu0
      %v4683 = vadd.f32 %v4121, %v4682
      %v4684 = vpop.f32.mrb[0].mxu0
      %v4685 = vadd.f32 %v4117, %v4684
      %v4686 = vpop.f32.mrb[0].mxu0
      %v4687 = vadd.f32 %v4121, %v4686
      %4688 = vmatprep.mubr.bf16.mxu0 0
      %4689 = vmatmul.mubr.bf16.gmra.mrb[0].mxu0 %v4180
      %v4690 = vpop.f32.mrb[0].mxu0
      %v4691 = vadd.f32 %v4117, %v4690
      %v4692 = vpop.f32.mrb[0].mxu0
      %v4693 = vadd.f32 %v4121, %v4692
      %v4694 = vpop.f32.mrb[0].mxu0
      %v4695 = vadd.f32 %v4117, %v4694
      %v4696 = vpop.f32.mrb[0].mxu0
      %v4697 = vadd.f32 %v4121, %v4696
      %4698 = vmatprep.mubr.bf16.mxu0 0
      %4699 = vmatmul.mubr.bf16.gmra.mrb[0].mxu0 %v4183
      %v4700 = vpop.f32.mrb[0].mxu0
      %v4701 = vadd.f32 %v4117, %v4700
      %v4702 = vpop.f32.mrb[0].mxu0
      %v4703 = vadd.f32 %v4121, %v4702
      %v4704 = vpop.f32.mrb[0].mxu0
      %v4705 = vadd.f32 %v4117, %v4704
      %v4706 = vpop.f32.mrb[0].mxu0
      %v4707 = vadd.f32 %v4121, %v4706
      %4708 = vmatprep.mubr.bf16.mxu0 0
      %4709 = vmatmul.mubr.bf16.gmra.mrb[0].mxu0 %v4186
      %v4710 = vpop.f32.mrb[0].mxu0
      %v4711 = vadd.f32 %v4117, %v4710
      %v4712 = vpop.f32.mrb[0].mxu0
      %v4713 = vadd.f32 %v4121, %v4712
      %v4714 = vpop.f32.mrb[0].mxu0
      %v4715 = vadd.f32 %v4117, %v4714
      %v4716 = vpop.f32.mrb[0].mxu0
      %v4717 = vadd.f32 %v4121, %v4716
      %4718 = vmatprep.mubr.bf16.mxu0 0
      %4719 = vmatmul.mubr.bf16.gmra.mrb[0].mxu0 %v4189
      %v4720 = vpop.f32.mrb[0].mxu0
      %v4721 = vadd.f32 %v4117, %v4720
      %v4722 = vpop.f32.mrb[0].mxu0
      %v4723 = vadd.f32 %v4121, %v4722
      %v4724 = vpop.f32.mrb[0].mxu0
      %v4725 = vadd.f32 %v4117, %v4724
      %v4726 = vpop.f32.mrb[0].mxu0
      %v4727 = vadd.f32 %v4121, %v4726
      %4728 = vmatprep.mubr.bf16.mxu0 0
      %4729 = vmatmul.mubr.bf16.gmra.mrb[0].mxu0 %v4192
      %v4730 = vpop.f32.mrb[0].mxu0
      %v4731 = vadd.f32 %v4117, %v4730
      %v4732 = vpop.f32.mrb[0].mxu0
      %v4733 = vadd.f32 %v4121, %v4732
      %v4734 = vpop.f32.mrb[0].mxu0
      %v4735 = vadd.f32 %v4117, %v4734
      %v4736 = vpop.f32.mrb[0].mxu0
      %v4737 = vadd.f32 %v4121, %v4736
      %4738 = vmatprep.mubr.bf16.mxu0 0
      %4739 = vmatmul.mubr.bf16.gmra.mrb[0].mxu0 %v4195
      %v4740 = vpop.f32.mrb[0].mxu0
      %v4741 = vadd.f32 %v4117, %v4740
      %v4742 = vpop.f32.mrb[0].mxu0
      %v4743 = vadd.f32 %v4121, %v4742
      %v4744 = vpop.f32.mrb[0].mxu0
      %v4745 = vadd.f32 %v4117, %v4744
      %v4746 = vpop.f32.mrb[0].mxu0
      %v4747 = vadd.f32 %v4121, %v4746
      %4748 = vmatprep.mubr.bf16.mxu0 0
      %4749 = vmatmul.mubr.bf16.gmra.mrb[0].mxu0 %v4198
      %v4750 = vpop.f32.mrb[0].mxu0
      %v4751 = vadd.f32 %v4117, %v4750
      %v4752 = vpop.f32.mrb[0].mxu0
      %v4753 = vadd.f32 %v4121, %v4752
      %v4754 = vpop.f32.mrb[0].mxu0
      %v4755 = vadd.f32 %v4117, %v4754
      %v4756 = vpop.f32.mrb[0].mxu0
      %v4757 = vadd.f32 %v4121, %v4756
      %4758 = vmatprep.mubr.bf16.mxu0 0
      %4759 = vmatmul.mubr.bf16.gmra.mrb[0].mxu0 %v4201
      %v4760 = vpop.f32.mrb[0].mxu0
      %v4761 = vadd.f32 %v4117, %v4760
      %v4762 = vpop.f32.mrb[0].mxu0
      %v4763 = vadd.f32 %v4121, %v4762
      %v4764 = vpop.f32.mrb[0].mxu0
      %v4765 = vadd.f32 %v4117, %v4764
      %v4766 = vpop.f32.mrb[0].mxu0
      %v4767 = vadd.f32 %v4121, %v4766
      %4768 = vmatprep.mubr.bf16.mxu0 0
      %4769 = vmatmul.mubr.bf16.gmra.mrb[0].mxu0 %v4204
      %v4770 = vpop.f32.mrb[0].mxu0
      %v4771 = vadd.f32 %v4117, %v4770
      %v4772 = vpop.f32.mrb[0].mxu0
      %v4773 = vadd.f32 %v4121, %v4772
      %v4774 = vpop.f32.mrb[0].mxu0
      %v4775 = vadd.f32 %v4117, %v4774
      %v4776 = vpop.f32.mrb[0].mxu0
      %v4777 = vadd.f32 %v4121, %v4776
      %4778 = vmatprep.mubr.bf16.mxu0 0
      %4779 = vmatmul.mubr.bf16.gmra.mrb[0].mxu0 %v4207
      %v4780 = vpop.f32.mrb[0].mxu0
      %v4781 = vadd.f32 %v4117, %v4780
      %v4782 = vpop.f32.mrb[0].mxu0
      %v4783 = vadd.f32 %v4121, %v4782
      %v4784 = vpop.f32.mrb[0].mxu0
      %v4785 = vadd.f32 %v4117, %v4784
      %v4786 = vpop.f32.mrb[0].mxu0
      %v4787 = vadd.f32 %v4121, %v4786
      %4788 = vmatprep.mubr.bf16.mxu0 0
      %4789 = vmatmul.mubr.bf16.gmra.mrb[0].mxu0 %v4210
      %v4790 = vpop.f32.mrb[0].mxu0
      %v4791 = vadd.f32 %v4117, %v4790
      %v4792 = vpop.f32.mrb[0].mxu0
      %v4793 = vadd.f32 %v4121, %v4792
      %v4794 = vpop.f32.mrb[0].mxu0
      %v4795 = vadd.f32 %v4117, %v4794
      %v4796 = vpop.f32.mrb[0].mxu0
      %v4797 = vadd.f32 %v4121, %v4796
      %4798 = vmatprep.mubr.bf16.mxu0 0
      %4799 = vmatmul.mubr.bf16.gmra.mrb[0].mxu0 %v4213
      %v4800 = vpop.f32.mrb[0].mxu0
      %v4801 = vadd.f32 %v4117, %v4800
      %v4802 = vpop.f32.mrb[0].mxu0
      %v4803 = vadd.f32 %v4121, %v4802
      %v4804 = vpop.f32.mrb[0].mxu0
      %v4805 = vadd.f32 %v4117, %v4804
      %v4806 = vpop.f32.mrb[0].mxu0
      %v4807 = vadd.f32 %v4121, %v4806
      %4808 = vmatprep.mubr.bf16.mxu0 0
      %4809 = vmatmul.mubr.bf16.gmra.mrb[0].mxu0 %v4216
      %v4810 = vpop.f32.mrb[0].mxu0
      %v4811 = vadd.f32 %v4117, %v4810
      %v4812 = vpop.f32.mrb[0].mxu0
      %v4813 = vadd.f32 %v4121, %v4812
      %v4814 = vpop.f32.mrb[0].mxu0
      %v4815 = vadd.f32 %v4117, %v4814
      %v4816 = vpop.f32.mrb[0].mxu0
      %v4817 = vadd.f32 %v4121, %v4816
      %4818 = vmatprep.mubr.bf16.mxu0 0
      %4819 = vmatmul.mubr.bf16.gmra.mrb[0].mxu0 %v4219
      %v4820 = vpop.f32.mrb[0].mxu0
      %v4821 = vadd.f32 %v4117, %v4820
      %v4822 = vpop.f32.mrb[0].mxu0
      %v4823 = vadd.f32 %v4121, %v4822
      %v4824 = vpop.f32.mrb[0].mxu0
      %v4825 = vadd.f32 %v4117, %v4824
      %v4826 = vpop.f32.mrb[0].mxu0
      %v4827 = vadd.f32 %v4121, %v4826
      %4828 = vmatprep.mubr.bf16.mxu0 0
      %4829 = vmatmul.mubr.bf16.gmra.mrb[0].mxu0 %v4222
      %v4830 = vpop.f32.mrb[0].mxu0
      %v4831 = vadd.f32 %v4117, %v4830
      %v4832 = vpop.f32.mrb[0].mxu0
      %v4833 = vadd.f32 %v4121, %v4832
      %v4834 = vpop.f32.mrb[0].mxu0
      %v4835 = vadd.f32 %v4117, %v4834
      %v4836 = vpop.f32.mrb[0].mxu0
      %v4837 = vadd.f32 %v4121, %v4836
      %4838 = vmatprep.mubr.bf16.mxu0 0
      %4839 = vmatmul.mubr.bf16.gmra.mrb[0].mxu0 %v4225
      %v4840 = vpop.f32.mrb[0].mxu0
      %v4841 = vadd.f32 %v4117, %v4840
      %v4842 = vpop.f32.mrb[0].mxu0
      %v4843 = vadd.f32 %v4121, %v4842
      %v4844 = vpop.f32.mrb[0].mxu0
      %v4845 = vadd.f32 %v4117, %v4844
      %v4846 = vpop.f32.mrb[0].mxu0
      %v4847 = vadd.f32 %v4121, %v4846
      %4848 = vmatprep.mubr.bf16.mxu0 0
      %4849 = vmatmul.mubr.bf16.gmra.mrb[0].mxu0 %v4228
      %v4850 = vpop.f32.mrb[0].mxu0
      %v4851 = vadd.f32 %v4117, %v4850
      %v4852 = vpop.f32.mrb[0].mxu0
      %v4853 = vadd.f32 %v4121, %v4852
      %v4854 = vpop.f32.mrb[0].mxu0
      %v4855 = vadd.f32 %v4117, %v4854
      %v4856 = vpop.f32.mrb[0].mxu0
      %v4857 = vadd.f32 %v4121, %v4856
      %4858 = vmatprep.mubr.bf16.mxu0 0
      %4859 = vmatmul.mubr.bf16.gmra.mrb[0].mxu0 %v4231
      %v4860 = vpop.f32.mrb[0].mxu0
      %v4861 = vadd.f32 %v4117, %v4860
      %v4862 = vpop.f32.mrb[0].mxu0
      %v4863 = vadd.f32 %v4121, %v4862
      %v4864 = vpop.f32.mrb[0].mxu0
      %v4865 = vadd.f32 %v4117, %v4864
      %v4866 = vpop.f32.mrb[0].mxu0
      %v4867 = vadd.f32 %v4121, %v4866
      %4868 = vmatprep.mubr.bf16.mxu0 0
      %4869 = vmatmul.mubr.bf16.gmra.mrb[0].mxu0 %v4234
      %v4870 = vpop.f32.mrb[0].mxu0
      %v4871 = vadd.f32 %v4117, %v4870
      %v4872 = vpop.f32.mrb[0].mxu0
      %v4873 = vadd.f32 %v4121, %v4872
      %v4874 = vpop.f32.mrb[0].mxu0
      %v4875 = vadd.f32 %v4117, %v4874
      %v4876 = vpop.f32.mrb[0].mxu0
      %v4877 = vadd.f32 %v4121, %v4876
      %4878 = vmatprep.mubr.bf16.mxu0 0
      %4879 = vmatmul.mubr.bf16.gmra.mrb[0].mxu0 %v4237
      %v4880 = vpop.f32.mrb[0].mxu0
      %v4881 = vadd.f32 %v4117, %v4880
      %v4882 = vpop.f32.mrb[0].mxu0
      %v4883 = vadd.f32 %v4121, %v4882
      %v4884 = vpop.f32.mrb[0].mxu0
      %v4885 = vadd.f32 %v4117, %v4884
      %v4886 = vpop.f32.mrb[0].mxu0
      %v4887 = vadd.f32 %v4121, %v4886
      %4888 = vmatprep.mubr.bf16.mxu0 0
      %4889 = vmatmul.mubr.bf16.gmra.mrb[0].mxu0 %v4240
      %v4890 = vpop.f32.mrb[0].mxu0
      %v4891 = vadd.f32 %v4117, %v4890
      %v4892 = vpop.f32.mrb[0].mxu0
      %v4893 = vadd.f32 %v4121, %v4892
      %v4894 = vpop.f32.mrb[0].mxu0
      %v4895 = vadd.f32 %v4117, %v4894
      %v4896 = vpop.f32.mrb[0].mxu0
      %v4897 = vadd.f32 %v4121, %v4896
      %4898 = vmatprep.mubr.bf16.mxu0 0
      %4899 = vmatmul.mubr.bf16.gmra.mrb[0].mxu0 %v4243
      %v4900 = vpop.f32.mrb[0].mxu0
      %v4901 = vadd.f32 %v4117, %v4900
      %v4902 = vpop.f32.mrb[0].mxu0
      %v4903 = vadd.f32 %v4121, %v4902
      %v4904 = vpop.f32.mrb[0].mxu0
      %v4905 = vadd.f32 %v4117, %v4904
      %v4906 = vpop.f32.mrb[0].mxu0
      %v4907 = vadd.f32 %v4121, %v4906
      %4908 = vmatprep.mubr.bf16.mxu0 0
      %4909 = vmatmul.mubr.bf16.gmra.mrb[0].mxu0 %v4246
      %v4910 = vpop.f32.mrb[0].mxu0
      %v4911 = vadd.f32 %v4117, %v4910
      %v4912 = vpop.f32.mrb[0].mxu0
      %v4913 = vadd.f32 %v4121, %v4912
      %v4914 = vpop.f32.mrb[0].mxu0
      %v4915 = vadd.f32 %v4117, %v4914
      %v4916 = vpop.f32.mrb[0].mxu0
      %v4917 = vadd.f32 %v4121, %v4916
      %4918 = vmatprep.mubr.bf16.mxu0 0
      %4919 = vmatmul.mubr.bf16.gmra.mrb[0].mxu0 %v4249
      %v4920 = vpop.f32.mrb[0].mxu0
      %v4921 = vadd.f32 %v4117, %v4920
      %v4922 = vpop.f32.mrb[0].mxu0
      %v4923 = vadd.f32 %v4121, %v4922
      %v4924 = vpop.f32.mrb[0].mxu0
      %v4925 = vadd.f32 %v4117, %v4924
      %v4926 = vpop.f32.mrb[0].mxu0
      %v4927 = vadd.f32 %v4121, %v4926
      %4928 = vmatprep.mubr.bf16.mxu0 0
      %4929 = vmatmul.mubr.bf16.gmra.mrb[0].mxu0 %v4252
      %v4930 = vpop.f32.mrb[0].mxu0
      %v4931 = vadd.f32 %v4117, %v4930
      %v4932 = vpop.f32.mrb[0].mxu0
      %v4933 = vadd.f32 %v4121, %v4932
      %v4934 = vpop.f32.mrb[0].mxu0
      %v4935 = vadd.f32 %v4117, %v4934
      %v4936 = vpop.f32.mrb[0].mxu0
      %v4937 = vadd.f32 %v4121, %v4936
      %4938 = vmatprep.mubr.bf16.mxu0 0
      %4939 = vmatmul.mubr.bf16.gmra.mrb[0].mxu0 %v4255
      %v4940 = vpop.f32.mrb[0].mxu0
      %v4941 = vadd.f32 %v4117, %v4940
      %v4942 = vpop.f32.mrb[0].mxu0
      %v4943 = vadd.f32 %v4121, %v4942
      %v4944 = vpop.f32.mrb[0].mxu0
      %v4945 = vadd.f32 %v4117, %v4944
      %v4946 = vpop.f32.mrb[0].mxu0
      %v4947 = vadd.f32 %v4121, %v4946
      %4948 = vmatprep.mubr.bf16.mxu0 0
      %4949 = vmatmul.mubr.bf16.gmra.mrb[0].mxu0 %v4258
      %v4950 = vpop.f32.mrb[0].mxu0
      %v4951 = vadd.f32 %v4117, %v4950
      %v4952 = vpop.f32.mrb[0].mxu0
      %v4953 = vadd.f32 %v4121, %v4952
      %v4954 = vpop.f32.mrb[0].mxu0
      %v4955 = vadd.f32 %v4117, %v4954
      %v4956 = vpop.f32.mrb[0].mxu0
      %v4957 = vadd.f32 %v4121, %v4956
      %4958 = vmatprep.mubr.bf16.mxu0 0
      %4959 = vmatmul.mubr.bf16.gmra.mrb[0].mxu0 %v4261
      %v4960 = vpop.f32.mrb[0].mxu0
      %v4961 = vadd.f32 %v4117, %v4960
      %v4962 = vpop.f32.mrb[0].mxu0
      %v4963 = vadd.f32 %v4121, %v4962
      %v4964 = vpop.f32.mrb[0].mxu0
      %v4965 = vadd.f32 %v4117, %v4964
      %v4966 = vpop.f32.mrb[0].mxu0
      %v4967 = vadd.f32 %v4121, %v4966
      %4968 = vdwg.mxu0
      %v4969 = vmax.f32 %v4298, 0.0
      %v4970 = vmax.f32 %v4300, 0.0
      %v4971 = vmax.f32 %v4651, 0.0
      %v4972 = vmax.f32 %v4653, 0.0
      %v4973 = vmax.f32 %v4302, 0.0
      %v4974 = vmax.f32 %v4304, 0.0
      %v4975 = vmax.f32 %v4655, 0.0
      %v4976 = vmax.f32 %v4657, 0.0
      %v4977 = vmax.f32 %v4308, 0.0
      %v4978 = vmax.f32 %v4310, 0.0
      %v4979 = vmax.f32 %v4661, 0.0
      %v4980 = vmax.f32 %v4663, 0.0
      %v4981 = vmax.f32 %v4312, 0.0
      %v4982 = vmax.f32 %v4314, 0.0
      %v4983 = vmax.f32 %v4665, 0.0
      %v4984 = vmax.f32 %v4667, 0.0
      %v4985 = vmax.f32 %v4318, 0.0
      %v4986 = vmax.f32 %v4320, 0.0
      %v4987 = vmax.f32 %v4671, 0.0
      %v4988 = vmax.f32 %v4673, 0.0
      %v4989 = vmax.f32 %v4322, 0.0
      %v4990 = vmax.f32 %v4324, 0.0
      %v4991 = vmax.f32 %v4675, 0.0
      %v4992 = vmax.f32 %v4677, 0.0
      %v4993 = vmax.f32 %v4328, 0.0
      %v4994 = vmax.f32 %v4330, 0.0
      %v4995 = vmax.f32 %v4681, 0.0
      %v4996 = vmax.f32 %v4683, 0.0
      %v4997 = vmax.f32 %v4332, 0.0
      %v4998 = vmax.f32 %v4334, 0.0
      %v4999 = vmax.f32 %v4685, 0.0
      %v5000 = vmax.f32 %v4687, 0.0
      %v5001 = vmax.f32 %v4338, 0.0
      %v5002 = vmax.f32 %v4340, 0.0
      %v5003 = vmax.f32 %v4691, 0.0
      %v5004 = vmax.f32 %v4693, 0.0
      %v5005 = vmax.f32 %v4342, 0.0
      %v5006 = vmax.f32 %v4344, 0.0
      %v5007 = vmax.f32 %v4695, 0.0
      %v5008 = vmax.f32 %v4697, 0.0
      %v5009 = vmax.f32 %v4348, 0.0
      %v5010 = vmax.f32 %v4350, 0.0
      %v5011 = vmax.f32 %v4701, 0.0
      %v5012 = vmax.f32 %v4703, 0.0
      %v5013 = vmax.f32 %v4352, 0.0
      %v5014 = vmax.f32 %v4354, 0.0
      %v5015 = vmax.f32 %v4705, 0.0
      %v5016 = vmax.f32 %v4707, 0.0
      %v5017 = vmax.f32 %v4358, 0.0
      %v5018 = vmax.f32 %v4360, 0.0
      %v5019 = vmax.f32 %v4711, 0.0
      %v5020 = vmax.f32 %v4713, 0.0
      %v5021 = vmax.f32 %v4362, 0.0
      %v5022 = vmax.f32 %v4364, 0.0
      %v5023 = vmax.f32 %v4715, 0.0
      %v5024 = vmax.f32 %v4717, 0.0
      %v5025 = vmax.f32 %v4368, 0.0
      %v5026 = vmax.f32 %v4370, 0.0
      %v5027 = vmax.f32 %v4721, 0.0
      %v5028 = vmax.f32 %v4723, 0.0
      %v5029 = vmax.f32 %v4372, 0.0
      %v5030 = vmax.f32 %v4374, 0.0
      %v5031 = vmax.f32 %v4725, 0.0
      %v5032 = vmax.f32 %v4727, 0.0
      %v5033 = vmax.f32 %v4378, 0.0
      %v5034 = vmax.f32 %v4380, 0.0
      %v5035 = vmax.f32 %v4731, 0.0
      %v5036 = vmax.f32 %v4733, 0.0
      %v5037 = vmax.f32 %v4382, 0.0
      %v5038 = vmax.f32 %v4384, 0.0
      %v5039 = vmax.f32 %v4735, 0.0
      %v5040 = vmax.f32 %v4737, 0.0
      %v5041 = vmax.f32 %v4388, 0.0
      %v5042 = vmax.f32 %v4390, 0.0
      %v5043 = vmax.f32 %v4741, 0.0
      %v5044 = vmax.f32 %v4743, 0.0
      %v5045 = vmax.f32 %v4392, 0.0
      %v5046 = vmax.f32 %v4394, 0.0
      %v5047 = vmax.f32 %v4745, 0.0
      %v5048 = vmax.f32 %v4747, 0.0
      %v5049 = vmax.f32 %v4398, 0.0
      %v5050 = vmax.f32 %v4400, 0.0
      %v5051 = vmax.f32 %v4751, 0.0
      %v5052 = vmax.f32 %v4753, 0.0
      %v5053 = vmax.f32 %v4402, 0.0
      %v5054 = vmax.f32 %v4404, 0.0
      %v5055 = vmax.f32 %v4755, 0.0
      %v5056 = vmax.f32 %v4757, 0.0
      %v5057 = vmax.f32 %v4408, 0.0
      %v5058 = vmax.f32 %v4410, 0.0
      %v5059 = vmax.f32 %v4761, 0.0
      %v5060 = vmax.f32 %v4763, 0.0
      %v5061 = vmax.f32 %v4412, 0.0
      %v5062 = vmax.f32 %v4414, 0.0
      %v5063 = vmax.f32 %v4765, 0.0
      %v5064 = vmax.f32 %v4767, 0.0
      %v5065 = vmax.f32 %v4418, 0.0
      %v5066 = vmax.f32 %v4420, 0.0
      %v5067 = vmax.f32 %v4771, 0.0
      %v5068 = vmax.f32 %v4773, 0.0
      %v5069 = vmax.f32 %v4422, 0.0
      %v5070 = vmax.f32 %v4424, 0.0
      %v5071 = vmax.f32 %v4775, 0.0
      %v5072 = vmax.f32 %v4777, 0.0
      %v5073 = vmax.f32 %v4428, 0.0
      %v5074 = vmax.f32 %v4430, 0.0
      %v5075 = vmax.f32 %v4781, 0.0
      %v5076 = vmax.f32 %v4783, 0.0
      %v5077 = vmax.f32 %v4432, 0.0
      %v5078 = vmax.f32 %v4434, 0.0
      %v5079 = vmax.f32 %v4785, 0.0
      %v5080 = vmax.f32 %v4787, 0.0
      %v5081 = vmax.f32 %v4438, 0.0
      %v5082 = vmax.f32 %v4440, 0.0
      %v5083 = vmax.f32 %v4791, 0.0
      %v5084 = vmax.f32 %v4793, 0.0
      %v5085 = vmax.f32 %v4442, 0.0
      %v5086 = vmax.f32 %v4444, 0.0
      %v5087 = vmax.f32 %v4795, 0.0
      %v5088 = vmax.f32 %v4797, 0.0
      %v5089 = vmax.f32 %v4448, 0.0
      %v5090 = vmax.f32 %v4450, 0.0
      %v5091 = vmax.f32 %v4801, 0.0
      %v5092 = vmax.f32 %v4803, 0.0
      %v5093 = vmax.f32 %v4452, 0.0
      %v5094 = vmax.f32 %v4454, 0.0
      %v5095 = vmax.f32 %v4805, 0.0
      %v5096 = vmax.f32 %v4807, 0.0
      %v5097 = vmax.f32 %v4458, 0.0
      %v5098 = vmax.f32 %v4460, 0.0
      %v5099 = vmax.f32 %v4811, 0.0
      %v5100 = vmax.f32 %v4813, 0.0
      %v5101 = vmax.f32 %v4462, 0.0
      %v5102 = vmax.f32 %v4464, 0.0
      %v5103 = vmax.f32 %v4815, 0.0
      %v5104 = vmax.f32 %v4817, 0.0
      %v5105 = vmax.f32 %v4468, 0.0
      %v5106 = vmax.f32 %v4470, 0.0
      %v5107 = vmax.f32 %v4821, 0.0
      %v5108 = vmax.f32 %v4823, 0.0
      %v5109 = vmax.f32 %v4472, 0.0
      %v5110 = vmax.f32 %v4474, 0.0
      %v5111 = vmax.f32 %v4825, 0.0
      %v5112 = vmax.f32 %v4827, 0.0
      %v5113 = vmax.f32 %v4478, 0.0
      %v5114 = vmax.f32 %v4480, 0.0
      %v5115 = vmax.f32 %v4831, 0.0
      %v5116 = vmax.f32 %v4833, 0.0
      %v5117 = vmax.f32 %v4482, 0.0
      %v5118 = vmax.f32 %v4484, 0.0
      %v5119 = vmax.f32 %v4835, 0.0
      %v5120 = vmax.f32 %v4837, 0.0
      %v5121 = vmax.f32 %v4488, 0.0
      %v5122 = vmax.f32 %v4490, 0.0
      %v5123 = vmax.f32 %v4841, 0.0
      %v5124 = vmax.f32 %v4843, 0.0
      %v5125 = vmax.f32 %v4492, 0.0
      %v5126 = vmax.f32 %v4494, 0.0
      %v5127 = vmax.f32 %v4845, 0.0
      %v5128 = vmax.f32 %v4847, 0.0
      %v5129 = vmax.f32 %v4498, 0.0
      %v5130 = vmax.f32 %v4500, 0.0
      %v5131 = vmax.f32 %v4851, 0.0
      %v5132 = vmax.f32 %v4853, 0.0
      %v5133 = vmax.f32 %v4502, 0.0
      %v5134 = vmax.f32 %v4504, 0.0
      %v5135 = vmax.f32 %v4855, 0.0
      %v5136 = vmax.f32 %v4857, 0.0
      %v5137 = vmax.f32 %v4508, 0.0
      %v5138 = vmax.f32 %v4510, 0.0
      %v5139 = vmax.f32 %v4861, 0.0
      %v5140 = vmax.f32 %v4863, 0.0
      %v5141 = vmax.f32 %v4512, 0.0
      %v5142 = vmax.f32 %v4514, 0.0
      %v5143 = vmax.f32 %v4865, 0.0
      %v5144 = vmax.f32 %v4867, 0.0
      %v5145 = vmax.f32 %v4518, 0.0
      %v5146 = vmax.f32 %v4520, 0.0
      %v5147 = vmax.f32 %v4871, 0.0
      %v5148 = vmax.f32 %v4873, 0.0
      %v5149 = vmax.f32 %v4522, 0.0
      %v5150 = vmax.f32 %v4524, 0.0
      %v5151 = vmax.f32 %v4875, 0.0
      %v5152 = vmax.f32 %v4877, 0.0
      %v5153 = vmax.f32 %v4528, 0.0
      %v5154 = vmax.f32 %v4530, 0.0
      %v5155 = vmax.f32 %v4881, 0.0
      %v5156 = vmax.f32 %v4883, 0.0
      %v5157 = vmax.f32 %v4532, 0.0
      %v5158 = vmax.f32 %v4534, 0.0
      %v5159 = vmax.f32 %v4885, 0.0
      %v5160 = vmax.f32 %v4887, 0.0
      %v5161 = vmax.f32 %v4538, 0.0
      %v5162 = vmax.f32 %v4540, 0.0
      %v5163 = vmax.f32 %v4891, 0.0
      %v5164 = vmax.f32 %v4893, 0.0
      %v5165 = vmax.f32 %v4542, 0.0
      %v5166 = vmax.f32 %v4544, 0.0
      %v5167 = vmax.f32 %v4895, 0.0
      %v5168 = vmax.f32 %v4897, 0.0
      %v5169 = vmax.f32 %v4548, 0.0
      %v5170 = vmax.f32 %v4550, 0.0
      %v5171 = vmax.f32 %v4901, 0.0
      %v5172 = vmax.f32 %v4903, 0.0
      %v5173 = vmax.f32 %v4552, 0.0
      %v5174 = vmax.f32 %v4554, 0.0
      %v5175 = vmax.f32 %v4905, 0.0
      %v5176 = vmax.f32 %v4907, 0.0
      %v5177 = vmax.f32 %v4558, 0.0
      %v5178 = vmax.f32 %v4560, 0.0
      %v5179 = vmax.f32 %v4911, 0.0
      %v5180 = vmax.f32 %v4913, 0.0
      %v5181 = vmax.f32 %v4562, 0.0
      %v5182 = vmax.f32 %v4564, 0.0
      %v5183 = vmax.f32 %v4915, 0.0
      %v5184 = vmax.f32 %v4917, 0.0
      %v5185 = vmax.f32 %v4568, 0.0
      %v5186 = vmax.f32 %v4570, 0.0
      %v5187 = vmax.f32 %v4921, 0.0
      %v5188 = vmax.f32 %v4923, 0.0
      %v5189 = vmax.f32 %v4572, 0.0
      %v5190 = vmax.f32 %v4574, 0.0
      %v5191 = vmax.f32 %v4925, 0.0
      %v5192 = vmax.f32 %v4927, 0.0
      %v5193 = vmax.f32 %v4578, 0.0
      %v5194 = vmax.f32 %v4580, 0.0
      %v5195 = vmax.f32 %v4931, 0.0
      %v5196 = vmax.f32 %v4933, 0.0
      %v5197 = vmax.f32 %v4582, 0.0
      %v5198 = vmax.f32 %v4584, 0.0
      %v5199 = vmax.f32 %v4935, 0.0
      %v5200 = vmax.f32 %v4937, 0.0
      %v5201 = vmax.f32 %v4588, 0.0
      %v5202 = vmax.f32 %v4590, 0.0
      %v5203 = vmax.f32 %v4941, 0.0
      %v5204 = vmax.f32 %v4943, 0.0
      %v5205 = vmax.f32 %v4592, 0.0
      %v5206 = vmax.f32 %v4594, 0.0
      %v5207 = vmax.f32 %v4945, 0.0
      %v5208 = vmax.f32 %v4947, 0.0
      %v5209 = vmax.f32 %v4598, 0.0
      %v5210 = vmax.f32 %v4600, 0.0
      %v5211 = vmax.f32 %v4951, 0.0
      %v5212 = vmax.f32 %v4953, 0.0
      %v5213 = vmax.f32 %v4602, 0.0
      %v5214 = vmax.f32 %v4604, 0.0
      %v5215 = vmax.f32 %v4955, 0.0
      %v5216 = vmax.f32 %v4957, 0.0
      %v5217 = vmax.f32 %v4608, 0.0
      %v5218 = vmax.f32 %v4610, 0.0
      %v5219 = vmax.f32 %v4961, 0.0
      %v5220 = vmax.f32 %v4963, 0.0
      %v5221 = vmax.f32 %v4612, 0.0
      %v5222 = vmax.f32 %v4614, 0.0
      %v5223 = vmax.f32 %v4965, 0.0
      %v5224 = vmax.f32 %v4967, 0.0
      %v5225 = vpack.c.bf16 %v4973, %v4969
      %v5226 = vpack.c.bf16 %v4974, %v4970
      %v5227 = vpack.c.bf16 %v4975, %v4971
      %v5228 = vpack.c.bf16 %v4976, %v4972
      %v5229 = vpack.c.bf16 %v4981, %v4977
      %v5230 = vpack.c.bf16 %v4982, %v4978
      %v5231 = vpack.c.bf16 %v4983, %v4979
      %v5232 = vpack.c.bf16 %v4984, %v4980
      %v5233 = vpack.c.bf16 %v4989, %v4985
      %v5234 = vpack.c.bf16 %v4990, %v4986
      %v5235 = vpack.c.bf16 %v4991, %v4987
      %v5236 = vpack.c.bf16 %v4992, %v4988
      %v5237 = vpack.c.bf16 %v4997, %v4993
      %v5238 = vpack.c.bf16 %v4998, %v4994
      %v5239 = vpack.c.bf16 %v4999, %v4995
      %v5240 = vpack.c.bf16 %v5000, %v4996
      %v5241 = vpack.c.bf16 %v5005, %v5001
      %v5242 = vpack.c.bf16 %v5006, %v5002
      %v5243 = vpack.c.bf16 %v5007, %v5003
      %v5244 = vpack.c.bf16 %v5008, %v5004
      %v5245 = vpack.c.bf16 %v5013, %v5009
      %v5246 = vpack.c.bf16 %v5014, %v5010
      %v5247 = vpack.c.bf16 %v5015, %v5011
      %v5248 = vpack.c.bf16 %v5016, %v5012
      %v5249 = vpack.c.bf16 %v5021, %v5017
      %v5250 = vpack.c.bf16 %v5022, %v5018
      %v5251 = vpack.c.bf16 %v5023, %v5019
      %v5252 = vpack.c.bf16 %v5024, %v5020
      %v5253 = vpack.c.bf16 %v5029, %v5025
      %v5254 = vpack.c.bf16 %v5030, %v5026
      %v5255 = vpack.c.bf16 %v5031, %v5027
      %v5256 = vpack.c.bf16 %v5032, %v5028
      %v5257 = vpack.c.bf16 %v5037, %v5033
      %v5258 = vpack.c.bf16 %v5038, %v5034
      %v5259 = vpack.c.bf16 %v5039, %v5035
      %v5260 = vpack.c.bf16 %v5040, %v5036
      %v5261 = vpack.c.bf16 %v5045, %v5041
      %v5262 = vpack.c.bf16 %v5046, %v5042
      %v5263 = vpack.c.bf16 %v5047, %v5043
      %v5264 = vpack.c.bf16 %v5048, %v5044
      %v5265 = vpack.c.bf16 %v5053, %v5049
      %v5266 = vpack.c.bf16 %v5054, %v5050
      %v5267 = vpack.c.bf16 %v5055, %v5051
      %v5268 = vpack.c.bf16 %v5056, %v5052
      %v5269 = vpack.c.bf16 %v5061, %v5057
      %v5270 = vpack.c.bf16 %v5062, %v5058
      %v5271 = vpack.c.bf16 %v5063, %v5059
      %v5272 = vpack.c.bf16 %v5064, %v5060
      %v5273 = vpack.c.bf16 %v5069, %v5065
      %v5274 = vpack.c.bf16 %v5070, %v5066
      %v5275 = vpack.c.bf16 %v5071, %v5067
      %v5276 = vpack.c.bf16 %v5072, %v5068
      %v5277 = vpack.c.bf16 %v5077, %v5073
      %v5278 = vpack.c.bf16 %v5078, %v5074
      %v5279 = vpack.c.bf16 %v5079, %v5075
      %v5280 = vpack.c.bf16 %v5080, %v5076
      %v5281 = vpack.c.bf16 %v5085, %v5081
      %v5282 = vpack.c.bf16 %v5086, %v5082
      %v5283 = vpack.c.bf16 %v5087, %v5083
      %v5284 = vpack.c.bf16 %v5088, %v5084
      %v5285 = vpack.c.bf16 %v5093, %v5089
      %v5286 = vpack.c.bf16 %v5094, %v5090
      %v5287 = vpack.c.bf16 %v5095, %v5091
      %v5288 = vpack.c.bf16 %v5096, %v5092
      %v5289 = vpack.c.bf16 %v5101, %v5097
      %v5290 = vpack.c.bf16 %v5102, %v5098
      %v5291 = vpack.c.bf16 %v5103, %v5099
      %v5292 = vpack.c.bf16 %v5104, %v5100
      %v5293 = vpack.c.bf16 %v5109, %v5105
      %v5294 = vpack.c.bf16 %v5110, %v5106
      %v5295 = vpack.c.bf16 %v5111, %v5107
      %v5296 = vpack.c.bf16 %v5112, %v5108
      %v5297 = vpack.c.bf16 %v5117, %v5113
      %v5298 = vpack.c.bf16 %v5118, %v5114
      %v5299 = vpack.c.bf16 %v5119, %v5115
      %v5300 = vpack.c.bf16 %v5120, %v5116
      %v5301 = vpack.c.bf16 %v5125, %v5121
      %v5302 = vpack.c.bf16 %v5126, %v5122
      %v5303 = vpack.c.bf16 %v5127, %v5123
      %v5304 = vpack.c.bf16 %v5128, %v5124
      %v5305 = vpack.c.bf16 %v5133, %v5129
      %v5306 = vpack.c.bf16 %v5134, %v5130
      %v5307 = vpack.c.bf16 %v5135, %v5131
      %v5308 = vpack.c.bf16 %v5136, %v5132
      %v5309 = vpack.c.bf16 %v5141, %v5137
      %v5310 = vpack.c.bf16 %v5142, %v5138
      %v5311 = vpack.c.bf16 %v5143, %v5139
      %v5312 = vpack.c.bf16 %v5144, %v5140
      %v5313 = vpack.c.bf16 %v5149, %v5145
      %v5314 = vpack.c.bf16 %v5150, %v5146
      %v5315 = vpack.c.bf16 %v5151, %v5147
      %v5316 = vpack.c.bf16 %v5152, %v5148
      %v5317 = vpack.c.bf16 %v5157, %v5153
      %v5318 = vpack.c.bf16 %v5158, %v5154
      %v5319 = vpack.c.bf16 %v5159, %v5155
      %v5320 = vpack.c.bf16 %v5160, %v5156
      %v5321 = vpack.c.bf16 %v5165, %v5161
      %v5322 = vpack.c.bf16 %v5166, %v5162
      %v5323 = vpack.c.bf16 %v5167, %v5163
      %v5324 = vpack.c.bf16 %v5168, %v5164
      %v5325 = vpack.c.bf16 %v5173, %v5169
      %v5326 = vpack.c.bf16 %v5174, %v5170
      %v5327 = vpack.c.bf16 %v5175, %v5171
      %v5328 = vpack.c.bf16 %v5176, %v5172
      %v5329 = vpack.c.bf16 %v5181, %v5177
      %v5330 = vpack.c.bf16 %v5182, %v5178
      %v5331 = vpack.c.bf16 %v5183, %v5179
      %v5332 = vpack.c.bf16 %v5184, %v5180
      %v5333 = vpack.c.bf16 %v5189, %v5185
      %v5334 = vpack.c.bf16 %v5190, %v5186
      %v5335 = vpack.c.bf16 %v5191, %v5187
      %v5336 = vpack.c.bf16 %v5192, %v5188
      %v5337 = vpack.c.bf16 %v5197, %v5193
      %v5338 = vpack.c.bf16 %v5198, %v5194
      %v5339 = vpack.c.bf16 %v5199, %v5195
      %v5340 = vpack.c.bf16 %v5200, %v5196
      %v5341 = vpack.c.bf16 %v5205, %v5201
      %v5342 = vpack.c.bf16 %v5206, %v5202
      %v5343 = vpack.c.bf16 %v5207, %v5203
      %v5344 = vpack.c.bf16 %v5208, %v5204
      %v5345 = vpack.c.bf16 %v5213, %v5209
      %v5346 = vpack.c.bf16 %v5214, %v5210
      %v5347 = vpack.c.bf16 %v5215, %v5211
      %v5348 = vpack.c.bf16 %v5216, %v5212
      %v5349 = vpack.c.bf16 %v5221, %v5217
      %v5350 = vpack.c.bf16 %v5222, %v5218
      %v5351 = vpack.c.bf16 %v5223, %v5219
      %v5352 = vpack.c.bf16 %v5224, %v5220
      %v5353 = vld [vmem:[%s4] sm:$0xf]
      %v5354 = vld [vmem:[%s4 + $0x4] sm:$0xf]
      %v5355 = vld [vmem:[%s4 + $0x8] sm:$0xf]
      %v5356 = vld [vmem:[%s4 + $0xc] sm:$0xf]
      %v5357 = vld [vmem:[%s4 + $0x10] sm:$0xf]
      %v5358 = vld [vmem:[%s4 + $0x14] sm:$0xf]
      %v5359 = vld [vmem:[%s4 + $0x18] sm:$0xf]
      %v5360 = vld [vmem:[%s4 + $0x1c] sm:$0xf]
      %v5361 = vld [vmem:[%s4 + $0x20] sm:$0xf]
      %v5362 = vld [vmem:[%s4 + $0x24] sm:$0xf]
      %v5363 = vld [vmem:[%s4 + $0x28] sm:$0xf]
      %v5364 = vld [vmem:[%s4 + $0x2c] sm:$0xf]
      %v5365 = vld [vmem:[%s4 + $0x30] sm:$0xf]
      %v5366 = vld [vmem:[%s4 + $0x34] sm:$0xf]
      %v5367 = vld [vmem:[%s4 + $0x38] sm:$0xf]
      %v5368 = vld [vmem:[%s4 + $0x3c] sm:$0xf]
      %v5369 = vld [vmem:[%s4 + $0x40] sm:$0xf]
      %v5370 = vld [vmem:[%s4 + $0x44] sm:$0xf]
      %v5371 = vld [vmem:[%s4 + $0x48] sm:$0xf]
      %v5372 = vld [vmem:[%s4 + $0x4c] sm:$0xf]
      %v5373 = vld [vmem:[%s4 + $0x50] sm:$0xf]
      %v5374 = vld [vmem:[%s4 + $0x54] sm:$0xf]
      %v5375 = vld [vmem:[%s4 + $0x58] sm:$0xf]
      %v5376 = vld [vmem:[%s4 + $0x5c] sm:$0xf]
      %v5377 = vld [vmem:[%s4 + $0x60] sm:$0xf]
      %v5378 = vld [vmem:[%s4 + $0x64] sm:$0xf]
      %v5379 = vld [vmem:[%s4 + $0x68] sm:$0xf]
      %v5380 = vld [vmem:[%s4 + $0x6c] sm:$0xf]
      %v5381 = vld [vmem:[%s4 + $0x70] sm:$0xf]
      %v5382 = vld [vmem:[%s4 + $0x74] sm:$0xf]
      %v5383 = vld [vmem:[%s4 + $0x78] sm:$0xf]
      %v5384 = vld [vmem:[%s4 + $0x7c] sm:$0xf]
      %v5385 = vld [vmem:[%s4 + $0x80] sm:$0xf]
      %v5386 = vld [vmem:[%s4 + $0x84] sm:$0xf]
      %v5387 = vld [vmem:[%s4 + $0x88] sm:$0xf]
      %v5388 = vld [vmem:[%s4 + $0x8c] sm:$0xf]
      %v5389 = vld [vmem:[%s4 + $0x90] sm:$0xf]
      %v5390 = vld [vmem:[%s4 + $0x94] sm:$0xf]
      %v5391 = vld [vmem:[%s4 + $0x98] sm:$0xf]
      %v5392 = vld [vmem:[%s4 + $0x9c] sm:$0xf]
      %v5393 = vld [vmem:[%s4 + $0xa0] sm:$0xf]
      %v5394 = vld [vmem:[%s4 + $0xa4] sm:$0xf]
      %v5395 = vld [vmem:[%s4 + $0xa8] sm:$0xf]
      %v5396 = vld [vmem:[%s4 + $0xac] sm:$0xf]
      %v5397 = vld [vmem:[%s4 + $0xb0] sm:$0xf]
      %v5398 = vld [vmem:[%s4 + $0xb4] sm:$0xf]
      %v5399 = vld [vmem:[%s4 + $0xb8] sm:$0xf]
      %v5400 = vld [vmem:[%s4 + $0xbc] sm:$0xf]
      %v5401 = vld [vmem:[%s4 + $0xc0] sm:$0xf]
      %v5402 = vld [vmem:[%s4 + $0xc4] sm:$0xf]
      %v5403 = vld [vmem:[%s4 + $0xc8] sm:$0xf]
      %v5404 = vld [vmem:[%s4 + $0xcc] sm:$0xf]
      %v5405 = vld [vmem:[%s4 + $0xd0] sm:$0xf]
      %v5406 = vld [vmem:[%s4 + $0xd4] sm:$0xf]
      %v5407 = vld [vmem:[%s4 + $0xd8] sm:$0xf]
      %v5408 = vld [vmem:[%s4 + $0xdc] sm:$0xf]
      %v5409 = vld [vmem:[%s4 + $0xe0] sm:$0xf]
      %v5410 = vld [vmem:[%s4 + $0xe4] sm:$0xf]
      %v5411 = vld [vmem:[%s4 + $0xe8] sm:$0xf]
      %v5412 = vld [vmem:[%s4 + $0xec] sm:$0xf]
      %v5413 = vld [vmem:[%s4 + $0xf0] sm:$0xf]
      %v5414 = vld [vmem:[%s4 + $0xf4] sm:$0xf]
      %v5415 = vld [vmem:[%s4 + $0xf8] sm:$0xf]
      %v5416 = vld [vmem:[%s4 + $0xfc] sm:$0xf]
      %v5417 = vld [vmem:[%s5 + $0x6] sm:$0x1]
      %v5419 = vlaneseq
      %v5420 = vshrl.u32 %v5419, 7
      %v5421 = vsub.s32 0, %v5420
      %v5422 = vrot.slane %v5417, %v5421
      %v5488 = vunpack.c.l.b16 %v5353
      %v5489 = vunpack.c.l.b16 %v5354
      %v5490 = vunpack.c.l.b16 %v5355
      %v5491 = vunpack.c.l.b16 %v5356
      %v5492 = vunpack.c.l.b16 %v5357
      %v5493 = vunpack.c.l.b16 %v5358
      %v5494 = vunpack.c.l.b16 %v5359
      %v5495 = vunpack.c.l.b16 %v5360
      %v5496 = vunpack.c.l.b16 %v5361
      %v5497 = vunpack.c.l.b16 %v5362
      %v5498 = vunpack.c.l.b16 %v5363
      %v5499 = vunpack.c.l.b16 %v5364
      %v5500 = vunpack.c.l.b16 %v5365
      %v5501 = vunpack.c.l.b16 %v5366
      %v5502 = vunpack.c.l.b16 %v5367
      %v5503 = vunpack.c.l.b16 %v5368
      %v5504 = vunpack.c.l.b16 %v5369
      %v5505 = vunpack.c.l.b16 %v5370
      %v5506 = vunpack.c.l.b16 %v5371
      %v5507 = vunpack.c.l.b16 %v5372
      %v5508 = vunpack.c.l.b16 %v5373
      %v5509 = vunpack.c.l.b16 %v5374
      %v5510 = vunpack.c.l.b16 %v5375
      %v5511 = vunpack.c.l.b16 %v5376
      %v5512 = vunpack.c.l.b16 %v5377
      %v5513 = vunpack.c.l.b16 %v5378
      %v5514 = vunpack.c.l.b16 %v5379
      %v5515 = vunpack.c.l.b16 %v5380
      %v5516 = vunpack.c.l.b16 %v5381
      %v5517 = vunpack.c.l.b16 %v5382
      %v5518 = vunpack.c.l.b16 %v5383
      %v5519 = vunpack.c.l.b16 %v5384
      %v5520 = vunpack.c.l.b16 %v5385
      %v5521 = vunpack.c.l.b16 %v5386
      %v5522 = vunpack.c.l.b16 %v5387
      %v5523 = vunpack.c.l.b16 %v5388
      %v5524 = vunpack.c.l.b16 %v5389
      %v5525 = vunpack.c.l.b16 %v5390
      %v5526 = vunpack.c.l.b16 %v5391
      %v5527 = vunpack.c.l.b16 %v5392
      %v5528 = vunpack.c.l.b16 %v5393
      %v5529 = vunpack.c.l.b16 %v5394
      %v5530 = vunpack.c.l.b16 %v5395
      %v5531 = vunpack.c.l.b16 %v5396
      %v5532 = vunpack.c.l.b16 %v5397
      %v5533 = vunpack.c.l.b16 %v5398
      %v5534 = vunpack.c.l.b16 %v5399
      %v5535 = vunpack.c.l.b16 %v5400
      %v5536 = vunpack.c.l.b16 %v5401
      %v5537 = vunpack.c.l.b16 %v5402
      %v5538 = vunpack.c.l.b16 %v5403
      %v5539 = vunpack.c.l.b16 %v5404
      %v5540 = vunpack.c.l.b16 %v5405
      %v5541 = vunpack.c.l.b16 %v5406
      %v5542 = vunpack.c.l.b16 %v5407
      %v5543 = vunpack.c.l.b16 %v5408
      %v5544 = vunpack.c.l.b16 %v5409
      %v5545 = vunpack.c.l.b16 %v5410
      %v5546 = vunpack.c.l.b16 %v5411
      %v5547 = vunpack.c.l.b16 %v5412
      %v5548 = vunpack.c.l.b16 %v5413
      %v5549 = vunpack.c.l.b16 %v5414
      %v5550 = vunpack.c.l.b16 %v5415
      %v5551 = vunpack.c.l.b16 %v5416
      %v5552 = vpack.c.b16 %v5489, %v5488
      %v5553 = vpack.c.b16 %v5491, %v5490
      %v5554 = vpack.c.b16 %v5493, %v5492
      %v5555 = vpack.c.b16 %v5495, %v5494
      %v5556 = vpack.c.b16 %v5497, %v5496
      %v5557 = vpack.c.b16 %v5499, %v5498
      %v5558 = vpack.c.b16 %v5501, %v5500
      %v5559 = vpack.c.b16 %v5503, %v5502
      %v5560 = vpack.c.b16 %v5505, %v5504
      %v5561 = vpack.c.b16 %v5507, %v5506
      %v5562 = vpack.c.b16 %v5509, %v5508
      %v5563 = vpack.c.b16 %v5511, %v5510
      %v5564 = vpack.c.b16 %v5513, %v5512
      %v5565 = vpack.c.b16 %v5515, %v5514
      %v5566 = vpack.c.b16 %v5517, %v5516
      %v5567 = vpack.c.b16 %v5519, %v5518
      %v5568 = vpack.c.b16 %v5521, %v5520
      %v5569 = vpack.c.b16 %v5523, %v5522
      %v5570 = vpack.c.b16 %v5525, %v5524
      %v5571 = vpack.c.b16 %v5527, %v5526
      %v5572 = vpack.c.b16 %v5529, %v5528
      %v5573 = vpack.c.b16 %v5531, %v5530
      %v5574 = vpack.c.b16 %v5533, %v5532
      %v5575 = vpack.c.b16 %v5535, %v5534
      %v5576 = vpack.c.b16 %v5537, %v5536
      %v5577 = vpack.c.b16 %v5539, %v5538
      %v5578 = vpack.c.b16 %v5541, %v5540
      %v5579 = vpack.c.b16 %v5543, %v5542
      %v5580 = vpack.c.b16 %v5545, %v5544
      %v5581 = vpack.c.b16 %v5547, %v5546
      %v5582 = vpack.c.b16 %v5549, %v5548
      %v5583 = vpack.c.b16 %v5551, %v5550
      %5616 = vmatprep.subr.bf16.mxu0 0
      %5617 = vmatpush1.bf16.msra.mxu0 %v5552
      %5618 = vmatprep.subr.bf16.mxu0 0
      %5619 = vmatpush1.bf16.msra.mxu0 %v5553
      %5620 = vmatprep.subr.bf16.mxu0 0
      %5621 = vmatpush1.bf16.msra.mxu0 %v5554
      %5622 = vmatprep.subr.bf16.mxu0 0
      %5623 = vmatpush1.bf16.msra.mxu0 %v5555
      %5624 = vmatprep.subr.bf16.mxu0 0
      %5625 = vmatpush1.bf16.msra.mxu0 %v5556
      %5626 = vmatprep.subr.bf16.mxu0 0
      %5627 = vmatpush1.bf16.msra.mxu0 %v5557
      %5628 = vmatprep.subr.bf16.mxu0 0
      %5629 = vmatpush1.bf16.msra.mxu0 %v5558
      %5630 = vmatprep.subr.bf16.mxu0 0
      %5631 = vmatpush1.bf16.msra.mxu0 %v5559
      %5632 = vmatprep.subr.bf16.mxu0 0
      %5633 = vmatpush1.bf16.msra.mxu0 %v5560
      %5634 = vmatprep.subr.bf16.mxu0 0
      %5635 = vmatpush1.bf16.msra.mxu0 %v5561
      %5636 = vmatprep.subr.bf16.mxu0 0
      %5637 = vmatpush1.bf16.msra.mxu0 %v5562
      %5638 = vmatprep.subr.bf16.mxu0 0
      %5639 = vmatpush1.bf16.msra.mxu0 %v5563
      %5640 = vmatprep.subr.bf16.mxu0 0
      %5641 = vmatpush1.bf16.msra.mxu0 %v5564
      %5642 = vmatprep.subr.bf16.mxu0 0
      %5643 = vmatpush1.bf16.msra.mxu0 %v5565
      %5644 = vmatprep.subr.bf16.mxu0 0
      %5645 = vmatpush1.bf16.msra.mxu0 %v5566
      %5646 = vmatprep.subr.bf16.mxu0 0
      %5647 = vmatpush1.bf16.msra.mxu0 %v5567
      %5648 = vmatprep.mubr.bf16.mxu0 %v5226
      %5649 = vmatmul.mubr.bf16.gmra.mrb[0].mxu0 %v5225
      %v5650 = vpop.f32.mrb[0].mxu0
      %v5651 = vadd.f32 %v5422, %v5650
      %v5652 = vpop.f32.mrb[0].mxu0
      %v5653 = vpop.f32.mrb[0].mxu0
      %v5654 = vadd.f32 %v5422, %v5653
      %v5655 = vpop.f32.mrb[0].mxu0
      %5656 = vmatprep.mubr.bf16.mxu0 %v5230
      %5657 = vmatmul.mubr.bf16.gmra.mrb[0].mxu0 %v5229
      %v5658 = vpop.f32.mrb[0].mxu0
      %v5659 = vadd.f32 %v5422, %v5658
      %v5660 = vpop.f32.mrb[0].mxu0
      %v5661 = vpop.f32.mrb[0].mxu0
      %v5662 = vadd.f32 %v5422, %v5661
      %v5663 = vpop.f32.mrb[0].mxu0
      %5664 = vmatprep.mubr.bf16.mxu0 %v5234
      %5665 = vmatmul.mubr.bf16.gmra.mrb[0].mxu0 %v5233
      %v5666 = vpop.f32.mrb[0].mxu0
      %v5667 = vadd.f32 %v5422, %v5666
      %v5668 = vpop.f32.mrb[0].mxu0
      %v5669 = vpop.f32.mrb[0].mxu0
      %v5670 = vadd.f32 %v5422, %v5669
      %v5671 = vpop.f32.mrb[0].mxu0
      %5672 = vmatprep.mubr.bf16.mxu0 %v5238
      %5673 = vmatmul.mubr.bf16.gmra.mrb[0].mxu0 %v5237
      %v5674 = vpop.f32.mrb[0].mxu0
      %v5675 = vadd.f32 %v5422, %v5674
      %v5676 = vpop.f32.mrb[0].mxu0
      %v5677 = vpop.f32.mrb[0].mxu0
      %v5678 = vadd.f32 %v5422, %v5677
      %v5679 = vpop.f32.mrb[0].mxu0
      %5680 = vmatprep.mubr.bf16.mxu0 %v5242
      %5681 = vmatmul.mubr.bf16.gmra.mrb[0].mxu0 %v5241
      %v5682 = vpop.f32.mrb[0].mxu0
      %v5683 = vadd.f32 %v5422, %v5682
      %v5684 = vpop.f32.mrb[0].mxu0
      %v5685 = vpop.f32.mrb[0].mxu0
      %v5686 = vadd.f32 %v5422, %v5685
      %v5687 = vpop.f32.mrb[0].mxu0
      %5688 = vmatprep.mubr.bf16.mxu0 %v5246
      %5689 = vmatmul.mubr.bf16.gmra.mrb[0].mxu0 %v5245
      %v5690 = vpop.f32.mrb[0].mxu0
      %v5691 = vadd.f32 %v5422, %v5690
      %v5692 = vpop.f32.mrb[0].mxu0
      %v5693 = vpop.f32.mrb[0].mxu0
      %v5694 = vadd.f32 %v5422, %v5693
      %v5695 = vpop.f32.mrb[0].mxu0
      %5696 = vmatprep.mubr.bf16.mxu0 %v5250
      %5697 = vmatmul.mubr.bf16.gmra.mrb[0].mxu0 %v5249
      %v5698 = vpop.f32.mrb[0].mxu0
      %v5699 = vadd.f32 %v5422, %v5698
      %v5700 = vpop.f32.mrb[0].mxu0
      %v5701 = vpop.f32.mrb[0].mxu0
      %v5702 = vadd.f32 %v5422, %v5701
      %v5703 = vpop.f32.mrb[0].mxu0
      %5704 = vmatprep.mubr.bf16.mxu0 %v5254
      %5705 = vmatmul.mubr.bf16.gmra.mrb[0].mxu0 %v5253
      %v5706 = vpop.f32.mrb[0].mxu0
      %v5707 = vadd.f32 %v5422, %v5706
      %v5708 = vpop.f32.mrb[0].mxu0
      %v5709 = vpop.f32.mrb[0].mxu0
      %v5710 = vadd.f32 %v5422, %v5709
      %v5711 = vpop.f32.mrb[0].mxu0
      %5712 = vmatprep.mubr.bf16.mxu0 %v5258
      %5713 = vmatmul.mubr.bf16.gmra.mrb[0].mxu0 %v5257
      %v5714 = vpop.f32.mrb[0].mxu0
      %v5715 = vadd.f32 %v5422, %v5714
      %v5716 = vpop.f32.mrb[0].mxu0
      %v5717 = vpop.f32.mrb[0].mxu0
      %v5718 = vadd.f32 %v5422, %v5717
      %v5719 = vpop.f32.mrb[0].mxu0
      %5720 = vmatprep.mubr.bf16.mxu0 %v5262
      %5721 = vmatmul.mubr.bf16.gmra.mrb[0].mxu0 %v5261
      %v5722 = vpop.f32.mrb[0].mxu0
      %v5723 = vadd.f32 %v5422, %v5722
      %v5724 = vpop.f32.mrb[0].mxu0
      %v5725 = vpop.f32.mrb[0].mxu0
      %v5726 = vadd.f32 %v5422, %v5725
      %v5727 = vpop.f32.mrb[0].mxu0
      %5728 = vmatprep.mubr.bf16.mxu0 %v5266
      %5729 = vmatmul.mubr.bf16.gmra.mrb[0].mxu0 %v5265
      %v5730 = vpop.f32.mrb[0].mxu0
      %v5731 = vadd.f32 %v5422, %v5730
      %v5732 = vpop.f32.mrb[0].mxu0
      %v5733 = vpop.f32.mrb[0].mxu0
      %v5734 = vadd.f32 %v5422, %v5733
      %v5735 = vpop.f32.mrb[0].mxu0
      %5736 = vmatprep.mubr.bf16.mxu0 %v5270
      %5737 = vmatmul.mubr.bf16.gmra.mrb[0].mxu0 %v5269
      %v5738 = vpop.f32.mrb[0].mxu0
      %v5739 = vadd.f32 %v5422, %v5738
      %v5740 = vpop.f32.mrb[0].mxu0
      %v5741 = vpop.f32.mrb[0].mxu0
      %v5742 = vadd.f32 %v5422, %v5741
      %v5743 = vpop.f32.mrb[0].mxu0
      %5744 = vmatprep.mubr.bf16.mxu0 %v5274
      %5745 = vmatmul.mubr.bf16.gmra.mrb[0].mxu0 %v5273
      %v5746 = vpop.f32.mrb[0].mxu0
      %v5747 = vadd.f32 %v5422, %v5746
      %v5748 = vpop.f32.mrb[0].mxu0
      %v5749 = vpop.f32.mrb[0].mxu0
      %v5750 = vadd.f32 %v5422, %v5749
      %v5751 = vpop.f32.mrb[0].mxu0
      %5752 = vmatprep.mubr.bf16.mxu0 %v5278
      %5753 = vmatmul.mubr.bf16.gmra.mrb[0].mxu0 %v5277
      %v5754 = vpop.f32.mrb[0].mxu0
      %v5755 = vadd.f32 %v5422, %v5754
      %v5756 = vpop.f32.mrb[0].mxu0
      %v5757 = vpop.f32.mrb[0].mxu0
      %v5758 = vadd.f32 %v5422, %v5757
      %v5759 = vpop.f32.mrb[0].mxu0
      %5760 = vmatprep.mubr.bf16.mxu0 %v5282
      %5761 = vmatmul.mubr.bf16.gmra.mrb[0].mxu0 %v5281
      %v5762 = vpop.f32.mrb[0].mxu0
      %v5763 = vadd.f32 %v5422, %v5762
      %v5764 = vpop.f32.mrb[0].mxu0
      %v5765 = vpop.f32.mrb[0].mxu0
      %v5766 = vadd.f32 %v5422, %v5765
      %v5767 = vpop.f32.mrb[0].mxu0
      %5768 = vmatprep.mubr.bf16.mxu0 %v5286
      %5769 = vmatmul.mubr.bf16.gmra.mrb[0].mxu0 %v5285
      %v5770 = vpop.f32.mrb[0].mxu0
      %v5771 = vadd.f32 %v5422, %v5770
      %v5772 = vpop.f32.mrb[0].mxu0
      %v5773 = vpop.f32.mrb[0].mxu0
      %v5774 = vadd.f32 %v5422, %v5773
      %v5775 = vpop.f32.mrb[0].mxu0
      %5776 = vmatprep.mubr.bf16.mxu0 %v5290
      %5777 = vmatmul.mubr.bf16.gmra.mrb[0].mxu0 %v5289
      %v5778 = vpop.f32.mrb[0].mxu0
      %v5779 = vadd.f32 %v5422, %v5778
      %v5780 = vpop.f32.mrb[0].mxu0
      %v5781 = vpop.f32.mrb[0].mxu0
      %v5782 = vadd.f32 %v5422, %v5781
      %v5783 = vpop.f32.mrb[0].mxu0
      %5784 = vmatprep.mubr.bf16.mxu0 %v5294
      %5785 = vmatmul.mubr.bf16.gmra.mrb[0].mxu0 %v5293
      %v5786 = vpop.f32.mrb[0].mxu0
      %v5787 = vadd.f32 %v5422, %v5786
      %v5788 = vpop.f32.mrb[0].mxu0
      %v5789 = vpop.f32.mrb[0].mxu0
      %v5790 = vadd.f32 %v5422, %v5789
      %v5791 = vpop.f32.mrb[0].mxu0
      %5792 = vmatprep.mubr.bf16.mxu0 %v5298
      %5793 = vmatmul.mubr.bf16.gmra.mrb[0].mxu0 %v5297
      %v5794 = vpop.f32.mrb[0].mxu0
      %v5795 = vadd.f32 %v5422, %v5794
      %v5796 = vpop.f32.mrb[0].mxu0
      %v5797 = vpop.f32.mrb[0].mxu0
      %v5798 = vadd.f32 %v5422, %v5797
      %v5799 = vpop.f32.mrb[0].mxu0
      %5800 = vmatprep.mubr.bf16.mxu0 %v5302
      %5801 = vmatmul.mubr.bf16.gmra.mrb[0].mxu0 %v5301
      %v5802 = vpop.f32.mrb[0].mxu0
      %v5803 = vadd.f32 %v5422, %v5802
      %v5804 = vpop.f32.mrb[0].mxu0
      %v5805 = vpop.f32.mrb[0].mxu0
      %v5806 = vadd.f32 %v5422, %v5805
      %v5807 = vpop.f32.mrb[0].mxu0
      %5808 = vmatprep.mubr.bf16.mxu0 %v5306
      %5809 = vmatmul.mubr.bf16.gmra.mrb[0].mxu0 %v5305
      %v5810 = vpop.f32.mrb[0].mxu0
      %v5811 = vadd.f32 %v5422, %v5810
      %v5812 = vpop.f32.mrb[0].mxu0
      %v5813 = vpop.f32.mrb[0].mxu0
      %v5814 = vadd.f32 %v5422, %v5813
      %v5815 = vpop.f32.mrb[0].mxu0
      %5816 = vmatprep.mubr.bf16.mxu0 %v5310
      %5817 = vmatmul.mubr.bf16.gmra.mrb[0].mxu0 %v5309
      %v5818 = vpop.f32.mrb[0].mxu0
      %v5819 = vadd.f32 %v5422, %v5818
      %v5820 = vpop.f32.mrb[0].mxu0
      %v5821 = vpop.f32.mrb[0].mxu0
      %v5822 = vadd.f32 %v5422, %v5821
      %v5823 = vpop.f32.mrb[0].mxu0
      %5824 = vmatprep.mubr.bf16.mxu0 %v5314
      %5825 = vmatmul.mubr.bf16.gmra.mrb[0].mxu0 %v5313
      %v5826 = vpop.f32.mrb[0].mxu0
      %v5827 = vadd.f32 %v5422, %v5826
      %v5828 = vpop.f32.mrb[0].mxu0
      %v5829 = vpop.f32.mrb[0].mxu0
      %v5830 = vadd.f32 %v5422, %v5829
      %v5831 = vpop.f32.mrb[0].mxu0
      %5832 = vmatprep.mubr.bf16.mxu0 %v5318
      %5833 = vmatmul.mubr.bf16.gmra.mrb[0].mxu0 %v5317
      %v5834 = vpop.f32.mrb[0].mxu0
      %v5835 = vadd.f32 %v5422, %v5834
      %v5836 = vpop.f32.mrb[0].mxu0
      %v5837 = vpop.f32.mrb[0].mxu0
      %v5838 = vadd.f32 %v5422, %v5837
      %v5839 = vpop.f32.mrb[0].mxu0
      %5840 = vmatprep.mubr.bf16.mxu0 %v5322
      %5841 = vmatmul.mubr.bf16.gmra.mrb[0].mxu0 %v5321
      %v5842 = vpop.f32.mrb[0].mxu0
      %v5843 = vadd.f32 %v5422, %v5842
      %v5844 = vpop.f32.mrb[0].mxu0
      %v5845 = vpop.f32.mrb[0].mxu0
      %v5846 = vadd.f32 %v5422, %v5845
      %v5847 = vpop.f32.mrb[0].mxu0
      %5848 = vmatprep.mubr.bf16.mxu0 %v5326
      %5849 = vmatmul.mubr.bf16.gmra.mrb[0].mxu0 %v5325
      %v5850 = vpop.f32.mrb[0].mxu0
      %v5851 = vadd.f32 %v5422, %v5850
      %v5852 = vpop.f32.mrb[0].mxu0
      %v5853 = vpop.f32.mrb[0].mxu0
      %v5854 = vadd.f32 %v5422, %v5853
      %v5855 = vpop.f32.mrb[0].mxu0
      %5856 = vmatprep.mubr.bf16.mxu0 %v5330
      %5857 = vmatmul.mubr.bf16.gmra.mrb[0].mxu0 %v5329
      %v5858 = vpop.f32.mrb[0].mxu0
      %v5859 = vadd.f32 %v5422, %v5858
      %v5860 = vpop.f32.mrb[0].mxu0
      %v5861 = vpop.f32.mrb[0].mxu0
      %v5862 = vadd.f32 %v5422, %v5861
      %v5863 = vpop.f32.mrb[0].mxu0
      %5864 = vmatprep.mubr.bf16.mxu0 %v5334
      %5865 = vmatmul.mubr.bf16.gmra.mrb[0].mxu0 %v5333
      %v5866 = vpop.f32.mrb[0].mxu0
      %v5867 = vadd.f32 %v5422, %v5866
      %v5868 = vpop.f32.mrb[0].mxu0
      %v5869 = vpop.f32.mrb[0].mxu0
      %v5870 = vadd.f32 %v5422, %v5869
      %v5871 = vpop.f32.mrb[0].mxu0
      %5872 = vmatprep.mubr.bf16.mxu0 %v5338
      %5873 = vmatmul.mubr.bf16.gmra.mrb[0].mxu0 %v5337
      %v5874 = vpop.f32.mrb[0].mxu0
      %v5875 = vadd.f32 %v5422, %v5874
      %v5876 = vpop.f32.mrb[0].mxu0
      %v5877 = vpop.f32.mrb[0].mxu0
      %v5878 = vadd.f32 %v5422, %v5877
      %v5879 = vpop.f32.mrb[0].mxu0
      %5880 = vmatprep.mubr.bf16.mxu0 %v5342
      %5881 = vmatmul.mubr.bf16.gmra.mrb[0].mxu0 %v5341
      %v5882 = vpop.f32.mrb[0].mxu0
      %v5883 = vadd.f32 %v5422, %v5882
      %v5884 = vpop.f32.mrb[0].mxu0
      %v5885 = vpop.f32.mrb[0].mxu0
      %v5886 = vadd.f32 %v5422, %v5885
      %v5887 = vpop.f32.mrb[0].mxu0
      %5888 = vmatprep.mubr.bf16.mxu0 %v5346
      %5889 = vmatmul.mubr.bf16.gmra.mrb[0].mxu0 %v5345
      %v5890 = vpop.f32.mrb[0].mxu0
      %v5891 = vadd.f32 %v5422, %v5890
      %v5892 = vpop.f32.mrb[0].mxu0
      %v5893 = vpop.f32.mrb[0].mxu0
      %v5894 = vadd.f32 %v5422, %v5893
      %v5895 = vpop.f32.mrb[0].mxu0
      %5896 = vmatprep.mubr.bf16.mxu0 %v5350
      %5897 = vmatmul.mubr.bf16.gmra.mrb[0].mxu0 %v5349
      %v5898 = vpop.f32.mrb[0].mxu0
      %v5899 = vadd.f32 %v5422, %v5898
      %v5900 = vpop.f32.mrb[0].mxu0
      %v5901 = vpop.f32.mrb[0].mxu0
      %v5902 = vadd.f32 %v5422, %v5901
      %v5903 = vpop.f32.mrb[0].mxu0
      %5904 = vdwg.mxu0
      %5905 = vmatprep.subr.bf16.mxu0 0
      %5906 = vmatpush1.bf16.msra.mxu0 %v5568
      %5907 = vmatprep.subr.bf16.mxu0 0
      %5908 = vmatpush1.bf16.msra.mxu0 %v5569
      %5909 = vmatprep.subr.bf16.mxu0 0
      %5910 = vmatpush1.bf16.msra.mxu0 %v5570
      %5911 = vmatprep.subr.bf16.mxu0 0
      %5912 = vmatpush1.bf16.msra.mxu0 %v5571
      %5913 = vmatprep.subr.bf16.mxu0 0
      %5914 = vmatpush1.bf16.msra.mxu0 %v5572
      %5915 = vmatprep.subr.bf16.mxu0 0
      %5916 = vmatpush1.bf16.msra.mxu0 %v5573
      %5917 = vmatprep.subr.bf16.mxu0 0
      %5918 = vmatpush1.bf16.msra.mxu0 %v5574
      %5919 = vmatprep.subr.bf16.mxu0 0
      %5920 = vmatpush1.bf16.msra.mxu0 %v5575
      %5921 = vmatprep.subr.bf16.mxu0 0
      %5922 = vmatpush1.bf16.msra.mxu0 %v5576
      %5923 = vmatprep.subr.bf16.mxu0 0
      %5924 = vmatpush1.bf16.msra.mxu0 %v5577
      %5925 = vmatprep.subr.bf16.mxu0 0
      %5926 = vmatpush1.bf16.msra.mxu0 %v5578
      %5927 = vmatprep.subr.bf16.mxu0 0
      %5928 = vmatpush1.bf16.msra.mxu0 %v5579
      %5929 = vmatprep.subr.bf16.mxu0 0
      %5930 = vmatpush1.bf16.msra.mxu0 %v5580
      %5931 = vmatprep.subr.bf16.mxu0 0
      %5932 = vmatpush1.bf16.msra.mxu0 %v5581
      %5933 = vmatprep.subr.bf16.mxu0 0
      %5934 = vmatpush1.bf16.msra.mxu0 %v5582
      %5935 = vmatprep.subr.bf16.mxu0 0
      %5936 = vmatpush1.bf16.msra.mxu0 %v5583
      %5937 = vmatprep.mubr.bf16.mxu0 %v5228
      %5938 = vmatmul.mubr.bf16.gmra.mrb[0].mxu0 %v5227
      %v5939 = vpop.f32.mrb[0].mxu0
      %v5940 = vadd.f32 %v5651, %v5939
      %v5941 = vpop.f32.mrb[0].mxu0
      %v5942 = vpop.f32.mrb[0].mxu0
      %v5943 = vadd.f32 %v5654, %v5942
      %v5944 = vpop.f32.mrb[0].mxu0
      %5945 = vmatprep.mubr.bf16.mxu0 %v5232
      %5946 = vmatmul.mubr.bf16.gmra.mrb[0].mxu0 %v5231
      %v5947 = vpop.f32.mrb[0].mxu0
      %v5948 = vadd.f32 %v5659, %v5947
      %v5949 = vpop.f32.mrb[0].mxu0
      %v5950 = vpop.f32.mrb[0].mxu0
      %v5951 = vadd.f32 %v5662, %v5950
      %v5952 = vpop.f32.mrb[0].mxu0
      %5953 = vmatprep.mubr.bf16.mxu0 %v5236
      %5954 = vmatmul.mubr.bf16.gmra.mrb[0].mxu0 %v5235
      %v5955 = vpop.f32.mrb[0].mxu0
      %v5956 = vadd.f32 %v5667, %v5955
      %v5957 = vpop.f32.mrb[0].mxu0
      %v5958 = vpop.f32.mrb[0].mxu0
      %v5959 = vadd.f32 %v5670, %v5958
      %v5960 = vpop.f32.mrb[0].mxu0
      %5961 = vmatprep.mubr.bf16.mxu0 %v5240
      %5962 = vmatmul.mubr.bf16.gmra.mrb[0].mxu0 %v5239
      %v5963 = vpop.f32.mrb[0].mxu0
      %v5964 = vadd.f32 %v5675, %v5963
      %v5965 = vpop.f32.mrb[0].mxu0
      %v5966 = vpop.f32.mrb[0].mxu0
      %v5967 = vadd.f32 %v5678, %v5966
      %v5968 = vpop.f32.mrb[0].mxu0
      %5969 = vmatprep.mubr.bf16.mxu0 %v5244
      %5970 = vmatmul.mubr.bf16.gmra.mrb[0].mxu0 %v5243
      %v5971 = vpop.f32.mrb[0].mxu0
      %v5972 = vadd.f32 %v5683, %v5971
      %v5973 = vpop.f32.mrb[0].mxu0
      %v5974 = vpop.f32.mrb[0].mxu0
      %v5975 = vadd.f32 %v5686, %v5974
      %v5976 = vpop.f32.mrb[0].mxu0
      %5977 = vmatprep.mubr.bf16.mxu0 %v5248
      %5978 = vmatmul.mubr.bf16.gmra.mrb[0].mxu0 %v5247
      %v5979 = vpop.f32.mrb[0].mxu0
      %v5980 = vadd.f32 %v5691, %v5979
      %v5981 = vpop.f32.mrb[0].mxu0
      %v5982 = vpop.f32.mrb[0].mxu0
      %v5983 = vadd.f32 %v5694, %v5982
      %v5984 = vpop.f32.mrb[0].mxu0
      %5985 = vmatprep.mubr.bf16.mxu0 %v5252
      %5986 = vmatmul.mubr.bf16.gmra.mrb[0].mxu0 %v5251
      %v5987 = vpop.f32.mrb[0].mxu0
      %v5988 = vadd.f32 %v5699, %v5987
      %v5989 = vpop.f32.mrb[0].mxu0
      %v5990 = vpop.f32.mrb[0].mxu0
      %v5991 = vadd.f32 %v5702, %v5990
      %v5992 = vpop.f32.mrb[0].mxu0
      %5993 = vmatprep.mubr.bf16.mxu0 %v5256
      %5994 = vmatmul.mubr.bf16.gmra.mrb[0].mxu0 %v5255
      %v5995 = vpop.f32.mrb[0].mxu0
      %v5996 = vadd.f32 %v5707, %v5995
      %v5997 = vpop.f32.mrb[0].mxu0
      %v5998 = vpop.f32.mrb[0].mxu0
      %v5999 = vadd.f32 %v5710, %v5998
      %v6000 = vpop.f32.mrb[0].mxu0
      %6001 = vmatprep.mubr.bf16.mxu0 %v5260
      %6002 = vmatmul.mubr.bf16.gmra.mrb[0].mxu0 %v5259
      %v6003 = vpop.f32.mrb[0].mxu0
      %v6004 = vadd.f32 %v5715, %v6003
      %v6005 = vpop.f32.mrb[0].mxu0
      %v6006 = vpop.f32.mrb[0].mxu0
      %v6007 = vadd.f32 %v5718, %v6006
      %v6008 = vpop.f32.mrb[0].mxu0
      %6009 = vmatprep.mubr.bf16.mxu0 %v5264
      %6010 = vmatmul.mubr.bf16.gmra.mrb[0].mxu0 %v5263
      %v6011 = vpop.f32.mrb[0].mxu0
      %v6012 = vadd.f32 %v5723, %v6011
      %v6013 = vpop.f32.mrb[0].mxu0
      %v6014 = vpop.f32.mrb[0].mxu0
      %v6015 = vadd.f32 %v5726, %v6014
      %v6016 = vpop.f32.mrb[0].mxu0
      %6017 = vmatprep.mubr.bf16.mxu0 %v5268
      %6018 = vmatmul.mubr.bf16.gmra.mrb[0].mxu0 %v5267
      %v6019 = vpop.f32.mrb[0].mxu0
      %v6020 = vadd.f32 %v5731, %v6019
      %v6021 = vpop.f32.mrb[0].mxu0
      %v6022 = vpop.f32.mrb[0].mxu0
      %v6023 = vadd.f32 %v5734, %v6022
      %v6024 = vpop.f32.mrb[0].mxu0
      %6025 = vmatprep.mubr.bf16.mxu0 %v5272
      %6026 = vmatmul.mubr.bf16.gmra.mrb[0].mxu0 %v5271
      %v6027 = vpop.f32.mrb[0].mxu0
      %v6028 = vadd.f32 %v5739, %v6027
      %v6029 = vpop.f32.mrb[0].mxu0
      %v6030 = vpop.f32.mrb[0].mxu0
      %v6031 = vadd.f32 %v5742, %v6030
      %v6032 = vpop.f32.mrb[0].mxu0
      %6033 = vmatprep.mubr.bf16.mxu0 %v5276
      %6034 = vmatmul.mubr.bf16.gmra.mrb[0].mxu0 %v5275
      %v6035 = vpop.f32.mrb[0].mxu0
      %v6036 = vadd.f32 %v5747, %v6035
      %v6037 = vpop.f32.mrb[0].mxu0
      %v6038 = vpop.f32.mrb[0].mxu0
      %v6039 = vadd.f32 %v5750, %v6038
      %v6040 = vpop.f32.mrb[0].mxu0
      %6041 = vmatprep.mubr.bf16.mxu0 %v5280
      %6042 = vmatmul.mubr.bf16.gmra.mrb[0].mxu0 %v5279
      %v6043 = vpop.f32.mrb[0].mxu0
      %v6044 = vadd.f32 %v5755, %v6043
      %v6045 = vpop.f32.mrb[0].mxu0
      %v6046 = vpop.f32.mrb[0].mxu0
      %v6047 = vadd.f32 %v5758, %v6046
      %v6048 = vpop.f32.mrb[0].mxu0
      %6049 = vmatprep.mubr.bf16.mxu0 %v5284
      %6050 = vmatmul.mubr.bf16.gmra.mrb[0].mxu0 %v5283
      %v6051 = vpop.f32.mrb[0].mxu0
      %v6052 = vadd.f32 %v5763, %v6051
      %v6053 = vpop.f32.mrb[0].mxu0
      %v6054 = vpop.f32.mrb[0].mxu0
      %v6055 = vadd.f32 %v5766, %v6054
      %v6056 = vpop.f32.mrb[0].mxu0
      %6057 = vmatprep.mubr.bf16.mxu0 %v5288
      %6058 = vmatmul.mubr.bf16.gmra.mrb[0].mxu0 %v5287
      %v6059 = vpop.f32.mrb[0].mxu0
      %v6060 = vadd.f32 %v5771, %v6059
      %v6061 = vpop.f32.mrb[0].mxu0
      %v6062 = vpop.f32.mrb[0].mxu0
      %v6063 = vadd.f32 %v5774, %v6062
      %v6064 = vpop.f32.mrb[0].mxu0
      %6065 = vmatprep.mubr.bf16.mxu0 %v5292
      %6066 = vmatmul.mubr.bf16.gmra.mrb[0].mxu0 %v5291
      %v6067 = vpop.f32.mrb[0].mxu0
      %v6068 = vadd.f32 %v5779, %v6067
      %v6069 = vpop.f32.mrb[0].mxu0
      %v6070 = vpop.f32.mrb[0].mxu0
      %v6071 = vadd.f32 %v5782, %v6070
      %v6072 = vpop.f32.mrb[0].mxu0
      %6073 = vmatprep.mubr.bf16.mxu0 %v5296
      %6074 = vmatmul.mubr.bf16.gmra.mrb[0].mxu0 %v5295
      %v6075 = vpop.f32.mrb[0].mxu0
      %v6076 = vadd.f32 %v5787, %v6075
      %v6077 = vpop.f32.mrb[0].mxu0
      %v6078 = vpop.f32.mrb[0].mxu0
      %v6079 = vadd.f32 %v5790, %v6078
      %v6080 = vpop.f32.mrb[0].mxu0
      %6081 = vmatprep.mubr.bf16.mxu0 %v5300
      %6082 = vmatmul.mubr.bf16.gmra.mrb[0].mxu0 %v5299
      %v6083 = vpop.f32.mrb[0].mxu0
      %v6084 = vadd.f32 %v5795, %v6083
      %v6085 = vpop.f32.mrb[0].mxu0
      %v6086 = vpop.f32.mrb[0].mxu0
      %v6087 = vadd.f32 %v5798, %v6086
      %v6088 = vpop.f32.mrb[0].mxu0
      %6089 = vmatprep.mubr.bf16.mxu0 %v5304
      %6090 = vmatmul.mubr.bf16.gmra.mrb[0].mxu0 %v5303
      %v6091 = vpop.f32.mrb[0].mxu0
      %v6092 = vadd.f32 %v5803, %v6091
      %v6093 = vpop.f32.mrb[0].mxu0
      %v6094 = vpop.f32.mrb[0].mxu0
      %v6095 = vadd.f32 %v5806, %v6094
      %v6096 = vpop.f32.mrb[0].mxu0
      %6097 = vmatprep.mubr.bf16.mxu0 %v5308
      %6098 = vmatmul.mubr.bf16.gmra.mrb[0].mxu0 %v5307
      %v6099 = vpop.f32.mrb[0].mxu0
      %v6100 = vadd.f32 %v5811, %v6099
      %v6101 = vpop.f32.mrb[0].mxu0
      %v6102 = vpop.f32.mrb[0].mxu0
      %v6103 = vadd.f32 %v5814, %v6102
      %v6104 = vpop.f32.mrb[0].mxu0
      %6105 = vmatprep.mubr.bf16.mxu0 %v5312
      %6106 = vmatmul.mubr.bf16.gmra.mrb[0].mxu0 %v5311
      %v6107 = vpop.f32.mrb[0].mxu0
      %v6108 = vadd.f32 %v5819, %v6107
      %v6109 = vpop.f32.mrb[0].mxu0
      %v6110 = vpop.f32.mrb[0].mxu0
      %v6111 = vadd.f32 %v5822, %v6110
      %v6112 = vpop.f32.mrb[0].mxu0
      %6113 = vmatprep.mubr.bf16.mxu0 %v5316
      %6114 = vmatmul.mubr.bf16.gmra.mrb[0].mxu0 %v5315
      %v6115 = vpop.f32.mrb[0].mxu0
      %v6116 = vadd.f32 %v5827, %v6115
      %v6117 = vpop.f32.mrb[0].mxu0
      %v6118 = vpop.f32.mrb[0].mxu0
      %v6119 = vadd.f32 %v5830, %v6118
      %v6120 = vpop.f32.mrb[0].mxu0
      %6121 = vmatprep.mubr.bf16.mxu0 %v5320
      %6122 = vmatmul.mubr.bf16.gmra.mrb[0].mxu0 %v5319
      %v6123 = vpop.f32.mrb[0].mxu0
      %v6124 = vadd.f32 %v5835, %v6123
      %v6125 = vpop.f32.mrb[0].mxu0
      %v6126 = vpop.f32.mrb[0].mxu0
      %v6127 = vadd.f32 %v5838, %v6126
      %v6128 = vpop.f32.mrb[0].mxu0
      %6129 = vmatprep.mubr.bf16.mxu0 %v5324
      %6130 = vmatmul.mubr.bf16.gmra.mrb[0].mxu0 %v5323
      %v6131 = vpop.f32.mrb[0].mxu0
      %v6132 = vadd.f32 %v5843, %v6131
      %v6133 = vpop.f32.mrb[0].mxu0
      %v6134 = vpop.f32.mrb[0].mxu0
      %v6135 = vadd.f32 %v5846, %v6134
      %v6136 = vpop.f32.mrb[0].mxu0
      %6137 = vmatprep.mubr.bf16.mxu0 %v5328
      %6138 = vmatmul.mubr.bf16.gmra.mrb[0].mxu0 %v5327
      %v6139 = vpop.f32.mrb[0].mxu0
      %v6140 = vadd.f32 %v5851, %v6139
      %v6141 = vpop.f32.mrb[0].mxu0
      %v6142 = vpop.f32.mrb[0].mxu0
      %v6143 = vadd.f32 %v5854, %v6142
      %v6144 = vpop.f32.mrb[0].mxu0
      %6145 = vmatprep.mubr.bf16.mxu0 %v5332
      %6146 = vmatmul.mubr.bf16.gmra.mrb[0].mxu0 %v5331
      %v6147 = vpop.f32.mrb[0].mxu0
      %v6148 = vadd.f32 %v5859, %v6147
      %v6149 = vpop.f32.mrb[0].mxu0
      %v6150 = vpop.f32.mrb[0].mxu0
      %v6151 = vadd.f32 %v5862, %v6150
      %v6152 = vpop.f32.mrb[0].mxu0
      %6153 = vmatprep.mubr.bf16.mxu0 %v5336
      %6154 = vmatmul.mubr.bf16.gmra.mrb[0].mxu0 %v5335
      %v6155 = vpop.f32.mrb[0].mxu0
      %v6156 = vadd.f32 %v5867, %v6155
      %v6157 = vpop.f32.mrb[0].mxu0
      %v6158 = vpop.f32.mrb[0].mxu0
      %v6159 = vadd.f32 %v5870, %v6158
      %v6160 = vpop.f32.mrb[0].mxu0
      %6161 = vmatprep.mubr.bf16.mxu0 %v5340
      %6162 = vmatmul.mubr.bf16.gmra.mrb[0].mxu0 %v5339
      %v6163 = vpop.f32.mrb[0].mxu0
      %v6164 = vadd.f32 %v5875, %v6163
      %v6165 = vpop.f32.mrb[0].mxu0
      %v6166 = vpop.f32.mrb[0].mxu0
      %v6167 = vadd.f32 %v5878, %v6166
      %v6168 = vpop.f32.mrb[0].mxu0
      %6169 = vmatprep.mubr.bf16.mxu0 %v5344
      %6170 = vmatmul.mubr.bf16.gmra.mrb[0].mxu0 %v5343
      %v6171 = vpop.f32.mrb[0].mxu0
      %v6172 = vadd.f32 %v5883, %v6171
      %v6173 = vpop.f32.mrb[0].mxu0
      %v6174 = vpop.f32.mrb[0].mxu0
      %v6175 = vadd.f32 %v5886, %v6174
      %v6176 = vpop.f32.mrb[0].mxu0
      %6177 = vmatprep.mubr.bf16.mxu0 %v5348
      %6178 = vmatmul.mubr.bf16.gmra.mrb[0].mxu0 %v5347
      %v6179 = vpop.f32.mrb[0].mxu0
      %v6180 = vadd.f32 %v5891, %v6179
      %v6181 = vpop.f32.mrb[0].mxu0
      %v6182 = vpop.f32.mrb[0].mxu0
      %v6183 = vadd.f32 %v5894, %v6182
      %v6184 = vpop.f32.mrb[0].mxu0
      %6185 = vmatprep.mubr.bf16.mxu0 %v5352
      %6186 = vmatmul.mubr.bf16.gmra.mrb[0].mxu0 %v5351
      %v6187 = vpop.f32.mrb[0].mxu0
      %v6188 = vadd.f32 %v5899, %v6187
      %v6189 = vpop.f32.mrb[0].mxu0
      %v6190 = vpop.f32.mrb[0].mxu0
      %v6191 = vadd.f32 %v5902, %v6190
      %v6192 = vpop.f32.mrb[0].mxu0
      %6193 = vdwg.mxu0
      %v6194 = vpack.c.bf16 %v5943, %v5940
      %v6195 = vpack.c.bf16 %v5951, %v5948
      %v6196 = vpack.c.bf16 %v5959, %v5956
      %v6197 = vpack.c.bf16 %v5967, %v5964
      %v6198 = vpack.c.bf16 %v5975, %v5972
      %v6199 = vpack.c.bf16 %v5983, %v5980
      %v6200 = vpack.c.bf16 %v5991, %v5988
      %v6201 = vpack.c.bf16 %v5999, %v5996
      %v6202 = vpack.c.bf16 %v6007, %v6004
      %v6203 = vpack.c.bf16 %v6015, %v6012
      %v6204 = vpack.c.bf16 %v6023, %v6020
      %v6205 = vpack.c.bf16 %v6031, %v6028
      %v6206 = vpack.c.bf16 %v6039, %v6036
      %v6207 = vpack.c.bf16 %v6047, %v6044
      %v6208 = vpack.c.bf16 %v6055, %v6052
      %v6209 = vpack.c.bf16 %v6063, %v6060
      %v6210 = vpack.c.bf16 %v6071, %v6068
      %v6211 = vpack.c.bf16 %v6079, %v6076
      %v6212 = vpack.c.bf16 %v6087, %v6084
      %v6213 = vpack.c.bf16 %v6095, %v6092
      %v6214 = vpack.c.bf16 %v6103, %v6100
      %v6215 = vpack.c.bf16 %v6111, %v6108
      %v6216 = vpack.c.bf16 %v6119, %v6116
      %v6217 = vpack.c.bf16 %v6127, %v6124
      %v6218 = vpack.c.bf16 %v6135, %v6132
      %v6219 = vpack.c.bf16 %v6143, %v6140
      %v6220 = vpack.c.bf16 %v6151, %v6148
      %v6221 = vpack.c.bf16 %v6159, %v6156
      %v6222 = vpack.c.bf16 %v6167, %v6164
      %v6223 = vpack.c.bf16 %v6175, %v6172
      %v6224 = vpack.c.bf16 %v6183, %v6180
      %v6225 = vpack.c.bf16 %v6191, %v6188
      %v6258 = vunpack.c.l.b16 %v6194
      %v6259 = vunpack.c.h.b16 %v6194
      %v6260 = vunpack.c.l.b16 %v6195
      %v6261 = vunpack.c.h.b16 %v6195
      %v6262 = vunpack.c.l.b16 %v6196
      %v6263 = vunpack.c.h.b16 %v6196
      %v6264 = vunpack.c.l.b16 %v6197
      %v6265 = vunpack.c.h.b16 %v6197
      %v6266 = vunpack.c.l.b16 %v6198
      %v6267 = vunpack.c.h.b16 %v6198
      %v6268 = vunpack.c.l.b16 %v6199
      %v6269 = vunpack.c.h.b16 %v6199
      %v6270 = vunpack.c.l.b16 %v6200
      %v6271 = vunpack.c.h.b16 %v6200
      %v6272 = vunpack.c.l.b16 %v6201
      %v6273 = vunpack.c.h.b16 %v6201
      %v6274 = vunpack.c.l.b16 %v6202
      %v6275 = vunpack.c.h.b16 %v6202
      %v6276 = vunpack.c.l.b16 %v6203
      %v6277 = vunpack.c.h.b16 %v6203
      %v6278 = vunpack.c.l.b16 %v6204
      %v6279 = vunpack.c.h.b16 %v6204
      %v6280 = vunpack.c.l.b16 %v6205
      %v6281 = vunpack.c.h.b16 %v6205
      %v6282 = vunpack.c.l.b16 %v6206
      %v6283 = vunpack.c.h.b16 %v6206
      %v6284 = vunpack.c.l.b16 %v6207
      %v6285 = vunpack.c.h.b16 %v6207
      %v6286 = vunpack.c.l.b16 %v6208
      %v6287 = vunpack.c.h.b16 %v6208
      %v6288 = vunpack.c.l.b16 %v6209
      %v6289 = vunpack.c.h.b16 %v6209
      %v6290 = vunpack.c.l.b16 %v6210
      %v6291 = vunpack.c.h.b16 %v6210
      %v6292 = vunpack.c.l.b16 %v6211
      %v6293 = vunpack.c.h.b16 %v6211
      %v6294 = vunpack.c.l.b16 %v6212
      %v6295 = vunpack.c.h.b16 %v6212
      %v6296 = vunpack.c.l.b16 %v6213
      %v6297 = vunpack.c.h.b16 %v6213
      %v6298 = vunpack.c.l.b16 %v6214
      %v6299 = vunpack.c.h.b16 %v6214
      %v6300 = vunpack.c.l.b16 %v6215
      %v6301 = vunpack.c.h.b16 %v6215
      %v6302 = vunpack.c.l.b16 %v6216
      %v6303 = vunpack.c.h.b16 %v6216
      %v6304 = vunpack.c.l.b16 %v6217
      %v6305 = vunpack.c.h.b16 %v6217
      %v6306 = vunpack.c.l.b16 %v6218
      %v6307 = vunpack.c.h.b16 %v6218
      %v6308 = vunpack.c.l.b16 %v6219
      %v6309 = vunpack.c.h.b16 %v6219
      %v6310 = vunpack.c.l.b16 %v6220
      %v6311 = vunpack.c.h.b16 %v6220
      %v6312 = vunpack.c.l.b16 %v6221
      %v6313 = vunpack.c.h.b16 %v6221
      %v6314 = vunpack.c.l.b16 %v6222
      %v6315 = vunpack.c.h.b16 %v6222
      %v6316 = vunpack.c.l.b16 %v6223
      %v6317 = vunpack.c.h.b16 %v6223
      %v6318 = vunpack.c.l.b16 %v6224
      %v6319 = vunpack.c.h.b16 %v6224
      %v6320 = vunpack.c.l.b16 %v6225
      %v6321 = vunpack.c.h.b16 %v6225
      %v6322 = vpack.c.b16 %v6258, %v6258
      %v6323 = vpack.c.b16 %v6259, %v6259
      %v6324 = vpack.c.b16 %v6260, %v6260
      %v6325 = vpack.c.b16 %v6261, %v6261
      %v6326 = vpack.c.b16 %v6262, %v6262
      %v6327 = vpack.c.b16 %v6263, %v6263
      %v6328 = vpack.c.b16 %v6264, %v6264
      %v6329 = vpack.c.b16 %v6265, %v6265
      %v6330 = vpack.c.b16 %v6266, %v6266
      %v6331 = vpack.c.b16 %v6267, %v6267
      %v6332 = vpack.c.b16 %v6268, %v6268
      %v6333 = vpack.c.b16 %v6269, %v6269
      %v6334 = vpack.c.b16 %v6270, %v6270
      %v6335 = vpack.c.b16 %v6271, %v6271
      %v6336 = vpack.c.b16 %v6272, %v6272
      %v6337 = vpack.c.b16 %v6273, %v6273
      %v6338 = vpack.c.b16 %v6274, %v6274
      %v6339 = vpack.c.b16 %v6275, %v6275
      %v6340 = vpack.c.b16 %v6276, %v6276
      %v6341 = vpack.c.b16 %v6277, %v6277
      %v6342 = vpack.c.b16 %v6278, %v6278
      %v6343 = vpack.c.b16 %v6279, %v6279
      %v6344 = vpack.c.b16 %v6280, %v6280
      %v6345 = vpack.c.b16 %v6281, %v6281
      %v6346 = vpack.c.b16 %v6282, %v6282
      %v6347 = vpack.c.b16 %v6283, %v6283
      %v6348 = vpack.c.b16 %v6284, %v6284
      %v6349 = vpack.c.b16 %v6285, %v6285
      %v6350 = vpack.c.b16 %v6286, %v6286
      %v6351 = vpack.c.b16 %v6287, %v6287
      %v6352 = vpack.c.b16 %v6288, %v6288
      %v6353 = vpack.c.b16 %v6289, %v6289
      %v6354 = vpack.c.b16 %v6290, %v6290
      %v6355 = vpack.c.b16 %v6291, %v6291
      %v6356 = vpack.c.b16 %v6292, %v6292
      %v6357 = vpack.c.b16 %v6293, %v6293
      %v6358 = vpack.c.b16 %v6294, %v6294
      %v6359 = vpack.c.b16 %v6295, %v6295
      %v6360 = vpack.c.b16 %v6296, %v6296
      %v6361 = vpack.c.b16 %v6297, %v6297
      %v6362 = vpack.c.b16 %v6298, %v6298
      %v6363 = vpack.c.b16 %v6299, %v6299
      %v6364 = vpack.c.b16 %v6300, %v6300
      %v6365 = vpack.c.b16 %v6301, %v6301
      %v6366 = vpack.c.b16 %v6302, %v6302
      %v6367 = vpack.c.b16 %v6303, %v6303
      %v6368 = vpack.c.b16 %v6304, %v6304
      %v6369 = vpack.c.b16 %v6305, %v6305
      %v6370 = vpack.c.b16 %v6306, %v6306
      %v6371 = vpack.c.b16 %v6307, %v6307
      %v6372 = vpack.c.b16 %v6308, %v6308
      %v6373 = vpack.c.b16 %v6309, %v6309
      %v6374 = vpack.c.b16 %v6310, %v6310
      %v6375 = vpack.c.b16 %v6311, %v6311
      %v6376 = vpack.c.b16 %v6312, %v6312
      %v6377 = vpack.c.b16 %v6313, %v6313
      %v6378 = vpack.c.b16 %v6314, %v6314
      %v6379 = vpack.c.b16 %v6315, %v6315
      %v6380 = vpack.c.b16 %v6316, %v6316
      %v6381 = vpack.c.b16 %v6317, %v6317
      %v6382 = vpack.c.b16 %v6318, %v6318
      %v6383 = vpack.c.b16 %v6319, %v6319
      %v6384 = vpack.c.b16 %v6320, %v6320
      %v6385 = vpack.c.b16 %v6321, %v6321
      %6450 = vst [vmem:[%s256] sm:$0xf] %v6322
      %6451 = vst [vmem:[%s256 + $0x4] sm:$0xf] %v6323
      %6452 = vst [vmem:[%s256 + $0x8] sm:$0xf] %v6324
      %6453 = vst [vmem:[%s256 + $0xc] sm:$0xf] %v6325
      %6454 = vst [vmem:[%s256 + $0x10] sm:$0xf] %v6326
      %6455 = vst [vmem:[%s256 + $0x14] sm:$0xf] %v6327
      %6456 = vst [vmem:[%s256 + $0x18] sm:$0xf] %v6328
      %6457 = vst [vmem:[%s256 + $0x1c] sm:$0xf] %v6329
      %6458 = vst [vmem:[%s256 + $0x20] sm:$0xf] %v6330
      %6459 = vst [vmem:[%s256 + $0x24] sm:$0xf] %v6331
      %6460 = vst [vmem:[%s256 + $0x28] sm:$0xf] %v6332
      %6461 = vst [vmem:[%s256 + $0x2c] sm:$0xf] %v6333
      %6462 = vst [vmem:[%s256 + $0x30] sm:$0xf] %v6334
      %6463 = vst [vmem:[%s256 + $0x34] sm:$0xf] %v6335
      %6464 = vst [vmem:[%s256 + $0x38] sm:$0xf] %v6336
      %6465 = vst [vmem:[%s256 + $0x3c] sm:$0xf] %v6337
      %6466 = vst [vmem:[%s256 + $0x40] sm:$0xf] %v6338
      %6467 = vst [vmem:[%s256 + $0x44] sm:$0xf] %v6339
      %6468 = vst [vmem:[%s256 + $0x48] sm:$0xf] %v6340
      %6469 = vst [vmem:[%s256 + $0x4c] sm:$0xf] %v6341
      %6470 = vst [vmem:[%s256 + $0x50] sm:$0xf] %v6342
      %6471 = vst [vmem:[%s256 + $0x54] sm:$0xf] %v6343
      %6472 = vst [vmem:[%s256 + $0x58] sm:$0xf] %v6344
      %6473 = vst [vmem:[%s256 + $0x5c] sm:$0xf] %v6345
      %6474 = vst [vmem:[%s256 + $0x60] sm:$0xf] %v6346
      %6475 = vst [vmem:[%s256 + $0x64] sm:$0xf] %v6347
      %6476 = vst [vmem:[%s256 + $0x68] sm:$0xf] %v6348
      %6477 = vst [vmem:[%s256 + $0x6c] sm:$0xf] %v6349
      %6478 = vst [vmem:[%s256 + $0x70] sm:$0xf] %v6350
      %6479 = vst [vmem:[%s256 + $0x74] sm:$0xf] %v6351
      %6480 = vst [vmem:[%s256 + $0x78] sm:$0xf] %v6352
      %6481 = vst [vmem:[%s256 + $0x7c] sm:$0xf] %v6353
      %6482 = vst [vmem:[%s256 + $0x80] sm:$0xf] %v6354
      %6483 = vst [vmem:[%s256 + $0x84] sm:$0xf] %v6355
      %6484 = vst [vmem:[%s256 + $0x88] sm:$0xf] %v6356
      %6485 = vst [vmem:[%s256 + $0x8c] sm:$0xf] %v6357
      %6486 = vst [vmem:[%s256 + $0x90] sm:$0xf] %v6358
      %6487 = vst [vmem:[%s256 + $0x94] sm:$0xf] %v6359
      %6488 = vst [vmem:[%s256 + $0x98] sm:$0xf] %v6360
      %6489 = vst [vmem:[%s256 + $0x9c] sm:$0xf] %v6361
      %6490 = vst [vmem:[%s256 + $0xa0] sm:$0xf] %v6362
      %6491 = vst [vmem:[%s256 + $0xa4] sm:$0xf] %v6363
      %6492 = vst [vmem:[%s256 + $0xa8] sm:$0xf] %v6364
      %6493 = vst [vmem:[%s256 + $0xac] sm:$0xf] %v6365
      %6494 = vst [vmem:[%s256 + $0xb0] sm:$0xf] %v6366
      %6495 = vst [vmem:[%s256 + $0xb4] sm:$0xf] %v6367
      %6496 = vst [vmem:[%s256 + $0xb8] sm:$0xf] %v6368
      %6497 = vst [vmem:[%s256 + $0xbc] sm:$0xf] %v6369
      %6498 = vst [vmem:[%s256 + $0xc0] sm:$0xf] %v6370
      %6499 = vst [vmem:[%s256 + $0xc4] sm:$0xf] %v6371
      %6500 = vst [vmem:[%s256 + $0xc8] sm:$0xf] %v6372
      %6501 = vst [vmem:[%s256 + $0xcc] sm:$0xf] %v6373
      %6502 = vst [vmem:[%s256 + $0xd0] sm:$0xf] %v6374
      %6503 = vst [vmem:[%s256 + $0xd4] sm:$0xf] %v6375
      %6504 = vst [vmem:[%s256 + $0xd8] sm:$0xf] %v6376
      %6505 = vst [vmem:[%s256 + $0xdc] sm:$0xf] %v6377
      %6506 = vst [vmem:[%s256 + $0xe0] sm:$0xf] %v6378
      %6507 = vst [vmem:[%s256 + $0xe4] sm:$0xf] %v6379
      %6508 = vst [vmem:[%s256 + $0xe8] sm:$0xf] %v6380
      %6509 = vst [vmem:[%s256 + $0xec] sm:$0xf] %v6381
      %6510 = vst [vmem:[%s256 + $0xf0] sm:$0xf] %v6382
      %6511 = vst [vmem:[%s256 + $0xf4] sm:$0xf] %v6383
      %6512 = vst [vmem:[%s256 + $0xf8] sm:$0xf] %v6384
      %6513 = vst [vmem:[%s256 + $0xfc] sm:$0xf] %v6385
      %v6546 = vunpack.c.l.b16 %v4064
      %v6547 = vunpack.c.h.b16 %v4064
      %v6548 = vunpack.c.l.b16 %v4065
      %v6549 = vunpack.c.h.b16 %v4065
      %v6550 = vunpack.c.l.b16 %v4066
      %v6551 = vunpack.c.h.b16 %v4066
      %v6552 = vunpack.c.l.b16 %v4067
      %v6553 = vunpack.c.h.b16 %v4067
      %v6554 = vunpack.c.l.b16 %v4068
      %v6555 = vunpack.c.h.b16 %v4068
      %v6556 = vunpack.c.l.b16 %v4069
      %v6557 = vunpack.c.h.b16 %v4069
      %v6558 = vunpack.c.l.b16 %v4070
      %v6559 = vunpack.c.h.b16 %v4070
      %v6560 = vunpack.c.l.b16 %v4071
      %v6561 = vunpack.c.h.b16 %v4071
      %v6562 = vunpack.c.l.b16 %v4072
      %v6563 = vunpack.c.h.b16 %v4072
      %v6564 = vunpack.c.l.b16 %v4073
      %v6565 = vunpack.c.h.b16 %v4073
      %v6566 = vunpack.c.l.b16 %v4074
      %v6567 = vunpack.c.h.b16 %v4074
      %v6568 = vunpack.c.l.b16 %v4075
      %v6569 = vunpack.c.h.b16 %v4075
      %v6570 = vunpack.c.l.b16 %v4076
      %v6571 = vunpack.c.h.b16 %v4076
      %v6572 = vunpack.c.l.b16 %v4077
      %v6573 = vunpack.c.h.b16 %v4077
      %v6574 = vunpack.c.l.b16 %v4078
      %v6575 = vunpack.c.h.b16 %v4078
      %v6576 = vunpack.c.l.b16 %v4079
      %v6577 = vunpack.c.h.b16 %v4079
      %v6578 = vunpack.c.l.b16 %v4080
      %v6579 = vunpack.c.h.b16 %v4080
      %v6580 = vunpack.c.l.b16 %v4081
      %v6581 = vunpack.c.h.b16 %v4081
      %v6582 = vunpack.c.l.b16 %v4082
      %v6583 = vunpack.c.h.b16 %v4082
      %v6584 = vunpack.c.l.b16 %v4083
      %v6585 = vunpack.c.h.b16 %v4083
      %v6586 = vunpack.c.l.b16 %v4084
      %v6587 = vunpack.c.h.b16 %v4084
      %v6588 = vunpack.c.l.b16 %v4085
      %v6589 = vunpack.c.h.b16 %v4085
      %v6590 = vunpack.c.l.b16 %v4086
      %v6591 = vunpack.c.h.b16 %v4086
      %v6592 = vunpack.c.l.b16 %v4087
      %v6593 = vunpack.c.h.b16 %v4087
      %v6594 = vunpack.c.l.b16 %v4088
      %v6595 = vunpack.c.h.b16 %v4088
      %v6596 = vunpack.c.l.b16 %v4089
      %v6597 = vunpack.c.h.b16 %v4089
      %v6598 = vunpack.c.l.b16 %v4090
      %v6599 = vunpack.c.h.b16 %v4090
      %v6600 = vunpack.c.l.b16 %v4091
      %v6601 = vunpack.c.h.b16 %v4091
      %v6602 = vunpack.c.l.b16 %v4092
      %v6603 = vunpack.c.h.b16 %v4092
      %v6604 = vunpack.c.l.b16 %v4093
      %v6605 = vunpack.c.h.b16 %v4093
      %v6606 = vunpack.c.l.b16 %v4094
      %v6607 = vunpack.c.h.b16 %v4094
      %v6608 = vunpack.c.l.b16 %v4095
      %v6609 = vunpack.c.h.b16 %v4095
      %v6610 = vpack.c.b16 %v6546, %v6546
      %v6611 = vpack.c.b16 %v6547, %v6547
      %v6612 = vpack.c.b16 %v6548, %v6548
      %v6613 = vpack.c.b16 %v6549, %v6549
      %v6614 = vpack.c.b16 %v6550, %v6550
      %v6615 = vpack.c.b16 %v6551, %v6551
      %v6616 = vpack.c.b16 %v6552, %v6552
      %v6617 = vpack.c.b16 %v6553, %v6553
      %v6618 = vpack.c.b16 %v6554, %v6554
      %v6619 = vpack.c.b16 %v6555, %v6555
      %v6620 = vpack.c.b16 %v6556, %v6556
      %v6621 = vpack.c.b16 %v6557, %v6557
      %v6622 = vpack.c.b16 %v6558, %v6558
      %v6623 = vpack.c.b16 %v6559, %v6559
      %v6624 = vpack.c.b16 %v6560, %v6560
      %v6625 = vpack.c.b16 %v6561, %v6561
      %v6626 = vpack.c.b16 %v6562, %v6562
      %v6627 = vpack.c.b16 %v6563, %v6563
      %v6628 = vpack.c.b16 %v6564, %v6564
      %v6629 = vpack.c.b16 %v6565, %v6565
      %v6630 = vpack.c.b16 %v6566, %v6566
      %v6631 = vpack.c.b16 %v6567, %v6567
      %v6632 = vpack.c.b16 %v6568, %v6568
      %v6633 = vpack.c.b16 %v6569, %v6569
      %v6634 = vpack.c.b16 %v6570, %v6570
      %v6635 = vpack.c.b16 %v6571, %v6571
      %v6636 = vpack.c.b16 %v6572, %v6572
      %v6637 = vpack.c.b16 %v6573, %v6573
      %v6638 = vpack.c.b16 %v6574, %v6574
      %v6639 = vpack.c.b16 %v6575, %v6575
      %v6640 = vpack.c.b16 %v6576, %v6576
      %v6641 = vpack.c.b16 %v6577, %v6577
      %v6642 = vpack.c.b16 %v6578, %v6578
      %v6643 = vpack.c.b16 %v6579, %v6579
      %v6644 = vpack.c.b16 %v6580, %v6580
      %v6645 = vpack.c.b16 %v6581, %v6581
      %v6646 = vpack.c.b16 %v6582, %v6582
      %v6647 = vpack.c.b16 %v6583, %v6583
      %v6648 = vpack.c.b16 %v6584, %v6584
      %v6649 = vpack.c.b16 %v6585, %v6585
      %v6650 = vpack.c.b16 %v6586, %v6586
      %v6651 = vpack.c.b16 %v6587, %v6587
      %v6652 = vpack.c.b16 %v6588, %v6588
      %v6653 = vpack.c.b16 %v6589, %v6589
      %v6654 = vpack.c.b16 %v6590, %v6590
      %v6655 = vpack.c.b16 %v6591, %v6591
      %v6656 = vpack.c.b16 %v6592, %v6592
      %v6657 = vpack.c.b16 %v6593, %v6593
      %v6658 = vpack.c.b16 %v6594, %v6594
      %v6659 = vpack.c.b16 %v6595, %v6595
      %v6660 = vpack.c.b16 %v6596, %v6596
      %v6661 = vpack.c.b16 %v6597, %v6597
      %v6662 = vpack.c.b16 %v6598, %v6598
      %v6663 = vpack.c.b16 %v6599, %v6599
      %v6664 = vpack.c.b16 %v6600, %v6600
      %v6665 = vpack.c.b16 %v6601, %v6601
      %v6666 = vpack.c.b16 %v6602, %v6602
      %v6667 = vpack.c.b16 %v6603, %v6603
      %v6668 = vpack.c.b16 %v6604, %v6604
      %v6669 = vpack.c.b16 %v6605, %v6605
      %v6670 = vpack.c.b16 %v6606, %v6606
      %v6671 = vpack.c.b16 %v6607, %v6607
      %v6672 = vpack.c.b16 %v6608, %v6608
      %v6673 = vpack.c.b16 %v6609, %v6609
      %6674 = vrot.lane.b32.xlu0 %v6610, 64
      %v6675 = vpop.permute.xlu0 %6674
      %6676 = vrot.lane.b32.xlu0 %v6611, 64
      %v6677 = vpop.permute.xlu0 %6676
      %6678 = vrot.lane.b32.xlu0 %v6612, 64
      %v6679 = vpop.permute.xlu0 %6678
      %6680 = vrot.lane.b32.xlu0 %v6613, 64
      %v6681 = vpop.permute.xlu0 %6680
      %6682 = vrot.lane.b32.xlu0 %v6614, 64
      %v6683 = vpop.permute.xlu0 %6682
      %6684 = vrot.lane.b32.xlu0 %v6615, 64
      %v6685 = vpop.permute.xlu0 %6684
      %6686 = vrot.lane.b32.xlu0 %v6616, 64
      %v6687 = vpop.permute.xlu0 %6686
      %6688 = vrot.lane.b32.xlu0 %v6617, 64
      %v6689 = vpop.permute.xlu0 %6688
      %6690 = vrot.lane.b32.xlu0 %v6618, 64
      %v6691 = vpop.permute.xlu0 %6690
      %6692 = vrot.lane.b32.xlu0 %v6619, 64
      %v6693 = vpop.permute.xlu0 %6692
      %6694 = vrot.lane.b32.xlu0 %v6620, 64
      %v6695 = vpop.permute.xlu0 %6694
      %6696 = vrot.lane.b32.xlu0 %v6621, 64
      %v6697 = vpop.permute.xlu0 %6696
      %6698 = vrot.lane.b32.xlu0 %v6622, 64
      %v6699 = vpop.permute.xlu0 %6698
      %6700 = vrot.lane.b32.xlu0 %v6623, 64
      %v6701 = vpop.permute.xlu0 %6700
      %6702 = vrot.lane.b32.xlu0 %v6624, 64
      %v6703 = vpop.permute.xlu0 %6702
      %6704 = vrot.lane.b32.xlu0 %v6625, 64
      %v6705 = vpop.permute.xlu0 %6704
      %6706 = vrot.lane.b32.xlu0 %v6626, 64
      %v6707 = vpop.permute.xlu0 %6706
      %6708 = vrot.lane.b32.xlu0 %v6627, 64
      %v6709 = vpop.permute.xlu0 %6708
      %6710 = vrot.lane.b32.xlu0 %v6628, 64
      %v6711 = vpop.permute.xlu0 %6710
      %6712 = vrot.lane.b32.xlu0 %v6629, 64
      %v6713 = vpop.permute.xlu0 %6712
      %6714 = vrot.lane.b32.xlu0 %v6630, 64
      %v6715 = vpop.permute.xlu0 %6714
      %6716 = vrot.lane.b32.xlu0 %v6631, 64
      %v6717 = vpop.permute.xlu0 %6716
      %6718 = vrot.lane.b32.xlu0 %v6632, 64
      %v6719 = vpop.permute.xlu0 %6718
      %6720 = vrot.lane.b32.xlu0 %v6633, 64
      %v6721 = vpop.permute.xlu0 %6720
      %6722 = vrot.lane.b32.xlu0 %v6634, 64
      %v6723 = vpop.permute.xlu0 %6722
      %6724 = vrot.lane.b32.xlu0 %v6635, 64
      %v6725 = vpop.permute.xlu0 %6724
      %6726 = vrot.lane.b32.xlu0 %v6636, 64
      %v6727 = vpop.permute.xlu0 %6726
      %6728 = vrot.lane.b32.xlu0 %v6637, 64
      %v6729 = vpop.permute.xlu0 %6728
      %6730 = vrot.lane.b32.xlu0 %v6638, 64
      %v6731 = vpop.permute.xlu0 %6730
      %6732 = vrot.lane.b32.xlu0 %v6639, 64
      %v6733 = vpop.permute.xlu0 %6732
      %6734 = vrot.lane.b32.xlu0 %v6640, 64
      %v6735 = vpop.permute.xlu0 %6734
      %6736 = vrot.lane.b32.xlu0 %v6641, 64
      %v6737 = vpop.permute.xlu0 %6736
      %6738 = vrot.lane.b32.xlu0 %v6642, 64
      %v6739 = vpop.permute.xlu0 %6738
      %6740 = vrot.lane.b32.xlu0 %v6643, 64
      %v6741 = vpop.permute.xlu0 %6740
      %6742 = vrot.lane.b32.xlu0 %v6644, 64
      %v6743 = vpop.permute.xlu0 %6742
      %6744 = vrot.lane.b32.xlu0 %v6645, 64
      %v6745 = vpop.permute.xlu0 %6744
      %6746 = vrot.lane.b32.xlu0 %v6646, 64
      %v6747 = vpop.permute.xlu0 %6746
      %6748 = vrot.lane.b32.xlu0 %v6647, 64
      %v6749 = vpop.permute.xlu0 %6748
      %6750 = vrot.lane.b32.xlu0 %v6648, 64
      %v6751 = vpop.permute.xlu0 %6750
      %6752 = vrot.lane.b32.xlu0 %v6649, 64
      %v6753 = vpop.permute.xlu0 %6752
      %6754 = vrot.lane.b32.xlu0 %v6650, 64
      %v6755 = vpop.permute.xlu0 %6754
      %6756 = vrot.lane.b32.xlu0 %v6651, 64
      %v6757 = vpop.permute.xlu0 %6756
      %6758 = vrot.lane.b32.xlu0 %v6652, 64
      %v6759 = vpop.permute.xlu0 %6758
      %6760 = vrot.lane.b32.xlu0 %v6653, 64
      %v6761 = vpop.permute.xlu0 %6760
      %6762 = vrot.lane.b32.xlu0 %v6654, 64
      %v6763 = vpop.permute.xlu0 %6762
      %6764 = vrot.lane.b32.xlu0 %v6655, 64
      %v6765 = vpop.permute.xlu0 %6764
      %6766 = vrot.lane.b32.xlu0 %v6656, 64
      %v6767 = vpop.permute.xlu0 %6766
      %6768 = vrot.lane.b32.xlu0 %v6657, 64
      %v6769 = vpop.permute.xlu0 %6768
      %6770 = vrot.lane.b32.xlu0 %v6658, 64
      %v6771 = vpop.permute.xlu0 %6770
      %6772 = vrot.lane.b32.xlu0 %v6659, 64
      %v6773 = vpop.permute.xlu0 %6772
      %6774 = vrot.lane.b32.xlu0 %v6660, 64
      %v6775 = vpop.permute.xlu0 %6774
      %6776 = vrot.lane.b32.xlu0 %v6661, 64
      %v6777 = vpop.permute.xlu0 %6776
      %6778 = vrot.lane.b32.xlu0 %v6662, 64
      %v6779 = vpop.permute.xlu0 %6778
      %6780 = vrot.lane.b32.xlu0 %v6663, 64
      %v6781 = vpop.permute.xlu0 %6780
      %6782 = vrot.lane.b32.xlu0 %v6664, 64
      %v6783 = vpop.permute.xlu0 %6782
      %6784 = vrot.lane.b32.xlu0 %v6665, 64
      %v6785 = vpop.permute.xlu0 %6784
      %6786 = vrot.lane.b32.xlu0 %v6666, 64
      %v6787 = vpop.permute.xlu0 %6786
      %6788 = vrot.lane.b32.xlu0 %v6667, 64
      %v6789 = vpop.permute.xlu0 %6788
      %6790 = vrot.lane.b32.xlu0 %v6668, 64
      %v6791 = vpop.permute.xlu0 %6790
      %6792 = vrot.lane.b32.xlu0 %v6669, 64
      %v6793 = vpop.permute.xlu0 %6792
      %6794 = vrot.lane.b32.xlu0 %v6670, 64
      %v6795 = vpop.permute.xlu0 %6794
      %6796 = vrot.lane.b32.xlu0 %v6671, 64
      %v6797 = vpop.permute.xlu0 %6796
      %6798 = vrot.lane.b32.xlu0 %v6672, 64
      %v6799 = vpop.permute.xlu0 %6798
      %6800 = vrot.lane.b32.xlu0 %v6673, 64
      %v6801 = vpop.permute.xlu0 %6800
      %vm6866 = vcmask 781824
      %6867 = vst.msk [vmem:[%s256] sm:$0xf] %vm6866, %v6675
      %6868 = vst.msk [vmem:[%s256 + $0x4] sm:$0xf] %vm6866, %v6677
      %6869 = vst.msk [vmem:[%s256 + $0x8] sm:$0xf] %vm6866, %v6679
      %6870 = vst.msk [vmem:[%s256 + $0xc] sm:$0xf] %vm6866, %v6681
      %6871 = vst.msk [vmem:[%s256 + $0x10] sm:$0xf] %vm6866, %v6683
      %6872 = vst.msk [vmem:[%s256 + $0x14] sm:$0xf] %vm6866, %v6685
      %6873 = vst.msk [vmem:[%s256 + $0x18] sm:$0xf] %vm6866, %v6687
      %6874 = vst.msk [vmem:[%s256 + $0x1c] sm:$0xf] %vm6866, %v6689
      %6875 = vst.msk [vmem:[%s256 + $0x20] sm:$0xf] %vm6866, %v6691
      %6876 = vst.msk [vmem:[%s256 + $0x24] sm:$0xf] %vm6866, %v6693
      %6877 = vst.msk [vmem:[%s256 + $0x28] sm:$0xf] %vm6866, %v6695
      %6878 = vst.msk [vmem:[%s256 + $0x2c] sm:$0xf] %vm6866, %v6697
      %6879 = vst.msk [vmem:[%s256 + $0x30] sm:$0xf] %vm6866, %v6699
      %6880 = vst.msk [vmem:[%s256 + $0x34] sm:$0xf] %vm6866, %v6701
      %6881 = vst.msk [vmem:[%s256 + $0x38] sm:$0xf] %vm6866, %v6703
      %6882 = vst.msk [vmem:[%s256 + $0x3c] sm:$0xf] %vm6866, %v6705
      %6883 = vst.msk [vmem:[%s256 + $0x40] sm:$0xf] %vm6866, %v6707
      %6884 = vst.msk [vmem:[%s256 + $0x44] sm:$0xf] %vm6866, %v6709
      %6885 = vst.msk [vmem:[%s256 + $0x48] sm:$0xf] %vm6866, %v6711
      %6886 = vst.msk [vmem:[%s256 + $0x4c] sm:$0xf] %vm6866, %v6713
      %6887 = vst.msk [vmem:[%s256 + $0x50] sm:$0xf] %vm6866, %v6715
      %6888 = vst.msk [vmem:[%s256 + $0x54] sm:$0xf] %vm6866, %v6717
      %6889 = vst.msk [vmem:[%s256 + $0x58] sm:$0xf] %vm6866, %v6719
      %6890 = vst.msk [vmem:[%s256 + $0x5c] sm:$0xf] %vm6866, %v6721
      %6891 = vst.msk [vmem:[%s256 + $0x60] sm:$0xf] %vm6866, %v6723
      %6892 = vst.msk [vmem:[%s256 + $0x64] sm:$0xf] %vm6866, %v6725
      %6893 = vst.msk [vmem:[%s256 + $0x68] sm:$0xf] %vm6866, %v6727
      %6894 = vst.msk [vmem:[%s256 + $0x6c] sm:$0xf] %vm6866, %v6729
      %6895 = vst.msk [vmem:[%s256 + $0x70] sm:$0xf] %vm6866, %v6731
      %6896 = vst.msk [vmem:[%s256 + $0x74] sm:$0xf] %vm6866, %v6733
      %6897 = vst.msk [vmem:[%s256 + $0x78] sm:$0xf] %vm6866, %v6735
      %6898 = vst.msk [vmem:[%s256 + $0x7c] sm:$0xf] %vm6866, %v6737
      %6899 = vst.msk [vmem:[%s256 + $0x80] sm:$0xf] %vm6866, %v6739
      %6900 = vst.msk [vmem:[%s256 + $0x84] sm:$0xf] %vm6866, %v6741
      %6901 = vst.msk [vmem:[%s256 + $0x88] sm:$0xf] %vm6866, %v6743
      %6902 = vst.msk [vmem:[%s256 + $0x8c] sm:$0xf] %vm6866, %v6745
      %6903 = vst.msk [vmem:[%s256 + $0x90] sm:$0xf] %vm6866, %v6747
      %6904 = vst.msk [vmem:[%s256 + $0x94] sm:$0xf] %vm6866, %v6749
      %6905 = vst.msk [vmem:[%s256 + $0x98] sm:$0xf] %vm6866, %v6751
      %6906 = vst.msk [vmem:[%s256 + $0x9c] sm:$0xf] %vm6866, %v6753
      %6907 = vst.msk [vmem:[%s256 + $0xa0] sm:$0xf] %vm6866, %v6755
      %6908 = vst.msk [vmem:[%s256 + $0xa4] sm:$0xf] %vm6866, %v6757
      %6909 = vst.msk [vmem:[%s256 + $0xa8] sm:$0xf] %vm6866, %v6759
      %6910 = vst.msk [vmem:[%s256 + $0xac] sm:$0xf] %vm6866, %v6761
      %6911 = vst.msk [vmem:[%s256 + $0xb0] sm:$0xf] %vm6866, %v6763
      %6912 = vst.msk [vmem:[%s256 + $0xb4] sm:$0xf] %vm6866, %v6765
      %6913 = vst.msk [vmem:[%s256 + $0xb8] sm:$0xf] %vm6866, %v6767
      %6914 = vst.msk [vmem:[%s256 + $0xbc] sm:$0xf] %vm6866, %v6769
      %6915 = vst.msk [vmem:[%s256 + $0xc0] sm:$0xf] %vm6866, %v6771
      %6916 = vst.msk [vmem:[%s256 + $0xc4] sm:$0xf] %vm6866, %v6773
      %6917 = vst.msk [vmem:[%s256 + $0xc8] sm:$0xf] %vm6866, %v6775
      %6918 = vst.msk [vmem:[%s256 + $0xcc] sm:$0xf] %vm6866, %v6777
      %6919 = vst.msk [vmem:[%s256 + $0xd0] sm:$0xf] %vm6866, %v6779
      %6920 = vst.msk [vmem:[%s256 + $0xd4] sm:$0xf] %vm6866, %v6781
      %6921 = vst.msk [vmem:[%s256 + $0xd8] sm:$0xf] %vm6866, %v6783
      %6922 = vst.msk [vmem:[%s256 + $0xdc] sm:$0xf] %vm6866, %v6785
      %6923 = vst.msk [vmem:[%s256 + $0xe0] sm:$0xf] %vm6866, %v6787
      %6924 = vst.msk [vmem:[%s256 + $0xe4] sm:$0xf] %vm6866, %v6789
      %6925 = vst.msk [vmem:[%s256 + $0xe8] sm:$0xf] %vm6866, %v6791
      %6926 = vst.msk [vmem:[%s256 + $0xec] sm:$0xf] %vm6866, %v6793
      %6927 = vst.msk [vmem:[%s256 + $0xf0] sm:$0xf] %vm6866, %v6795
      %6928 = vst.msk [vmem:[%s256 + $0xf4] sm:$0xf] %vm6866, %v6797
      %6929 = vst.msk [vmem:[%s256 + $0xf8] sm:$0xf] %vm6866, %v6799
      %6930 = vst.msk [vmem:[%s256 + $0xfc] sm:$0xf] %vm6866, %v6801
      %s6931 = smul.u32 64, %s17
      %p6932 = scmp.lt.s32.totalorder %s6931, 127
      %s6933 = scalar_select %p6932, %s6931, 127
      %s6934 = smul.addr %s6933, 4
      %s6935 = scalar_lea.vmem %s6, %s6934
      // Predicated region
      $region45: #{hash_autoencoder_forward.1} parent=43 // pred_check
        %p6936 = pneg %p166
      $region46: #{hash_autoencoder_forward.1} parent=43 // pred_check_branch
        %6938 = sbr.rel (%p6936) target = $region48
      $region47: #{hash_autoencoder_forward.1} parent=43 // pred_region
        %s6939 = smul.u32 64, %s17
      $region48: #{hash_autoencoder_forward.1} parent=43 // pred_fallthru
        _
    $region44: #{hash_autoencoder_forward.1} parent=5 // pred_fallthru
      _
    %p6940 = scmp.le.s32.totalorder 2, %s12
    // Predicated region
    $region49: #{hash_autoencoder_forward.1} parent=5 // pred_check
      %p6941 = pneg %p6940
    $region50: #{hash_autoencoder_forward.1} parent=5 // pred_check_branch
      %6943 = sbr.rel (%p6941) target = $region52
    $region51: #{hash_autoencoder_forward.1} parent=5 // pred_region
      %s6944 = ssub.s32 %s12, 2
      // Predicated region
      $region53: #{hash_autoencoder_forward.1} parent=51 // pred_check
        %p6945 = pneg %p172
      $region54: #{hash_autoencoder_forward.1} parent=51 // pred_check_branch
        %6947 = sbr.rel (%p6945) target = $region56
      $region55: #{hash_autoencoder_forward.1} parent=51 // pred_region
        %s6948 = smul.u32 64, %s18
        %p6949 = scmp.lt.s32.totalorder %s6948, 127
        %s6950 = scalar_select %p6949, %s6948, 127
        %s6951 = smul.addr %s6950, 4
        %s6952 = scalar_lea.vmem %s6, %s6951
      $region56: #{hash_autoencoder_forward.1} parent=51 // pred_fallthru
        _
    $region52: #{hash_autoencoder_forward.1} parent=5 // pred_fallthru
      _
  $region6: #{hash_autoencoder_forward.1} parent=0 // loop_footer
    %s16 = sadd.s32 1, %s12
  $region7: #{hash_autoencoder_forward.1} parent=0 // loop_footer_branch
    %11 = sbr.rel target = $region3
  $region8: #{hash_autoencoder_forward.1} parent=0 // loop_exit
    _

</llo_original>
